<compile_context>
chip_gen: v6e
topology: v6e:2x2x1
jax: 0.10.0
libtpu: 0.0.40
codegen_flags: <defaults>
</compile_context>

<pallas_src>
import functools
import math

import jax
import jax.numpy as jnp
import numpy as np
from jax.experimental import pallas as pl
from jax.experimental.pallas import tpu as pltpu

_LANE = 128


def _round_up(n, m):
    return ((n + m - 1) // m) * m


# ----------------------------------------------------------------------------
# fused Pallas kernel: whole DiTDecoder forward for one batch chunk
# ----------------------------------------------------------------------------
def fused_dit_decoder_kernel(q_ref, k_ref, ctx_ref,
                             wa_ref, ba_ref,
                             n1w_ref, n1b_ref,
                             wqkv_ref, bqkv_ref,
                             wo_ref, bo_ref,
                             lnw_ref, lnb_ref, wf_ref, bf_ref,
                             out_ref, *, num_heads, approx_recip):
    """All 2L DiT layers + final LayerNorm/Linear, fully VMEM-resident.

    Layer li is a cross-attention layer when li is even (ca_layers[i]) and a
    self-attention layer when li is odd (decoder_layers[i]), matching
    DiTDecoder.forward's `for ca_layer, dec_layer in zip(...)` loop.
    """
    f32, bf16 = jnp.float32, jnp.bfloat16
    Bblk, Nq, E = q_ref.shape
    Nk = k_ref.shape[1]
    L2 = wqkv_ref.shape[0]
    H = num_heads
    Dh = E // H
    LE = L2 * E
    inv_sqrt_dh = 1.0 / math.sqrt(Dh)
    eps = 1e-5

    q3 = q_ref[...]                               # (B, Nq, E) running residual
    k3 = k_ref[...]                               # (B, Nk, E) cross source

    # --- hoisted: cross-K LayerNorm statistics (k constant across layers) ---
    k_mu = jnp.mean(k3, axis=-1, keepdims=True)
    k_var = jnp.mean(jnp.square(k3 - k_mu), axis=-1, keepdims=True)
    k_hat = (k3 - k_mu) * jax.lax.rsqrt(k_var + eps)          # (B, Nk, E)

    # --- adaLN modulation (SiLU + Linear) for ALL layers in one matmul ------
    # Column layout (see pack_decoder_params): [all shifts | all scales | gates]
    ctx2 = ctx_ref[...].reshape(Bblk, ctx_ref.shape[-1])      # (B, C)
    hsilu = ctx2 / (1.0 + jnp.exp(-ctx2))                     # SiLU (explicit)
    mods = jnp.dot(hsilu.astype(bf16), wa_ref[...],
                   preferred_element_type=f32) + ba_ref[...]  # (B, 3*L2*E)

    def mha(xq, xkv, li, self_attn):
        """Multi-head SDP attention, batched over the batch dim.
        xq: (B, Nq, E) f32, xkv: (B, nkv, E) f32."""
        nkv = xkv.shape[1]
        wqkv = wqkv_ref[li]                        # (E, 3E_pad=128) bf16
        bqkv = bqkv_ref[li]                        # (1, 3E_pad)     f32
        kv_rows = xkv.reshape(Bblk * nkv, E).astype(bf16)
        kvfull = jnp.dot(kv_rows, wqkv, preferred_element_type=f32) + bqkv
        if self_attn:
            qfull = kvfull                         # q == kv source: one dot
        else:
            q_rows = xq.reshape(Bblk * Nq, E).astype(bf16)
            qfull = jnp.dot(q_rows, wqkv, preferred_element_type=f32) + bqkv

        heads = []
        for hh in range(H):                        # static unroll (tiny H)
            q_sl = slice(hh * Dh, (hh + 1) * Dh)
            k_sl = slice(E + hh * Dh, E + (hh + 1) * Dh)
            v_sl = slice(2 * E + hh * Dh, 2 * E + (hh + 1) * Dh)
            Qh = qfull[:, q_sl].reshape(Bblk, Nq, Dh)      # f32 head slices
            Kh = kvfull[:, k_sl].reshape(Bblk, nkv, Dh)
            Vh = kvfull[:, v_sl].reshape(Bblk, nkv, Dh)
            # scores: single batched contraction over all batch rows
            s = jax.lax.dot_general(
                Qh, Kh, (((2,), (2,)), ((0,), (0,))),
                preferred_element_type=f32) * inv_sqrt_dh  # (B, Nq, nkv)
            m = jnp.max(s, axis=-1, keepdims=True)
            p = jnp.exp(s - m)
            denom = jnp.sum(p, axis=-1, keepdims=True)
            if approx_recip:
                p = p * pl.reciprocal(denom, approx=True)  # EUP slot (~1e-3 rel)
            else:
                p = p / denom
            heads.append(jax.lax.dot_general(
                p, Vh, (((2,), (1,)), ((0,), (0,))),
                preferred_element_type=f32))               # (B, Nq, Dh)
        cat = jnp.concatenate(heads, axis=-1)              # (B, Nq, E)
        # single output projection for all heads / all batch rows
        cat_rows = cat.reshape(Bblk * Nq, E).astype(bf16)
        proj = jnp.dot(cat_rows, wo_ref[li],
                       preferred_element_type=f32) + bo_ref[li]
        return proj.reshape(Bblk, Nq, E)

    # --- statically unrolled layer loop (L2 = 2*num_layers = 4 here) --------
    # TODO(synk): for production depths (2L >= 12) switch to lax.fori_loop with
    # dynamic weight indexing to bound vreg live ranges / compile time.
    for li in range(L2):
        cross = (li % 2 == 0)
        shift = mods[:, li * E:(li + 1) * E]               # (B, E), 32-aligned
        scale = mods[:, LE + li * E:LE + (li + 1) * E]
        gate = mods[:, 2 * LE + li * E:2 * LE + (li + 1) * E]
        n1w = n1w_ref[li]                                  # (1, E)
        n1b = n1b_ref[li]
        if cross:
            ln = k_hat * n1w + n1b                         # reuse hoisted stats
            modded = ln * (1.0 + scale[:, None, :]) + shift[:, None, :]
            attn = mha(q3, modded, li, self_attn=False)
        else:
            mu = jnp.mean(q3, axis=-1, keepdims=True)
            var = jnp.mean(jnp.square(q3 - mu), axis=-1, keepdims=True)
            ln = (q3 - mu) * jax.lax.rsqrt(var + eps) * n1w + n1b
            modded = ln * (1.0 + scale[:, None, :]) + shift[:, None, :]
            attn = mha(modded, modded, li, self_attn=True)
        q3 = q3 + gate[:, None, :] * attn
        # MLP branch skipped: dense_config=None in the reference module.

    # --- final LayerNorm + Linear (output lanes padded to 128 -> dense vst) -
    mu = jnp.mean(q3, axis=-1, keepdims=True)
    var = jnp.mean(jnp.square(q3 - mu), axis=-1, keepdims=True)
    xf = (q3 - mu) * jax.lax.rsqrt(var + eps) * lnw_ref[...] + lnb_ref[...]
    xf_rows = xf.reshape(Bblk * Nq, E).astype(bf16)
    y = jnp.dot(xf_rows, wf_ref[...], preferred_element_type=f32) + bf_ref[...]
    out_ref[...] = y.reshape(Bblk, Nq, out_ref.shape[-1]).astype(out_ref.dtype)


# ----------------------------------------------------------------------------
# weight packing + wrapper
# ----------------------------------------------------------------------------
_PACKED_ORDER = ['wa', 'ba', 'n1w', 'n1b', 'wqkv', 'bqkv', 'wo', 'bo',
                 'lnw', 'lnb', 'wf', 'bf']


def _pad_cols(x, cols):
    return jnp.pad(x, ((0, 0), (0, cols - x.shape[-1])))


def pack_decoder_params(ca_params, dec_params, final_params,
                        *, weight_dtype=jnp.bfloat16):
    """Stack per-layer weights along a leading layer axis (interleaved
    [ca_0, dec_0, ca_1, dec_1, ...]), fuse wq/wk/wv and zero-pad their columns
    to a 128-lane multiple, keep only the MSA (first 3E) adaLN columns --
    reordered as [all shifts | all scales | all gates] -- and pad the final
    Linear to 128 output lanes.  Matmul weights are cast to bf16."""
    layers = []
    for ca, de in zip(ca_params, dec_params):
        layers += [ca, de]
    E = layers[0]['n1w'].shape[-1]
    qkv_cols = _round_up(3 * E, _LANE)
    out_cols = _round_up(final_params['wf'].shape[-1], _LANE)

    wa_parts, ba_parts = [], []
    for idx in range(3):                       # 0: shift_msa, 1: scale, 2: gate
        lo, hi = idx * E, (idx + 1) * E
        wa_parts += [p['wa'][:, lo:hi] for p in layers]
        ba_parts += [p['ba'][:, lo:hi] for p in layers]

    return dict(
        wa=jnp.concatenate(wa_parts, axis=1).astype(weight_dtype),  # (C, 3*L2*E)
        ba=jnp.concatenate(ba_parts, axis=1),                       # (1, 3*L2*E)
        n1w=jnp.stack([p['n1w'] for p in layers]),                  # (L2, 1, E)
        n1b=jnp.stack([p['n1b'] for p in layers]),
        wqkv=jnp.stack([_pad_cols(jnp.concatenate([p['wq'], p['wk'], p['wv']],
                                                  axis=1), qkv_cols)
                        for p in layers]).astype(weight_dtype),     # (L2, E, 128)
        bqkv=jnp.stack([_pad_cols(jnp.concatenate([p['bq'], p['bk'], p['bv']],
                                                  axis=1), qkv_cols)
                        for p in layers]),                          # (L2, 1, 128)
        wo=jnp.stack([p['wo'] for p in layers]).astype(weight_dtype),   # (L2,E,E)
        bo=jnp.stack([p['bo'] for p in layers]),                        # (L2,1,E)
        lnw=final_params['lnw'], lnb=final_params['lnb'],
        wf=_pad_cols(final_params['wf'], out_cols).astype(weight_dtype),  # (E,128)
        bf=_pad_cols(final_params['bf'], out_cols),                       # (1,128)
    )


def _broadcast_spec(shape):
    nd = len(shape)
    return pl.BlockSpec(shape, lambda c, _nd=nd: (0,) * _nd)


def dit_decoder_forward(q, k, ctx, packed, *, num_heads, out_dim,
                        batch_chunks=1, approx_recip=True):
    """Whole DiTDecoder forward in a single pallas_call.

    batch_chunks=1: all batch rows in one grid step (best at small shapes --
    no duplicated weight DMA / per-step overhead).  batch_chunks>1 shards the
    batch across v7x's two TensorCores via the "parallel" grid axis; only
    enable when per-chunk compute is large enough to hide the extra weight DMA.
    """
    B, Nq, E = q.shape
    Nk = k.shape[1]
    C = ctx.shape[-1]
    OUTP = packed['wf'].shape[-1]                 # lane-padded output width
    assert E % num_heads == 0
    assert B % batch_chunks == 0
    bc = B // batch_chunks
    ctx3 = ctx[:, None, :]                        # (B, 1, C)

    weights = [packed[n] for n in _PACKED_ORDER]
    kernel = functools.partial(fused_dit_decoder_kernel,
                               num_heads=num_heads, approx_recip=approx_recip)

    in_specs = [
        pl.BlockSpec((bc, Nq, E), lambda c: (c, 0, 0)),     # q
        pl.BlockSpec((bc, Nk, E), lambda c: (c, 0, 0)),     # k
        pl.BlockSpec((bc, 1, C), lambda c: (c, 0, 0)),      # context
    ] + [_broadcast_spec(w.shape) for w in weights]          # weights: const idx
    # TODO(synk): at production sizes on v7x (64 MiB VMEM), add
    # pipeline_mode=pl.Buffered(1) on the weight BlockSpecs to drop the second
    # pipeline buffer; irrelevant at these shapes / grid=(batch_chunks,).

    out = pl.pallas_call(
        kernel,
        out_shape=jax.ShapeDtypeStruct((B, Nq, OUTP), jnp.float32),
        grid=(batch_chunks,),
        in_specs=in_specs,
        out_specs=pl.BlockSpec((bc, Nq, OUTP), lambda c: (c, 0, 0)),
        compiler_params=pltpu.CompilerParams(
            dimension_semantics=("parallel",),
            vmem_limit_bytes=32 * 1024 * 1024),
    )(q, k, ctx3, *weights)
    return out[..., :out_dim]                     # strip output lane padding


# ----------------------------------------------------------------------------
# deterministic parameter init (shapes per DiTLayer / DiTDecoder __init__)
# ----------------------------------------------------------------------------
def init_layer_params(key, E, C):
    ks = jax.random.split(key, 10)
    g = lambda k, shp, s: (s * jax.random.normal(k, shp)).astype(jnp.float32)
    return dict(
        wa=g(ks[0], (C, 6 * E), 0.05), ba=g(ks[1], (1, 6 * E), 0.05),
        n1w=jnp.ones((1, E), jnp.float32), n1b=jnp.zeros((1, E), jnp.float32),
        wq=g(ks[2], (E, E), 0.1), bq=g(ks[3], (1, E), 0.02),
        wk=g(ks[4], (E, E), 0.1), bk=g(ks[5], (1, E), 0.02),
        wv=g(ks[6], (E, E), 0.1), bv=g(ks[7], (1, E), 0.02),
        wo=g(ks[8], (E, E), 0.1), bo=g(ks[9], (1, E), 0.02),
    )


# ----------------------------------------------------------------------------
# pure-JAX reference (mirrors the PyTorch forward) for correctness checking
# ----------------------------------------------------------------------------
def _ref_ln(x, w, b, eps=1e-5):
    mu = x.mean(-1, keepdims=True)
    var = ((x - mu) ** 2).mean(-1, keepdims=True)
    return (x - mu) / jnp.sqrt(var + eps) * w + b


def _ref_mha(xq, xkv, p, H):
    B, Nq, E = xq.shape
    Dh = E // H
    Q = (xq @ p['wq'] + p['bq']).reshape(B, Nq, H, Dh)
    K = (xkv @ p['wk'] + p['bk']).reshape(B, -1, H, Dh)
    V = (xkv @ p['wv'] + p['bv']).reshape(B, -1, H, Dh)
    s = jnp.einsum('bqhd,bkhd->bhqk', Q, K) / math.sqrt(Dh)
    a = jax.nn.softmax(s, axis=-1)
    o = jnp.einsum('bhqk,bkhd->bqhd', a, V).reshape(B, Nq, E)
    return o @ p['wo'] + p['bo']


def _ref_dit_layer(q, kv, ctx, p, cross, H):
    E = q.shape[-1]
    mods = (ctx * jax.nn.sigmoid(ctx)) @ p['wa'] + p['ba']
    sh, sc, g = mods[:, :E], mods[:, E:2 * E], mods[:, 2 * E:3 * E]
    if cross:
        k_mod = _ref_ln(kv, p['n1w'], p['n1b']) * (1 + sc[:, None, :]) + sh[:, None, :]
        attn = _ref_mha(q, k_mod, p, H)
    else:
        q_mod = _ref_ln(q, p['n1w'], p['n1b']) * (1 + sc[:, None, :]) + sh[:, None, :]
        attn = _ref_mha(q_mod, q_mod, p, H)
    return q + g[:, None, :] * attn


# ----------------------------------------------------------------------------
# main
# ----------------------------------------------------------------------------
if __name__ == "__main__":
    B, Nq, Nk, E, H, C, OUT, L = 2, 8, 16, 32, 4, 16, 8, 2

    key = jax.random.PRNGKey(0)
    kq, kk, kc, kp = jax.random.split(key, 4)
    q = jax.random.normal(kq, (B, Nq, E), jnp.float32)
    k = jax.random.normal(kk, (B, Nk, E), jnp.float32)
    ctx = jax.random.normal(kc, (B, C), jnp.float32)

    lkeys = jax.random.split(kp, 2 * L + 2)
    ca_params = [init_layer_params(lkeys[i], E, C) for i in range(L)]
    dec_params = [init_layer_params(lkeys[L + i], E, C) for i in range(L)]
    final_params = dict(
        lnw=jnp.ones((1, E), jnp.float32),
        lnb=jnp.zeros((1, E), jnp.float32),
        wf=(0.1 * jax.random.normal(lkeys[-2], (E, OUT))).astype(jnp.float32),
        bf=(0.02 * jax.random.normal(lkeys[-1], (1, OUT))).astype(jnp.float32),
    )

    packed = pack_decoder_params(ca_params, dec_params, final_params)

    # --- fused Pallas forward (single pallas_call for the whole decoder) ----
    out = dit_decoder_forward(q, k, ctx, packed, num_heads=H, out_dim=OUT,
                              batch_chunks=1)
    out = jax.block_until_ready(out)

    # --- pure JAX reference --------------------------------------------------
    qr = q
    for i in range(L):
        qr = _ref_dit_layer(qr, k, ctx, ca_params[i], True, H)
        qr = _ref_dit_layer(qr, qr, ctx, dec_params[i], False, H)
    qr = _ref_ln(qr, final_params['lnw'], final_params['lnb'])
    ref = qr @ final_params['wf'] + final_params['bf']

    np.testing.assert_allclose(np.asarray(out), np.asarray(ref),
                               rtol=5e-2, atol=2e-2)
    print("KERNEL_OK")
</pallas_src>

<mosaic_0001>
module attributes {stable_mosaic.version = 11 : i64} {
  func.func @fused_dit_decoder_kernel(%arg0: i32, %arg1: memref<2x8x32xf32, #tpu.memory_space<vmem>>, %arg2: memref<2x16x32xf32, #tpu.memory_space<vmem>>, %arg3: memref<2x1x16xf32, #tpu.memory_space<vmem>>, %arg4: memref<16x384xbf16, #tpu.memory_space<vmem>>, %arg5: memref<1x384xf32, #tpu.memory_space<vmem>>, %arg6: memref<4x1x32xf32, #tpu.memory_space<vmem>>, %arg7: memref<4x1x32xf32, #tpu.memory_space<vmem>>, %arg8: memref<4x32x128xbf16, #tpu.memory_space<vmem>>, %arg9: memref<4x1x128xf32, #tpu.memory_space<vmem>>, %arg10: memref<4x32x32xbf16, #tpu.memory_space<vmem>>, %arg11: memref<4x1x32xf32, #tpu.memory_space<vmem>>, %arg12: memref<1x32xf32, #tpu.memory_space<vmem>>, %arg13: memref<1x32xf32, #tpu.memory_space<vmem>>, %arg14: memref<32x128xbf16, #tpu.memory_space<vmem>>, %arg15: memref<1x128xf32, #tpu.memory_space<vmem>>, %arg16: memref<2x8x128xf32, #tpu.memory_space<vmem>>) attributes {dimension_semantics = [#tpu.dimension_semantics<parallel>], iteration_bounds = array<i64: 1>, scalar_prefetch = 0 : i64, scratch_operands = 0 : i64, tpu.core_type = #tpu.core_type<tc>, window_params = [{transform_indices = @transform_0, window_bounds = array<i64: 2, 8, 32>}, {transform_indices = @transform_1, window_bounds = array<i64: 2, 16, 32>}, {transform_indices = @transform_2, window_bounds = array<i64: 2, 1, 16>}, {pipeline_mode = #tpu.pipeline_mode<synchronous>, transform_indices = @transform_3, window_bounds = array<i64: 16, 384>}, {pipeline_mode = #tpu.pipeline_mode<synchronous>, transform_indices = @transform_4, window_bounds = array<i64: 1, 384>}, {pipeline_mode = #tpu.pipeline_mode<synchronous>, transform_indices = @transform_5, window_bounds = array<i64: 4, 1, 32>}, {pipeline_mode = #tpu.pipeline_mode<synchronous>, transform_indices = @transform_6, window_bounds = array<i64: 4, 1, 32>}, {pipeline_mode = #tpu.pipeline_mode<synchronous>, transform_indices = @transform_7, window_bounds = array<i64: 4, 32, 128>}, {pipeline_mode = #tpu.pipeline_mode<synchronous>, transform_indices = @transform_8, window_bounds = array<i64: 4, 1, 128>}, {pipeline_mode = #tpu.pipeline_mode<synchronous>, transform_indices = @transform_9, window_bounds = array<i64: 4, 32, 32>}, {pipeline_mode = #tpu.pipeline_mode<synchronous>, transform_indices = @transform_10, window_bounds = array<i64: 4, 1, 32>}, {pipeline_mode = #tpu.pipeline_mode<synchronous>, transform_indices = @transform_11, window_bounds = array<i64: 1, 32>}, {pipeline_mode = #tpu.pipeline_mode<synchronous>, transform_indices = @transform_12, window_bounds = array<i64: 1, 32>}, {pipeline_mode = #tpu.pipeline_mode<synchronous>, transform_indices = @transform_13, window_bounds = array<i64: 32, 128>}, {pipeline_mode = #tpu.pipeline_mode<synchronous>, transform_indices = @transform_14, window_bounds = array<i64: 1, 128>}, {transform_indices = @transform_15, window_bounds = array<i64: 2, 8, 128>}]} {
    %c0 = arith.constant 0 : index
    %c0_0 = arith.constant 0 : index
    %c0_1 = arith.constant 0 : index
    %0 = vector.load %arg1[%c0, %c0_0, %c0_1] : memref<2x8x32xf32, #tpu.memory_space<vmem>>, vector<2x8x32xf32>
    %c0_2 = arith.constant 0 : index
    %c0_3 = arith.constant 0 : index
    %c0_4 = arith.constant 0 : index
    %1 = vector.load %arg2[%c0_2, %c0_3, %c0_4] : memref<2x16x32xf32, #tpu.memory_space<vmem>>, vector<2x16x32xf32>
    %cst = arith.constant dense<0.000000e+00> : vector<2x16xf32>
    %2 = vector.multi_reduction <add>, %1, %cst [2] : vector<2x16x32xf32> to vector<2x16xf32>
    %3 = vector.shape_cast %2 : vector<2x16xf32> to vector<2x16x1xf32>
    %cst_5 = arith.constant 3.200000e+01 : f32
    %4 = vector.broadcast %cst_5 : f32 to vector<2x16x1xf32>
    %5 = arith.divf %3, %4 : vector<2x16x1xf32>
    %6 = vector.broadcast %5 : vector<2x16x1xf32> to vector<2x16x32xf32>
    %7 = arith.subf %1, %6 : vector<2x16x32xf32>
    %8 = arith.mulf %7, %7 : vector<2x16x32xf32>
    %cst_6 = arith.constant dense<0.000000e+00> : vector<2x16xf32>
    %9 = vector.multi_reduction <add>, %8, %cst_6 [2] : vector<2x16x32xf32> to vector<2x16xf32>
    %10 = vector.shape_cast %9 : vector<2x16xf32> to vector<2x16x1xf32>
    %cst_7 = arith.constant 3.200000e+01 : f32
    %11 = vector.broadcast %cst_7 : f32 to vector<2x16x1xf32>
    %12 = arith.divf %10, %11 : vector<2x16x1xf32>
    %13 = vector.broadcast %5 : vector<2x16x1xf32> to vector<2x16x32xf32>
    %14 = arith.subf %1, %13 : vector<2x16x32xf32>
    %cst_8 = arith.constant 9.99999974E-6 : f32
    %15 = vector.broadcast %cst_8 : f32 to vector<2x16x1xf32>
    %16 = arith.addf %12, %15 : vector<2x16x1xf32>
    %17 = math.rsqrt %16 : vector<2x16x1xf32>
    %18 = vector.broadcast %17 : vector<2x16x1xf32> to vector<2x16x32xf32>
    %19 = arith.mulf %14, %18 : vector<2x16x32xf32>
    %c0_9 = arith.constant 0 : index
    %c0_10 = arith.constant 0 : index
    %c0_11 = arith.constant 0 : index
    %20 = vector.load %arg3[%c0_9, %c0_10, %c0_11] : memref<2x1x16xf32, #tpu.memory_space<vmem>>, vector<2x1x16xf32>
    %21 = vector.shape_cast %20 : vector<2x1x16xf32> to vector<2x16xf32>
    %cst_12 = arith.constant 0.000000e+00 : f32
    %22 = vector.broadcast %cst_12 : f32 to vector<2x16xf32>
    %23 = arith.subf %22, %21 : vector<2x16xf32>
    %24 = math.exp %23 : vector<2x16xf32>
    %cst_13 = arith.constant 1.000000e+00 : f32
    %25 = vector.broadcast %cst_13 : f32 to vector<2x16xf32>
    %26 = arith.addf %25, %24 : vector<2x16xf32>
    %27 = arith.divf %21, %26 : vector<2x16xf32>
    %28 = arith.truncf %27 : vector<2x16xf32> to vector<2x16xbf16>
    %c0_14 = arith.constant 0 : index
    %c0_15 = arith.constant 0 : index
    %29 = vector.load %arg4[%c0_14, %c0_15] : memref<16x384xbf16, #tpu.memory_space<vmem>>, vector<16x384xbf16>
    %cst_16 = arith.constant dense<0.000000e+00> : vector<2x384xf32>
    %30 = tpu.matmul %28, %29, %cst_16 {dimension_numbers = #tpu.dot_dimension_numbers<[1], [0], [0], [1], [0, 0, 1, 1], [], []>} : vector<2x16xbf16>, vector<16x384xbf16>, vector<2x384xf32> -> vector<2x384xf32>
    %c0_17 = arith.constant 0 : index
    %c0_18 = arith.constant 0 : index
    %31 = vector.load %arg5[%c0_17, %c0_18] : memref<1x384xf32, #tpu.memory_space<vmem>>, vector<1x384xf32>
    %32 = vector.broadcast %31 : vector<1x384xf32> to vector<2x384xf32>
    %33 = arith.addf %30, %32 : vector<2x384xf32>
    %34 = vector.extract_strided_slice %33 {offsets = [0, 0], sizes = [2, 32], strides = [1, 1]} : vector<2x384xf32> to vector<2x32xf32>
    %35 = vector.extract_strided_slice %33 {offsets = [0, 128], sizes = [2, 32], strides = [1, 1]} : vector<2x384xf32> to vector<2x32xf32>
    %36 = vector.extract_strided_slice %33 {offsets = [0, 256], sizes = [2, 32], strides = [1, 1]} : vector<2x384xf32> to vector<2x32xf32>
    %c0_19 = arith.constant 0 : index
    %c0_20 = arith.constant 0 : index
    %c0_21 = arith.constant 0 : index
    %37 = vector.load %arg6[%c0_19, %c0_20, %c0_21] : memref<4x1x32xf32, #tpu.memory_space<vmem>>, vector<1x1x32xf32>
    %38 = vector.shape_cast %37 : vector<1x1x32xf32> to vector<1x32xf32>
    %c0_22 = arith.constant 0 : index
    %c0_23 = arith.constant 0 : index
    %c0_24 = arith.constant 0 : index
    %39 = vector.load %arg7[%c0_22, %c0_23, %c0_24] : memref<4x1x32xf32, #tpu.memory_space<vmem>>, vector<1x1x32xf32>
    %40 = vector.shape_cast %39 : vector<1x1x32xf32> to vector<1x32xf32>
    %41 = vector.shape_cast %38 : vector<1x32xf32> to vector<1x1x32xf32>
    %42 = vector.broadcast %41 : vector<1x1x32xf32> to vector<2x16x32xf32>
    %43 = arith.mulf %19, %42 : vector<2x16x32xf32>
    %44 = vector.shape_cast %40 : vector<1x32xf32> to vector<1x1x32xf32>
    %45 = vector.broadcast %44 : vector<1x1x32xf32> to vector<2x16x32xf32>
    %46 = arith.addf %43, %45 : vector<2x16x32xf32>
    %47 = vector.shape_cast %35 : vector<2x32xf32> to vector<2x1x32xf32>
    %cst_25 = arith.constant 1.000000e+00 : f32
    %48 = vector.broadcast %cst_25 : f32 to vector<2x1x32xf32>
    %49 = arith.addf %48, %47 : vector<2x1x32xf32>
    %50 = vector.broadcast %49 : vector<2x1x32xf32> to vector<2x16x32xf32>
    %51 = arith.mulf %46, %50 : vector<2x16x32xf32>
    %52 = vector.shape_cast %34 : vector<2x32xf32> to vector<2x1x32xf32>
    %53 = vector.broadcast %52 : vector<2x1x32xf32> to vector<2x16x32xf32>
    %54 = arith.addf %51, %53 : vector<2x16x32xf32>
    %c0_26 = arith.constant 0 : index
    %c0_27 = arith.constant 0 : index
    %c0_28 = arith.constant 0 : index
    %55 = vector.load %arg8[%c0_26, %c0_27, %c0_28] : memref<4x32x128xbf16, #tpu.memory_space<vmem>>, vector<1x32x128xbf16>
    %56 = vector.shape_cast %55 : vector<1x32x128xbf16> to vector<32x128xbf16>
    %c0_29 = arith.constant 0 : index
    %c0_30 = arith.constant 0 : index
    %c0_31 = arith.constant 0 : index
    %57 = vector.load %arg9[%c0_29, %c0_30, %c0_31] : memref<4x1x128xf32, #tpu.memory_space<vmem>>, vector<1x1x128xf32>
    %58 = vector.shape_cast %57 : vector<1x1x128xf32> to vector<1x128xf32>
    %59 = vector.shape_cast %54 : vector<2x16x32xf32> to vector<32x32xf32>
    %60 = arith.truncf %59 : vector<32x32xf32> to vector<32x32xbf16>
    %cst_32 = arith.constant dense<0.000000e+00> : vector<32x128xf32>
    %61 = tpu.matmul %60, %56, %cst_32 {dimension_numbers = #tpu.dot_dimension_numbers<[1], [0], [0], [1], [0, 0, 1, 1], [], []>} : vector<32x32xbf16>, vector<32x128xbf16>, vector<32x128xf32> -> vector<32x128xf32>
    %62 = vector.broadcast %58 : vector<1x128xf32> to vector<32x128xf32>
    %63 = arith.addf %61, %62 : vector<32x128xf32>
    %64 = vector.shape_cast %0 : vector<2x8x32xf32> to vector<16x32xf32>
    %65 = arith.truncf %64 : vector<16x32xf32> to vector<16x32xbf16>
    %cst_33 = arith.constant dense<0.000000e+00> : vector<16x128xf32>
    %66 = tpu.matmul %65, %56, %cst_33 {dimension_numbers = #tpu.dot_dimension_numbers<[1], [0], [0], [1], [0, 0, 1, 1], [], []>} : vector<16x32xbf16>, vector<32x128xbf16>, vector<16x128xf32> -> vector<16x128xf32>
    %67 = vector.broadcast %58 : vector<1x128xf32> to vector<16x128xf32>
    %68 = arith.addf %66, %67 : vector<16x128xf32>
    %69 = vector.extract_strided_slice %68 {offsets = [0, 0], sizes = [16, 8], strides = [1, 1]} : vector<16x128xf32> to vector<16x8xf32>
    %70 = vector.shape_cast %69 : vector<16x8xf32> to vector<2x8x8xf32>
    %71 = vector.extract_strided_slice %63 {offsets = [0, 32], sizes = [32, 8], strides = [1, 1]} : vector<32x128xf32> to vector<32x8xf32>
    %72 = vector.shape_cast %71 : vector<32x8xf32> to vector<2x16x8xf32>
    %73 = vector.extract_strided_slice %63 {offsets = [0, 64], sizes = [32, 8], strides = [1, 1]} : vector<32x128xf32> to vector<32x8xf32>
    %74 = vector.shape_cast %73 : vector<32x8xf32> to vector<2x16x8xf32>
    %cst_34 = arith.constant dense<0.000000e+00> : vector<2x8x16xf32>
    %75 = tpu.matmul %70, %72, %cst_34 {dimension_numbers = #tpu.dot_dimension_numbers<[2], [2], [1], [1], [0, 0, 0, 1, 1, 1], [0], [0]>} : vector<2x8x8xf32>, vector<2x16x8xf32>, vector<2x8x16xf32> -> vector<2x8x16xf32>
    %cst_35 = arith.constant 0.353553385 : f32
    %76 = vector.broadcast %cst_35 : f32 to vector<2x8x16xf32>
    %77 = arith.mulf %75, %76 : vector<2x8x16xf32>
    %cst_36 = arith.constant dense<0xFF800000> : vector<2x8xf32>
    %78 = vector.multi_reduction <maximumf>, %77, %cst_36 [2] : vector<2x8x16xf32> to vector<2x8xf32>
    %79 = vector.shape_cast %78 : vector<2x8xf32> to vector<2x8x1xf32>
    %80 = vector.broadcast %79 : vector<2x8x1xf32> to vector<2x8x16xf32>
    %81 = arith.subf %77, %80 : vector<2x8x16xf32>
    %82 = math.exp %81 : vector<2x8x16xf32>
    %cst_37 = arith.constant dense<0.000000e+00> : vector<2x8xf32>
    %83 = vector.multi_reduction <add>, %82, %cst_37 [2] : vector<2x8x16xf32> to vector<2x8xf32>
    %84 = vector.shape_cast %83 : vector<2x8xf32> to vector<2x8x1xf32>
    %85 = tpu.reciprocal %84 {approx = true} : vector<2x8x1xf32> -> vector<2x8x1xf32>
    %86 = vector.broadcast %85 : vector<2x8x1xf32> to vector<2x8x16xf32>
    %87 = arith.mulf %82, %86 : vector<2x8x16xf32>
    %cst_38 = arith.constant dense<0.000000e+00> : vector<2x8x8xf32>
    %88 = tpu.matmul %87, %74, %cst_38 {dimension_numbers = #tpu.dot_dimension_numbers<[2], [1], [1], [2], [0, 0, 0, 1, 1, 2], [0], [0]>} : vector<2x8x16xf32>, vector<2x16x8xf32>, vector<2x8x8xf32> -> vector<2x8x8xf32>
    %89 = vector.extract_strided_slice %68 {offsets = [0, 8], sizes = [16, 8], strides = [1, 1]} : vector<16x128xf32> to vector<16x8xf32>
    %90 = vector.shape_cast %89 : vector<16x8xf32> to vector<2x8x8xf32>
    %91 = vector.extract_strided_slice %63 {offsets = [0, 40], sizes = [32, 8], strides = [1, 1]} : vector<32x128xf32> to vector<32x8xf32>
    %92 = vector.shape_cast %91 : vector<32x8xf32> to vector<2x16x8xf32>
    %93 = vector.extract_strided_slice %63 {offsets = [0, 72], sizes = [32, 8], strides = [1, 1]} : vector<32x128xf32> to vector<32x8xf32>
    %94 = vector.shape_cast %93 : vector<32x8xf32> to vector<2x16x8xf32>
    %cst_39 = arith.constant dense<0.000000e+00> : vector<2x8x16xf32>
    %95 = tpu.matmul %90, %92, %cst_39 {dimension_numbers = #tpu.dot_dimension_numbers<[2], [2], [1], [1], [0, 0, 0, 1, 1, 1], [0], [0]>} : vector<2x8x8xf32>, vector<2x16x8xf32>, vector<2x8x16xf32> -> vector<2x8x16xf32>
    %cst_40 = arith.constant 0.353553385 : f32
    %96 = vector.broadcast %cst_40 : f32 to vector<2x8x16xf32>
    %97 = arith.mulf %95, %96 : vector<2x8x16xf32>
    %cst_41 = arith.constant dense<0xFF800000> : vector<2x8xf32>
    %98 = vector.multi_reduction <maximumf>, %97, %cst_41 [2] : vector<2x8x16xf32> to vector<2x8xf32>
    %99 = vector.shape_cast %98 : vector<2x8xf32> to vector<2x8x1xf32>
    %100 = vector.broadcast %99 : vector<2x8x1xf32> to vector<2x8x16xf32>
    %101 = arith.subf %97, %100 : vector<2x8x16xf32>
    %102 = math.exp %101 : vector<2x8x16xf32>
    %cst_42 = arith.constant dense<0.000000e+00> : vector<2x8xf32>
    %103 = vector.multi_reduction <add>, %102, %cst_42 [2] : vector<2x8x16xf32> to vector<2x8xf32>
    %104 = vector.shape_cast %103 : vector<2x8xf32> to vector<2x8x1xf32>
    %105 = tpu.reciprocal %104 {approx = true} : vector<2x8x1xf32> -> vector<2x8x1xf32>
    %106 = vector.broadcast %105 : vector<2x8x1xf32> to vector<2x8x16xf32>
    %107 = arith.mulf %102, %106 : vector<2x8x16xf32>
    %cst_43 = arith.constant dense<0.000000e+00> : vector<2x8x8xf32>
    %108 = tpu.matmul %107, %94, %cst_43 {dimension_numbers = #tpu.dot_dimension_numbers<[2], [1], [1], [2], [0, 0, 0, 1, 1, 2], [0], [0]>} : vector<2x8x16xf32>, vector<2x16x8xf32>, vector<2x8x8xf32> -> vector<2x8x8xf32>
    %109 = vector.extract_strided_slice %68 {offsets = [0, 16], sizes = [16, 8], strides = [1, 1]} : vector<16x128xf32> to vector<16x8xf32>
    %110 = vector.shape_cast %109 : vector<16x8xf32> to vector<2x8x8xf32>
    %111 = vector.extract_strided_slice %63 {offsets = [0, 48], sizes = [32, 8], strides = [1, 1]} : vector<32x128xf32> to vector<32x8xf32>
    %112 = vector.shape_cast %111 : vector<32x8xf32> to vector<2x16x8xf32>
    %113 = vector.extract_strided_slice %63 {offsets = [0, 80], sizes = [32, 8], strides = [1, 1]} : vector<32x128xf32> to vector<32x8xf32>
    %114 = vector.shape_cast %113 : vector<32x8xf32> to vector<2x16x8xf32>
    %cst_44 = arith.constant dense<0.000000e+00> : vector<2x8x16xf32>
    %115 = tpu.matmul %110, %112, %cst_44 {dimension_numbers = #tpu.dot_dimension_numbers<[2], [2], [1], [1], [0, 0, 0, 1, 1, 1], [0], [0]>} : vector<2x8x8xf32>, vector<2x16x8xf32>, vector<2x8x16xf32> -> vector<2x8x16xf32>
    %cst_45 = arith.constant 0.353553385 : f32
    %116 = vector.broadcast %cst_45 : f32 to vector<2x8x16xf32>
    %117 = arith.mulf %115, %116 : vector<2x8x16xf32>
    %cst_46 = arith.constant dense<0xFF800000> : vector<2x8xf32>
    %118 = vector.multi_reduction <maximumf>, %117, %cst_46 [2] : vector<2x8x16xf32> to vector<2x8xf32>
    %119 = vector.shape_cast %118 : vector<2x8xf32> to vector<2x8x1xf32>
    %120 = vector.broadcast %119 : vector<2x8x1xf32> to vector<2x8x16xf32>
    %121 = arith.subf %117, %120 : vector<2x8x16xf32>
    %122 = math.exp %121 : vector<2x8x16xf32>
    %cst_47 = arith.constant dense<0.000000e+00> : vector<2x8xf32>
    %123 = vector.multi_reduction <add>, %122, %cst_47 [2] : vector<2x8x16xf32> to vector<2x8xf32>
    %124 = vector.shape_cast %123 : vector<2x8xf32> to vector<2x8x1xf32>
    %125 = tpu.reciprocal %124 {approx = true} : vector<2x8x1xf32> -> vector<2x8x1xf32>
    %126 = vector.broadcast %125 : vector<2x8x1xf32> to vector<2x8x16xf32>
    %127 = arith.mulf %122, %126 : vector<2x8x16xf32>
    %cst_48 = arith.constant dense<0.000000e+00> : vector<2x8x8xf32>
    %128 = tpu.matmul %127, %114, %cst_48 {dimension_numbers = #tpu.dot_dimension_numbers<[2], [1], [1], [2], [0, 0, 0, 1, 1, 2], [0], [0]>} : vector<2x8x16xf32>, vector<2x16x8xf32>, vector<2x8x8xf32> -> vector<2x8x8xf32>
    %129 = vector.extract_strided_slice %68 {offsets = [0, 24], sizes = [16, 8], strides = [1, 1]} : vector<16x128xf32> to vector<16x8xf32>
    %130 = vector.shape_cast %129 : vector<16x8xf32> to vector<2x8x8xf32>
    %131 = vector.extract_strided_slice %63 {offsets = [0, 56], sizes = [32, 8], strides = [1, 1]} : vector<32x128xf32> to vector<32x8xf32>
    %132 = vector.shape_cast %131 : vector<32x8xf32> to vector<2x16x8xf32>
    %133 = vector.extract_strided_slice %63 {offsets = [0, 88], sizes = [32, 8], strides = [1, 1]} : vector<32x128xf32> to vector<32x8xf32>
    %134 = vector.shape_cast %133 : vector<32x8xf32> to vector<2x16x8xf32>
    %cst_49 = arith.constant dense<0.000000e+00> : vector<2x8x16xf32>
    %135 = tpu.matmul %130, %132, %cst_49 {dimension_numbers = #tpu.dot_dimension_numbers<[2], [2], [1], [1], [0, 0, 0, 1, 1, 1], [0], [0]>} : vector<2x8x8xf32>, vector<2x16x8xf32>, vector<2x8x16xf32> -> vector<2x8x16xf32>
    %cst_50 = arith.constant 0.353553385 : f32
    %136 = vector.broadcast %cst_50 : f32 to vector<2x8x16xf32>
    %137 = arith.mulf %135, %136 : vector<2x8x16xf32>
    %cst_51 = arith.constant dense<0xFF800000> : vector<2x8xf32>
    %138 = vector.multi_reduction <maximumf>, %137, %cst_51 [2] : vector<2x8x16xf32> to vector<2x8xf32>
    %139 = vector.shape_cast %138 : vector<2x8xf32> to vector<2x8x1xf32>
    %140 = vector.broadcast %139 : vector<2x8x1xf32> to vector<2x8x16xf32>
    %141 = arith.subf %137, %140 : vector<2x8x16xf32>
    %142 = math.exp %141 : vector<2x8x16xf32>
    %cst_52 = arith.constant dense<0.000000e+00> : vector<2x8xf32>
    %143 = vector.multi_reduction <add>, %142, %cst_52 [2] : vector<2x8x16xf32> to vector<2x8xf32>
    %144 = vector.shape_cast %143 : vector<2x8xf32> to vector<2x8x1xf32>
    %145 = tpu.reciprocal %144 {approx = true} : vector<2x8x1xf32> -> vector<2x8x1xf32>
    %146 = vector.broadcast %145 : vector<2x8x1xf32> to vector<2x8x16xf32>
    %147 = arith.mulf %142, %146 : vector<2x8x16xf32>
    %cst_53 = arith.constant dense<0.000000e+00> : vector<2x8x8xf32>
    %148 = tpu.matmul %147, %134, %cst_53 {dimension_numbers = #tpu.dot_dimension_numbers<[2], [1], [1], [2], [0, 0, 0, 1, 1, 2], [0], [0]>} : vector<2x8x16xf32>, vector<2x16x8xf32>, vector<2x8x8xf32> -> vector<2x8x8xf32>
    %149 = tpu.concatenate %88, %108, %128, %148 in 2 : vector<2x8x8xf32>, vector<2x8x8xf32>, vector<2x8x8xf32>, vector<2x8x8xf32> -> vector<2x8x32xf32>
    %150 = vector.shape_cast %149 : vector<2x8x32xf32> to vector<16x32xf32>
    %151 = arith.truncf %150 : vector<16x32xf32> to vector<16x32xbf16>
    %c0_54 = arith.constant 0 : index
    %c0_55 = arith.constant 0 : index
    %c0_56 = arith.constant 0 : index
    %152 = vector.load %arg10[%c0_54, %c0_55, %c0_56] : memref<4x32x32xbf16, #tpu.memory_space<vmem>>, vector<1x32x32xbf16>
    %153 = vector.shape_cast %152 : vector<1x32x32xbf16> to vector<32x32xbf16>
    %cst_57 = arith.constant dense<0.000000e+00> : vector<16x32xf32>
    %154 = tpu.matmul %151, %153, %cst_57 {dimension_numbers = #tpu.dot_dimension_numbers<[1], [0], [0], [1], [0, 0, 1, 1], [], []>} : vector<16x32xbf16>, vector<32x32xbf16>, vector<16x32xf32> -> vector<16x32xf32>
    %c0_58 = arith.constant 0 : index
    %c0_59 = arith.constant 0 : index
    %c0_60 = arith.constant 0 : index
    %155 = vector.load %arg11[%c0_58, %c0_59, %c0_60] : memref<4x1x32xf32, #tpu.memory_space<vmem>>, vector<1x1x32xf32>
    %156 = vector.shape_cast %155 : vector<1x1x32xf32> to vector<1x32xf32>
    %157 = vector.broadcast %156 : vector<1x32xf32> to vector<16x32xf32>
    %158 = arith.addf %154, %157 : vector<16x32xf32>
    %159 = vector.shape_cast %158 : vector<16x32xf32> to vector<2x8x32xf32>
    %160 = vector.shape_cast %36 : vector<2x32xf32> to vector<2x1x32xf32>
    %161 = vector.broadcast %160 : vector<2x1x32xf32> to vector<2x8x32xf32>
    %162 = arith.mulf %161, %159 : vector<2x8x32xf32>
    %163 = arith.addf %0, %162 : vector<2x8x32xf32>
    %164 = vector.extract_strided_slice %33 {offsets = [0, 32], sizes = [2, 32], strides = [1, 1]} : vector<2x384xf32> to vector<2x32xf32>
    %165 = vector.extract_strided_slice %33 {offsets = [0, 160], sizes = [2, 32], strides = [1, 1]} : vector<2x384xf32> to vector<2x32xf32>
    %166 = vector.extract_strided_slice %33 {offsets = [0, 288], sizes = [2, 32], strides = [1, 1]} : vector<2x384xf32> to vector<2x32xf32>
    %c1 = arith.constant 1 : index
    %c0_61 = arith.constant 0 : index
    %c0_62 = arith.constant 0 : index
    %167 = vector.load %arg6[%c1, %c0_61, %c0_62] : memref<4x1x32xf32, #tpu.memory_space<vmem>>, vector<1x1x32xf32>
    %168 = vector.shape_cast %167 : vector<1x1x32xf32> to vector<1x32xf32>
    %c1_63 = arith.constant 1 : index
    %c0_64 = arith.constant 0 : index
    %c0_65 = arith.constant 0 : index
    %169 = vector.load %arg7[%c1_63, %c0_64, %c0_65] : memref<4x1x32xf32, #tpu.memory_space<vmem>>, vector<1x1x32xf32>
    %170 = vector.shape_cast %169 : vector<1x1x32xf32> to vector<1x32xf32>
    %cst_66 = arith.constant dense<0.000000e+00> : vector<2x8xf32>
    %171 = vector.multi_reduction <add>, %163, %cst_66 [2] : vector<2x8x32xf32> to vector<2x8xf32>
    %172 = vector.shape_cast %171 : vector<2x8xf32> to vector<2x8x1xf32>
    %cst_67 = arith.constant 3.200000e+01 : f32
    %173 = vector.broadcast %cst_67 : f32 to vector<2x8x1xf32>
    %174 = arith.divf %172, %173 : vector<2x8x1xf32>
    %175 = vector.broadcast %174 : vector<2x8x1xf32> to vector<2x8x32xf32>
    %176 = arith.subf %163, %175 : vector<2x8x32xf32>
    %177 = arith.mulf %176, %176 : vector<2x8x32xf32>
    %cst_68 = arith.constant dense<0.000000e+00> : vector<2x8xf32>
    %178 = vector.multi_reduction <add>, %177, %cst_68 [2] : vector<2x8x32xf32> to vector<2x8xf32>
    %179 = vector.shape_cast %178 : vector<2x8xf32> to vector<2x8x1xf32>
    %cst_69 = arith.constant 3.200000e+01 : f32
    %180 = vector.broadcast %cst_69 : f32 to vector<2x8x1xf32>
    %181 = arith.divf %179, %180 : vector<2x8x1xf32>
    %182 = vector.broadcast %174 : vector<2x8x1xf32> to vector<2x8x32xf32>
    %183 = arith.subf %163, %182 : vector<2x8x32xf32>
    %cst_70 = arith.constant 9.99999974E-6 : f32
    %184 = vector.broadcast %cst_70 : f32 to vector<2x8x1xf32>
    %185 = arith.addf %181, %184 : vector<2x8x1xf32>
    %186 = math.rsqrt %185 : vector<2x8x1xf32>
    %187 = vector.broadcast %186 : vector<2x8x1xf32> to vector<2x8x32xf32>
    %188 = arith.mulf %183, %187 : vector<2x8x32xf32>
    %189 = vector.shape_cast %168 : vector<1x32xf32> to vector<1x1x32xf32>
    %190 = vector.broadcast %189 : vector<1x1x32xf32> to vector<2x8x32xf32>
    %191 = arith.mulf %188, %190 : vector<2x8x32xf32>
    %192 = vector.shape_cast %170 : vector<1x32xf32> to vector<1x1x32xf32>
    %193 = vector.broadcast %192 : vector<1x1x32xf32> to vector<2x8x32xf32>
    %194 = arith.addf %191, %193 : vector<2x8x32xf32>
    %195 = vector.shape_cast %165 : vector<2x32xf32> to vector<2x1x32xf32>
    %cst_71 = arith.constant 1.000000e+00 : f32
    %196 = vector.broadcast %cst_71 : f32 to vector<2x1x32xf32>
    %197 = arith.addf %196, %195 : vector<2x1x32xf32>
    %198 = vector.broadcast %197 : vector<2x1x32xf32> to vector<2x8x32xf32>
    %199 = arith.mulf %194, %198 : vector<2x8x32xf32>
    %200 = vector.shape_cast %164 : vector<2x32xf32> to vector<2x1x32xf32>
    %201 = vector.broadcast %200 : vector<2x1x32xf32> to vector<2x8x32xf32>
    %202 = arith.addf %199, %201 : vector<2x8x32xf32>
    %c1_72 = arith.constant 1 : index
    %c0_73 = arith.constant 0 : index
    %c0_74 = arith.constant 0 : index
    %203 = vector.load %arg8[%c1_72, %c0_73, %c0_74] : memref<4x32x128xbf16, #tpu.memory_space<vmem>>, vector<1x32x128xbf16>
    %204 = vector.shape_cast %203 : vector<1x32x128xbf16> to vector<32x128xbf16>
    %c1_75 = arith.constant 1 : index
    %c0_76 = arith.constant 0 : index
    %c0_77 = arith.constant 0 : index
    %205 = vector.load %arg9[%c1_75, %c0_76, %c0_77] : memref<4x1x128xf32, #tpu.memory_space<vmem>>, vector<1x1x128xf32>
    %206 = vector.shape_cast %205 : vector<1x1x128xf32> to vector<1x128xf32>
    %207 = vector.shape_cast %202 : vector<2x8x32xf32> to vector<16x32xf32>
    %208 = arith.truncf %207 : vector<16x32xf32> to vector<16x32xbf16>
    %cst_78 = arith.constant dense<0.000000e+00> : vector<16x128xf32>
    %209 = tpu.matmul %208, %204, %cst_78 {dimension_numbers = #tpu.dot_dimension_numbers<[1], [0], [0], [1], [0, 0, 1, 1], [], []>} : vector<16x32xbf16>, vector<32x128xbf16>, vector<16x128xf32> -> vector<16x128xf32>
    %210 = vector.broadcast %206 : vector<1x128xf32> to vector<16x128xf32>
    %211 = arith.addf %209, %210 : vector<16x128xf32>
    %212 = vector.extract_strided_slice %211 {offsets = [0, 0], sizes = [16, 8], strides = [1, 1]} : vector<16x128xf32> to vector<16x8xf32>
    %213 = vector.shape_cast %212 : vector<16x8xf32> to vector<2x8x8xf32>
    %214 = vector.extract_strided_slice %211 {offsets = [0, 32], sizes = [16, 8], strides = [1, 1]} : vector<16x128xf32> to vector<16x8xf32>
    %215 = vector.shape_cast %214 : vector<16x8xf32> to vector<2x8x8xf32>
    %216 = vector.extract_strided_slice %211 {offsets = [0, 64], sizes = [16, 8], strides = [1, 1]} : vector<16x128xf32> to vector<16x8xf32>
    %217 = vector.shape_cast %216 : vector<16x8xf32> to vector<2x8x8xf32>
    %cst_79 = arith.constant dense<0.000000e+00> : vector<2x8x8xf32>
    %218 = tpu.matmul %213, %215, %cst_79 {dimension_numbers = #tpu.dot_dimension_numbers<[2], [2], [1], [1], [0, 0, 0, 1, 1, 1], [0], [0]>} : vector<2x8x8xf32>, vector<2x8x8xf32>, vector<2x8x8xf32> -> vector<2x8x8xf32>
    %cst_80 = arith.constant 0.353553385 : f32
    %219 = vector.broadcast %cst_80 : f32 to vector<2x8x8xf32>
    %220 = arith.mulf %218, %219 : vector<2x8x8xf32>
    %cst_81 = arith.constant dense<0xFF800000> : vector<2x8xf32>
    %221 = vector.multi_reduction <maximumf>, %220, %cst_81 [2] : vector<2x8x8xf32> to vector<2x8xf32>
    %222 = vector.shape_cast %221 : vector<2x8xf32> to vector<2x8x1xf32>
    %223 = vector.broadcast %222 : vector<2x8x1xf32> to vector<2x8x8xf32>
    %224 = arith.subf %220, %223 : vector<2x8x8xf32>
    %225 = math.exp %224 : vector<2x8x8xf32>
    %cst_82 = arith.constant dense<0.000000e+00> : vector<2x8xf32>
    %226 = vector.multi_reduction <add>, %225, %cst_82 [2] : vector<2x8x8xf32> to vector<2x8xf32>
    %227 = vector.shape_cast %226 : vector<2x8xf32> to vector<2x8x1xf32>
    %228 = tpu.reciprocal %227 {approx = true} : vector<2x8x1xf32> -> vector<2x8x1xf32>
    %229 = vector.broadcast %228 : vector<2x8x1xf32> to vector<2x8x8xf32>
    %230 = arith.mulf %225, %229 : vector<2x8x8xf32>
    %cst_83 = arith.constant dense<0.000000e+00> : vector<2x8x8xf32>
    %231 = tpu.matmul %230, %217, %cst_83 {dimension_numbers = #tpu.dot_dimension_numbers<[2], [1], [1], [2], [0, 0, 0, 1, 1, 2], [0], [0]>} : vector<2x8x8xf32>, vector<2x8x8xf32>, vector<2x8x8xf32> -> vector<2x8x8xf32>
    %232 = vector.extract_strided_slice %211 {offsets = [0, 8], sizes = [16, 8], strides = [1, 1]} : vector<16x128xf32> to vector<16x8xf32>
    %233 = vector.shape_cast %232 : vector<16x8xf32> to vector<2x8x8xf32>
    %234 = vector.extract_strided_slice %211 {offsets = [0, 40], sizes = [16, 8], strides = [1, 1]} : vector<16x128xf32> to vector<16x8xf32>
    %235 = vector.shape_cast %234 : vector<16x8xf32> to vector<2x8x8xf32>
    %236 = vector.extract_strided_slice %211 {offsets = [0, 72], sizes = [16, 8], strides = [1, 1]} : vector<16x128xf32> to vector<16x8xf32>
    %237 = vector.shape_cast %236 : vector<16x8xf32> to vector<2x8x8xf32>
    %cst_84 = arith.constant dense<0.000000e+00> : vector<2x8x8xf32>
    %238 = tpu.matmul %233, %235, %cst_84 {dimension_numbers = #tpu.dot_dimension_numbers<[2], [2], [1], [1], [0, 0, 0, 1, 1, 1], [0], [0]>} : vector<2x8x8xf32>, vector<2x8x8xf32>, vector<2x8x8xf32> -> vector<2x8x8xf32>
    %cst_85 = arith.constant 0.353553385 : f32
    %239 = vector.broadcast %cst_85 : f32 to vector<2x8x8xf32>
    %240 = arith.mulf %238, %239 : vector<2x8x8xf32>
    %cst_86 = arith.constant dense<0xFF800000> : vector<2x8xf32>
    %241 = vector.multi_reduction <maximumf>, %240, %cst_86 [2] : vector<2x8x8xf32> to vector<2x8xf32>
    %242 = vector.shape_cast %241 : vector<2x8xf32> to vector<2x8x1xf32>
    %243 = vector.broadcast %242 : vector<2x8x1xf32> to vector<2x8x8xf32>
    %244 = arith.subf %240, %243 : vector<2x8x8xf32>
    %245 = math.exp %244 : vector<2x8x8xf32>
    %cst_87 = arith.constant dense<0.000000e+00> : vector<2x8xf32>
    %246 = vector.multi_reduction <add>, %245, %cst_87 [2] : vector<2x8x8xf32> to vector<2x8xf32>
    %247 = vector.shape_cast %246 : vector<2x8xf32> to vector<2x8x1xf32>
    %248 = tpu.reciprocal %247 {approx = true} : vector<2x8x1xf32> -> vector<2x8x1xf32>
    %249 = vector.broadcast %248 : vector<2x8x1xf32> to vector<2x8x8xf32>
    %250 = arith.mulf %245, %249 : vector<2x8x8xf32>
    %cst_88 = arith.constant dense<0.000000e+00> : vector<2x8x8xf32>
    %251 = tpu.matmul %250, %237, %cst_88 {dimension_numbers = #tpu.dot_dimension_numbers<[2], [1], [1], [2], [0, 0, 0, 1, 1, 2], [0], [0]>} : vector<2x8x8xf32>, vector<2x8x8xf32>, vector<2x8x8xf32> -> vector<2x8x8xf32>
    %252 = vector.extract_strided_slice %211 {offsets = [0, 16], sizes = [16, 8], strides = [1, 1]} : vector<16x128xf32> to vector<16x8xf32>
    %253 = vector.shape_cast %252 : vector<16x8xf32> to vector<2x8x8xf32>
    %254 = vector.extract_strided_slice %211 {offsets = [0, 48], sizes = [16, 8], strides = [1, 1]} : vector<16x128xf32> to vector<16x8xf32>
    %255 = vector.shape_cast %254 : vector<16x8xf32> to vector<2x8x8xf32>
    %256 = vector.extract_strided_slice %211 {offsets = [0, 80], sizes = [16, 8], strides = [1, 1]} : vector<16x128xf32> to vector<16x8xf32>
    %257 = vector.shape_cast %256 : vector<16x8xf32> to vector<2x8x8xf32>
    %cst_89 = arith.constant dense<0.000000e+00> : vector<2x8x8xf32>
    %258 = tpu.matmul %253, %255, %cst_89 {dimension_numbers = #tpu.dot_dimension_numbers<[2], [2], [1], [1], [0, 0, 0, 1, 1, 1], [0], [0]>} : vector<2x8x8xf32>, vector<2x8x8xf32>, vector<2x8x8xf32> -> vector<2x8x8xf32>
    %cst_90 = arith.constant 0.353553385 : f32
    %259 = vector.broadcast %cst_90 : f32 to vector<2x8x8xf32>
    %260 = arith.mulf %258, %259 : vector<2x8x8xf32>
    %cst_91 = arith.constant dense<0xFF800000> : vector<2x8xf32>
    %261 = vector.multi_reduction <maximumf>, %260, %cst_91 [2] : vector<2x8x8xf32> to vector<2x8xf32>
    %262 = vector.shape_cast %261 : vector<2x8xf32> to vector<2x8x1xf32>
    %263 = vector.broadcast %262 : vector<2x8x1xf32> to vector<2x8x8xf32>
    %264 = arith.subf %260, %263 : vector<2x8x8xf32>
    %265 = math.exp %264 : vector<2x8x8xf32>
    %cst_92 = arith.constant dense<0.000000e+00> : vector<2x8xf32>
    %266 = vector.multi_reduction <add>, %265, %cst_92 [2] : vector<2x8x8xf32> to vector<2x8xf32>
    %267 = vector.shape_cast %266 : vector<2x8xf32> to vector<2x8x1xf32>
    %268 = tpu.reciprocal %267 {approx = true} : vector<2x8x1xf32> -> vector<2x8x1xf32>
    %269 = vector.broadcast %268 : vector<2x8x1xf32> to vector<2x8x8xf32>
    %270 = arith.mulf %265, %269 : vector<2x8x8xf32>
    %cst_93 = arith.constant dense<0.000000e+00> : vector<2x8x8xf32>
    %271 = tpu.matmul %270, %257, %cst_93 {dimension_numbers = #tpu.dot_dimension_numbers<[2], [1], [1], [2], [0, 0, 0, 1, 1, 2], [0], [0]>} : vector<2x8x8xf32>, vector<2x8x8xf32>, vector<2x8x8xf32> -> vector<2x8x8xf32>
    %272 = vector.extract_strided_slice %211 {offsets = [0, 24], sizes = [16, 8], strides = [1, 1]} : vector<16x128xf32> to vector<16x8xf32>
    %273 = vector.shape_cast %272 : vector<16x8xf32> to vector<2x8x8xf32>
    %274 = vector.extract_strided_slice %211 {offsets = [0, 56], sizes = [16, 8], strides = [1, 1]} : vector<16x128xf32> to vector<16x8xf32>
    %275 = vector.shape_cast %274 : vector<16x8xf32> to vector<2x8x8xf32>
    %276 = vector.extract_strided_slice %211 {offsets = [0, 88], sizes = [16, 8], strides = [1, 1]} : vector<16x128xf32> to vector<16x8xf32>
    %277 = vector.shape_cast %276 : vector<16x8xf32> to vector<2x8x8xf32>
    %cst_94 = arith.constant dense<0.000000e+00> : vector<2x8x8xf32>
    %278 = tpu.matmul %273, %275, %cst_94 {dimension_numbers = #tpu.dot_dimension_numbers<[2], [2], [1], [1], [0, 0, 0, 1, 1, 1], [0], [0]>} : vector<2x8x8xf32>, vector<2x8x8xf32>, vector<2x8x8xf32> -> vector<2x8x8xf32>
    %cst_95 = arith.constant 0.353553385 : f32
    %279 = vector.broadcast %cst_95 : f32 to vector<2x8x8xf32>
    %280 = arith.mulf %278, %279 : vector<2x8x8xf32>
    %cst_96 = arith.constant dense<0xFF800000> : vector<2x8xf32>
    %281 = vector.multi_reduction <maximumf>, %280, %cst_96 [2] : vector<2x8x8xf32> to vector<2x8xf32>
    %282 = vector.shape_cast %281 : vector<2x8xf32> to vector<2x8x1xf32>
    %283 = vector.broadcast %282 : vector<2x8x1xf32> to vector<2x8x8xf32>
    %284 = arith.subf %280, %283 : vector<2x8x8xf32>
    %285 = math.exp %284 : vector<2x8x8xf32>
    %cst_97 = arith.constant dense<0.000000e+00> : vector<2x8xf32>
    %286 = vector.multi_reduction <add>, %285, %cst_97 [2] : vector<2x8x8xf32> to vector<2x8xf32>
    %287 = vector.shape_cast %286 : vector<2x8xf32> to vector<2x8x1xf32>
    %288 = tpu.reciprocal %287 {approx = true} : vector<2x8x1xf32> -> vector<2x8x1xf32>
    %289 = vector.broadcast %288 : vector<2x8x1xf32> to vector<2x8x8xf32>
    %290 = arith.mulf %285, %289 : vector<2x8x8xf32>
    %cst_98 = arith.constant dense<0.000000e+00> : vector<2x8x8xf32>
    %291 = tpu.matmul %290, %277, %cst_98 {dimension_numbers = #tpu.dot_dimension_numbers<[2], [1], [1], [2], [0, 0, 0, 1, 1, 2], [0], [0]>} : vector<2x8x8xf32>, vector<2x8x8xf32>, vector<2x8x8xf32> -> vector<2x8x8xf32>
    %292 = tpu.concatenate %231, %251, %271, %291 in 2 : vector<2x8x8xf32>, vector<2x8x8xf32>, vector<2x8x8xf32>, vector<2x8x8xf32> -> vector<2x8x32xf32>
    %293 = vector.shape_cast %292 : vector<2x8x32xf32> to vector<16x32xf32>
    %294 = arith.truncf %293 : vector<16x32xf32> to vector<16x32xbf16>
    %c1_99 = arith.constant 1 : index
    %c0_100 = arith.constant 0 : index
    %c0_101 = arith.constant 0 : index
    %295 = vector.load %arg10[%c1_99, %c0_100, %c0_101] : memref<4x32x32xbf16, #tpu.memory_space<vmem>>, vector<1x32x32xbf16>
    %296 = vector.shape_cast %295 : vector<1x32x32xbf16> to vector<32x32xbf16>
    %cst_102 = arith.constant dense<0.000000e+00> : vector<16x32xf32>
    %297 = tpu.matmul %294, %296, %cst_102 {dimension_numbers = #tpu.dot_dimension_numbers<[1], [0], [0], [1], [0, 0, 1, 1], [], []>} : vector<16x32xbf16>, vector<32x32xbf16>, vector<16x32xf32> -> vector<16x32xf32>
    %c1_103 = arith.constant 1 : index
    %c0_104 = arith.constant 0 : index
    %c0_105 = arith.constant 0 : index
    %298 = vector.load %arg11[%c1_103, %c0_104, %c0_105] : memref<4x1x32xf32, #tpu.memory_space<vmem>>, vector<1x1x32xf32>
    %299 = vector.shape_cast %298 : vector<1x1x32xf32> to vector<1x32xf32>
    %300 = vector.broadcast %299 : vector<1x32xf32> to vector<16x32xf32>
    %301 = arith.addf %297, %300 : vector<16x32xf32>
    %302 = vector.shape_cast %301 : vector<16x32xf32> to vector<2x8x32xf32>
    %303 = vector.shape_cast %166 : vector<2x32xf32> to vector<2x1x32xf32>
    %304 = vector.broadcast %303 : vector<2x1x32xf32> to vector<2x8x32xf32>
    %305 = arith.mulf %304, %302 : vector<2x8x32xf32>
    %306 = arith.addf %163, %305 : vector<2x8x32xf32>
    %307 = vector.extract_strided_slice %33 {offsets = [0, 64], sizes = [2, 32], strides = [1, 1]} : vector<2x384xf32> to vector<2x32xf32>
    %308 = vector.extract_strided_slice %33 {offsets = [0, 192], sizes = [2, 32], strides = [1, 1]} : vector<2x384xf32> to vector<2x32xf32>
    %309 = vector.extract_strided_slice %33 {offsets = [0, 320], sizes = [2, 32], strides = [1, 1]} : vector<2x384xf32> to vector<2x32xf32>
    %c2 = arith.constant 2 : index
    %c0_106 = arith.constant 0 : index
    %c0_107 = arith.constant 0 : index
    %310 = vector.load %arg6[%c2, %c0_106, %c0_107] : memref<4x1x32xf32, #tpu.memory_space<vmem>>, vector<1x1x32xf32>
    %311 = vector.shape_cast %310 : vector<1x1x32xf32> to vector<1x32xf32>
    %c2_108 = arith.constant 2 : index
    %c0_109 = arith.constant 0 : index
    %c0_110 = arith.constant 0 : index
    %312 = vector.load %arg7[%c2_108, %c0_109, %c0_110] : memref<4x1x32xf32, #tpu.memory_space<vmem>>, vector<1x1x32xf32>
    %313 = vector.shape_cast %312 : vector<1x1x32xf32> to vector<1x32xf32>
    %314 = vector.shape_cast %311 : vector<1x32xf32> to vector<1x1x32xf32>
    %315 = vector.broadcast %314 : vector<1x1x32xf32> to vector<2x16x32xf32>
    %316 = arith.mulf %19, %315 : vector<2x16x32xf32>
    %317 = vector.shape_cast %313 : vector<1x32xf32> to vector<1x1x32xf32>
    %318 = vector.broadcast %317 : vector<1x1x32xf32> to vector<2x16x32xf32>
    %319 = arith.addf %316, %318 : vector<2x16x32xf32>
    %320 = vector.shape_cast %308 : vector<2x32xf32> to vector<2x1x32xf32>
    %cst_111 = arith.constant 1.000000e+00 : f32
    %321 = vector.broadcast %cst_111 : f32 to vector<2x1x32xf32>
    %322 = arith.addf %321, %320 : vector<2x1x32xf32>
    %323 = vector.broadcast %322 : vector<2x1x32xf32> to vector<2x16x32xf32>
    %324 = arith.mulf %319, %323 : vector<2x16x32xf32>
    %325 = vector.shape_cast %307 : vector<2x32xf32> to vector<2x1x32xf32>
    %326 = vector.broadcast %325 : vector<2x1x32xf32> to vector<2x16x32xf32>
    %327 = arith.addf %324, %326 : vector<2x16x32xf32>
    %c2_112 = arith.constant 2 : index
    %c0_113 = arith.constant 0 : index
    %c0_114 = arith.constant 0 : index
    %328 = vector.load %arg8[%c2_112, %c0_113, %c0_114] : memref<4x32x128xbf16, #tpu.memory_space<vmem>>, vector<1x32x128xbf16>
    %329 = vector.shape_cast %328 : vector<1x32x128xbf16> to vector<32x128xbf16>
    %c2_115 = arith.constant 2 : index
    %c0_116 = arith.constant 0 : index
    %c0_117 = arith.constant 0 : index
    %330 = vector.load %arg9[%c2_115, %c0_116, %c0_117] : memref<4x1x128xf32, #tpu.memory_space<vmem>>, vector<1x1x128xf32>
    %331 = vector.shape_cast %330 : vector<1x1x128xf32> to vector<1x128xf32>
    %332 = vector.shape_cast %327 : vector<2x16x32xf32> to vector<32x32xf32>
    %333 = arith.truncf %332 : vector<32x32xf32> to vector<32x32xbf16>
    %cst_118 = arith.constant dense<0.000000e+00> : vector<32x128xf32>
    %334 = tpu.matmul %333, %329, %cst_118 {dimension_numbers = #tpu.dot_dimension_numbers<[1], [0], [0], [1], [0, 0, 1, 1], [], []>} : vector<32x32xbf16>, vector<32x128xbf16>, vector<32x128xf32> -> vector<32x128xf32>
    %335 = vector.broadcast %331 : vector<1x128xf32> to vector<32x128xf32>
    %336 = arith.addf %334, %335 : vector<32x128xf32>
    %337 = vector.shape_cast %306 : vector<2x8x32xf32> to vector<16x32xf32>
    %338 = arith.truncf %337 : vector<16x32xf32> to vector<16x32xbf16>
    %cst_119 = arith.constant dense<0.000000e+00> : vector<16x128xf32>
    %339 = tpu.matmul %338, %329, %cst_119 {dimension_numbers = #tpu.dot_dimension_numbers<[1], [0], [0], [1], [0, 0, 1, 1], [], []>} : vector<16x32xbf16>, vector<32x128xbf16>, vector<16x128xf32> -> vector<16x128xf32>
    %340 = vector.broadcast %331 : vector<1x128xf32> to vector<16x128xf32>
    %341 = arith.addf %339, %340 : vector<16x128xf32>
    %342 = vector.extract_strided_slice %341 {offsets = [0, 0], sizes = [16, 8], strides = [1, 1]} : vector<16x128xf32> to vector<16x8xf32>
    %343 = vector.shape_cast %342 : vector<16x8xf32> to vector<2x8x8xf32>
    %344 = vector.extract_strided_slice %336 {offsets = [0, 32], sizes = [32, 8], strides = [1, 1]} : vector<32x128xf32> to vector<32x8xf32>
    %345 = vector.shape_cast %344 : vector<32x8xf32> to vector<2x16x8xf32>
    %346 = vector.extract_strided_slice %336 {offsets = [0, 64], sizes = [32, 8], strides = [1, 1]} : vector<32x128xf32> to vector<32x8xf32>
    %347 = vector.shape_cast %346 : vector<32x8xf32> to vector<2x16x8xf32>
    %cst_120 = arith.constant dense<0.000000e+00> : vector<2x8x16xf32>
    %348 = tpu.matmul %343, %345, %cst_120 {dimension_numbers = #tpu.dot_dimension_numbers<[2], [2], [1], [1], [0, 0, 0, 1, 1, 1], [0], [0]>} : vector<2x8x8xf32>, vector<2x16x8xf32>, vector<2x8x16xf32> -> vector<2x8x16xf32>
    %cst_121 = arith.constant 0.353553385 : f32
    %349 = vector.broadcast %cst_121 : f32 to vector<2x8x16xf32>
    %350 = arith.mulf %348, %349 : vector<2x8x16xf32>
    %cst_122 = arith.constant dense<0xFF800000> : vector<2x8xf32>
    %351 = vector.multi_reduction <maximumf>, %350, %cst_122 [2] : vector<2x8x16xf32> to vector<2x8xf32>
    %352 = vector.shape_cast %351 : vector<2x8xf32> to vector<2x8x1xf32>
    %353 = vector.broadcast %352 : vector<2x8x1xf32> to vector<2x8x16xf32>
    %354 = arith.subf %350, %353 : vector<2x8x16xf32>
    %355 = math.exp %354 : vector<2x8x16xf32>
    %cst_123 = arith.constant dense<0.000000e+00> : vector<2x8xf32>
    %356 = vector.multi_reduction <add>, %355, %cst_123 [2] : vector<2x8x16xf32> to vector<2x8xf32>
    %357 = vector.shape_cast %356 : vector<2x8xf32> to vector<2x8x1xf32>
    %358 = tpu.reciprocal %357 {approx = true} : vector<2x8x1xf32> -> vector<2x8x1xf32>
    %359 = vector.broadcast %358 : vector<2x8x1xf32> to vector<2x8x16xf32>
    %360 = arith.mulf %355, %359 : vector<2x8x16xf32>
    %cst_124 = arith.constant dense<0.000000e+00> : vector<2x8x8xf32>
    %361 = tpu.matmul %360, %347, %cst_124 {dimension_numbers = #tpu.dot_dimension_numbers<[2], [1], [1], [2], [0, 0, 0, 1, 1, 2], [0], [0]>} : vector<2x8x16xf32>, vector<2x16x8xf32>, vector<2x8x8xf32> -> vector<2x8x8xf32>
    %362 = vector.extract_strided_slice %341 {offsets = [0, 8], sizes = [16, 8], strides = [1, 1]} : vector<16x128xf32> to vector<16x8xf32>
    %363 = vector.shape_cast %362 : vector<16x8xf32> to vector<2x8x8xf32>
    %364 = vector.extract_strided_slice %336 {offsets = [0, 40], sizes = [32, 8], strides = [1, 1]} : vector<32x128xf32> to vector<32x8xf32>
    %365 = vector.shape_cast %364 : vector<32x8xf32> to vector<2x16x8xf32>
    %366 = vector.extract_strided_slice %336 {offsets = [0, 72], sizes = [32, 8], strides = [1, 1]} : vector<32x128xf32> to vector<32x8xf32>
    %367 = vector.shape_cast %366 : vector<32x8xf32> to vector<2x16x8xf32>
    %cst_125 = arith.constant dense<0.000000e+00> : vector<2x8x16xf32>
    %368 = tpu.matmul %363, %365, %cst_125 {dimension_numbers = #tpu.dot_dimension_numbers<[2], [2], [1], [1], [0, 0, 0, 1, 1, 1], [0], [0]>} : vector<2x8x8xf32>, vector<2x16x8xf32>, vector<2x8x16xf32> -> vector<2x8x16xf32>
    %cst_126 = arith.constant 0.353553385 : f32
    %369 = vector.broadcast %cst_126 : f32 to vector<2x8x16xf32>
    %370 = arith.mulf %368, %369 : vector<2x8x16xf32>
    %cst_127 = arith.constant dense<0xFF800000> : vector<2x8xf32>
    %371 = vector.multi_reduction <maximumf>, %370, %cst_127 [2] : vector<2x8x16xf32> to vector<2x8xf32>
    %372 = vector.shape_cast %371 : vector<2x8xf32> to vector<2x8x1xf32>
    %373 = vector.broadcast %372 : vector<2x8x1xf32> to vector<2x8x16xf32>
    %374 = arith.subf %370, %373 : vector<2x8x16xf32>
    %375 = math.exp %374 : vector<2x8x16xf32>
    %cst_128 = arith.constant dense<0.000000e+00> : vector<2x8xf32>
    %376 = vector.multi_reduction <add>, %375, %cst_128 [2] : vector<2x8x16xf32> to vector<2x8xf32>
    %377 = vector.shape_cast %376 : vector<2x8xf32> to vector<2x8x1xf32>
    %378 = tpu.reciprocal %377 {approx = true} : vector<2x8x1xf32> -> vector<2x8x1xf32>
    %379 = vector.broadcast %378 : vector<2x8x1xf32> to vector<2x8x16xf32>
    %380 = arith.mulf %375, %379 : vector<2x8x16xf32>
    %cst_129 = arith.constant dense<0.000000e+00> : vector<2x8x8xf32>
    %381 = tpu.matmul %380, %367, %cst_129 {dimension_numbers = #tpu.dot_dimension_numbers<[2], [1], [1], [2], [0, 0, 0, 1, 1, 2], [0], [0]>} : vector<2x8x16xf32>, vector<2x16x8xf32>, vector<2x8x8xf32> -> vector<2x8x8xf32>
    %382 = vector.extract_strided_slice %341 {offsets = [0, 16], sizes = [16, 8], strides = [1, 1]} : vector<16x128xf32> to vector<16x8xf32>
    %383 = vector.shape_cast %382 : vector<16x8xf32> to vector<2x8x8xf32>
    %384 = vector.extract_strided_slice %336 {offsets = [0, 48], sizes = [32, 8], strides = [1, 1]} : vector<32x128xf32> to vector<32x8xf32>
    %385 = vector.shape_cast %384 : vector<32x8xf32> to vector<2x16x8xf32>
    %386 = vector.extract_strided_slice %336 {offsets = [0, 80], sizes = [32, 8], strides = [1, 1]} : vector<32x128xf32> to vector<32x8xf32>
    %387 = vector.shape_cast %386 : vector<32x8xf32> to vector<2x16x8xf32>
    %cst_130 = arith.constant dense<0.000000e+00> : vector<2x8x16xf32>
    %388 = tpu.matmul %383, %385, %cst_130 {dimension_numbers = #tpu.dot_dimension_numbers<[2], [2], [1], [1], [0, 0, 0, 1, 1, 1], [0], [0]>} : vector<2x8x8xf32>, vector<2x16x8xf32>, vector<2x8x16xf32> -> vector<2x8x16xf32>
    %cst_131 = arith.constant 0.353553385 : f32
    %389 = vector.broadcast %cst_131 : f32 to vector<2x8x16xf32>
    %390 = arith.mulf %388, %389 : vector<2x8x16xf32>
    %cst_132 = arith.constant dense<0xFF800000> : vector<2x8xf32>
    %391 = vector.multi_reduction <maximumf>, %390, %cst_132 [2] : vector<2x8x16xf32> to vector<2x8xf32>
    %392 = vector.shape_cast %391 : vector<2x8xf32> to vector<2x8x1xf32>
    %393 = vector.broadcast %392 : vector<2x8x1xf32> to vector<2x8x16xf32>
    %394 = arith.subf %390, %393 : vector<2x8x16xf32>
    %395 = math.exp %394 : vector<2x8x16xf32>
    %cst_133 = arith.constant dense<0.000000e+00> : vector<2x8xf32>
    %396 = vector.multi_reduction <add>, %395, %cst_133 [2] : vector<2x8x16xf32> to vector<2x8xf32>
    %397 = vector.shape_cast %396 : vector<2x8xf32> to vector<2x8x1xf32>
    %398 = tpu.reciprocal %397 {approx = true} : vector<2x8x1xf32> -> vector<2x8x1xf32>
    %399 = vector.broadcast %398 : vector<2x8x1xf32> to vector<2x8x16xf32>
    %400 = arith.mulf %395, %399 : vector<2x8x16xf32>
    %cst_134 = arith.constant dense<0.000000e+00> : vector<2x8x8xf32>
    %401 = tpu.matmul %400, %387, %cst_134 {dimension_numbers = #tpu.dot_dimension_numbers<[2], [1], [1], [2], [0, 0, 0, 1, 1, 2], [0], [0]>} : vector<2x8x16xf32>, vector<2x16x8xf32>, vector<2x8x8xf32> -> vector<2x8x8xf32>
    %402 = vector.extract_strided_slice %341 {offsets = [0, 24], sizes = [16, 8], strides = [1, 1]} : vector<16x128xf32> to vector<16x8xf32>
    %403 = vector.shape_cast %402 : vector<16x8xf32> to vector<2x8x8xf32>
    %404 = vector.extract_strided_slice %336 {offsets = [0, 56], sizes = [32, 8], strides = [1, 1]} : vector<32x128xf32> to vector<32x8xf32>
    %405 = vector.shape_cast %404 : vector<32x8xf32> to vector<2x16x8xf32>
    %406 = vector.extract_strided_slice %336 {offsets = [0, 88], sizes = [32, 8], strides = [1, 1]} : vector<32x128xf32> to vector<32x8xf32>
    %407 = vector.shape_cast %406 : vector<32x8xf32> to vector<2x16x8xf32>
    %cst_135 = arith.constant dense<0.000000e+00> : vector<2x8x16xf32>
    %408 = tpu.matmul %403, %405, %cst_135 {dimension_numbers = #tpu.dot_dimension_numbers<[2], [2], [1], [1], [0, 0, 0, 1, 1, 1], [0], [0]>} : vector<2x8x8xf32>, vector<2x16x8xf32>, vector<2x8x16xf32> -> vector<2x8x16xf32>
    %cst_136 = arith.constant 0.353553385 : f32
    %409 = vector.broadcast %cst_136 : f32 to vector<2x8x16xf32>
    %410 = arith.mulf %408, %409 : vector<2x8x16xf32>
    %cst_137 = arith.constant dense<0xFF800000> : vector<2x8xf32>
    %411 = vector.multi_reduction <maximumf>, %410, %cst_137 [2] : vector<2x8x16xf32> to vector<2x8xf32>
    %412 = vector.shape_cast %411 : vector<2x8xf32> to vector<2x8x1xf32>
    %413 = vector.broadcast %412 : vector<2x8x1xf32> to vector<2x8x16xf32>
    %414 = arith.subf %410, %413 : vector<2x8x16xf32>
    %415 = math.exp %414 : vector<2x8x16xf32>
    %cst_138 = arith.constant dense<0.000000e+00> : vector<2x8xf32>
    %416 = vector.multi_reduction <add>, %415, %cst_138 [2] : vector<2x8x16xf32> to vector<2x8xf32>
    %417 = vector.shape_cast %416 : vector<2x8xf32> to vector<2x8x1xf32>
    %418 = tpu.reciprocal %417 {approx = true} : vector<2x8x1xf32> -> vector<2x8x1xf32>
    %419 = vector.broadcast %418 : vector<2x8x1xf32> to vector<2x8x16xf32>
    %420 = arith.mulf %415, %419 : vector<2x8x16xf32>
    %cst_139 = arith.constant dense<0.000000e+00> : vector<2x8x8xf32>
    %421 = tpu.matmul %420, %407, %cst_139 {dimension_numbers = #tpu.dot_dimension_numbers<[2], [1], [1], [2], [0, 0, 0, 1, 1, 2], [0], [0]>} : vector<2x8x16xf32>, vector<2x16x8xf32>, vector<2x8x8xf32> -> vector<2x8x8xf32>
    %422 = tpu.concatenate %361, %381, %401, %421 in 2 : vector<2x8x8xf32>, vector<2x8x8xf32>, vector<2x8x8xf32>, vector<2x8x8xf32> -> vector<2x8x32xf32>
    %423 = vector.shape_cast %422 : vector<2x8x32xf32> to vector<16x32xf32>
    %424 = arith.truncf %423 : vector<16x32xf32> to vector<16x32xbf16>
    %c2_140 = arith.constant 2 : index
    %c0_141 = arith.constant 0 : index
    %c0_142 = arith.constant 0 : index
    %425 = vector.load %arg10[%c2_140, %c0_141, %c0_142] : memref<4x32x32xbf16, #tpu.memory_space<vmem>>, vector<1x32x32xbf16>
    %426 = vector.shape_cast %425 : vector<1x32x32xbf16> to vector<32x32xbf16>
    %cst_143 = arith.constant dense<0.000000e+00> : vector<16x32xf32>
    %427 = tpu.matmul %424, %426, %cst_143 {dimension_numbers = #tpu.dot_dimension_numbers<[1], [0], [0], [1], [0, 0, 1, 1], [], []>} : vector<16x32xbf16>, vector<32x32xbf16>, vector<16x32xf32> -> vector<16x32xf32>
    %c2_144 = arith.constant 2 : index
    %c0_145 = arith.constant 0 : index
    %c0_146 = arith.constant 0 : index
    %428 = vector.load %arg11[%c2_144, %c0_145, %c0_146] : memref<4x1x32xf32, #tpu.memory_space<vmem>>, vector<1x1x32xf32>
    %429 = vector.shape_cast %428 : vector<1x1x32xf32> to vector<1x32xf32>
    %430 = vector.broadcast %429 : vector<1x32xf32> to vector<16x32xf32>
    %431 = arith.addf %427, %430 : vector<16x32xf32>
    %432 = vector.shape_cast %431 : vector<16x32xf32> to vector<2x8x32xf32>
    %433 = vector.shape_cast %309 : vector<2x32xf32> to vector<2x1x32xf32>
    %434 = vector.broadcast %433 : vector<2x1x32xf32> to vector<2x8x32xf32>
    %435 = arith.mulf %434, %432 : vector<2x8x32xf32>
    %436 = arith.addf %306, %435 : vector<2x8x32xf32>
    %437 = vector.extract_strided_slice %33 {offsets = [0, 96], sizes = [2, 32], strides = [1, 1]} : vector<2x384xf32> to vector<2x32xf32>
    %438 = vector.extract_strided_slice %33 {offsets = [0, 224], sizes = [2, 32], strides = [1, 1]} : vector<2x384xf32> to vector<2x32xf32>
    %439 = vector.extract_strided_slice %33 {offsets = [0, 352], sizes = [2, 32], strides = [1, 1]} : vector<2x384xf32> to vector<2x32xf32>
    %c3 = arith.constant 3 : index
    %c0_147 = arith.constant 0 : index
    %c0_148 = arith.constant 0 : index
    %440 = vector.load %arg6[%c3, %c0_147, %c0_148] : memref<4x1x32xf32, #tpu.memory_space<vmem>>, vector<1x1x32xf32>
    %441 = vector.shape_cast %440 : vector<1x1x32xf32> to vector<1x32xf32>
    %c3_149 = arith.constant 3 : index
    %c0_150 = arith.constant 0 : index
    %c0_151 = arith.constant 0 : index
    %442 = vector.load %arg7[%c3_149, %c0_150, %c0_151] : memref<4x1x32xf32, #tpu.memory_space<vmem>>, vector<1x1x32xf32>
    %443 = vector.shape_cast %442 : vector<1x1x32xf32> to vector<1x32xf32>
    %cst_152 = arith.constant dense<0.000000e+00> : vector<2x8xf32>
    %444 = vector.multi_reduction <add>, %436, %cst_152 [2] : vector<2x8x32xf32> to vector<2x8xf32>
    %445 = vector.shape_cast %444 : vector<2x8xf32> to vector<2x8x1xf32>
    %cst_153 = arith.constant 3.200000e+01 : f32
    %446 = vector.broadcast %cst_153 : f32 to vector<2x8x1xf32>
    %447 = arith.divf %445, %446 : vector<2x8x1xf32>
    %448 = vector.broadcast %447 : vector<2x8x1xf32> to vector<2x8x32xf32>
    %449 = arith.subf %436, %448 : vector<2x8x32xf32>
    %450 = arith.mulf %449, %449 : vector<2x8x32xf32>
    %cst_154 = arith.constant dense<0.000000e+00> : vector<2x8xf32>
    %451 = vector.multi_reduction <add>, %450, %cst_154 [2] : vector<2x8x32xf32> to vector<2x8xf32>
    %452 = vector.shape_cast %451 : vector<2x8xf32> to vector<2x8x1xf32>
    %cst_155 = arith.constant 3.200000e+01 : f32
    %453 = vector.broadcast %cst_155 : f32 to vector<2x8x1xf32>
    %454 = arith.divf %452, %453 : vector<2x8x1xf32>
    %455 = vector.broadcast %447 : vector<2x8x1xf32> to vector<2x8x32xf32>
    %456 = arith.subf %436, %455 : vector<2x8x32xf32>
    %cst_156 = arith.constant 9.99999974E-6 : f32
    %457 = vector.broadcast %cst_156 : f32 to vector<2x8x1xf32>
    %458 = arith.addf %454, %457 : vector<2x8x1xf32>
    %459 = math.rsqrt %458 : vector<2x8x1xf32>
    %460 = vector.broadcast %459 : vector<2x8x1xf32> to vector<2x8x32xf32>
    %461 = arith.mulf %456, %460 : vector<2x8x32xf32>
    %462 = vector.shape_cast %441 : vector<1x32xf32> to vector<1x1x32xf32>
    %463 = vector.broadcast %462 : vector<1x1x32xf32> to vector<2x8x32xf32>
    %464 = arith.mulf %461, %463 : vector<2x8x32xf32>
    %465 = vector.shape_cast %443 : vector<1x32xf32> to vector<1x1x32xf32>
    %466 = vector.broadcast %465 : vector<1x1x32xf32> to vector<2x8x32xf32>
    %467 = arith.addf %464, %466 : vector<2x8x32xf32>
    %468 = vector.shape_cast %438 : vector<2x32xf32> to vector<2x1x32xf32>
    %cst_157 = arith.constant 1.000000e+00 : f32
    %469 = vector.broadcast %cst_157 : f32 to vector<2x1x32xf32>
    %470 = arith.addf %469, %468 : vector<2x1x32xf32>
    %471 = vector.broadcast %470 : vector<2x1x32xf32> to vector<2x8x32xf32>
    %472 = arith.mulf %467, %471 : vector<2x8x32xf32>
    %473 = vector.shape_cast %437 : vector<2x32xf32> to vector<2x1x32xf32>
    %474 = vector.broadcast %473 : vector<2x1x32xf32> to vector<2x8x32xf32>
    %475 = arith.addf %472, %474 : vector<2x8x32xf32>
    %c3_158 = arith.constant 3 : index
    %c0_159 = arith.constant 0 : index
    %c0_160 = arith.constant 0 : index
    %476 = vector.load %arg8[%c3_158, %c0_159, %c0_160] : memref<4x32x128xbf16, #tpu.memory_space<vmem>>, vector<1x32x128xbf16>
    %477 = vector.shape_cast %476 : vector<1x32x128xbf16> to vector<32x128xbf16>
    %c3_161 = arith.constant 3 : index
    %c0_162 = arith.constant 0 : index
    %c0_163 = arith.constant 0 : index
    %478 = vector.load %arg9[%c3_161, %c0_162, %c0_163] : memref<4x1x128xf32, #tpu.memory_space<vmem>>, vector<1x1x128xf32>
    %479 = vector.shape_cast %478 : vector<1x1x128xf32> to vector<1x128xf32>
    %480 = vector.shape_cast %475 : vector<2x8x32xf32> to vector<16x32xf32>
    %481 = arith.truncf %480 : vector<16x32xf32> to vector<16x32xbf16>
    %cst_164 = arith.constant dense<0.000000e+00> : vector<16x128xf32>
    %482 = tpu.matmul %481, %477, %cst_164 {dimension_numbers = #tpu.dot_dimension_numbers<[1], [0], [0], [1], [0, 0, 1, 1], [], []>} : vector<16x32xbf16>, vector<32x128xbf16>, vector<16x128xf32> -> vector<16x128xf32>
    %483 = vector.broadcast %479 : vector<1x128xf32> to vector<16x128xf32>
    %484 = arith.addf %482, %483 : vector<16x128xf32>
    %485 = vector.extract_strided_slice %484 {offsets = [0, 0], sizes = [16, 8], strides = [1, 1]} : vector<16x128xf32> to vector<16x8xf32>
    %486 = vector.shape_cast %485 : vector<16x8xf32> to vector<2x8x8xf32>
    %487 = vector.extract_strided_slice %484 {offsets = [0, 32], sizes = [16, 8], strides = [1, 1]} : vector<16x128xf32> to vector<16x8xf32>
    %488 = vector.shape_cast %487 : vector<16x8xf32> to vector<2x8x8xf32>
    %489 = vector.extract_strided_slice %484 {offsets = [0, 64], sizes = [16, 8], strides = [1, 1]} : vector<16x128xf32> to vector<16x8xf32>
    %490 = vector.shape_cast %489 : vector<16x8xf32> to vector<2x8x8xf32>
    %cst_165 = arith.constant dense<0.000000e+00> : vector<2x8x8xf32>
    %491 = tpu.matmul %486, %488, %cst_165 {dimension_numbers = #tpu.dot_dimension_numbers<[2], [2], [1], [1], [0, 0, 0, 1, 1, 1], [0], [0]>} : vector<2x8x8xf32>, vector<2x8x8xf32>, vector<2x8x8xf32> -> vector<2x8x8xf32>
    %cst_166 = arith.constant 0.353553385 : f32
    %492 = vector.broadcast %cst_166 : f32 to vector<2x8x8xf32>
    %493 = arith.mulf %491, %492 : vector<2x8x8xf32>
    %cst_167 = arith.constant dense<0xFF800000> : vector<2x8xf32>
    %494 = vector.multi_reduction <maximumf>, %493, %cst_167 [2] : vector<2x8x8xf32> to vector<2x8xf32>
    %495 = vector.shape_cast %494 : vector<2x8xf32> to vector<2x8x1xf32>
    %496 = vector.broadcast %495 : vector<2x8x1xf32> to vector<2x8x8xf32>
    %497 = arith.subf %493, %496 : vector<2x8x8xf32>
    %498 = math.exp %497 : vector<2x8x8xf32>
    %cst_168 = arith.constant dense<0.000000e+00> : vector<2x8xf32>
    %499 = vector.multi_reduction <add>, %498, %cst_168 [2] : vector<2x8x8xf32> to vector<2x8xf32>
    %500 = vector.shape_cast %499 : vector<2x8xf32> to vector<2x8x1xf32>
    %501 = tpu.reciprocal %500 {approx = true} : vector<2x8x1xf32> -> vector<2x8x1xf32>
    %502 = vector.broadcast %501 : vector<2x8x1xf32> to vector<2x8x8xf32>
    %503 = arith.mulf %498, %502 : vector<2x8x8xf32>
    %cst_169 = arith.constant dense<0.000000e+00> : vector<2x8x8xf32>
    %504 = tpu.matmul %503, %490, %cst_169 {dimension_numbers = #tpu.dot_dimension_numbers<[2], [1], [1], [2], [0, 0, 0, 1, 1, 2], [0], [0]>} : vector<2x8x8xf32>, vector<2x8x8xf32>, vector<2x8x8xf32> -> vector<2x8x8xf32>
    %505 = vector.extract_strided_slice %484 {offsets = [0, 8], sizes = [16, 8], strides = [1, 1]} : vector<16x128xf32> to vector<16x8xf32>
    %506 = vector.shape_cast %505 : vector<16x8xf32> to vector<2x8x8xf32>
    %507 = vector.extract_strided_slice %484 {offsets = [0, 40], sizes = [16, 8], strides = [1, 1]} : vector<16x128xf32> to vector<16x8xf32>
    %508 = vector.shape_cast %507 : vector<16x8xf32> to vector<2x8x8xf32>
    %509 = vector.extract_strided_slice %484 {offsets = [0, 72], sizes = [16, 8], strides = [1, 1]} : vector<16x128xf32> to vector<16x8xf32>
    %510 = vector.shape_cast %509 : vector<16x8xf32> to vector<2x8x8xf32>
    %cst_170 = arith.constant dense<0.000000e+00> : vector<2x8x8xf32>
    %511 = tpu.matmul %506, %508, %cst_170 {dimension_numbers = #tpu.dot_dimension_numbers<[2], [2], [1], [1], [0, 0, 0, 1, 1, 1], [0], [0]>} : vector<2x8x8xf32>, vector<2x8x8xf32>, vector<2x8x8xf32> -> vector<2x8x8xf32>
    %cst_171 = arith.constant 0.353553385 : f32
    %512 = vector.broadcast %cst_171 : f32 to vector<2x8x8xf32>
    %513 = arith.mulf %511, %512 : vector<2x8x8xf32>
    %cst_172 = arith.constant dense<0xFF800000> : vector<2x8xf32>
    %514 = vector.multi_reduction <maximumf>, %513, %cst_172 [2] : vector<2x8x8xf32> to vector<2x8xf32>
    %515 = vector.shape_cast %514 : vector<2x8xf32> to vector<2x8x1xf32>
    %516 = vector.broadcast %515 : vector<2x8x1xf32> to vector<2x8x8xf32>
    %517 = arith.subf %513, %516 : vector<2x8x8xf32>
    %518 = math.exp %517 : vector<2x8x8xf32>
    %cst_173 = arith.constant dense<0.000000e+00> : vector<2x8xf32>
    %519 = vector.multi_reduction <add>, %518, %cst_173 [2] : vector<2x8x8xf32> to vector<2x8xf32>
    %520 = vector.shape_cast %519 : vector<2x8xf32> to vector<2x8x1xf32>
    %521 = tpu.reciprocal %520 {approx = true} : vector<2x8x1xf32> -> vector<2x8x1xf32>
    %522 = vector.broadcast %521 : vector<2x8x1xf32> to vector<2x8x8xf32>
    %523 = arith.mulf %518, %522 : vector<2x8x8xf32>
    %cst_174 = arith.constant dense<0.000000e+00> : vector<2x8x8xf32>
    %524 = tpu.matmul %523, %510, %cst_174 {dimension_numbers = #tpu.dot_dimension_numbers<[2], [1], [1], [2], [0, 0, 0, 1, 1, 2], [0], [0]>} : vector<2x8x8xf32>, vector<2x8x8xf32>, vector<2x8x8xf32> -> vector<2x8x8xf32>
    %525 = vector.extract_strided_slice %484 {offsets = [0, 16], sizes = [16, 8], strides = [1, 1]} : vector<16x128xf32> to vector<16x8xf32>
    %526 = vector.shape_cast %525 : vector<16x8xf32> to vector<2x8x8xf32>
    %527 = vector.extract_strided_slice %484 {offsets = [0, 48], sizes = [16, 8], strides = [1, 1]} : vector<16x128xf32> to vector<16x8xf32>
    %528 = vector.shape_cast %527 : vector<16x8xf32> to vector<2x8x8xf32>
    %529 = vector.extract_strided_slice %484 {offsets = [0, 80], sizes = [16, 8], strides = [1, 1]} : vector<16x128xf32> to vector<16x8xf32>
    %530 = vector.shape_cast %529 : vector<16x8xf32> to vector<2x8x8xf32>
    %cst_175 = arith.constant dense<0.000000e+00> : vector<2x8x8xf32>
    %531 = tpu.matmul %526, %528, %cst_175 {dimension_numbers = #tpu.dot_dimension_numbers<[2], [2], [1], [1], [0, 0, 0, 1, 1, 1], [0], [0]>} : vector<2x8x8xf32>, vector<2x8x8xf32>, vector<2x8x8xf32> -> vector<2x8x8xf32>
    %cst_176 = arith.constant 0.353553385 : f32
    %532 = vector.broadcast %cst_176 : f32 to vector<2x8x8xf32>
    %533 = arith.mulf %531, %532 : vector<2x8x8xf32>
    %cst_177 = arith.constant dense<0xFF800000> : vector<2x8xf32>
    %534 = vector.multi_reduction <maximumf>, %533, %cst_177 [2] : vector<2x8x8xf32> to vector<2x8xf32>
    %535 = vector.shape_cast %534 : vector<2x8xf32> to vector<2x8x1xf32>
    %536 = vector.broadcast %535 : vector<2x8x1xf32> to vector<2x8x8xf32>
    %537 = arith.subf %533, %536 : vector<2x8x8xf32>
    %538 = math.exp %537 : vector<2x8x8xf32>
    %cst_178 = arith.constant dense<0.000000e+00> : vector<2x8xf32>
    %539 = vector.multi_reduction <add>, %538, %cst_178 [2] : vector<2x8x8xf32> to vector<2x8xf32>
    %540 = vector.shape_cast %539 : vector<2x8xf32> to vector<2x8x1xf32>
    %541 = tpu.reciprocal %540 {approx = true} : vector<2x8x1xf32> -> vector<2x8x1xf32>
    %542 = vector.broadcast %541 : vector<2x8x1xf32> to vector<2x8x8xf32>
    %543 = arith.mulf %538, %542 : vector<2x8x8xf32>
    %cst_179 = arith.constant dense<0.000000e+00> : vector<2x8x8xf32>
    %544 = tpu.matmul %543, %530, %cst_179 {dimension_numbers = #tpu.dot_dimension_numbers<[2], [1], [1], [2], [0, 0, 0, 1, 1, 2], [0], [0]>} : vector<2x8x8xf32>, vector<2x8x8xf32>, vector<2x8x8xf32> -> vector<2x8x8xf32>
    %545 = vector.extract_strided_slice %484 {offsets = [0, 24], sizes = [16, 8], strides = [1, 1]} : vector<16x128xf32> to vector<16x8xf32>
    %546 = vector.shape_cast %545 : vector<16x8xf32> to vector<2x8x8xf32>
    %547 = vector.extract_strided_slice %484 {offsets = [0, 56], sizes = [16, 8], strides = [1, 1]} : vector<16x128xf32> to vector<16x8xf32>
    %548 = vector.shape_cast %547 : vector<16x8xf32> to vector<2x8x8xf32>
    %549 = vector.extract_strided_slice %484 {offsets = [0, 88], sizes = [16, 8], strides = [1, 1]} : vector<16x128xf32> to vector<16x8xf32>
    %550 = vector.shape_cast %549 : vector<16x8xf32> to vector<2x8x8xf32>
    %cst_180 = arith.constant dense<0.000000e+00> : vector<2x8x8xf32>
    %551 = tpu.matmul %546, %548, %cst_180 {dimension_numbers = #tpu.dot_dimension_numbers<[2], [2], [1], [1], [0, 0, 0, 1, 1, 1], [0], [0]>} : vector<2x8x8xf32>, vector<2x8x8xf32>, vector<2x8x8xf32> -> vector<2x8x8xf32>
    %cst_181 = arith.constant 0.353553385 : f32
    %552 = vector.broadcast %cst_181 : f32 to vector<2x8x8xf32>
    %553 = arith.mulf %551, %552 : vector<2x8x8xf32>
    %cst_182 = arith.constant dense<0xFF800000> : vector<2x8xf32>
    %554 = vector.multi_reduction <maximumf>, %553, %cst_182 [2] : vector<2x8x8xf32> to vector<2x8xf32>
    %555 = vector.shape_cast %554 : vector<2x8xf32> to vector<2x8x1xf32>
    %556 = vector.broadcast %555 : vector<2x8x1xf32> to vector<2x8x8xf32>
    %557 = arith.subf %553, %556 : vector<2x8x8xf32>
    %558 = math.exp %557 : vector<2x8x8xf32>
    %cst_183 = arith.constant dense<0.000000e+00> : vector<2x8xf32>
    %559 = vector.multi_reduction <add>, %558, %cst_183 [2] : vector<2x8x8xf32> to vector<2x8xf32>
    %560 = vector.shape_cast %559 : vector<2x8xf32> to vector<2x8x1xf32>
    %561 = tpu.reciprocal %560 {approx = true} : vector<2x8x1xf32> -> vector<2x8x1xf32>
    %562 = vector.broadcast %561 : vector<2x8x1xf32> to vector<2x8x8xf32>
    %563 = arith.mulf %558, %562 : vector<2x8x8xf32>
    %cst_184 = arith.constant dense<0.000000e+00> : vector<2x8x8xf32>
    %564 = tpu.matmul %563, %550, %cst_184 {dimension_numbers = #tpu.dot_dimension_numbers<[2], [1], [1], [2], [0, 0, 0, 1, 1, 2], [0], [0]>} : vector<2x8x8xf32>, vector<2x8x8xf32>, vector<2x8x8xf32> -> vector<2x8x8xf32>
    %565 = tpu.concatenate %504, %524, %544, %564 in 2 : vector<2x8x8xf32>, vector<2x8x8xf32>, vector<2x8x8xf32>, vector<2x8x8xf32> -> vector<2x8x32xf32>
    %566 = vector.shape_cast %565 : vector<2x8x32xf32> to vector<16x32xf32>
    %567 = arith.truncf %566 : vector<16x32xf32> to vector<16x32xbf16>
    %c3_185 = arith.constant 3 : index
    %c0_186 = arith.constant 0 : index
    %c0_187 = arith.constant 0 : index
    %568 = vector.load %arg10[%c3_185, %c0_186, %c0_187] : memref<4x32x32xbf16, #tpu.memory_space<vmem>>, vector<1x32x32xbf16>
    %569 = vector.shape_cast %568 : vector<1x32x32xbf16> to vector<32x32xbf16>
    %cst_188 = arith.constant dense<0.000000e+00> : vector<16x32xf32>
    %570 = tpu.matmul %567, %569, %cst_188 {dimension_numbers = #tpu.dot_dimension_numbers<[1], [0], [0], [1], [0, 0, 1, 1], [], []>} : vector<16x32xbf16>, vector<32x32xbf16>, vector<16x32xf32> -> vector<16x32xf32>
    %c3_189 = arith.constant 3 : index
    %c0_190 = arith.constant 0 : index
    %c0_191 = arith.constant 0 : index
    %571 = vector.load %arg11[%c3_189, %c0_190, %c0_191] : memref<4x1x32xf32, #tpu.memory_space<vmem>>, vector<1x1x32xf32>
    %572 = vector.shape_cast %571 : vector<1x1x32xf32> to vector<1x32xf32>
    %573 = vector.broadcast %572 : vector<1x32xf32> to vector<16x32xf32>
    %574 = arith.addf %570, %573 : vector<16x32xf32>
    %575 = vector.shape_cast %574 : vector<16x32xf32> to vector<2x8x32xf32>
    %576 = vector.shape_cast %439 : vector<2x32xf32> to vector<2x1x32xf32>
    %577 = vector.broadcast %576 : vector<2x1x32xf32> to vector<2x8x32xf32>
    %578 = arith.mulf %577, %575 : vector<2x8x32xf32>
    %579 = arith.addf %436, %578 : vector<2x8x32xf32>
    %cst_192 = arith.constant dense<0.000000e+00> : vector<2x8xf32>
    %580 = vector.multi_reduction <add>, %579, %cst_192 [2] : vector<2x8x32xf32> to vector<2x8xf32>
    %581 = vector.shape_cast %580 : vector<2x8xf32> to vector<2x8x1xf32>
    %cst_193 = arith.constant 3.200000e+01 : f32
    %582 = vector.broadcast %cst_193 : f32 to vector<2x8x1xf32>
    %583 = arith.divf %581, %582 : vector<2x8x1xf32>
    %584 = vector.broadcast %583 : vector<2x8x1xf32> to vector<2x8x32xf32>
    %585 = arith.subf %579, %584 : vector<2x8x32xf32>
    %586 = arith.mulf %585, %585 : vector<2x8x32xf32>
    %cst_194 = arith.constant dense<0.000000e+00> : vector<2x8xf32>
    %587 = vector.multi_reduction <add>, %586, %cst_194 [2] : vector<2x8x32xf32> to vector<2x8xf32>
    %588 = vector.shape_cast %587 : vector<2x8xf32> to vector<2x8x1xf32>
    %cst_195 = arith.constant 3.200000e+01 : f32
    %589 = vector.broadcast %cst_195 : f32 to vector<2x8x1xf32>
    %590 = arith.divf %588, %589 : vector<2x8x1xf32>
    %591 = vector.broadcast %583 : vector<2x8x1xf32> to vector<2x8x32xf32>
    %592 = arith.subf %579, %591 : vector<2x8x32xf32>
    %cst_196 = arith.constant 9.99999974E-6 : f32
    %593 = vector.broadcast %cst_196 : f32 to vector<2x8x1xf32>
    %594 = arith.addf %590, %593 : vector<2x8x1xf32>
    %595 = math.rsqrt %594 : vector<2x8x1xf32>
    %596 = vector.broadcast %595 : vector<2x8x1xf32> to vector<2x8x32xf32>
    %597 = arith.mulf %592, %596 : vector<2x8x32xf32>
    %c0_197 = arith.constant 0 : index
    %c0_198 = arith.constant 0 : index
    %598 = vector.load %arg12[%c0_197, %c0_198] : memref<1x32xf32, #tpu.memory_space<vmem>>, vector<1x32xf32>
    %599 = vector.shape_cast %598 : vector<1x32xf32> to vector<1x1x32xf32>
    %600 = vector.broadcast %599 : vector<1x1x32xf32> to vector<2x8x32xf32>
    %601 = arith.mulf %597, %600 : vector<2x8x32xf32>
    %c0_199 = arith.constant 0 : index
    %c0_200 = arith.constant 0 : index
    %602 = vector.load %arg13[%c0_199, %c0_200] : memref<1x32xf32, #tpu.memory_space<vmem>>, vector<1x32xf32>
    %603 = vector.shape_cast %602 : vector<1x32xf32> to vector<1x1x32xf32>
    %604 = vector.broadcast %603 : vector<1x1x32xf32> to vector<2x8x32xf32>
    %605 = arith.addf %601, %604 : vector<2x8x32xf32>
    %606 = vector.shape_cast %605 : vector<2x8x32xf32> to vector<16x32xf32>
    %607 = arith.truncf %606 : vector<16x32xf32> to vector<16x32xbf16>
    %c0_201 = arith.constant 0 : index
    %c0_202 = arith.constant 0 : index
    %608 = vector.load %arg14[%c0_201, %c0_202] : memref<32x128xbf16, #tpu.memory_space<vmem>>, vector<32x128xbf16>
    %cst_203 = arith.constant dense<0.000000e+00> : vector<16x128xf32>
    %609 = tpu.matmul %607, %608, %cst_203 {dimension_numbers = #tpu.dot_dimension_numbers<[1], [0], [0], [1], [0, 0, 1, 1], [], []>} : vector<16x32xbf16>, vector<32x128xbf16>, vector<16x128xf32> -> vector<16x128xf32>
    %c0_204 = arith.constant 0 : index
    %c0_205 = arith.constant 0 : index
    %610 = vector.load %arg15[%c0_204, %c0_205] : memref<1x128xf32, #tpu.memory_space<vmem>>, vector<1x128xf32>
    %611 = vector.broadcast %610 : vector<1x128xf32> to vector<16x128xf32>
    %612 = arith.addf %609, %611 : vector<16x128xf32>
    %613 = vector.shape_cast %612 : vector<16x128xf32> to vector<2x8x128xf32>
    %c0_206 = arith.constant 0 : index
    %c0_207 = arith.constant 0 : index
    %c0_208 = arith.constant 0 : index
    %614 = vector.load %arg16[%c0_206, %c0_207, %c0_208] : memref<2x8x128xf32, #tpu.memory_space<vmem>>, vector<2x8x128xf32>
    tpu.vector_store %arg16[%c0_206, %c0_207, %c0_208], %613 {strides = array<i32>} : memref<2x8x128xf32, #tpu.memory_space<vmem>>, vector<2x8x128xf32>,
    return
  }
  func.func @transform_0(%arg0: i32) -> (i32, i32, i32) {
    %c0_i32 = arith.constant 0 : i32
    %c0_i32_0 = arith.constant 0 : i32
    %c0_i32_1 = arith.constant 0 : i32
    return %arg0, %c0_i32, %c0_i32_0 : i32, i32, i32
  }
  func.func @transform_1(%arg0: i32) -> (i32, i32, i32) {
    %c0_i32 = arith.constant 0 : i32
    %c0_i32_0 = arith.constant 0 : i32
    %c0_i32_1 = arith.constant 0 : i32
    return %arg0, %c0_i32, %c0_i32_0 : i32, i32, i32
  }
  func.func @transform_2(%arg0: i32) -> (i32, i32, i32) {
    %c0_i32 = arith.constant 0 : i32
    %c0_i32_0 = arith.constant 0 : i32
    %c0_i32_1 = arith.constant 0 : i32
    return %arg0, %c0_i32, %c0_i32_0 : i32, i32, i32
  }
  func.func @transform_3(%arg0: i32) -> (i32, i32) {
    %c0_i32 = arith.constant 0 : i32
    %c0_i32_0 = arith.constant 0 : i32
    %c0_i32_1 = arith.constant 0 : i32
    return %c0_i32, %c0_i32_0 : i32, i32
  }
  func.func @transform_4(%arg0: i32) -> (i32, i32) {
    %c0_i32 = arith.constant 0 : i32
    %c0_i32_0 = arith.constant 0 : i32
    %c0_i32_1 = arith.constant 0 : i32
    return %c0_i32, %c0_i32_0 : i32, i32
  }
  func.func @transform_5(%arg0: i32) -> (i32, i32, i32) {
    %c0_i32 = arith.constant 0 : i32
    %c0_i32_0 = arith.constant 0 : i32
    %c0_i32_1 = arith.constant 0 : i32
    %c0_i32_2 = arith.constant 0 : i32
    return %c0_i32, %c0_i32_0, %c0_i32_1 : i32, i32, i32
  }
  func.func @transform_6(%arg0: i32) -> (i32, i32, i32) {
    %c0_i32 = arith.constant 0 : i32
    %c0_i32_0 = arith.constant 0 : i32
    %c0_i32_1 = arith.constant 0 : i32
    %c0_i32_2 = arith.constant 0 : i32
    return %c0_i32, %c0_i32_0, %c0_i32_1 : i32, i32, i32
  }
  func.func @transform_7(%arg0: i32) -> (i32, i32, i32) {
    %c0_i32 = arith.constant 0 : i32
    %c0_i32_0 = arith.constant 0 : i32
    %c0_i32_1 = arith.constant 0 : i32
    %c0_i32_2 = arith.constant 0 : i32
    return %c0_i32, %c0_i32_0, %c0_i32_1 : i32, i32, i32
  }
  func.func @transform_8(%arg0: i32) -> (i32, i32, i32) {
    %c0_i32 = arith.constant 0 : i32
    %c0_i32_0 = arith.constant 0 : i32
    %c0_i32_1 = arith.constant 0 : i32
    %c0_i32_2 = arith.constant 0 : i32
    return %c0_i32, %c0_i32_0, %c0_i32_1 : i32, i32, i32
  }
  func.func @transform_9(%arg0: i32) -> (i32, i32, i32) {
    %c0_i32 = arith.constant 0 : i32
    %c0_i32_0 = arith.constant 0 : i32
    %c0_i32_1 = arith.constant 0 : i32
    %c0_i32_2 = arith.constant 0 : i32
    return %c0_i32, %c0_i32_0, %c0_i32_1 : i32, i32, i32
  }
  func.func @transform_10(%arg0: i32) -> (i32, i32, i32) {
    %c0_i32 = arith.constant 0 : i32
    %c0_i32_0 = arith.constant 0 : i32
    %c0_i32_1 = arith.constant 0 : i32
    %c0_i32_2 = arith.constant 0 : i32
    return %c0_i32, %c0_i32_0, %c0_i32_1 : i32, i32, i32
  }
  func.func @transform_11(%arg0: i32) -> (i32, i32) {
    %c0_i32 = arith.constant 0 : i32
    %c0_i32_0 = arith.constant 0 : i32
    %c0_i32_1 = arith.constant 0 : i32
    return %c0_i32, %c0_i32_0 : i32, i32
  }
  func.func @transform_12(%arg0: i32) -> (i32, i32) {
    %c0_i32 = arith.constant 0 : i32
    %c0_i32_0 = arith.constant 0 : i32
    %c0_i32_1 = arith.constant 0 : i32
    return %c0_i32, %c0_i32_0 : i32, i32
  }
  func.func @transform_13(%arg0: i32) -> (i32, i32) {
    %c0_i32 = arith.constant 0 : i32
    %c0_i32_0 = arith.constant 0 : i32
    %c0_i32_1 = arith.constant 0 : i32
    return %c0_i32, %c0_i32_0 : i32, i32
  }
  func.func @transform_14(%arg0: i32) -> (i32, i32) {
    %c0_i32 = arith.constant 0 : i32
    %c0_i32_0 = arith.constant 0 : i32
    %c0_i32_1 = arith.constant 0 : i32
    return %c0_i32, %c0_i32_0 : i32, i32
  }
  func.func @transform_15(%arg0: i32) -> (i32, i32, i32) {
    %c0_i32 = arith.constant 0 : i32
    %c0_i32_0 = arith.constant 0 : i32
    %c0_i32_1 = arith.constant 0 : i32
    return %arg0, %c0_i32, %c0_i32_0 : i32, i32, i32
  }
}

</mosaic_0001>

<llo_original>
// kernel: tpu_custom_call.1
$region0: #{tpu_custom_call.1}
  #allocation0 [shape = 'u32[]', space=smem, size = 0x4, offset = 0x4, fixed_abs, tag = 'smem constant byte address 0x4 - core index']
  #allocation1 [shape = 'u32[144,128]{1,0:T(1,128)}', space=vmem, size = 0x12000, scoped, tag = 'internal scratch']
  %s0 = inlined_call_operand.hbm [shape: f32[2,8,32], index: 0, kind: input, shape index: {}]
  %s1 = inlined_call_operand.hbm [shape: f32[2,16,32], index: 1, kind: input, shape index: {}]
  %s2 = inlined_call_operand.hbm [shape: f32[2,1,16], index: 2, kind: input, shape index: {}]
  %s3 = inlined_call_operand.hbm [shape: bf16[16,384], index: 3, kind: input, shape index: {}]
  %s4 = inlined_call_operand.vmem [shape: f32[1,384], index: 4, kind: input, shape index: {}]
  %s5 = inlined_call_operand.vmem [shape: f32[4,1,32], index: 5, kind: input, shape index: {}]
  %s6 = inlined_call_operand.hbm [shape: f32[4,1,32], index: 6, kind: input, shape index: {}]
  %s7 = inlined_call_operand.hbm [shape: bf16[4,32,128], index: 7, kind: input, shape index: {}]
  %s8 = inlined_call_operand.hbm [shape: f32[4,1,128], index: 8, kind: input, shape index: {}]
  %s9 = inlined_call_operand.hbm [shape: bf16[4,32,32], index: 9, kind: input, shape index: {}]
  %s10 = inlined_call_operand.hbm [shape: f32[4,1,32], index: 10, kind: input, shape index: {}]
  %s11 = inlined_call_operand.hbm [shape: f32[1,32], index: 11, kind: input, shape index: {}]
  %s12 = inlined_call_operand.hbm [shape: f32[1,32], index: 12, kind: input, shape index: {}]
  %s13 = inlined_call_operand.vmem [shape: bf16[32,128], index: 13, kind: input, shape index: {}]
  %s14 = inlined_call_operand.vmem [shape: f32[1,128], index: 14, kind: input, shape index: {}]
  %s15 = inlined_call_operand.hbm [shape: f32[2,8,128], index: 15, kind: output, shape index: {}]
  %s16 = sld [smem:[#allocation0]]
  $region114: #{tpu_custom_call.1} parent=0
    _
  %s18 = ssub.s32 1, %s16
  %s19 = scalar_select 0, %s18, %s16
  $region1: #{tpu_custom_call.1} parent=0
    #allocation2 [shape = 'u8[8192]{0}', space=vmem, size = 0x2000, scoped, tag = 'input window, operand 0, single buffered']
    #allocation3 [shape = 's32[1]{0}', space=sflag, size = 0x4, scoped, tag = 'scoped memory for tpu_custom_call.1']
    #allocation4 [shape = 's32[1]{0}', space=sflag, size = 0x4, scoped, tag = 'scoped memory for tpu_custom_call.1']
    #allocation5 [shape = 'u8[16384]{0}', space=vmem, size = 0x4000, scoped, tag = 'input window, operand 1, single buffered']
    #allocation6 [shape = 's32[1]{0}', space=sflag, size = 0x4, scoped, tag = 'scoped memory for tpu_custom_call.1']
    #allocation7 [shape = 'u8[1024]{0}', space=vmem, size = 0x400, scoped, tag = 'input window, operand 2, single buffered']
    #allocation8 [shape = 'u8[12288]{0}', space=vmem, size = 0x3000, scoped, tag = 'input window, operand 3, single buffered']
    #allocation9 [shape = 's32[1]{0}', space=sflag, size = 0x4, scoped, tag = 'scoped memory for tpu_custom_call.1']
    #allocation10 [shape = 'u8[2048]{0}', space=vmem, size = 0x800, scoped, tag = 'input window, operand 6, single buffered']
    #allocation11 [shape = 'u8[32768]{0}', space=vmem, size = 0x8000, scoped, tag = 'input window, operand 7, single buffered']
    #allocation12 [shape = 's32[1]{0}', space=sflag, size = 0x4, scoped, tag = 'scoped memory for tpu_custom_call.1']
    #allocation13 [shape = 'u8[2048]{0}', space=vmem, size = 0x800, scoped, tag = 'input window, operand 8, single buffered']
    #allocation14 [shape = 'u8[32768]{0}', space=vmem, size = 0x8000, scoped, tag = 'input window, operand 9, single buffered']
    #allocation15 [shape = 's32[1]{0}', space=sflag, size = 0x4, scoped, tag = 'scoped memory for tpu_custom_call.1']
    #allocation16 [shape = 'u8[2048]{0}', space=vmem, size = 0x800, scoped, tag = 'input window, operand 10, single buffered']
    #allocation17 [shape = 'u8[512]{0}', space=vmem, size = 0x400, scoped, tag = 'input window, operand 11, single buffered']
    #allocation18 [shape = 's32[1]{0}', space=sflag, size = 0x4, scoped, tag = 'scoped memory for tpu_custom_call.1']
    #allocation19 [shape = 'u8[512]{0}', space=vmem, size = 0x400, scoped, tag = 'input window, operand 12, single buffered']
    #allocation20 [shape = 'u8[8192]{0}', space=vmem, size = 0x2000, scoped, tag = 'output window, operand 0, single buffered']
    %20 = vsyncpa [#allocation3], 0
    %21 = vsyncpa [#allocation6], 0
    %22 = vsyncpa [#allocation9], 0
    %23 = vsyncpa [#allocation12], 0
    %24 = vsyncpa [#allocation15], 0
    %25 = vsyncpa [#allocation18], 0
    %26 = vsyncpa [#allocation4], 0
    // Predicated region
    $region2: #{tpu_custom_call.1} parent=1 // pred_check
      _
    $region3: #{tpu_custom_call.1} parent=1 // pred_check_branch
      %28 = sbr.rel (0) target = $region5
    $region4: #{tpu_custom_call.1} parent=1 // pred_region
      %s30 = ssub.s32 256, 256
      %31 = vsyncadd [#allocation3], %s30
      %s32 = sshll.u32 [#allocation2], 4
      %s33 = int_to_ptr.vmem [resolvable:$true] %s32
      %38 = dma.hbm_to_vmem [thread:$0]  %s0, 256, %s33, [#allocation3], 128, 128, 8
    $region5: #{tpu_custom_call.1} parent=1 // pred_fallthru
      _
    // Predicated region
    $region6: #{tpu_custom_call.1} parent=1 // pred_check
      _
    $region7: #{tpu_custom_call.1} parent=1 // pred_check_branch
      %40 = sbr.rel (0) target = $region9
    $region8: #{tpu_custom_call.1} parent=1 // pred_region
      %s42 = ssub.s32 512, 512
      %43 = vsyncadd [#allocation6], %s42
      %s44 = sshll.u32 [#allocation5], 4
      %s45 = int_to_ptr.vmem [resolvable:$true] %s44
      %50 = dma.hbm_to_vmem [thread:$0]  %s1, 512, %s45, [#allocation6], 128, 128, 8
    $region9: #{tpu_custom_call.1} parent=1 // pred_fallthru
      _
    // Predicated region
    $region10: #{tpu_custom_call.1} parent=1 // pred_check
      _
    $region11: #{tpu_custom_call.1} parent=1 // pred_check_branch
      %52 = sbr.rel (0) target = $region13
    $region12: #{tpu_custom_call.1} parent=1 // pred_region
      %s54 = ssub.s32 32, 32
      %55 = vsyncadd [#allocation6], %s54
      %s56 = sshll.u32 [#allocation7], 4
      %s57 = int_to_ptr.vmem [resolvable:$true] %s56
      %62 = dma.hbm_to_vmem [thread:$0]  %s2, 32, %s57, [#allocation6], 16, 16, 1
    $region13: #{tpu_custom_call.1} parent=1 // pred_fallthru
      _
    // Predicated region
    $region14: #{tpu_custom_call.1} parent=1 // pred_check
      _
    $region15: #{tpu_custom_call.1} parent=1 // pred_check_branch
      %64 = sbr.rel (0) target = $region17
    $region16: #{tpu_custom_call.1} parent=1 // pred_region
      %s66 = ssub.s32 384, 384
      %67 = vsyncadd [#allocation9], %s66
      %s68 = sshll.u32 [#allocation8], 4
      %s69 = int_to_ptr.vmem [resolvable:$true] %s68
      %74 = dma.hbm_to_vmem [thread:$0]  %s3, 384, %s69, [#allocation9], 192, 192, 12
    $region17: #{tpu_custom_call.1} parent=1 // pred_fallthru
      _
    // Predicated region
    $region18: #{tpu_custom_call.1} parent=1 // pred_check
      _
    $region19: #{tpu_custom_call.1} parent=1 // pred_check_branch
      %76 = sbr.rel (0) target = $region21
    $region20: #{tpu_custom_call.1} parent=1 // pred_region
      _
    $region21: #{tpu_custom_call.1} parent=1 // pred_fallthru
      _
    // Predicated region
    $region22: #{tpu_custom_call.1} parent=1 // pred_check
      _
    $region23: #{tpu_custom_call.1} parent=1 // pred_check_branch
      %78 = sbr.rel (0) target = $region25
    $region24: #{tpu_custom_call.1} parent=1 // pred_region
      _
    $region25: #{tpu_custom_call.1} parent=1 // pred_fallthru
      _
    // Predicated region
    $region26: #{tpu_custom_call.1} parent=1 // pred_check
      _
    $region27: #{tpu_custom_call.1} parent=1 // pred_check_branch
      %80 = sbr.rel (0) target = $region29
    $region28: #{tpu_custom_call.1} parent=1 // pred_region
      %s82 = ssub.s32 64, 64
      %83 = vsyncadd [#allocation9], %s82
      %s84 = sshll.u32 [#allocation10], 4
      %s85 = int_to_ptr.vmem [resolvable:$true] %s84
      %90 = dma.hbm_to_vmem [thread:$0]  %s6, 64, %s85, [#allocation9], 16, 16, 1
    $region29: #{tpu_custom_call.1} parent=1 // pred_fallthru
      _
    // Predicated region
    $region30: #{tpu_custom_call.1} parent=1 // pred_check
      _
    $region31: #{tpu_custom_call.1} parent=1 // pred_check_branch
      %92 = sbr.rel (0) target = $region33
    $region32: #{tpu_custom_call.1} parent=1 // pred_region
      %s94 = ssub.s32 1024, 1024
      %95 = vsyncadd [#allocation12], %s94
      %s96 = sshll.u32 [#allocation11], 4
      %s97 = int_to_ptr.vmem [resolvable:$true] %s96
      %102 = dma.hbm_to_vmem [thread:$0]  %s7, 1024, %s97, [#allocation12], 64, 64, 4
    $region33: #{tpu_custom_call.1} parent=1 // pred_fallthru
      _
    // Predicated region
    $region34: #{tpu_custom_call.1} parent=1 // pred_check
      _
    $region35: #{tpu_custom_call.1} parent=1 // pred_check_branch
      %104 = sbr.rel (0) target = $region37
    $region36: #{tpu_custom_call.1} parent=1 // pred_region
      %s106 = ssub.s32 64, 64
      %107 = vsyncadd [#allocation12], %s106
      %s108 = sshll.u32 [#allocation13], 4
      %s109 = int_to_ptr.vmem [resolvable:$true] %s108
      %114 = dma.hbm_to_vmem [thread:$0]  %s8, 64, %s109, [#allocation12], 16, 16, 1
    $region37: #{tpu_custom_call.1} parent=1 // pred_fallthru
      _
    // Predicated region
    $region38: #{tpu_custom_call.1} parent=1 // pred_check
      _
    $region39: #{tpu_custom_call.1} parent=1 // pred_check_branch
      %116 = sbr.rel (0) target = $region41
    $region40: #{tpu_custom_call.1} parent=1 // pred_region
      %s118 = ssub.s32 1024, 1024
      %119 = vsyncadd [#allocation15], %s118
      %s120 = sshll.u32 [#allocation14], 4
      %s121 = int_to_ptr.vmem [resolvable:$true] %s120
      %126 = dma.hbm_to_vmem [thread:$0]  %s9, 1024, %s121, [#allocation15], 64, 64, 4
    $region41: #{tpu_custom_call.1} parent=1 // pred_fallthru
      _
    // Predicated region
    $region42: #{tpu_custom_call.1} parent=1 // pred_check
      _
    $region43: #{tpu_custom_call.1} parent=1 // pred_check_branch
      %128 = sbr.rel (0) target = $region45
    $region44: #{tpu_custom_call.1} parent=1 // pred_region
      %s130 = ssub.s32 64, 64
      %131 = vsyncadd [#allocation15], %s130
      %s132 = sshll.u32 [#allocation16], 4
      %s133 = int_to_ptr.vmem [resolvable:$true] %s132
      %138 = dma.hbm_to_vmem [thread:$0]  %s10, 64, %s133, [#allocation15], 16, 16, 1
    $region45: #{tpu_custom_call.1} parent=1 // pred_fallthru
      _
    // Predicated region
    $region46: #{tpu_custom_call.1} parent=1 // pred_check
      _
    $region47: #{tpu_custom_call.1} parent=1 // pred_check_branch
      %140 = sbr.rel (0) target = $region49
    $region48: #{tpu_custom_call.1} parent=1 // pred_region
      %s142 = ssub.s32 16, 16
      %143 = vsyncadd [#allocation18], %s142
      %s145 = sshll.u32 [#allocation17], 4
      %s146 = int_to_ptr.vmem [resolvable:$true] %s145
      %148 = dma.hbm_to_vmem [thread:$0]  %s11, 16, %s146, [#allocation18]
    $region49: #{tpu_custom_call.1} parent=1 // pred_fallthru
      _
    // Predicated region
    $region50: #{tpu_custom_call.1} parent=1 // pred_check
      _
    $region51: #{tpu_custom_call.1} parent=1 // pred_check_branch
      %150 = sbr.rel (0) target = $region53
    $region52: #{tpu_custom_call.1} parent=1 // pred_region
      %s152 = ssub.s32 16, 16
      %153 = vsyncadd [#allocation18], %s152
      %s155 = sshll.u32 [#allocation19], 4
      %s156 = int_to_ptr.vmem [resolvable:$true] %s155
      %158 = dma.hbm_to_vmem [thread:$0]  %s12, 16, %s156, [#allocation18]
    $region53: #{tpu_custom_call.1} parent=1 // pred_fallthru
      _
    // Predicated region
    $region54: #{tpu_custom_call.1} parent=1 // pred_check
      _
    $region55: #{tpu_custom_call.1} parent=1 // pred_check_branch
      %160 = sbr.rel (0) target = $region57
    $region56: #{tpu_custom_call.1} parent=1 // pred_region
      _
    $region57: #{tpu_custom_call.1} parent=1 // pred_fallthru
      _
    // Predicated region
    $region58: #{tpu_custom_call.1} parent=1 // pred_check
      _
    $region59: #{tpu_custom_call.1} parent=1 // pred_check_branch
      %162 = sbr.rel (0) target = $region61
    $region60: #{tpu_custom_call.1} parent=1 // pred_region
      _
    $region61: #{tpu_custom_call.1} parent=1 // pred_fallthru
      _
    // Predicated region
    $region62: #{tpu_custom_call.1} parent=1 // pred_check
      _
    $region63: #{tpu_custom_call.1} parent=1 // pred_check_branch
      %164 = sbr.rel (0) target = $region65
    $region64: #{tpu_custom_call.1} parent=1 // pred_region
      %165 = dma.done [#allocation3], 256
    $region65: #{tpu_custom_call.1} parent=1 // pred_fallthru
      _
    // Predicated region
    $region66: #{tpu_custom_call.1} parent=1 // pred_check
      _
    $region67: #{tpu_custom_call.1} parent=1 // pred_check_branch
      %167 = sbr.rel (0) target = $region69
    $region68: #{tpu_custom_call.1} parent=1 // pred_region
      %168 = dma.done [#allocation6], 512
    $region69: #{tpu_custom_call.1} parent=1 // pred_fallthru
      _
    // Predicated region
    $region70: #{tpu_custom_call.1} parent=1 // pred_check
      _
    $region71: #{tpu_custom_call.1} parent=1 // pred_check_branch
      %170 = sbr.rel (0) target = $region73
    $region72: #{tpu_custom_call.1} parent=1 // pred_region
      %171 = dma.done [#allocation6], 32
    $region73: #{tpu_custom_call.1} parent=1 // pred_fallthru
      _
    // Predicated region
    $region74: #{tpu_custom_call.1} parent=1 // pred_check
      _
    $region75: #{tpu_custom_call.1} parent=1 // pred_check_branch
      %173 = sbr.rel (0) target = $region77
    $region76: #{tpu_custom_call.1} parent=1 // pred_region
      %174 = dma.done [#allocation9], 384
    $region77: #{tpu_custom_call.1} parent=1 // pred_fallthru
      _
    // Predicated region
    $region78: #{tpu_custom_call.1} parent=1 // pred_check
      _
    $region79: #{tpu_custom_call.1} parent=1 // pred_check_branch
      %176 = sbr.rel (0) target = $region81
    $region80: #{tpu_custom_call.1} parent=1 // pred_region
      %177 = dma.done [#allocation9], 64
    $region81: #{tpu_custom_call.1} parent=1 // pred_fallthru
      _
    // Predicated region
    $region82: #{tpu_custom_call.1} parent=1 // pred_check
      _
    $region83: #{tpu_custom_call.1} parent=1 // pred_check_branch
      %179 = sbr.rel (0) target = $region85
    $region84: #{tpu_custom_call.1} parent=1 // pred_region
      %180 = dma.done [#allocation12], 1024
    $region85: #{tpu_custom_call.1} parent=1 // pred_fallthru
      _
    // Predicated region
    $region86: #{tpu_custom_call.1} parent=1 // pred_check
      _
    $region87: #{tpu_custom_call.1} parent=1 // pred_check_branch
      %182 = sbr.rel (0) target = $region89
    $region88: #{tpu_custom_call.1} parent=1 // pred_region
      %183 = dma.done [#allocation12], 64
    $region89: #{tpu_custom_call.1} parent=1 // pred_fallthru
      _
    // Predicated region
    $region90: #{tpu_custom_call.1} parent=1 // pred_check
      _
    $region91: #{tpu_custom_call.1} parent=1 // pred_check_branch
      %185 = sbr.rel (0) target = $region93
    $region92: #{tpu_custom_call.1} parent=1 // pred_region
      %186 = dma.done [#allocation15], 1024
    $region93: #{tpu_custom_call.1} parent=1 // pred_fallthru
      _
    // Predicated region
    $region94: #{tpu_custom_call.1} parent=1 // pred_check
      _
    $region95: #{tpu_custom_call.1} parent=1 // pred_check_branch
      %188 = sbr.rel (0) target = $region97
    $region96: #{tpu_custom_call.1} parent=1 // pred_region
      %189 = dma.done [#allocation15], 64
    $region97: #{tpu_custom_call.1} parent=1 // pred_fallthru
      _
    // Predicated region
    $region98: #{tpu_custom_call.1} parent=1 // pred_check
      _
    $region99: #{tpu_custom_call.1} parent=1 // pred_check_branch
      %191 = sbr.rel (0) target = $region101
    $region100: #{tpu_custom_call.1} parent=1 // pred_region
      %192 = dma.done [#allocation18], 16
    $region101: #{tpu_custom_call.1} parent=1 // pred_fallthru
      _
    // Predicated region
    $region102: #{tpu_custom_call.1} parent=1 // pred_check
      _
    $region103: #{tpu_custom_call.1} parent=1 // pred_check_branch
      %194 = sbr.rel (0) target = $region105
    $region104: #{tpu_custom_call.1} parent=1 // pred_region
      %195 = dma.done [#allocation18], 16
    $region105: #{tpu_custom_call.1} parent=1 // pred_fallthru
      _
    %v197 = vld [vmem:[#allocation2] sm:$0xff]
    %v198 = vld [vmem:[#allocation2 + $0x8] sm:$0xff]
    %v199 = vld [vmem:[#allocation5] sm:$0xff]
    %v200 = vld [vmem:[#allocation5 + $0x8] sm:$0xff]
    %v201 = vld [vmem:[#allocation5 + $0x10] sm:$0xff]
    %v202 = vld [vmem:[#allocation5 + $0x18] sm:$0xff]
    %vm203 = vcmask 261120
    %v204 = vsel %vm203, %v199, 0.0
    %205 = vadd.xlane.f32.xlu0 %v204
    %v206 = vpop.xlane.xlu0 %205
    %v207 = vsel %vm203, %v200, 0.0
    %208 = vadd.xlane.f32.xlu0 %v207
    %v209 = vpop.xlane.xlu0 %208
    %v210 = vsel %vm203, %v201, 0.0
    %211 = vadd.xlane.f32.xlu0 %v210
    %v212 = vpop.xlane.xlu0 %211
    %v213 = vsel %vm203, %v202, 0.0
    %214 = vadd.xlane.f32.xlu0 %v213
    %v215 = vpop.xlane.xlu0 %214
    %v216 = vrcp.pop 32.0
    %v217 = vmul.f32 %v206, %v216
    %v218 = vmul.f32 %v209, %v216
    %v219 = vmul.f32 %v212, %v216
    %v220 = vmul.f32 %v215, %v216
    %v221 = vsub.f32 %v199, %v217
    %v222 = vsub.f32 %v200, %v218
    %v223 = vsub.f32 %v201, %v219
    %v224 = vsub.f32 %v202, %v220
    %v225 = vmul.f32 %v221, %v221
    %v226 = vmul.f32 %v222, %v222
    %v227 = vmul.f32 %v223, %v223
    %v228 = vmul.f32 %v224, %v224
    %v229 = vsel %vm203, %v225, 0.0
    %230 = vadd.xlane.f32.xlu0 %v229
    %v231 = vpop.xlane.xlu0 %230
    %v232 = vsel %vm203, %v226, 0.0
    %233 = vadd.xlane.f32.xlu0 %v232
    %v234 = vpop.xlane.xlu0 %233
    %v235 = vsel %vm203, %v227, 0.0
    %236 = vadd.xlane.f32.xlu0 %v235
    %v237 = vpop.xlane.xlu0 %236
    %v238 = vsel %vm203, %v228, 0.0
    %239 = vadd.xlane.f32.xlu0 %v238
    %v240 = vpop.xlane.xlu0 %239
    %v241 = vmul.f32 %v231, %v216
    %v242 = vmul.f32 %v234, %v216
    %v243 = vmul.f32 %v237, %v216
    %v244 = vmul.f32 %v240, %v216
    %v245 = vadd.f32 %v241, 1e-05
    %v246 = vadd.f32 %v242, 1e-05
    %v247 = vadd.f32 %v243, 1e-05
    %v248 = vadd.f32 %v244, 1e-05
    %v249 = vrsqrt.pop %v245
    %v250 = vrsqrt.pop %v246
    %v251 = vrsqrt.pop %v247
    %v252 = vrsqrt.pop %v248
    %v253 = vmul.f32 %v221, %v249
    %v254 = vmul.f32 %v222, %v250
    %v255 = vmul.f32 %v223, %v251
    %v256 = vmul.f32 %v224, %v252
    %v257 = vld [vmem:[#allocation7] sm:$0x1]
    %v258 = vld [vmem:[#allocation7 + $0x1] sm:$0x1]
    %v259 = vsub.f32 0.0, %v257
    %v260 = vsub.f32 0.0, %v258
    %v261 = vmul.f32 %v259, 1.442695
    %v262 = vpow.pop %v261
    %v263 = vmul.f32 %v260, 1.442695
    %v264 = vpow.pop %v263
    %v265 = vadd.f32 %v262, 1.0
    %v266 = vadd.f32 %v264, 1.0
    %v267 = vrcp.pop %v265
    %v268 = vmul.f32 %v257, %v267
    %v269 = vrcp.pop %v266
    %v270 = vmul.f32 %v258, %v269
    %v271 = vpack.c.bf16 %v268, %v268
    %v272 = vpack.c.bf16 %v270, %v270
    %v273 = vld [vmem:[#allocation8] sm:$0xff]
    %v274 = vld [vmem:[#allocation8 + $0x8] sm:$0xf]
    %v275 = vld [vmem:[#allocation8 + $0xc] sm:$0xff]
    %v276 = vld [vmem:[#allocation8 + $0x14] sm:$0xf]
    %v277 = vld [vmem:[%s4] sm:$0x7]
    %v279 = vlaneseq
    %v280 = vshrl.u32 %v279, 7
    %v281 = vsub.s32 0, %v280
    %v282 = vrot.slane %v277, %v281
    %v283 = vlaneseq
    %v284 = vshrl.u32 %v283, 7
    %v285 = vsub.s32 1, %v284
    %v286 = vrot.slane %v277, %v285
    %v287 = vlaneseq
    %v288 = vshrl.u32 %v287, 7
    %v289 = vsub.s32 2, %v288
    %v290 = vrot.slane %v277, %v289
    %v296 = vunpack.c.l.b16 %v271
    %v297 = vunpack.c.l.b16 %v272
    %v298 = vrot.slane %v297, 7
    %vm299 = vcmask 1041409
    %v300 = vsel %vm299, %v298, %v296
    %v301 = vpack.c.b16 %v300, %v300
    %v306 = vunpack.c.l.b16 %v273
    %v307 = vunpack.c.h.b16 %v273
    %v308 = vunpack.c.l.b16 %v274
    %v309 = vunpack.c.l.b16 %v275
    %v310 = vunpack.c.h.b16 %v275
    %v311 = vunpack.c.l.b16 %v276
    %v312 = vpack.c.b16 %v309, %v306
    %v313 = vpack.c.b16 %v310, %v307
    %v314 = vpack.c.b16 %v311, %v308
    %vm318 = vcmask 130048
    %v320 = vsel %vm318, %v301, 0
    %322 = vmatprep.subr.bf16.mxu0 0
    %323 = vmatpush1.bf16.msra.mxu0 0
    %324 = vmatprep.subr.bf16.mxu0 0
    %325 = vmatpush1.bf16.msra.mxu0 0
    %326 = vmatprep.subr.bf16.mxu0 0
    %327 = vmatpush1.bf16.msra.mxu0 0
    %328 = vmatprep.subr.bf16.mxu0 0
    %329 = vmatpush1.bf16.msra.mxu0 0
    %330 = vmatprep.subr.bf16.mxu0 0
    %331 = vmatpush1.bf16.msra.mxu0 0
    %332 = vmatprep.subr.bf16.mxu0 0
    %333 = vmatpush1.bf16.msra.mxu0 0
    %334 = vmatprep.subr.bf16.mxu0 0
    %335 = vmatpush1.bf16.msra.mxu0 0
    %336 = vmatprep.subr.bf16.mxu0 %v313
    %337 = vmatpush1.bf16.msra.mxu0 %v312
    %338 = vmatprep.subr.bf16.mxu0 0
    %339 = vmatpush2.bf16.msra.mxu0 0
    %340 = vmatprep.subr.bf16.mxu0 0
    %341 = vmatpush2.bf16.msra.mxu0 0
    %342 = vmatprep.subr.bf16.mxu0 0
    %343 = vmatpush2.bf16.msra.mxu0 0
    %344 = vmatprep.subr.bf16.mxu0 0
    %345 = vmatpush2.bf16.msra.mxu0 0
    %346 = vmatprep.subr.bf16.mxu0 0
    %347 = vmatpush2.bf16.msra.mxu0 0
    %348 = vmatprep.subr.bf16.mxu0 0
    %349 = vmatpush2.bf16.msra.mxu0 0
    %350 = vmatprep.subr.bf16.mxu0 0
    %351 = vmatpush2.bf16.msra.mxu0 0
    %352 = vmatprep.subr.bf16.mxu0 0
    %353 = vmatpush2.bf16.msra.mxu0 0
    %354 = vmatprep.mubr.bf16.mxu0 0
    %355 = vmatmul.mubr.bf16.gmra.mxu0 %v320
    %v356 = vpop.f32.mrf.mxu0
    %v357 = vadd.f32 %v282, %v356
    %v358 = vpop.f32.mrf.mxu0
    %v359 = vadd.f32 %v286, %v358
    %v360 = vpop.f32.mrf.mxu0
    %v361 = vpop.f32.mrf.mxu0
    %362 = vdwg.mxu0
    %363 = vmatprep.subr.bf16.mxu0 0
    %364 = vmatpush1.bf16.msra.mxu0 0
    %365 = vmatprep.subr.bf16.mxu0 0
    %366 = vmatpush1.bf16.msra.mxu0 0
    %367 = vmatprep.subr.bf16.mxu0 0
    %368 = vmatpush1.bf16.msra.mxu0 0
    %369 = vmatprep.subr.bf16.mxu0 0
    %370 = vmatpush1.bf16.msra.mxu0 0
    %371 = vmatprep.subr.bf16.mxu0 0
    %372 = vmatpush1.bf16.msra.mxu0 0
    %373 = vmatprep.subr.bf16.mxu0 0
    %374 = vmatpush1.bf16.msra.mxu0 0
    %375 = vmatprep.subr.bf16.mxu0 0
    %376 = vmatpush1.bf16.msra.mxu0 0
    %377 = vmatprep.subr.bf16.mxu0 0
    %378 = vmatpush1.bf16.msra.mxu0 %v314
    %379 = vmatprep.subr.bf16.mxu0 0
    %380 = vmatpush2.bf16.msra.mxu0 0
    %381 = vmatprep.subr.bf16.mxu0 0
    %382 = vmatpush2.bf16.msra.mxu0 0
    %383 = vmatprep.subr.bf16.mxu0 0
    %384 = vmatpush2.bf16.msra.mxu0 0
    %385 = vmatprep.subr.bf16.mxu0 0
    %386 = vmatpush2.bf16.msra.mxu0 0
    %387 = vmatprep.subr.bf16.mxu0 0
    %388 = vmatpush2.bf16.msra.mxu0 0
    %389 = vmatprep.subr.bf16.mxu0 0
    %390 = vmatpush2.bf16.msra.mxu0 0
    %391 = vmatprep.subr.bf16.mxu0 0
    %392 = vmatpush2.bf16.msra.mxu0 0
    %393 = vmatprep.subr.bf16.mxu0 0
    %394 = vmatpush2.bf16.msra.mxu0 0
    %395 = vmatprep.mubr.bf16.mxu0 0
    %396 = vmatmul.mubr.bf16.gmra.mxu0 %v320
    %v397 = vpop.f32.mrf.mxu0
    %v398 = vadd.f32 %v290, %v397
    %v399 = vpop.f32.mrf.mxu0
    %v400 = vpop.f32.mrf.mxu0
    %v401 = vpop.f32.mrf.mxu0
    %402 = vdwg.mxu0
    %v403 = vld [vmem:[%s5] sm:$0x1]
    %v404 = vld [vmem:[#allocation10] sm:$0x1]
    %v406 = vlaneseq
    %v407 = vshrl.u32 %v406, 7
    %v408 = vsub.s32 0, %v407
    %v409 = vrot.slane %v403, %v408
    %v411 = vmul.f32 %v253, %v409
    %v412 = vmul.f32 %v254, %v409
    %v413 = vmul.f32 %v255, %v409
    %v414 = vmul.f32 %v256, %v409
    %v416 = vlaneseq
    %v417 = vshrl.u32 %v416, 7
    %v418 = vsub.s32 0, %v417
    %v419 = vrot.slane %v404, %v418
    %v421 = vadd.f32 %v411, %v419
    %v422 = vadd.f32 %v412, %v419
    %v423 = vadd.f32 %v413, %v419
    %v424 = vadd.f32 %v414, %v419
    %v427 = vunpack.c.l.s4 1966171168
    %v428 = vunpack.c.0.s8 %v427
    %v429 = vlaneseq
    %v430 = vshrl.u32 %v429, 7
    %v431 = vsub.s32 %v428, %v430
    %v432 = vrot.slane %v359, %v431
    %v433 = vcombine.high %v432, %v432
    %v435 = vunpack.c.l.s4 1966171168
    %v436 = vunpack.c.0.s8 %v435
    %v437 = vlaneseq
    %v438 = vshrl.u32 %v437, 7
    %v439 = vsub.s32 %v436, %v438
    %v440 = vrot.slane %v432, %v439
    %v442 = vunpack.c.l.s4 1966171168
    %v443 = vunpack.c.0.s8 %v442
    %v444 = vlaneseq
    %v445 = vshrl.u32 %v444, 7
    %v446 = vsub.s32 %v443, %v445
    %v447 = vrot.slane %v433, %v446
    %v450 = vadd.f32 %v440, 1.0
    %v451 = vadd.f32 %v447, 1.0
    %v454 = vlaneseq
    %v455 = vshrl.u32 %v454, 7
    %v456 = vsub.s32 0, %v455
    %v457 = vrot.slane %v450, %v456
    %v458 = vlaneseq
    %v459 = vshrl.u32 %v458, 7
    %v460 = vsub.s32 0, %v459
    %v461 = vrot.slane %v451, %v460
    %v464 = vmul.f32 %v421, %v457
    %v465 = vmul.f32 %v422, %v457
    %v466 = vmul.f32 %v423, %v461
    %v467 = vmul.f32 %v424, %v461
    %v470 = vunpack.c.l.s4 1966171168
    %v471 = vunpack.c.0.s8 %v470
    %v472 = vlaneseq
    %v473 = vshrl.u32 %v472, 7
    %v474 = vsub.s32 %v471, %v473
    %v475 = vrot.slane %v357, %v474
    %v476 = vcombine.high %v475, %v475
    %v478 = vunpack.c.l.s4 1966171168
    %v479 = vunpack.c.0.s8 %v478
    %v480 = vlaneseq
    %v481 = vshrl.u32 %v480, 7
    %v482 = vsub.s32 %v479, %v481
    %v483 = vrot.slane %v475, %v482
    %v485 = vunpack.c.l.s4 1966171168
    %v486 = vunpack.c.0.s8 %v485
    %v487 = vlaneseq
    %v488 = vshrl.u32 %v487, 7
    %v489 = vsub.s32 %v486, %v488
    %v490 = vrot.slane %v476, %v489
    %v491 = vlaneseq
    %v492 = vshrl.u32 %v491, 7
    %v493 = vsub.s32 0, %v492
    %v494 = vrot.slane %v483, %v493
    %v495 = vlaneseq
    %v496 = vshrl.u32 %v495, 7
    %v497 = vsub.s32 0, %v496
    %v498 = vrot.slane %v490, %v497
    %v501 = vadd.f32 %v464, %v494
    %v502 = vadd.f32 %v465, %v494
    %v503 = vadd.f32 %v466, %v498
    %v504 = vadd.f32 %v467, %v498
    %v505 = vld [vmem:[#allocation11] sm:$0xf]
    %v506 = vld [vmem:[#allocation11 + $0x4] sm:$0xf]
    %v507 = vld [vmem:[#allocation11 + $0x8] sm:$0xf]
    %v508 = vld [vmem:[#allocation11 + $0xc] sm:$0xf]
    %v509 = vld [vmem:[#allocation13] sm:$0x1]
    %v510 = vpack.c.bf16 %v502, %v501
    %v511 = vpack.c.bf16 %v504, %v503
    %v513 = vlaneseq
    %v514 = vshrl.u32 %v513, 7
    %v515 = vsub.s32 0, %v514
    %v516 = vrot.slane %v509, %v515
    %v522 = vunpack.c.l.b16 %v505
    %v523 = vunpack.c.l.b16 %v506
    %v524 = vunpack.c.l.b16 %v507
    %v525 = vunpack.c.l.b16 %v508
    %v526 = vpack.c.b16 %v523, %v522
    %v527 = vpack.c.b16 %v525, %v524
    %v531 = vsel %vm203, %v510, 0
    %v534 = vsel %vm203, %v511, 0
    %536 = vmatprep.subr.bf16.mxu0 0
    %537 = vmatpush1.bf16.msra.mxu0 0
    %538 = vmatprep.subr.bf16.mxu0 0
    %539 = vmatpush1.bf16.msra.mxu0 0
    %540 = vmatprep.subr.bf16.mxu0 0
    %541 = vmatpush1.bf16.msra.mxu0 0
    %542 = vmatprep.subr.bf16.mxu0 0
    %543 = vmatpush1.bf16.msra.mxu0 0
    %544 = vmatprep.subr.bf16.mxu0 0
    %545 = vmatpush1.bf16.msra.mxu0 0
    %546 = vmatprep.subr.bf16.mxu0 0
    %547 = vmatpush1.bf16.msra.mxu0 0
    %548 = vmatprep.subr.bf16.mxu0 0
    %549 = vmatpush1.bf16.msra.mxu0 %v527
    %550 = vmatprep.subr.bf16.mxu0 0
    %551 = vmatpush1.bf16.msra.mxu0 %v526
    %552 = vmatprep.subr.bf16.mxu0 0
    %553 = vmatpush2.bf16.msra.mxu0 0
    %554 = vmatprep.subr.bf16.mxu0 0
    %555 = vmatpush2.bf16.msra.mxu0 0
    %556 = vmatprep.subr.bf16.mxu0 0
    %557 = vmatpush2.bf16.msra.mxu0 0
    %558 = vmatprep.subr.bf16.mxu0 0
    %559 = vmatpush2.bf16.msra.mxu0 0
    %560 = vmatprep.subr.bf16.mxu0 0
    %561 = vmatpush2.bf16.msra.mxu0 0
    %562 = vmatprep.subr.bf16.mxu0 0
    %563 = vmatpush2.bf16.msra.mxu0 0
    %564 = vmatprep.subr.bf16.mxu0 0
    %565 = vmatpush2.bf16.msra.mxu0 0
    %566 = vmatprep.subr.bf16.mxu0 0
    %567 = vmatpush2.bf16.msra.mxu0 0
    %568 = vmatprep.mubr.bf16.mxu0 0
    %569 = vmatmul.mubr.bf16.gmra.mxu0 %v531
    %v570 = vpop.f32.mrf.mxu0
    %v571 = vadd.f32 %v516, %v570
    %v572 = vpop.f32.mrf.mxu0
    %v573 = vpop.f32.mrf.mxu0
    %v574 = vadd.f32 %v516, %v573
    %v575 = vpop.f32.mrf.mxu0
    %576 = vmatprep.mubr.bf16.mxu0 0
    %577 = vmatmul.mubr.bf16.gmra.mxu0 %v534
    %v578 = vpop.f32.mrf.mxu0
    %v579 = vadd.f32 %v516, %v578
    %v580 = vpop.f32.mrf.mxu0
    %v581 = vpop.f32.mrf.mxu0
    %v582 = vadd.f32 %v516, %v581
    %v583 = vpop.f32.mrf.mxu0
    %584 = vdwg.mxu0
    %v585 = vpack.c.bf16 %v198, %v197
    %v587 = vsel %vm203, %v585, 0
    %589 = vmatprep.subr.bf16.mxu0 0
    %590 = vmatpush1.bf16.msra.mxu0 0
    %591 = vmatprep.subr.bf16.mxu0 0
    %592 = vmatpush1.bf16.msra.mxu0 0
    %593 = vmatprep.subr.bf16.mxu0 0
    %594 = vmatpush1.bf16.msra.mxu0 0
    %595 = vmatprep.subr.bf16.mxu0 0
    %596 = vmatpush1.bf16.msra.mxu0 0
    %597 = vmatprep.subr.bf16.mxu0 0
    %598 = vmatpush1.bf16.msra.mxu0 0
    %599 = vmatprep.subr.bf16.mxu0 0
    %600 = vmatpush1.bf16.msra.mxu0 0
    %601 = vmatprep.subr.bf16.mxu0 0
    %602 = vmatpush1.bf16.msra.mxu0 %v527
    %603 = vmatprep.subr.bf16.mxu0 0
    %604 = vmatpush1.bf16.msra.mxu0 %v526
    %605 = vmatprep.subr.bf16.mxu0 0
    %606 = vmatpush2.bf16.msra.mxu0 0
    %607 = vmatprep.subr.bf16.mxu0 0
    %608 = vmatpush2.bf16.msra.mxu0 0
    %609 = vmatprep.subr.bf16.mxu0 0
    %610 = vmatpush2.bf16.msra.mxu0 0
    %611 = vmatprep.subr.bf16.mxu0 0
    %612 = vmatpush2.bf16.msra.mxu0 0
    %613 = vmatprep.subr.bf16.mxu0 0
    %614 = vmatpush2.bf16.msra.mxu0 0
    %615 = vmatprep.subr.bf16.mxu0 0
    %616 = vmatpush2.bf16.msra.mxu0 0
    %617 = vmatprep.subr.bf16.mxu0 0
    %618 = vmatpush2.bf16.msra.mxu0 0
    %619 = vmatprep.subr.bf16.mxu0 0
    %620 = vmatpush2.bf16.msra.mxu0 0
    %621 = vmatprep.mubr.bf16.mxu0 0
    %622 = vmatmul.mubr.bf16.gmra.mxu0 %v587
    %v623 = vpop.f32.mrf.mxu0
    %v624 = vadd.f32 %v516, %v623
    %v625 = vpop.f32.mrf.mxu0
    %v626 = vpop.f32.mrf.mxu0
    %v627 = vadd.f32 %v516, %v626
    %v628 = vpop.f32.mrf.mxu0
    %629 = vdwg.mxu0
    %632 = vrot.lane.b32.xlu0 %v571, 96
    %v633 = vpop.permute.xlu0 %632
    %634 = vrot.lane.b32.xlu0 %v574, 96
    %v635 = vpop.permute.xlu0 %634
    %vm636 = vcmask 64512
    %v638 = vsel %vm636, %v624, 0
    %v640 = vsel %vm636, %v633, 0
    %v642 = vsel %vm636, %v635, 0
    %644 = vmatprep.subr.mxu0 0.0
    %645 = vmatpush1.xpose.msra.mxu0 0.0
    %646 = vmatprep.subr.mxu0 0.0
    %647 = vmatpush1.xpose.msra.mxu0 0.0
    %648 = vmatprep.subr.mxu0 0.0
    %649 = vmatpush1.xpose.msra.mxu0 0.0
    %650 = vmatprep.subr.mxu0 0.0
    %651 = vmatpush1.xpose.msra.mxu0 0.0
    %652 = vmatprep.subr.mxu0 0.0
    %653 = vmatpush1.xpose.msra.mxu0 0.0
    %654 = vmatprep.subr.mxu0 0.0
    %655 = vmatpush1.xpose.msra.mxu0 0.0
    %656 = vmatprep.subr.mxu0 0.0
    %657 = vmatpush1.xpose.msra.mxu0 0.0
    %658 = vmatprep.subr.mxu0 0.0
    %659 = vmatpush1.xpose.msra.mxu0 0.0
    %660 = vmatprep.subr.mxu0 0.0
    %661 = vmatpush1.xpose.msra.mxu0 0.0
    %662 = vmatprep.subr.mxu0 0.0
    %663 = vmatpush1.xpose.msra.mxu0 0.0
    %664 = vmatprep.subr.mxu0 0.0
    %665 = vmatpush1.xpose.msra.mxu0 0.0
    %666 = vmatprep.subr.mxu0 0.0
    %667 = vmatpush1.xpose.msra.mxu0 0.0
    %668 = vmatprep.subr.mxu0 0.0
    %669 = vmatpush1.xpose.msra.mxu0 0.0
    %670 = vmatprep.subr.mxu0 0.0
    %671 = vmatpush1.xpose.msra.mxu0 0.0
    %672 = vmatprep.subr.mxu0 0.0
    %673 = vmatpush1.xpose.msra.mxu0 %v642
    %674 = vmatprep.subr.mxu0 0.0
    %675 = vmatpush1.xpose.msra.mxu0 %v640
    %676 = vmatprep.subr.mxu0 0.0
    %677 = vmatpush2.xpose.msra.mxu0 0.0
    %678 = vmatprep.subr.mxu0 0.0
    %679 = vmatpush2.xpose.msra.mxu0 0.0
    %680 = vmatprep.subr.mxu0 0.0
    %681 = vmatpush2.xpose.msra.mxu0 0.0
    %682 = vmatprep.subr.mxu0 0.0
    %683 = vmatpush2.xpose.msra.mxu0 0.0
    %684 = vmatprep.subr.mxu0 0.0
    %685 = vmatpush2.xpose.msra.mxu0 0.0
    %686 = vmatprep.subr.mxu0 0.0
    %687 = vmatpush2.xpose.msra.mxu0 0.0
    %688 = vmatprep.subr.mxu0 0.0
    %689 = vmatpush2.xpose.msra.mxu0 0.0
    %690 = vmatprep.subr.mxu0 0.0
    %691 = vmatpush2.xpose.msra.mxu0 0.0
    %692 = vmatprep.subr.mxu0 0.0
    %693 = vmatpush2.xpose.msra.mxu0 0.0
    %694 = vmatprep.subr.mxu0 0.0
    %695 = vmatpush2.xpose.msra.mxu0 0.0
    %696 = vmatprep.subr.mxu0 0.0
    %697 = vmatpush2.xpose.msra.mxu0 0.0
    %698 = vmatprep.subr.mxu0 0.0
    %699 = vmatpush2.xpose.msra.mxu0 0.0
    %700 = vmatprep.subr.mxu0 0.0
    %701 = vmatpush2.xpose.msra.mxu0 0.0
    %702 = vmatprep.subr.mxu0 0.0
    %703 = vmatpush2.xpose.msra.mxu0 0.0
    %704 = vmatprep.subr.mxu0 0.0
    %705 = vmatpush2.xpose.msra.mxu0 0.0
    %706 = vmatprep.subr.mxu0 0.0
    %707 = vmatpush2.xpose.msra.mxu0 0.0
    %708 = vmatprep.mubr.f32.mxu0 0.0
    %709 = vmatmul.mubr.f32.gmra.mxu0 %v638
    %v710 = vpop.f32.mrf.mxu0
    %v711 = vadd.f32 0.0, %v710
    %v712 = vpop.f32.mrf.mxu0
    %713 = vdwg.mxu0
    %716 = vrot.lane.b32.xlu0 %v579, 96
    %v717 = vpop.permute.xlu0 %716
    %718 = vrot.lane.b32.xlu0 %v582, 96
    %v719 = vpop.permute.xlu0 %718
    %v721 = vsel %vm636, %v627, 0
    %v723 = vsel %vm636, %v717, 0
    %v725 = vsel %vm636, %v719, 0
    %727 = vmatprep.subr.mxu0 0.0
    %728 = vmatpush1.xpose.msra.mxu0 0.0
    %729 = vmatprep.subr.mxu0 0.0
    %730 = vmatpush1.xpose.msra.mxu0 0.0
    %731 = vmatprep.subr.mxu0 0.0
    %732 = vmatpush1.xpose.msra.mxu0 0.0
    %733 = vmatprep.subr.mxu0 0.0
    %734 = vmatpush1.xpose.msra.mxu0 0.0
    %735 = vmatprep.subr.mxu0 0.0
    %736 = vmatpush1.xpose.msra.mxu0 0.0
    %737 = vmatprep.subr.mxu0 0.0
    %738 = vmatpush1.xpose.msra.mxu0 0.0
    %739 = vmatprep.subr.mxu0 0.0
    %740 = vmatpush1.xpose.msra.mxu0 0.0
    %741 = vmatprep.subr.mxu0 0.0
    %742 = vmatpush1.xpose.msra.mxu0 0.0
    %743 = vmatprep.subr.mxu0 0.0
    %744 = vmatpush1.xpose.msra.mxu0 0.0
    %745 = vmatprep.subr.mxu0 0.0
    %746 = vmatpush1.xpose.msra.mxu0 0.0
    %747 = vmatprep.subr.mxu0 0.0
    %748 = vmatpush1.xpose.msra.mxu0 0.0
    %749 = vmatprep.subr.mxu0 0.0
    %750 = vmatpush1.xpose.msra.mxu0 0.0
    %751 = vmatprep.subr.mxu0 0.0
    %752 = vmatpush1.xpose.msra.mxu0 0.0
    %753 = vmatprep.subr.mxu0 0.0
    %754 = vmatpush1.xpose.msra.mxu0 0.0
    %755 = vmatprep.subr.mxu0 0.0
    %756 = vmatpush1.xpose.msra.mxu0 %v725
    %757 = vmatprep.subr.mxu0 0.0
    %758 = vmatpush1.xpose.msra.mxu0 %v723
    %759 = vmatprep.subr.mxu0 0.0
    %760 = vmatpush2.xpose.msra.mxu0 0.0
    %761 = vmatprep.subr.mxu0 0.0
    %762 = vmatpush2.xpose.msra.mxu0 0.0
    %763 = vmatprep.subr.mxu0 0.0
    %764 = vmatpush2.xpose.msra.mxu0 0.0
    %765 = vmatprep.subr.mxu0 0.0
    %766 = vmatpush2.xpose.msra.mxu0 0.0
    %767 = vmatprep.subr.mxu0 0.0
    %768 = vmatpush2.xpose.msra.mxu0 0.0
    %769 = vmatprep.subr.mxu0 0.0
    %770 = vmatpush2.xpose.msra.mxu0 0.0
    %771 = vmatprep.subr.mxu0 0.0
    %772 = vmatpush2.xpose.msra.mxu0 0.0
    %773 = vmatprep.subr.mxu0 0.0
    %774 = vmatpush2.xpose.msra.mxu0 0.0
    %775 = vmatprep.subr.mxu0 0.0
    %776 = vmatpush2.xpose.msra.mxu0 0.0
    %777 = vmatprep.subr.mxu0 0.0
    %778 = vmatpush2.xpose.msra.mxu0 0.0
    %779 = vmatprep.subr.mxu0 0.0
    %780 = vmatpush2.xpose.msra.mxu0 0.0
    %781 = vmatprep.subr.mxu0 0.0
    %782 = vmatpush2.xpose.msra.mxu0 0.0
    %783 = vmatprep.subr.mxu0 0.0
    %784 = vmatpush2.xpose.msra.mxu0 0.0
    %785 = vmatprep.subr.mxu0 0.0
    %786 = vmatpush2.xpose.msra.mxu0 0.0
    %787 = vmatprep.subr.mxu0 0.0
    %788 = vmatpush2.xpose.msra.mxu0 0.0
    %789 = vmatprep.subr.mxu0 0.0
    %790 = vmatpush2.xpose.msra.mxu0 0.0
    %791 = vmatprep.mubr.f32.mxu0 0.0
    %792 = vmatmul.mubr.f32.gmra.mxu0 %v721
    %v793 = vpop.f32.mrf.mxu0
    %v794 = vadd.f32 0.0, %v793
    %v795 = vpop.f32.mrf.mxu0
    %796 = vdwg.mxu0
    %v797 = vmul.f32 %v711, 0.35355338
    %v798 = vmul.f32 %v794, 0.35355338
    %v799 = vsel %vm318, %v797, -inf
    %800 = vmax.xlane.f32.xlu0 %v799
    %v801 = vpop.xlane.xlu0 %800
    %v802 = vsel %vm318, %v798, -inf
    %803 = vmax.xlane.f32.xlu0 %v802
    %v804 = vpop.xlane.xlu0 %803
    %v805 = vsub.f32 %v797, %v801
    %v806 = vsub.f32 %v798, %v804
    %v807 = vmul.f32 %v805, 1.442695
    %v808 = vpow.pop %v807
    %v809 = vmul.f32 %v806, 1.442695
    %v810 = vpow.pop %v809
    %v811 = vsel %vm318, %v808, 0.0
    %812 = vadd.xlane.f32.xlu0 %v811
    %v813 = vpop.xlane.xlu0 %812
    %v814 = vsel %vm318, %v810, 0.0
    %815 = vadd.xlane.f32.xlu0 %v814
    %v816 = vpop.xlane.xlu0 %815
    %v817 = vrcp.pop %v813
    %v818 = vrcp.pop %v816
    %v819 = vmul.f32 %v808, %v817
    %v820 = vmul.f32 %v810, %v818
    %821 = vrot.lane.b32.xlu0 %v571, 64
    %v822 = vpop.permute.xlu0 %821
    %823 = vrot.lane.b32.xlu0 %v574, 64
    %v824 = vpop.permute.xlu0 %823
    %v828 = vsel %vm318, %v819, 0
    %830 = vmatprep.subr.mxu0 0.0
    %831 = vmatpush1.msra.mxu0 0.0
    %832 = vmatprep.subr.mxu0 0.0
    %833 = vmatpush1.msra.mxu0 0.0
    %834 = vmatprep.subr.mxu0 0.0
    %835 = vmatpush1.msra.mxu0 0.0
    %836 = vmatprep.subr.mxu0 0.0
    %837 = vmatpush1.msra.mxu0 0.0
    %838 = vmatprep.subr.mxu0 0.0
    %839 = vmatpush1.msra.mxu0 0.0
    %840 = vmatprep.subr.mxu0 0.0
    %841 = vmatpush1.msra.mxu0 0.0
    %842 = vmatprep.subr.mxu0 0.0
    %843 = vmatpush1.msra.mxu0 0.0
    %844 = vmatprep.subr.mxu0 0.0
    %845 = vmatpush1.msra.mxu0 0.0
    %846 = vmatprep.subr.mxu0 0.0
    %847 = vmatpush1.msra.mxu0 0.0
    %848 = vmatprep.subr.mxu0 0.0
    %849 = vmatpush1.msra.mxu0 0.0
    %850 = vmatprep.subr.mxu0 0.0
    %851 = vmatpush1.msra.mxu0 0.0
    %852 = vmatprep.subr.mxu0 0.0
    %853 = vmatpush1.msra.mxu0 0.0
    %854 = vmatprep.subr.mxu0 0.0
    %855 = vmatpush1.msra.mxu0 0.0
    %856 = vmatprep.subr.mxu0 0.0
    %857 = vmatpush1.msra.mxu0 0.0
    %858 = vmatprep.subr.mxu0 0.0
    %859 = vmatpush1.msra.mxu0 %v824
    %860 = vmatprep.subr.mxu0 0.0
    %861 = vmatpush1.msra.mxu0 %v822
    %862 = vmatprep.subr.mxu0 0.0
    %863 = vmatpush2.msra.mxu0 0.0
    %864 = vmatprep.subr.mxu0 0.0
    %865 = vmatpush2.msra.mxu0 0.0
    %866 = vmatprep.subr.mxu0 0.0
    %867 = vmatpush2.msra.mxu0 0.0
    %868 = vmatprep.subr.mxu0 0.0
    %869 = vmatpush2.msra.mxu0 0.0
    %870 = vmatprep.subr.mxu0 0.0
    %871 = vmatpush2.msra.mxu0 0.0
    %872 = vmatprep.subr.mxu0 0.0
    %873 = vmatpush2.msra.mxu0 0.0
    %874 = vmatprep.subr.mxu0 0.0
    %875 = vmatpush2.msra.mxu0 0.0
    %876 = vmatprep.subr.mxu0 0.0
    %877 = vmatpush2.msra.mxu0 0.0
    %878 = vmatprep.subr.mxu0 0.0
    %879 = vmatpush2.msra.mxu0 0.0
    %880 = vmatprep.subr.mxu0 0.0
    %881 = vmatpush2.msra.mxu0 0.0
    %882 = vmatprep.subr.mxu0 0.0
    %883 = vmatpush2.msra.mxu0 0.0
    %884 = vmatprep.subr.mxu0 0.0
    %885 = vmatpush2.msra.mxu0 0.0
    %886 = vmatprep.subr.mxu0 0.0
    %887 = vmatpush2.msra.mxu0 0.0
    %888 = vmatprep.subr.mxu0 0.0
    %889 = vmatpush2.msra.mxu0 0.0
    %890 = vmatprep.subr.mxu0 0.0
    %891 = vmatpush2.msra.mxu0 0.0
    %892 = vmatprep.subr.mxu0 0.0
    %893 = vmatpush2.msra.mxu0 0.0
    %894 = vmatprep.mubr.f32.mxu0 0.0
    %895 = vmatmul.mubr.f32.gmra.mxu0 %v828
    %v896 = vpop.f32.mrf.mxu0
    %v897 = vadd.f32 0.0, %v896
    %v898 = vpop.f32.mrf.mxu0
    %899 = vdwg.mxu0
    %900 = vrot.lane.b32.xlu0 %v579, 64
    %v901 = vpop.permute.xlu0 %900
    %902 = vrot.lane.b32.xlu0 %v582, 64
    %v903 = vpop.permute.xlu0 %902
    %v907 = vsel %vm318, %v820, 0
    %909 = vmatprep.subr.mxu0 0.0
    %910 = vmatpush1.msra.mxu0 0.0
    %911 = vmatprep.subr.mxu0 0.0
    %912 = vmatpush1.msra.mxu0 0.0
    %913 = vmatprep.subr.mxu0 0.0
    %914 = vmatpush1.msra.mxu0 0.0
    %915 = vmatprep.subr.mxu0 0.0
    %916 = vmatpush1.msra.mxu0 0.0
    %917 = vmatprep.subr.mxu0 0.0
    %918 = vmatpush1.msra.mxu0 0.0
    %919 = vmatprep.subr.mxu0 0.0
    %920 = vmatpush1.msra.mxu0 0.0
    %921 = vmatprep.subr.mxu0 0.0
    %922 = vmatpush1.msra.mxu0 0.0
    %923 = vmatprep.subr.mxu0 0.0
    %924 = vmatpush1.msra.mxu0 0.0
    %925 = vmatprep.subr.mxu0 0.0
    %926 = vmatpush1.msra.mxu0 0.0
    %927 = vmatprep.subr.mxu0 0.0
    %928 = vmatpush1.msra.mxu0 0.0
    %929 = vmatprep.subr.mxu0 0.0
    %930 = vmatpush1.msra.mxu0 0.0
    %931 = vmatprep.subr.mxu0 0.0
    %932 = vmatpush1.msra.mxu0 0.0
    %933 = vmatprep.subr.mxu0 0.0
    %934 = vmatpush1.msra.mxu0 0.0
    %935 = vmatprep.subr.mxu0 0.0
    %936 = vmatpush1.msra.mxu0 0.0
    %937 = vmatprep.subr.mxu0 0.0
    %938 = vmatpush1.msra.mxu0 %v903
    %939 = vmatprep.subr.mxu0 0.0
    %940 = vmatpush1.msra.mxu0 %v901
    %941 = vmatprep.subr.mxu0 0.0
    %942 = vmatpush2.msra.mxu0 0.0
    %943 = vmatprep.subr.mxu0 0.0
    %944 = vmatpush2.msra.mxu0 0.0
    %945 = vmatprep.subr.mxu0 0.0
    %946 = vmatpush2.msra.mxu0 0.0
    %947 = vmatprep.subr.mxu0 0.0
    %948 = vmatpush2.msra.mxu0 0.0
    %949 = vmatprep.subr.mxu0 0.0
    %950 = vmatpush2.msra.mxu0 0.0
    %951 = vmatprep.subr.mxu0 0.0
    %952 = vmatpush2.msra.mxu0 0.0
    %953 = vmatprep.subr.mxu0 0.0
    %954 = vmatpush2.msra.mxu0 0.0
    %955 = vmatprep.subr.mxu0 0.0
    %956 = vmatpush2.msra.mxu0 0.0
    %957 = vmatprep.subr.mxu0 0.0
    %958 = vmatpush2.msra.mxu0 0.0
    %959 = vmatprep.subr.mxu0 0.0
    %960 = vmatpush2.msra.mxu0 0.0
    %961 = vmatprep.subr.mxu0 0.0
    %962 = vmatpush2.msra.mxu0 0.0
    %963 = vmatprep.subr.mxu0 0.0
    %964 = vmatpush2.msra.mxu0 0.0
    %965 = vmatprep.subr.mxu0 0.0
    %966 = vmatpush2.msra.mxu0 0.0
    %967 = vmatprep.subr.mxu0 0.0
    %968 = vmatpush2.msra.mxu0 0.0
    %969 = vmatprep.subr.mxu0 0.0
    %970 = vmatpush2.msra.mxu0 0.0
    %971 = vmatprep.subr.mxu0 0.0
    %972 = vmatpush2.msra.mxu0 0.0
    %973 = vmatprep.mubr.f32.mxu0 0.0
    %974 = vmatmul.mubr.f32.gmra.mxu0 %v907
    %v975 = vpop.f32.mrf.mxu0
    %v976 = vadd.f32 0.0, %v975
    %v977 = vpop.f32.mrf.mxu0
    %978 = vdwg.mxu0
    %979 = vrot.lane.b32.xlu0 %v624, 120
    %v980 = vpop.permute.xlu0 %979
    %981 = vrot.lane.b32.xlu0 %v571, 88
    %v982 = vpop.permute.xlu0 %981
    %983 = vrot.lane.b32.xlu0 %v574, 88
    %v984 = vpop.permute.xlu0 %983
    %v985 = vsel %vm636, %v980, 0
    %v987 = vsel %vm636, %v982, 0
    %v989 = vsel %vm636, %v984, 0
    %991 = vmatprep.subr.mxu0 0.0
    %992 = vmatpush1.xpose.msra.mxu0 0.0
    %993 = vmatprep.subr.mxu0 0.0
    %994 = vmatpush1.xpose.msra.mxu0 0.0
    %995 = vmatprep.subr.mxu0 0.0
    %996 = vmatpush1.xpose.msra.mxu0 0.0
    %997 = vmatprep.subr.mxu0 0.0
    %998 = vmatpush1.xpose.msra.mxu0 0.0
    %999 = vmatprep.subr.mxu0 0.0
    %1000 = vmatpush1.xpose.msra.mxu0 0.0
    %1001 = vmatprep.subr.mxu0 0.0
    %1002 = vmatpush1.xpose.msra.mxu0 0.0
    %1003 = vmatprep.subr.mxu0 0.0
    %1004 = vmatpush1.xpose.msra.mxu0 0.0
    %1005 = vmatprep.subr.mxu0 0.0
    %1006 = vmatpush1.xpose.msra.mxu0 0.0
    %1007 = vmatprep.subr.mxu0 0.0
    %1008 = vmatpush1.xpose.msra.mxu0 0.0
    %1009 = vmatprep.subr.mxu0 0.0
    %1010 = vmatpush1.xpose.msra.mxu0 0.0
    %1011 = vmatprep.subr.mxu0 0.0
    %1012 = vmatpush1.xpose.msra.mxu0 0.0
    %1013 = vmatprep.subr.mxu0 0.0
    %1014 = vmatpush1.xpose.msra.mxu0 0.0
    %1015 = vmatprep.subr.mxu0 0.0
    %1016 = vmatpush1.xpose.msra.mxu0 0.0
    %1017 = vmatprep.subr.mxu0 0.0
    %1018 = vmatpush1.xpose.msra.mxu0 0.0
    %1019 = vmatprep.subr.mxu0 0.0
    %1020 = vmatpush1.xpose.msra.mxu0 %v989
    %1021 = vmatprep.subr.mxu0 0.0
    %1022 = vmatpush1.xpose.msra.mxu0 %v987
    %1023 = vmatprep.subr.mxu0 0.0
    %1024 = vmatpush2.xpose.msra.mxu0 0.0
    %1025 = vmatprep.subr.mxu0 0.0
    %1026 = vmatpush2.xpose.msra.mxu0 0.0
    %1027 = vmatprep.subr.mxu0 0.0
    %1028 = vmatpush2.xpose.msra.mxu0 0.0
    %1029 = vmatprep.subr.mxu0 0.0
    %1030 = vmatpush2.xpose.msra.mxu0 0.0
    %1031 = vmatprep.subr.mxu0 0.0
    %1032 = vmatpush2.xpose.msra.mxu0 0.0
    %1033 = vmatprep.subr.mxu0 0.0
    %1034 = vmatpush2.xpose.msra.mxu0 0.0
    %1035 = vmatprep.subr.mxu0 0.0
    %1036 = vmatpush2.xpose.msra.mxu0 0.0
    %1037 = vmatprep.subr.mxu0 0.0
    %1038 = vmatpush2.xpose.msra.mxu0 0.0
    %1039 = vmatprep.subr.mxu0 0.0
    %1040 = vmatpush2.xpose.msra.mxu0 0.0
    %1041 = vmatprep.subr.mxu0 0.0
    %1042 = vmatpush2.xpose.msra.mxu0 0.0
    %1043 = vmatprep.subr.mxu0 0.0
    %1044 = vmatpush2.xpose.msra.mxu0 0.0
    %1045 = vmatprep.subr.mxu0 0.0
    %1046 = vmatpush2.xpose.msra.mxu0 0.0
    %1047 = vmatprep.subr.mxu0 0.0
    %1048 = vmatpush2.xpose.msra.mxu0 0.0
    %1049 = vmatprep.subr.mxu0 0.0
    %1050 = vmatpush2.xpose.msra.mxu0 0.0
    %1051 = vmatprep.subr.mxu0 0.0
    %1052 = vmatpush2.xpose.msra.mxu0 0.0
    %1053 = vmatprep.subr.mxu0 0.0
    %1054 = vmatpush2.xpose.msra.mxu0 0.0
    %1055 = vmatprep.mubr.f32.mxu0 0.0
    %1056 = vmatmul.mubr.f32.gmra.mxu0 %v985
    %v1057 = vpop.f32.mrf.mxu0
    %v1058 = vadd.f32 0.0, %v1057
    %v1059 = vpop.f32.mrf.mxu0
    %1060 = vdwg.mxu0
    %1061 = vrot.lane.b32.xlu0 %v627, 120
    %v1062 = vpop.permute.xlu0 %1061
    %1063 = vrot.lane.b32.xlu0 %v579, 88
    %v1064 = vpop.permute.xlu0 %1063
    %1065 = vrot.lane.b32.xlu0 %v582, 88
    %v1066 = vpop.permute.xlu0 %1065
    %v1067 = vsel %vm636, %v1062, 0
    %v1069 = vsel %vm636, %v1064, 0
    %v1071 = vsel %vm636, %v1066, 0
    %1073 = vmatprep.subr.mxu0 0.0
    %1074 = vmatpush1.xpose.msra.mxu0 0.0
    %1075 = vmatprep.subr.mxu0 0.0
    %1076 = vmatpush1.xpose.msra.mxu0 0.0
    %1077 = vmatprep.subr.mxu0 0.0
    %1078 = vmatpush1.xpose.msra.mxu0 0.0
    %1079 = vmatprep.subr.mxu0 0.0
    %1080 = vmatpush1.xpose.msra.mxu0 0.0
    %1081 = vmatprep.subr.mxu0 0.0
    %1082 = vmatpush1.xpose.msra.mxu0 0.0
    %1083 = vmatprep.subr.mxu0 0.0
    %1084 = vmatpush1.xpose.msra.mxu0 0.0
    %1085 = vmatprep.subr.mxu0 0.0
    %1086 = vmatpush1.xpose.msra.mxu0 0.0
    %1087 = vmatprep.subr.mxu0 0.0
    %1088 = vmatpush1.xpose.msra.mxu0 0.0
    %1089 = vmatprep.subr.mxu0 0.0
    %1090 = vmatpush1.xpose.msra.mxu0 0.0
    %1091 = vmatprep.subr.mxu0 0.0
    %1092 = vmatpush1.xpose.msra.mxu0 0.0
    %1093 = vmatprep.subr.mxu0 0.0
    %1094 = vmatpush1.xpose.msra.mxu0 0.0
    %1095 = vmatprep.subr.mxu0 0.0
    %1096 = vmatpush1.xpose.msra.mxu0 0.0
    %1097 = vmatprep.subr.mxu0 0.0
    %1098 = vmatpush1.xpose.msra.mxu0 0.0
    %1099 = vmatprep.subr.mxu0 0.0
    %1100 = vmatpush1.xpose.msra.mxu0 0.0
    %1101 = vmatprep.subr.mxu0 0.0
    %1102 = vmatpush1.xpose.msra.mxu0 %v1071
    %1103 = vmatprep.subr.mxu0 0.0
    %1104 = vmatpush1.xpose.msra.mxu0 %v1069
    %1105 = vmatprep.subr.mxu0 0.0
    %1106 = vmatpush2.xpose.msra.mxu0 0.0
    %1107 = vmatprep.subr.mxu0 0.0
    %1108 = vmatpush2.xpose.msra.mxu0 0.0
    %1109 = vmatprep.subr.mxu0 0.0
    %1110 = vmatpush2.xpose.msra.mxu0 0.0
    %1111 = vmatprep.subr.mxu0 0.0
    %1112 = vmatpush2.xpose.msra.mxu0 0.0
    %1113 = vmatprep.subr.mxu0 0.0
    %1114 = vmatpush2.xpose.msra.mxu0 0.0
    %1115 = vmatprep.subr.mxu0 0.0
    %1116 = vmatpush2.xpose.msra.mxu0 0.0
    %1117 = vmatprep.subr.mxu0 0.0
    %1118 = vmatpush2.xpose.msra.mxu0 0.0
    %1119 = vmatprep.subr.mxu0 0.0
    %1120 = vmatpush2.xpose.msra.mxu0 0.0
    %1121 = vmatprep.subr.mxu0 0.0
    %1122 = vmatpush2.xpose.msra.mxu0 0.0
    %1123 = vmatprep.subr.mxu0 0.0
    %1124 = vmatpush2.xpose.msra.mxu0 0.0
    %1125 = vmatprep.subr.mxu0 0.0
    %1126 = vmatpush2.xpose.msra.mxu0 0.0
    %1127 = vmatprep.subr.mxu0 0.0
    %1128 = vmatpush2.xpose.msra.mxu0 0.0
    %1129 = vmatprep.subr.mxu0 0.0
    %1130 = vmatpush2.xpose.msra.mxu0 0.0
    %1131 = vmatprep.subr.mxu0 0.0
    %1132 = vmatpush2.xpose.msra.mxu0 0.0
    %1133 = vmatprep.subr.mxu0 0.0
    %1134 = vmatpush2.xpose.msra.mxu0 0.0
    %1135 = vmatprep.subr.mxu0 0.0
    %1136 = vmatpush2.xpose.msra.mxu0 0.0
    %1137 = vmatprep.mubr.f32.mxu0 0.0
    %1138 = vmatmul.mubr.f32.gmra.mxu0 %v1067
    %v1139 = vpop.f32.mrf.mxu0
    %v1140 = vadd.f32 0.0, %v1139
    %v1141 = vpop.f32.mrf.mxu0
    %1142 = vdwg.mxu0
    %v1143 = vmul.f32 %v1058, 0.35355338
    %v1144 = vmul.f32 %v1140, 0.35355338
    %v1145 = vsel %vm318, %v1143, -inf
    %1146 = vmax.xlane.f32.xlu0 %v1145
    %v1147 = vpop.xlane.xlu0 %1146
    %v1148 = vsel %vm318, %v1144, -inf
    %1149 = vmax.xlane.f32.xlu0 %v1148
    %v1150 = vpop.xlane.xlu0 %1149
    %v1151 = vsub.f32 %v1143, %v1147
    %v1152 = vsub.f32 %v1144, %v1150
    %v1153 = vmul.f32 %v1151, 1.442695
    %v1154 = vpow.pop %v1153
    %v1155 = vmul.f32 %v1152, 1.442695
    %v1156 = vpow.pop %v1155
    %v1157 = vsel %vm318, %v1154, 0.0
    %1158 = vadd.xlane.f32.xlu0 %v1157
    %v1159 = vpop.xlane.xlu0 %1158
    %v1160 = vsel %vm318, %v1156, 0.0
    %1161 = vadd.xlane.f32.xlu0 %v1160
    %v1162 = vpop.xlane.xlu0 %1161
    %v1163 = vrcp.pop %v1159
    %v1164 = vrcp.pop %v1162
    %v1165 = vmul.f32 %v1154, %v1163
    %v1166 = vmul.f32 %v1156, %v1164
    %1167 = vrot.lane.b32.xlu0 %v571, 56
    %v1168 = vpop.permute.xlu0 %1167
    %1169 = vrot.lane.b32.xlu0 %v574, 56
    %v1170 = vpop.permute.xlu0 %1169
    %v1174 = vsel %vm318, %v1165, 0
    %1176 = vmatprep.subr.mxu0 0.0
    %1177 = vmatpush1.msra.mxu0 0.0
    %1178 = vmatprep.subr.mxu0 0.0
    %1179 = vmatpush1.msra.mxu0 0.0
    %1180 = vmatprep.subr.mxu0 0.0
    %1181 = vmatpush1.msra.mxu0 0.0
    %1182 = vmatprep.subr.mxu0 0.0
    %1183 = vmatpush1.msra.mxu0 0.0
    %1184 = vmatprep.subr.mxu0 0.0
    %1185 = vmatpush1.msra.mxu0 0.0
    %1186 = vmatprep.subr.mxu0 0.0
    %1187 = vmatpush1.msra.mxu0 0.0
    %1188 = vmatprep.subr.mxu0 0.0
    %1189 = vmatpush1.msra.mxu0 0.0
    %1190 = vmatprep.subr.mxu0 0.0
    %1191 = vmatpush1.msra.mxu0 0.0
    %1192 = vmatprep.subr.mxu0 0.0
    %1193 = vmatpush1.msra.mxu0 0.0
    %1194 = vmatprep.subr.mxu0 0.0
    %1195 = vmatpush1.msra.mxu0 0.0
    %1196 = vmatprep.subr.mxu0 0.0
    %1197 = vmatpush1.msra.mxu0 0.0
    %1198 = vmatprep.subr.mxu0 0.0
    %1199 = vmatpush1.msra.mxu0 0.0
    %1200 = vmatprep.subr.mxu0 0.0
    %1201 = vmatpush1.msra.mxu0 0.0
    %1202 = vmatprep.subr.mxu0 0.0
    %1203 = vmatpush1.msra.mxu0 0.0
    %1204 = vmatprep.subr.mxu0 0.0
    %1205 = vmatpush1.msra.mxu0 %v1170
    %1206 = vmatprep.subr.mxu0 0.0
    %1207 = vmatpush1.msra.mxu0 %v1168
    %1208 = vmatprep.subr.mxu0 0.0
    %1209 = vmatpush2.msra.mxu0 0.0
    %1210 = vmatprep.subr.mxu0 0.0
    %1211 = vmatpush2.msra.mxu0 0.0
    %1212 = vmatprep.subr.mxu0 0.0
    %1213 = vmatpush2.msra.mxu0 0.0
    %1214 = vmatprep.subr.mxu0 0.0
    %1215 = vmatpush2.msra.mxu0 0.0
    %1216 = vmatprep.subr.mxu0 0.0
    %1217 = vmatpush2.msra.mxu0 0.0
    %1218 = vmatprep.subr.mxu0 0.0
    %1219 = vmatpush2.msra.mxu0 0.0
    %1220 = vmatprep.subr.mxu0 0.0
    %1221 = vmatpush2.msra.mxu0 0.0
    %1222 = vmatprep.subr.mxu0 0.0
    %1223 = vmatpush2.msra.mxu0 0.0
    %1224 = vmatprep.subr.mxu0 0.0
    %1225 = vmatpush2.msra.mxu0 0.0
    %1226 = vmatprep.subr.mxu0 0.0
    %1227 = vmatpush2.msra.mxu0 0.0
    %1228 = vmatprep.subr.mxu0 0.0
    %1229 = vmatpush2.msra.mxu0 0.0
    %1230 = vmatprep.subr.mxu0 0.0
    %1231 = vmatpush2.msra.mxu0 0.0
    %1232 = vmatprep.subr.mxu0 0.0
    %1233 = vmatpush2.msra.mxu0 0.0
    %1234 = vmatprep.subr.mxu0 0.0
    %1235 = vmatpush2.msra.mxu0 0.0
    %1236 = vmatprep.subr.mxu0 0.0
    %1237 = vmatpush2.msra.mxu0 0.0
    %1238 = vmatprep.subr.mxu0 0.0
    %1239 = vmatpush2.msra.mxu0 0.0
    %1240 = vmatprep.mubr.f32.mxu0 0.0
    %1241 = vmatmul.mubr.f32.gmra.mxu0 %v1174
    %v1242 = vpop.f32.mrf.mxu0
    %v1243 = vadd.f32 0.0, %v1242
    %v1244 = vpop.f32.mrf.mxu0
    %1245 = vdwg.mxu0
    %1246 = vrot.lane.b32.xlu0 %v579, 56
    %v1247 = vpop.permute.xlu0 %1246
    %1248 = vrot.lane.b32.xlu0 %v582, 56
    %v1249 = vpop.permute.xlu0 %1248
    %v1253 = vsel %vm318, %v1166, 0
    %1255 = vmatprep.subr.mxu0 0.0
    %1256 = vmatpush1.msra.mxu0 0.0
    %1257 = vmatprep.subr.mxu0 0.0
    %1258 = vmatpush1.msra.mxu0 0.0
    %1259 = vmatprep.subr.mxu0 0.0
    %1260 = vmatpush1.msra.mxu0 0.0
    %1261 = vmatprep.subr.mxu0 0.0
    %1262 = vmatpush1.msra.mxu0 0.0
    %1263 = vmatprep.subr.mxu0 0.0
    %1264 = vmatpush1.msra.mxu0 0.0
    %1265 = vmatprep.subr.mxu0 0.0
    %1266 = vmatpush1.msra.mxu0 0.0
    %1267 = vmatprep.subr.mxu0 0.0
    %1268 = vmatpush1.msra.mxu0 0.0
    %1269 = vmatprep.subr.mxu0 0.0
    %1270 = vmatpush1.msra.mxu0 0.0
    %1271 = vmatprep.subr.mxu0 0.0
    %1272 = vmatpush1.msra.mxu0 0.0
    %1273 = vmatprep.subr.mxu0 0.0
    %1274 = vmatpush1.msra.mxu0 0.0
    %1275 = vmatprep.subr.mxu0 0.0
    %1276 = vmatpush1.msra.mxu0 0.0
    %1277 = vmatprep.subr.mxu0 0.0
    %1278 = vmatpush1.msra.mxu0 0.0
    %1279 = vmatprep.subr.mxu0 0.0
    %1280 = vmatpush1.msra.mxu0 0.0
    %1281 = vmatprep.subr.mxu0 0.0
    %1282 = vmatpush1.msra.mxu0 0.0
    %1283 = vmatprep.subr.mxu0 0.0
    %1284 = vmatpush1.msra.mxu0 %v1249
    %1285 = vmatprep.subr.mxu0 0.0
    %1286 = vmatpush1.msra.mxu0 %v1247
    %1287 = vmatprep.subr.mxu0 0.0
    %1288 = vmatpush2.msra.mxu0 0.0
    %1289 = vmatprep.subr.mxu0 0.0
    %1290 = vmatpush2.msra.mxu0 0.0
    %1291 = vmatprep.subr.mxu0 0.0
    %1292 = vmatpush2.msra.mxu0 0.0
    %1293 = vmatprep.subr.mxu0 0.0
    %1294 = vmatpush2.msra.mxu0 0.0
    %1295 = vmatprep.subr.mxu0 0.0
    %1296 = vmatpush2.msra.mxu0 0.0
    %1297 = vmatprep.subr.mxu0 0.0
    %1298 = vmatpush2.msra.mxu0 0.0
    %1299 = vmatprep.subr.mxu0 0.0
    %1300 = vmatpush2.msra.mxu0 0.0
    %1301 = vmatprep.subr.mxu0 0.0
    %1302 = vmatpush2.msra.mxu0 0.0
    %1303 = vmatprep.subr.mxu0 0.0
    %1304 = vmatpush2.msra.mxu0 0.0
    %1305 = vmatprep.subr.mxu0 0.0
    %1306 = vmatpush2.msra.mxu0 0.0
    %1307 = vmatprep.subr.mxu0 0.0
    %1308 = vmatpush2.msra.mxu0 0.0
    %1309 = vmatprep.subr.mxu0 0.0
    %1310 = vmatpush2.msra.mxu0 0.0
    %1311 = vmatprep.subr.mxu0 0.0
    %1312 = vmatpush2.msra.mxu0 0.0
    %1313 = vmatprep.subr.mxu0 0.0
    %1314 = vmatpush2.msra.mxu0 0.0
    %1315 = vmatprep.subr.mxu0 0.0
    %1316 = vmatpush2.msra.mxu0 0.0
    %1317 = vmatprep.subr.mxu0 0.0
    %1318 = vmatpush2.msra.mxu0 0.0
    %1319 = vmatprep.mubr.f32.mxu0 0.0
    %1320 = vmatmul.mubr.f32.gmra.mxu0 %v1253
    %v1321 = vpop.f32.mrf.mxu0
    %v1322 = vadd.f32 0.0, %v1321
    %v1323 = vpop.f32.mrf.mxu0
    %1324 = vdwg.mxu0
    %1325 = vrot.lane.b32.xlu0 %v624, 112
    %v1326 = vpop.permute.xlu0 %1325
    %1327 = vrot.lane.b32.xlu0 %v571, 80
    %v1328 = vpop.permute.xlu0 %1327
    %1329 = vrot.lane.b32.xlu0 %v574, 80
    %v1330 = vpop.permute.xlu0 %1329
    %v1331 = vsel %vm636, %v1326, 0
    %v1333 = vsel %vm636, %v1328, 0
    %v1335 = vsel %vm636, %v1330, 0
    %1337 = vmatprep.subr.mxu0 0.0
    %1338 = vmatpush1.xpose.msra.mxu0 0.0
    %1339 = vmatprep.subr.mxu0 0.0
    %1340 = vmatpush1.xpose.msra.mxu0 0.0
    %1341 = vmatprep.subr.mxu0 0.0
    %1342 = vmatpush1.xpose.msra.mxu0 0.0
    %1343 = vmatprep.subr.mxu0 0.0
    %1344 = vmatpush1.xpose.msra.mxu0 0.0
    %1345 = vmatprep.subr.mxu0 0.0
    %1346 = vmatpush1.xpose.msra.mxu0 0.0
    %1347 = vmatprep.subr.mxu0 0.0
    %1348 = vmatpush1.xpose.msra.mxu0 0.0
    %1349 = vmatprep.subr.mxu0 0.0
    %1350 = vmatpush1.xpose.msra.mxu0 0.0
    %1351 = vmatprep.subr.mxu0 0.0
    %1352 = vmatpush1.xpose.msra.mxu0 0.0
    %1353 = vmatprep.subr.mxu0 0.0
    %1354 = vmatpush1.xpose.msra.mxu0 0.0
    %1355 = vmatprep.subr.mxu0 0.0
    %1356 = vmatpush1.xpose.msra.mxu0 0.0
    %1357 = vmatprep.subr.mxu0 0.0
    %1358 = vmatpush1.xpose.msra.mxu0 0.0
    %1359 = vmatprep.subr.mxu0 0.0
    %1360 = vmatpush1.xpose.msra.mxu0 0.0
    %1361 = vmatprep.subr.mxu0 0.0
    %1362 = vmatpush1.xpose.msra.mxu0 0.0
    %1363 = vmatprep.subr.mxu0 0.0
    %1364 = vmatpush1.xpose.msra.mxu0 0.0
    %1365 = vmatprep.subr.mxu0 0.0
    %1366 = vmatpush1.xpose.msra.mxu0 %v1335
    %1367 = vmatprep.subr.mxu0 0.0
    %1368 = vmatpush1.xpose.msra.mxu0 %v1333
    %1369 = vmatprep.subr.mxu0 0.0
    %1370 = vmatpush2.xpose.msra.mxu0 0.0
    %1371 = vmatprep.subr.mxu0 0.0
    %1372 = vmatpush2.xpose.msra.mxu0 0.0
    %1373 = vmatprep.subr.mxu0 0.0
    %1374 = vmatpush2.xpose.msra.mxu0 0.0
    %1375 = vmatprep.subr.mxu0 0.0
    %1376 = vmatpush2.xpose.msra.mxu0 0.0
    %1377 = vmatprep.subr.mxu0 0.0
    %1378 = vmatpush2.xpose.msra.mxu0 0.0
    %1379 = vmatprep.subr.mxu0 0.0
    %1380 = vmatpush2.xpose.msra.mxu0 0.0
    %1381 = vmatprep.subr.mxu0 0.0
    %1382 = vmatpush2.xpose.msra.mxu0 0.0
    %1383 = vmatprep.subr.mxu0 0.0
    %1384 = vmatpush2.xpose.msra.mxu0 0.0
    %1385 = vmatprep.subr.mxu0 0.0
    %1386 = vmatpush2.xpose.msra.mxu0 0.0
    %1387 = vmatprep.subr.mxu0 0.0
    %1388 = vmatpush2.xpose.msra.mxu0 0.0
    %1389 = vmatprep.subr.mxu0 0.0
    %1390 = vmatpush2.xpose.msra.mxu0 0.0
    %1391 = vmatprep.subr.mxu0 0.0
    %1392 = vmatpush2.xpose.msra.mxu0 0.0
    %1393 = vmatprep.subr.mxu0 0.0
    %1394 = vmatpush2.xpose.msra.mxu0 0.0
    %1395 = vmatprep.subr.mxu0 0.0
    %1396 = vmatpush2.xpose.msra.mxu0 0.0
    %1397 = vmatprep.subr.mxu0 0.0
    %1398 = vmatpush2.xpose.msra.mxu0 0.0
    %1399 = vmatprep.subr.mxu0 0.0
    %1400 = vmatpush2.xpose.msra.mxu0 0.0
    %1401 = vmatprep.mubr.f32.mxu0 0.0
    %1402 = vmatmul.mubr.f32.gmra.mxu0 %v1331
    %v1403 = vpop.f32.mrf.mxu0
    %v1404 = vadd.f32 0.0, %v1403
    %v1405 = vpop.f32.mrf.mxu0
    %1406 = vdwg.mxu0
    %1407 = vrot.lane.b32.xlu0 %v627, 112
    %v1408 = vpop.permute.xlu0 %1407
    %1409 = vrot.lane.b32.xlu0 %v579, 80
    %v1410 = vpop.permute.xlu0 %1409
    %1411 = vrot.lane.b32.xlu0 %v582, 80
    %v1412 = vpop.permute.xlu0 %1411
    %v1413 = vsel %vm636, %v1408, 0
    %v1415 = vsel %vm636, %v1410, 0
    %v1417 = vsel %vm636, %v1412, 0
    %1419 = vmatprep.subr.mxu0 0.0
    %1420 = vmatpush1.xpose.msra.mxu0 0.0
    %1421 = vmatprep.subr.mxu0 0.0
    %1422 = vmatpush1.xpose.msra.mxu0 0.0
    %1423 = vmatprep.subr.mxu0 0.0
    %1424 = vmatpush1.xpose.msra.mxu0 0.0
    %1425 = vmatprep.subr.mxu0 0.0
    %1426 = vmatpush1.xpose.msra.mxu0 0.0
    %1427 = vmatprep.subr.mxu0 0.0
    %1428 = vmatpush1.xpose.msra.mxu0 0.0
    %1429 = vmatprep.subr.mxu0 0.0
    %1430 = vmatpush1.xpose.msra.mxu0 0.0
    %1431 = vmatprep.subr.mxu0 0.0
    %1432 = vmatpush1.xpose.msra.mxu0 0.0
    %1433 = vmatprep.subr.mxu0 0.0
    %1434 = vmatpush1.xpose.msra.mxu0 0.0
    %1435 = vmatprep.subr.mxu0 0.0
    %1436 = vmatpush1.xpose.msra.mxu0 0.0
    %1437 = vmatprep.subr.mxu0 0.0
    %1438 = vmatpush1.xpose.msra.mxu0 0.0
    %1439 = vmatprep.subr.mxu0 0.0
    %1440 = vmatpush1.xpose.msra.mxu0 0.0
    %1441 = vmatprep.subr.mxu0 0.0
    %1442 = vmatpush1.xpose.msra.mxu0 0.0
    %1443 = vmatprep.subr.mxu0 0.0
    %1444 = vmatpush1.xpose.msra.mxu0 0.0
    %1445 = vmatprep.subr.mxu0 0.0
    %1446 = vmatpush1.xpose.msra.mxu0 0.0
    %1447 = vmatprep.subr.mxu0 0.0
    %1448 = vmatpush1.xpose.msra.mxu0 %v1417
    %1449 = vmatprep.subr.mxu0 0.0
    %1450 = vmatpush1.xpose.msra.mxu0 %v1415
    %1451 = vmatprep.subr.mxu0 0.0
    %1452 = vmatpush2.xpose.msra.mxu0 0.0
    %1453 = vmatprep.subr.mxu0 0.0
    %1454 = vmatpush2.xpose.msra.mxu0 0.0
    %1455 = vmatprep.subr.mxu0 0.0
    %1456 = vmatpush2.xpose.msra.mxu0 0.0
    %1457 = vmatprep.subr.mxu0 0.0
    %1458 = vmatpush2.xpose.msra.mxu0 0.0
    %1459 = vmatprep.subr.mxu0 0.0
    %1460 = vmatpush2.xpose.msra.mxu0 0.0
    %1461 = vmatprep.subr.mxu0 0.0
    %1462 = vmatpush2.xpose.msra.mxu0 0.0
    %1463 = vmatprep.subr.mxu0 0.0
    %1464 = vmatpush2.xpose.msra.mxu0 0.0
    %1465 = vmatprep.subr.mxu0 0.0
    %1466 = vmatpush2.xpose.msra.mxu0 0.0
    %1467 = vmatprep.subr.mxu0 0.0
    %1468 = vmatpush2.xpose.msra.mxu0 0.0
    %1469 = vmatprep.subr.mxu0 0.0
    %1470 = vmatpush2.xpose.msra.mxu0 0.0
    %1471 = vmatprep.subr.mxu0 0.0
    %1472 = vmatpush2.xpose.msra.mxu0 0.0
    %1473 = vmatprep.subr.mxu0 0.0
    %1474 = vmatpush2.xpose.msra.mxu0 0.0
    %1475 = vmatprep.subr.mxu0 0.0
    %1476 = vmatpush2.xpose.msra.mxu0 0.0
    %1477 = vmatprep.subr.mxu0 0.0
    %1478 = vmatpush2.xpose.msra.mxu0 0.0
    %1479 = vmatprep.subr.mxu0 0.0
    %1480 = vmatpush2.xpose.msra.mxu0 0.0
    %1481 = vmatprep.subr.mxu0 0.0
    %1482 = vmatpush2.xpose.msra.mxu0 0.0
    %1483 = vmatprep.mubr.f32.mxu0 0.0
    %1484 = vmatmul.mubr.f32.gmra.mxu0 %v1413
    %v1485 = vpop.f32.mrf.mxu0
    %v1486 = vadd.f32 0.0, %v1485
    %v1487 = vpop.f32.mrf.mxu0
    %1488 = vdwg.mxu0
    %v1489 = vmul.f32 %v1404, 0.35355338
    %v1490 = vmul.f32 %v1486, 0.35355338
    %v1491 = vsel %vm318, %v1489, -inf
    %1492 = vmax.xlane.f32.xlu0 %v1491
    %v1493 = vpop.xlane.xlu0 %1492
    %v1494 = vsel %vm318, %v1490, -inf
    %1495 = vmax.xlane.f32.xlu0 %v1494
    %v1496 = vpop.xlane.xlu0 %1495
    %v1497 = vsub.f32 %v1489, %v1493
    %v1498 = vsub.f32 %v1490, %v1496
    %v1499 = vmul.f32 %v1497, 1.442695
    %v1500 = vpow.pop %v1499
    %v1501 = vmul.f32 %v1498, 1.442695
    %v1502 = vpow.pop %v1501
    %v1503 = vsel %vm318, %v1500, 0.0
    %1504 = vadd.xlane.f32.xlu0 %v1503
    %v1505 = vpop.xlane.xlu0 %1504
    %v1506 = vsel %vm318, %v1502, 0.0
    %1507 = vadd.xlane.f32.xlu0 %v1506
    %v1508 = vpop.xlane.xlu0 %1507
    %v1509 = vrcp.pop %v1505
    %v1510 = vrcp.pop %v1508
    %v1511 = vmul.f32 %v1500, %v1509
    %v1512 = vmul.f32 %v1502, %v1510
    %1513 = vrot.lane.b32.xlu0 %v571, 48
    %v1514 = vpop.permute.xlu0 %1513
    %1515 = vrot.lane.b32.xlu0 %v574, 48
    %v1516 = vpop.permute.xlu0 %1515
    %v1520 = vsel %vm318, %v1511, 0
    %1522 = vmatprep.subr.mxu0 0.0
    %1523 = vmatpush1.msra.mxu0 0.0
    %1524 = vmatprep.subr.mxu0 0.0
    %1525 = vmatpush1.msra.mxu0 0.0
    %1526 = vmatprep.subr.mxu0 0.0
    %1527 = vmatpush1.msra.mxu0 0.0
    %1528 = vmatprep.subr.mxu0 0.0
    %1529 = vmatpush1.msra.mxu0 0.0
    %1530 = vmatprep.subr.mxu0 0.0
    %1531 = vmatpush1.msra.mxu0 0.0
    %1532 = vmatprep.subr.mxu0 0.0
    %1533 = vmatpush1.msra.mxu0 0.0
    %1534 = vmatprep.subr.mxu0 0.0
    %1535 = vmatpush1.msra.mxu0 0.0
    %1536 = vmatprep.subr.mxu0 0.0
    %1537 = vmatpush1.msra.mxu0 0.0
    %1538 = vmatprep.subr.mxu0 0.0
    %1539 = vmatpush1.msra.mxu0 0.0
    %1540 = vmatprep.subr.mxu0 0.0
    %1541 = vmatpush1.msra.mxu0 0.0
    %1542 = vmatprep.subr.mxu0 0.0
    %1543 = vmatpush1.msra.mxu0 0.0
    %1544 = vmatprep.subr.mxu0 0.0
    %1545 = vmatpush1.msra.mxu0 0.0
    %1546 = vmatprep.subr.mxu0 0.0
    %1547 = vmatpush1.msra.mxu0 0.0
    %1548 = vmatprep.subr.mxu0 0.0
    %1549 = vmatpush1.msra.mxu0 0.0
    %1550 = vmatprep.subr.mxu0 0.0
    %1551 = vmatpush1.msra.mxu0 %v1516
    %1552 = vmatprep.subr.mxu0 0.0
    %1553 = vmatpush1.msra.mxu0 %v1514
    %1554 = vmatprep.subr.mxu0 0.0
    %1555 = vmatpush2.msra.mxu0 0.0
    %1556 = vmatprep.subr.mxu0 0.0
    %1557 = vmatpush2.msra.mxu0 0.0
    %1558 = vmatprep.subr.mxu0 0.0
    %1559 = vmatpush2.msra.mxu0 0.0
    %1560 = vmatprep.subr.mxu0 0.0
    %1561 = vmatpush2.msra.mxu0 0.0
    %1562 = vmatprep.subr.mxu0 0.0
    %1563 = vmatpush2.msra.mxu0 0.0
    %1564 = vmatprep.subr.mxu0 0.0
    %1565 = vmatpush2.msra.mxu0 0.0
    %1566 = vmatprep.subr.mxu0 0.0
    %1567 = vmatpush2.msra.mxu0 0.0
    %1568 = vmatprep.subr.mxu0 0.0
    %1569 = vmatpush2.msra.mxu0 0.0
    %1570 = vmatprep.subr.mxu0 0.0
    %1571 = vmatpush2.msra.mxu0 0.0
    %1572 = vmatprep.subr.mxu0 0.0
    %1573 = vmatpush2.msra.mxu0 0.0
    %1574 = vmatprep.subr.mxu0 0.0
    %1575 = vmatpush2.msra.mxu0 0.0
    %1576 = vmatprep.subr.mxu0 0.0
    %1577 = vmatpush2.msra.mxu0 0.0
    %1578 = vmatprep.subr.mxu0 0.0
    %1579 = vmatpush2.msra.mxu0 0.0
    %1580 = vmatprep.subr.mxu0 0.0
    %1581 = vmatpush2.msra.mxu0 0.0
    %1582 = vmatprep.subr.mxu0 0.0
    %1583 = vmatpush2.msra.mxu0 0.0
    %1584 = vmatprep.subr.mxu0 0.0
    %1585 = vmatpush2.msra.mxu0 0.0
    %1586 = vmatprep.mubr.f32.mxu0 0.0
    %1587 = vmatmul.mubr.f32.gmra.mxu0 %v1520
    %v1588 = vpop.f32.mrf.mxu0
    %v1589 = vadd.f32 0.0, %v1588
    %v1590 = vpop.f32.mrf.mxu0
    %1591 = vdwg.mxu0
    %1592 = vrot.lane.b32.xlu0 %v579, 48
    %v1593 = vpop.permute.xlu0 %1592
    %1594 = vrot.lane.b32.xlu0 %v582, 48
    %v1595 = vpop.permute.xlu0 %1594
    %v1599 = vsel %vm318, %v1512, 0
    %1601 = vmatprep.subr.mxu0 0.0
    %1602 = vmatpush1.msra.mxu0 0.0
    %1603 = vmatprep.subr.mxu0 0.0
    %1604 = vmatpush1.msra.mxu0 0.0
    %1605 = vmatprep.subr.mxu0 0.0
    %1606 = vmatpush1.msra.mxu0 0.0
    %1607 = vmatprep.subr.mxu0 0.0
    %1608 = vmatpush1.msra.mxu0 0.0
    %1609 = vmatprep.subr.mxu0 0.0
    %1610 = vmatpush1.msra.mxu0 0.0
    %1611 = vmatprep.subr.mxu0 0.0
    %1612 = vmatpush1.msra.mxu0 0.0
    %1613 = vmatprep.subr.mxu0 0.0
    %1614 = vmatpush1.msra.mxu0 0.0
    %1615 = vmatprep.subr.mxu0 0.0
    %1616 = vmatpush1.msra.mxu0 0.0
    %1617 = vmatprep.subr.mxu0 0.0
    %1618 = vmatpush1.msra.mxu0 0.0
    %1619 = vmatprep.subr.mxu0 0.0
    %1620 = vmatpush1.msra.mxu0 0.0
    %1621 = vmatprep.subr.mxu0 0.0
    %1622 = vmatpush1.msra.mxu0 0.0
    %1623 = vmatprep.subr.mxu0 0.0
    %1624 = vmatpush1.msra.mxu0 0.0
    %1625 = vmatprep.subr.mxu0 0.0
    %1626 = vmatpush1.msra.mxu0 0.0
    %1627 = vmatprep.subr.mxu0 0.0
    %1628 = vmatpush1.msra.mxu0 0.0
    %1629 = vmatprep.subr.mxu0 0.0
    %1630 = vmatpush1.msra.mxu0 %v1595
    %1631 = vmatprep.subr.mxu0 0.0
    %1632 = vmatpush1.msra.mxu0 %v1593
    %1633 = vmatprep.subr.mxu0 0.0
    %1634 = vmatpush2.msra.mxu0 0.0
    %1635 = vmatprep.subr.mxu0 0.0
    %1636 = vmatpush2.msra.mxu0 0.0
    %1637 = vmatprep.subr.mxu0 0.0
    %1638 = vmatpush2.msra.mxu0 0.0
    %1639 = vmatprep.subr.mxu0 0.0
    %1640 = vmatpush2.msra.mxu0 0.0
    %1641 = vmatprep.subr.mxu0 0.0
    %1642 = vmatpush2.msra.mxu0 0.0
    %1643 = vmatprep.subr.mxu0 0.0
    %1644 = vmatpush2.msra.mxu0 0.0
    %1645 = vmatprep.subr.mxu0 0.0
    %1646 = vmatpush2.msra.mxu0 0.0
    %1647 = vmatprep.subr.mxu0 0.0
    %1648 = vmatpush2.msra.mxu0 0.0
    %1649 = vmatprep.subr.mxu0 0.0
    %1650 = vmatpush2.msra.mxu0 0.0
    %1651 = vmatprep.subr.mxu0 0.0
    %1652 = vmatpush2.msra.mxu0 0.0
    %1653 = vmatprep.subr.mxu0 0.0
    %1654 = vmatpush2.msra.mxu0 0.0
    %1655 = vmatprep.subr.mxu0 0.0
    %1656 = vmatpush2.msra.mxu0 0.0
    %1657 = vmatprep.subr.mxu0 0.0
    %1658 = vmatpush2.msra.mxu0 0.0
    %1659 = vmatprep.subr.mxu0 0.0
    %1660 = vmatpush2.msra.mxu0 0.0
    %1661 = vmatprep.subr.mxu0 0.0
    %1662 = vmatpush2.msra.mxu0 0.0
    %1663 = vmatprep.subr.mxu0 0.0
    %1664 = vmatpush2.msra.mxu0 0.0
    %1665 = vmatprep.mubr.f32.mxu0 0.0
    %1666 = vmatmul.mubr.f32.gmra.mxu0 %v1599
    %v1667 = vpop.f32.mrf.mxu0
    %v1668 = vadd.f32 0.0, %v1667
    %v1669 = vpop.f32.mrf.mxu0
    %1670 = vdwg.mxu0
    %1671 = vrot.lane.b32.xlu0 %v624, 104
    %v1672 = vpop.permute.xlu0 %1671
    %1673 = vrot.lane.b32.xlu0 %v571, 72
    %v1674 = vpop.permute.xlu0 %1673
    %1675 = vrot.lane.b32.xlu0 %v574, 72
    %v1676 = vpop.permute.xlu0 %1675
    %v1677 = vsel %vm636, %v1672, 0
    %v1679 = vsel %vm636, %v1674, 0
    %v1681 = vsel %vm636, %v1676, 0
    %1683 = vmatprep.subr.mxu0 0.0
    %1684 = vmatpush1.xpose.msra.mxu0 0.0
    %1685 = vmatprep.subr.mxu0 0.0
    %1686 = vmatpush1.xpose.msra.mxu0 0.0
    %1687 = vmatprep.subr.mxu0 0.0
    %1688 = vmatpush1.xpose.msra.mxu0 0.0
    %1689 = vmatprep.subr.mxu0 0.0
    %1690 = vmatpush1.xpose.msra.mxu0 0.0
    %1691 = vmatprep.subr.mxu0 0.0
    %1692 = vmatpush1.xpose.msra.mxu0 0.0
    %1693 = vmatprep.subr.mxu0 0.0
    %1694 = vmatpush1.xpose.msra.mxu0 0.0
    %1695 = vmatprep.subr.mxu0 0.0
    %1696 = vmatpush1.xpose.msra.mxu0 0.0
    %1697 = vmatprep.subr.mxu0 0.0
    %1698 = vmatpush1.xpose.msra.mxu0 0.0
    %1699 = vmatprep.subr.mxu0 0.0
    %1700 = vmatpush1.xpose.msra.mxu0 0.0
    %1701 = vmatprep.subr.mxu0 0.0
    %1702 = vmatpush1.xpose.msra.mxu0 0.0
    %1703 = vmatprep.subr.mxu0 0.0
    %1704 = vmatpush1.xpose.msra.mxu0 0.0
    %1705 = vmatprep.subr.mxu0 0.0
    %1706 = vmatpush1.xpose.msra.mxu0 0.0
    %1707 = vmatprep.subr.mxu0 0.0
    %1708 = vmatpush1.xpose.msra.mxu0 0.0
    %1709 = vmatprep.subr.mxu0 0.0
    %1710 = vmatpush1.xpose.msra.mxu0 0.0
    %1711 = vmatprep.subr.mxu0 0.0
    %1712 = vmatpush1.xpose.msra.mxu0 %v1681
    %1713 = vmatprep.subr.mxu0 0.0
    %1714 = vmatpush1.xpose.msra.mxu0 %v1679
    %1715 = vmatprep.subr.mxu0 0.0
    %1716 = vmatpush2.xpose.msra.mxu0 0.0
    %1717 = vmatprep.subr.mxu0 0.0
    %1718 = vmatpush2.xpose.msra.mxu0 0.0
    %1719 = vmatprep.subr.mxu0 0.0
    %1720 = vmatpush2.xpose.msra.mxu0 0.0
    %1721 = vmatprep.subr.mxu0 0.0
    %1722 = vmatpush2.xpose.msra.mxu0 0.0
    %1723 = vmatprep.subr.mxu0 0.0
    %1724 = vmatpush2.xpose.msra.mxu0 0.0
    %1725 = vmatprep.subr.mxu0 0.0
    %1726 = vmatpush2.xpose.msra.mxu0 0.0
    %1727 = vmatprep.subr.mxu0 0.0
    %1728 = vmatpush2.xpose.msra.mxu0 0.0
    %1729 = vmatprep.subr.mxu0 0.0
    %1730 = vmatpush2.xpose.msra.mxu0 0.0
    %1731 = vmatprep.subr.mxu0 0.0
    %1732 = vmatpush2.xpose.msra.mxu0 0.0
    %1733 = vmatprep.subr.mxu0 0.0
    %1734 = vmatpush2.xpose.msra.mxu0 0.0
    %1735 = vmatprep.subr.mxu0 0.0
    %1736 = vmatpush2.xpose.msra.mxu0 0.0
    %1737 = vmatprep.subr.mxu0 0.0
    %1738 = vmatpush2.xpose.msra.mxu0 0.0
    %1739 = vmatprep.subr.mxu0 0.0
    %1740 = vmatpush2.xpose.msra.mxu0 0.0
    %1741 = vmatprep.subr.mxu0 0.0
    %1742 = vmatpush2.xpose.msra.mxu0 0.0
    %1743 = vmatprep.subr.mxu0 0.0
    %1744 = vmatpush2.xpose.msra.mxu0 0.0
    %1745 = vmatprep.subr.mxu0 0.0
    %1746 = vmatpush2.xpose.msra.mxu0 0.0
    %1747 = vmatprep.mubr.f32.mxu0 0.0
    %1748 = vmatmul.mubr.f32.gmra.mxu0 %v1677
    %v1749 = vpop.f32.mrf.mxu0
    %v1750 = vadd.f32 0.0, %v1749
    %v1751 = vpop.f32.mrf.mxu0
    %1752 = vdwg.mxu0
    %1753 = vrot.lane.b32.xlu0 %v627, 104
    %v1754 = vpop.permute.xlu0 %1753
    %1755 = vrot.lane.b32.xlu0 %v579, 72
    %v1756 = vpop.permute.xlu0 %1755
    %1757 = vrot.lane.b32.xlu0 %v582, 72
    %v1758 = vpop.permute.xlu0 %1757
    %v1759 = vsel %vm636, %v1754, 0
    %v1761 = vsel %vm636, %v1756, 0
    %v1763 = vsel %vm636, %v1758, 0
    %1765 = vmatprep.subr.mxu0 0.0
    %1766 = vmatpush1.xpose.msra.mxu0 0.0
    %1767 = vmatprep.subr.mxu0 0.0
    %1768 = vmatpush1.xpose.msra.mxu0 0.0
    %1769 = vmatprep.subr.mxu0 0.0
    %1770 = vmatpush1.xpose.msra.mxu0 0.0
    %1771 = vmatprep.subr.mxu0 0.0
    %1772 = vmatpush1.xpose.msra.mxu0 0.0
    %1773 = vmatprep.subr.mxu0 0.0
    %1774 = vmatpush1.xpose.msra.mxu0 0.0
    %1775 = vmatprep.subr.mxu0 0.0
    %1776 = vmatpush1.xpose.msra.mxu0 0.0
    %1777 = vmatprep.subr.mxu0 0.0
    %1778 = vmatpush1.xpose.msra.mxu0 0.0
    %1779 = vmatprep.subr.mxu0 0.0
    %1780 = vmatpush1.xpose.msra.mxu0 0.0
    %1781 = vmatprep.subr.mxu0 0.0
    %1782 = vmatpush1.xpose.msra.mxu0 0.0
    %1783 = vmatprep.subr.mxu0 0.0
    %1784 = vmatpush1.xpose.msra.mxu0 0.0
    %1785 = vmatprep.subr.mxu0 0.0
    %1786 = vmatpush1.xpose.msra.mxu0 0.0
    %1787 = vmatprep.subr.mxu0 0.0
    %1788 = vmatpush1.xpose.msra.mxu0 0.0
    %1789 = vmatprep.subr.mxu0 0.0
    %1790 = vmatpush1.xpose.msra.mxu0 0.0
    %1791 = vmatprep.subr.mxu0 0.0
    %1792 = vmatpush1.xpose.msra.mxu0 0.0
    %1793 = vmatprep.subr.mxu0 0.0
    %1794 = vmatpush1.xpose.msra.mxu0 %v1763
    %1795 = vmatprep.subr.mxu0 0.0
    %1796 = vmatpush1.xpose.msra.mxu0 %v1761
    %1797 = vmatprep.subr.mxu0 0.0
    %1798 = vmatpush2.xpose.msra.mxu0 0.0
    %1799 = vmatprep.subr.mxu0 0.0
    %1800 = vmatpush2.xpose.msra.mxu0 0.0
    %1801 = vmatprep.subr.mxu0 0.0
    %1802 = vmatpush2.xpose.msra.mxu0 0.0
    %1803 = vmatprep.subr.mxu0 0.0
    %1804 = vmatpush2.xpose.msra.mxu0 0.0
    %1805 = vmatprep.subr.mxu0 0.0
    %1806 = vmatpush2.xpose.msra.mxu0 0.0
    %1807 = vmatprep.subr.mxu0 0.0
    %1808 = vmatpush2.xpose.msra.mxu0 0.0
    %1809 = vmatprep.subr.mxu0 0.0
    %1810 = vmatpush2.xpose.msra.mxu0 0.0
    %1811 = vmatprep.subr.mxu0 0.0
    %1812 = vmatpush2.xpose.msra.mxu0 0.0
    %1813 = vmatprep.subr.mxu0 0.0
    %1814 = vmatpush2.xpose.msra.mxu0 0.0
    %1815 = vmatprep.subr.mxu0 0.0
    %1816 = vmatpush2.xpose.msra.mxu0 0.0
    %1817 = vmatprep.subr.mxu0 0.0
    %1818 = vmatpush2.xpose.msra.mxu0 0.0
    %1819 = vmatprep.subr.mxu0 0.0
    %1820 = vmatpush2.xpose.msra.mxu0 0.0
    %1821 = vmatprep.subr.mxu0 0.0
    %1822 = vmatpush2.xpose.msra.mxu0 0.0
    %1823 = vmatprep.subr.mxu0 0.0
    %1824 = vmatpush2.xpose.msra.mxu0 0.0
    %1825 = vmatprep.subr.mxu0 0.0
    %1826 = vmatpush2.xpose.msra.mxu0 0.0
    %1827 = vmatprep.subr.mxu0 0.0
    %1828 = vmatpush2.xpose.msra.mxu0 0.0
    %1829 = vmatprep.mubr.f32.mxu0 0.0
    %1830 = vmatmul.mubr.f32.gmra.mxu0 %v1759
    %v1831 = vpop.f32.mrf.mxu0
    %v1832 = vadd.f32 0.0, %v1831
    %v1833 = vpop.f32.mrf.mxu0
    %1834 = vdwg.mxu0
    %v1835 = vmul.f32 %v1750, 0.35355338
    %v1836 = vmul.f32 %v1832, 0.35355338
    %v1837 = vsel %vm318, %v1835, -inf
    %1838 = vmax.xlane.f32.xlu0 %v1837
    %v1839 = vpop.xlane.xlu0 %1838
    %v1840 = vsel %vm318, %v1836, -inf
    %1841 = vmax.xlane.f32.xlu0 %v1840
    %v1842 = vpop.xlane.xlu0 %1841
    %v1843 = vsub.f32 %v1835, %v1839
    %v1844 = vsub.f32 %v1836, %v1842
    %v1845 = vmul.f32 %v1843, 1.442695
    %v1846 = vpow.pop %v1845
    %v1847 = vmul.f32 %v1844, 1.442695
    %v1848 = vpow.pop %v1847
    %v1849 = vsel %vm318, %v1846, 0.0
    %1850 = vadd.xlane.f32.xlu0 %v1849
    %v1851 = vpop.xlane.xlu0 %1850
    %v1852 = vsel %vm318, %v1848, 0.0
    %1853 = vadd.xlane.f32.xlu0 %v1852
    %v1854 = vpop.xlane.xlu0 %1853
    %v1855 = vrcp.pop %v1851
    %v1856 = vrcp.pop %v1854
    %v1857 = vmul.f32 %v1846, %v1855
    %v1858 = vmul.f32 %v1848, %v1856
    %1859 = vrot.lane.b32.xlu0 %v571, 40
    %v1860 = vpop.permute.xlu0 %1859
    %1861 = vrot.lane.b32.xlu0 %v574, 40
    %v1862 = vpop.permute.xlu0 %1861
    %v1866 = vsel %vm318, %v1857, 0
    %1868 = vmatprep.subr.mxu0 0.0
    %1869 = vmatpush1.msra.mxu0 0.0
    %1870 = vmatprep.subr.mxu0 0.0
    %1871 = vmatpush1.msra.mxu0 0.0
    %1872 = vmatprep.subr.mxu0 0.0
    %1873 = vmatpush1.msra.mxu0 0.0
    %1874 = vmatprep.subr.mxu0 0.0
    %1875 = vmatpush1.msra.mxu0 0.0
    %1876 = vmatprep.subr.mxu0 0.0
    %1877 = vmatpush1.msra.mxu0 0.0
    %1878 = vmatprep.subr.mxu0 0.0
    %1879 = vmatpush1.msra.mxu0 0.0
    %1880 = vmatprep.subr.mxu0 0.0
    %1881 = vmatpush1.msra.mxu0 0.0
    %1882 = vmatprep.subr.mxu0 0.0
    %1883 = vmatpush1.msra.mxu0 0.0
    %1884 = vmatprep.subr.mxu0 0.0
    %1885 = vmatpush1.msra.mxu0 0.0
    %1886 = vmatprep.subr.mxu0 0.0
    %1887 = vmatpush1.msra.mxu0 0.0
    %1888 = vmatprep.subr.mxu0 0.0
    %1889 = vmatpush1.msra.mxu0 0.0
    %1890 = vmatprep.subr.mxu0 0.0
    %1891 = vmatpush1.msra.mxu0 0.0
    %1892 = vmatprep.subr.mxu0 0.0
    %1893 = vmatpush1.msra.mxu0 0.0
    %1894 = vmatprep.subr.mxu0 0.0
    %1895 = vmatpush1.msra.mxu0 0.0
    %1896 = vmatprep.subr.mxu0 0.0
    %1897 = vmatpush1.msra.mxu0 %v1862
    %1898 = vmatprep.subr.mxu0 0.0
    %1899 = vmatpush1.msra.mxu0 %v1860
    %1900 = vmatprep.subr.mxu0 0.0
    %1901 = vmatpush2.msra.mxu0 0.0
    %1902 = vmatprep.subr.mxu0 0.0
    %1903 = vmatpush2.msra.mxu0 0.0
    %1904 = vmatprep.subr.mxu0 0.0
    %1905 = vmatpush2.msra.mxu0 0.0
    %1906 = vmatprep.subr.mxu0 0.0
    %1907 = vmatpush2.msra.mxu0 0.0
    %1908 = vmatprep.subr.mxu0 0.0
    %1909 = vmatpush2.msra.mxu0 0.0
    %1910 = vmatprep.subr.mxu0 0.0
    %1911 = vmatpush2.msra.mxu0 0.0
    %1912 = vmatprep.subr.mxu0 0.0
    %1913 = vmatpush2.msra.mxu0 0.0
    %1914 = vmatprep.subr.mxu0 0.0
    %1915 = vmatpush2.msra.mxu0 0.0
    %1916 = vmatprep.subr.mxu0 0.0
    %1917 = vmatpush2.msra.mxu0 0.0
    %1918 = vmatprep.subr.mxu0 0.0
    %1919 = vmatpush2.msra.mxu0 0.0
    %1920 = vmatprep.subr.mxu0 0.0
    %1921 = vmatpush2.msra.mxu0 0.0
    %1922 = vmatprep.subr.mxu0 0.0
    %1923 = vmatpush2.msra.mxu0 0.0
    %1924 = vmatprep.subr.mxu0 0.0
    %1925 = vmatpush2.msra.mxu0 0.0
    %1926 = vmatprep.subr.mxu0 0.0
    %1927 = vmatpush2.msra.mxu0 0.0
    %1928 = vmatprep.subr.mxu0 0.0
    %1929 = vmatpush2.msra.mxu0 0.0
    %1930 = vmatprep.subr.mxu0 0.0
    %1931 = vmatpush2.msra.mxu0 0.0
    %1932 = vmatprep.mubr.f32.mxu0 0.0
    %1933 = vmatmul.mubr.f32.gmra.mxu0 %v1866
    %v1934 = vpop.f32.mrf.mxu0
    %v1935 = vadd.f32 0.0, %v1934
    %v1936 = vpop.f32.mrf.mxu0
    %1937 = vdwg.mxu0
    %1938 = vrot.lane.b32.xlu0 %v579, 40
    %v1939 = vpop.permute.xlu0 %1938
    %1940 = vrot.lane.b32.xlu0 %v582, 40
    %v1941 = vpop.permute.xlu0 %1940
    %v1945 = vsel %vm318, %v1858, 0
    %1947 = vmatprep.subr.mxu0 0.0
    %1948 = vmatpush1.msra.mxu0 0.0
    %1949 = vmatprep.subr.mxu0 0.0
    %1950 = vmatpush1.msra.mxu0 0.0
    %1951 = vmatprep.subr.mxu0 0.0
    %1952 = vmatpush1.msra.mxu0 0.0
    %1953 = vmatprep.subr.mxu0 0.0
    %1954 = vmatpush1.msra.mxu0 0.0
    %1955 = vmatprep.subr.mxu0 0.0
    %1956 = vmatpush1.msra.mxu0 0.0
    %1957 = vmatprep.subr.mxu0 0.0
    %1958 = vmatpush1.msra.mxu0 0.0
    %1959 = vmatprep.subr.mxu0 0.0
    %1960 = vmatpush1.msra.mxu0 0.0
    %1961 = vmatprep.subr.mxu0 0.0
    %1962 = vmatpush1.msra.mxu0 0.0
    %1963 = vmatprep.subr.mxu0 0.0
    %1964 = vmatpush1.msra.mxu0 0.0
    %1965 = vmatprep.subr.mxu0 0.0
    %1966 = vmatpush1.msra.mxu0 0.0
    %1967 = vmatprep.subr.mxu0 0.0
    %1968 = vmatpush1.msra.mxu0 0.0
    %1969 = vmatprep.subr.mxu0 0.0
    %1970 = vmatpush1.msra.mxu0 0.0
    %1971 = vmatprep.subr.mxu0 0.0
    %1972 = vmatpush1.msra.mxu0 0.0
    %1973 = vmatprep.subr.mxu0 0.0
    %1974 = vmatpush1.msra.mxu0 0.0
    %1975 = vmatprep.subr.mxu0 0.0
    %1976 = vmatpush1.msra.mxu0 %v1941
    %1977 = vmatprep.subr.mxu0 0.0
    %1978 = vmatpush1.msra.mxu0 %v1939
    %1979 = vmatprep.subr.mxu0 0.0
    %1980 = vmatpush2.msra.mxu0 0.0
    %1981 = vmatprep.subr.mxu0 0.0
    %1982 = vmatpush2.msra.mxu0 0.0
    %1983 = vmatprep.subr.mxu0 0.0
    %1984 = vmatpush2.msra.mxu0 0.0
    %1985 = vmatprep.subr.mxu0 0.0
    %1986 = vmatpush2.msra.mxu0 0.0
    %1987 = vmatprep.subr.mxu0 0.0
    %1988 = vmatpush2.msra.mxu0 0.0
    %1989 = vmatprep.subr.mxu0 0.0
    %1990 = vmatpush2.msra.mxu0 0.0
    %1991 = vmatprep.subr.mxu0 0.0
    %1992 = vmatpush2.msra.mxu0 0.0
    %1993 = vmatprep.subr.mxu0 0.0
    %1994 = vmatpush2.msra.mxu0 0.0
    %1995 = vmatprep.subr.mxu0 0.0
    %1996 = vmatpush2.msra.mxu0 0.0
    %1997 = vmatprep.subr.mxu0 0.0
    %1998 = vmatpush2.msra.mxu0 0.0
    %1999 = vmatprep.subr.mxu0 0.0
    %2000 = vmatpush2.msra.mxu0 0.0
    %2001 = vmatprep.subr.mxu0 0.0
    %2002 = vmatpush2.msra.mxu0 0.0
    %2003 = vmatprep.subr.mxu0 0.0
    %2004 = vmatpush2.msra.mxu0 0.0
    %2005 = vmatprep.subr.mxu0 0.0
    %2006 = vmatpush2.msra.mxu0 0.0
    %2007 = vmatprep.subr.mxu0 0.0
    %2008 = vmatpush2.msra.mxu0 0.0
    %2009 = vmatprep.subr.mxu0 0.0
    %2010 = vmatpush2.msra.mxu0 0.0
    %2011 = vmatprep.mubr.f32.mxu0 0.0
    %2012 = vmatmul.mubr.f32.gmra.mxu0 %v1945
    %v2013 = vpop.f32.mrf.mxu0
    %v2014 = vadd.f32 0.0, %v2013
    %v2015 = vpop.f32.mrf.mxu0
    %2016 = vdwg.mxu0
    %2019 = vrot.lane.b32.xlu0 %v1243, 8
    %v2020 = vpop.permute.xlu0 %2019
    %2021 = vrot.lane.b32.xlu0 %v1322, 8
    %v2022 = vpop.permute.xlu0 %2021
    %2027 = vrot.lane.b32.xlu0 %v1589, 16
    %v2028 = vpop.permute.xlu0 %2027
    %2029 = vrot.lane.b32.xlu0 %v1668, 16
    %v2030 = vpop.permute.xlu0 %2029
    %2035 = vrot.lane.b32.xlu0 %v1935, 24
    %v2036 = vpop.permute.xlu0 %2035
    %2037 = vrot.lane.b32.xlu0 %v2014, 24
    %v2038 = vpop.permute.xlu0 %2037
    %v2041 = vsel %vm636, %v897, %v2020
    %v2042 = vsel %vm636, %v976, %v2022
    %v2043 = vsel %vm318, %v2041, %v2028
    %v2044 = vsel %vm318, %v2042, %v2030
    %vm2045 = vcmask 195584
    %v2046 = vsel %vm2045, %v2043, %v2036
    %v2047 = vsel %vm2045, %v2044, %v2038
    %v2048 = vpack.c.bf16 %v2047, %v2046
    %v2049 = vld [vmem:[#allocation14] sm:$0xf]
    %v2050 = vld [vmem:[#allocation14 + $0x4] sm:$0xf]
    %v2051 = vld [vmem:[#allocation14 + $0x8] sm:$0xf]
    %v2052 = vld [vmem:[#allocation14 + $0xc] sm:$0xf]
    %v2053 = vld [vmem:[#allocation16] sm:$0x1]
    %v2055 = vlaneseq
    %v2056 = vshrl.u32 %v2055, 7
    %v2057 = vsub.s32 0, %v2056
    %v2058 = vrot.slane %v2053, %v2057
    %v2064 = vunpack.c.l.b16 %v2049
    %v2065 = vunpack.c.l.b16 %v2050
    %v2066 = vunpack.c.l.b16 %v2051
    %v2067 = vunpack.c.l.b16 %v2052
    %v2068 = vpack.c.b16 %v2065, %v2064
    %v2069 = vpack.c.b16 %v2067, %v2066
    %v2073 = vsel %vm203, %v2048, 0
    %2075 = vmatprep.subr.bf16.mxu0 0
    %2076 = vmatpush1.bf16.msra.mxu0 0
    %2077 = vmatprep.subr.bf16.mxu0 0
    %2078 = vmatpush1.bf16.msra.mxu0 0
    %2079 = vmatprep.subr.bf16.mxu0 0
    %2080 = vmatpush1.bf16.msra.mxu0 0
    %2081 = vmatprep.subr.bf16.mxu0 0
    %2082 = vmatpush1.bf16.msra.mxu0 0
    %2083 = vmatprep.subr.bf16.mxu0 0
    %2084 = vmatpush1.bf16.msra.mxu0 0
    %2085 = vmatprep.subr.bf16.mxu0 0
    %2086 = vmatpush1.bf16.msra.mxu0 0
    %2087 = vmatprep.subr.bf16.mxu0 0
    %2088 = vmatpush1.bf16.msra.mxu0 %v2069
    %2089 = vmatprep.subr.bf16.mxu0 0
    %2090 = vmatpush1.bf16.msra.mxu0 %v2068
    %2091 = vmatprep.subr.bf16.mxu0 0
    %2092 = vmatpush2.bf16.msra.mxu0 0
    %2093 = vmatprep.subr.bf16.mxu0 0
    %2094 = vmatpush2.bf16.msra.mxu0 0
    %2095 = vmatprep.subr.bf16.mxu0 0
    %2096 = vmatpush2.bf16.msra.mxu0 0
    %2097 = vmatprep.subr.bf16.mxu0 0
    %2098 = vmatpush2.bf16.msra.mxu0 0
    %2099 = vmatprep.subr.bf16.mxu0 0
    %2100 = vmatpush2.bf16.msra.mxu0 0
    %2101 = vmatprep.subr.bf16.mxu0 0
    %2102 = vmatpush2.bf16.msra.mxu0 0
    %2103 = vmatprep.subr.bf16.mxu0 0
    %2104 = vmatpush2.bf16.msra.mxu0 0
    %2105 = vmatprep.subr.bf16.mxu0 0
    %2106 = vmatpush2.bf16.msra.mxu0 0
    %2107 = vmatprep.mubr.bf16.mxu0 0
    %2108 = vmatmul.mubr.bf16.gmra.mxu0 %v2073
    %v2109 = vpop.f32.mrf.mxu0
    %v2110 = vadd.f32 %v2058, %v2109
    %v2111 = vpop.f32.mrf.mxu0
    %v2112 = vpop.f32.mrf.mxu0
    %v2113 = vadd.f32 %v2058, %v2112
    %v2114 = vpop.f32.mrf.mxu0
    %2115 = vdwg.mxu0
    %v2118 = vunpack.c.l.s4 1966171168
    %v2119 = vunpack.c.0.s8 %v2118
    %v2120 = vlaneseq
    %v2121 = vshrl.u32 %v2120, 7
    %v2122 = vsub.s32 %v2119, %v2121
    %v2123 = vrot.slane %v398, %v2122
    %v2124 = vcombine.high %v2123, %v2123
    %v2126 = vunpack.c.l.s4 1966171168
    %v2127 = vunpack.c.0.s8 %v2126
    %v2128 = vlaneseq
    %v2129 = vshrl.u32 %v2128, 7
    %v2130 = vsub.s32 %v2127, %v2129
    %v2131 = vrot.slane %v2123, %v2130
    %v2133 = vunpack.c.l.s4 1966171168
    %v2134 = vunpack.c.0.s8 %v2133
    %v2135 = vlaneseq
    %v2136 = vshrl.u32 %v2135, 7
    %v2137 = vsub.s32 %v2134, %v2136
    %v2138 = vrot.slane %v2124, %v2137
    %v2139 = vlaneseq
    %v2140 = vshrl.u32 %v2139, 7
    %v2141 = vsub.s32 0, %v2140
    %v2142 = vrot.slane %v2131, %v2141
    %v2143 = vlaneseq
    %v2144 = vshrl.u32 %v2143, 7
    %v2145 = vsub.s32 0, %v2144
    %v2146 = vrot.slane %v2138, %v2145
    %v2149 = vmul.f32 %v2142, %v2110
    %v2150 = vmul.f32 %v2146, %v2113
    %v2151 = vadd.f32 %v197, %v2149
    %v2152 = vadd.f32 %v198, %v2150
    %s2153 = scalar_lea.vmem %s5, 1
    %v2154 = vld [vmem:[%s2153] sm:$0x1]
    %s2155 = scalar_lea.vmem [#allocation10], 1
    %v2156 = vld [vmem:[%s2155] sm:$0x1]
    %v2157 = vsel %vm203, %v2151, 0.0
    %2158 = vadd.xlane.f32.xlu0 %v2157
    %v2159 = vpop.xlane.xlu0 %2158
    %v2160 = vsel %vm203, %v2152, 0.0
    %2161 = vadd.xlane.f32.xlu0 %v2160
    %v2162 = vpop.xlane.xlu0 %2161
    %v2163 = vmul.f32 %v2159, %v216
    %v2164 = vmul.f32 %v2162, %v216
    %v2165 = vsub.f32 %v2151, %v2163
    %v2166 = vsub.f32 %v2152, %v2164
    %v2167 = vmul.f32 %v2165, %v2165
    %v2168 = vmul.f32 %v2166, %v2166
    %v2169 = vsel %vm203, %v2167, 0.0
    %2170 = vadd.xlane.f32.xlu0 %v2169
    %v2171 = vpop.xlane.xlu0 %2170
    %v2172 = vsel %vm203, %v2168, 0.0
    %2173 = vadd.xlane.f32.xlu0 %v2172
    %v2174 = vpop.xlane.xlu0 %2173
    %v2175 = vmul.f32 %v2171, %v216
    %v2176 = vmul.f32 %v2174, %v216
    %v2177 = vadd.f32 %v2175, 1e-05
    %v2178 = vadd.f32 %v2176, 1e-05
    %v2179 = vrsqrt.pop %v2177
    %v2180 = vrsqrt.pop %v2178
    %v2181 = vmul.f32 %v2165, %v2179
    %v2182 = vmul.f32 %v2166, %v2180
    %v2184 = vlaneseq
    %v2185 = vshrl.u32 %v2184, 7
    %v2186 = vsub.s32 0, %v2185
    %v2187 = vrot.slane %v2154, %v2186
    %v2189 = vmul.f32 %v2181, %v2187
    %v2190 = vmul.f32 %v2182, %v2187
    %v2192 = vlaneseq
    %v2193 = vshrl.u32 %v2192, 7
    %v2194 = vsub.s32 0, %v2193
    %v2195 = vrot.slane %v2156, %v2194
    %v2197 = vadd.f32 %v2189, %v2195
    %v2198 = vadd.f32 %v2190, %v2195
    %2199 = vrot.lane.b32.xlu0 %v457, 96
    %v2200 = vpop.permute.xlu0 %2199
    %2201 = vrot.lane.b32.xlu0 %v461, 96
    %v2202 = vpop.permute.xlu0 %2201
    %v2205 = vmul.f32 %v2197, %v2200
    %v2206 = vmul.f32 %v2198, %v2202
    %2207 = vrot.lane.b32.xlu0 %v494, 96
    %v2208 = vpop.permute.xlu0 %2207
    %2209 = vrot.lane.b32.xlu0 %v498, 96
    %v2210 = vpop.permute.xlu0 %2209
    %v2213 = vadd.f32 %v2205, %v2208
    %v2214 = vadd.f32 %v2206, %v2210
    %s2215 = scalar_lea.vmem [#allocation11], 16
    %v2216 = vld [vmem:[%s2215] sm:$0xf]
    %v2217 = vld [vmem:[%s2215 + $0x4] sm:$0xf]
    %v2218 = vld [vmem:[%s2215 + $0x8] sm:$0xf]
    %v2219 = vld [vmem:[%s2215 + $0xc] sm:$0xf]
    %s2220 = scalar_lea.vmem [#allocation13], 1
    %v2221 = vld [vmem:[%s2220] sm:$0x1]
    %v2222 = vpack.c.bf16 %v2214, %v2213
    %v2224 = vlaneseq
    %v2225 = vshrl.u32 %v2224, 7
    %v2226 = vsub.s32 0, %v2225
    %v2227 = vrot.slane %v2221, %v2226
    %v2233 = vunpack.c.l.b16 %v2216
    %v2234 = vunpack.c.l.b16 %v2217
    %v2235 = vunpack.c.l.b16 %v2218
    %v2236 = vunpack.c.l.b16 %v2219
    %v2237 = vpack.c.b16 %v2234, %v2233
    %v2238 = vpack.c.b16 %v2236, %v2235
    %v2242 = vsel %vm203, %v2222, 0
    %2244 = vmatprep.subr.bf16.mxu0 0
    %2245 = vmatpush1.bf16.msra.mxu0 0
    %2246 = vmatprep.subr.bf16.mxu0 0
    %2247 = vmatpush1.bf16.msra.mxu0 0
    %2248 = vmatprep.subr.bf16.mxu0 0
    %2249 = vmatpush1.bf16.msra.mxu0 0
    %2250 = vmatprep.subr.bf16.mxu0 0
    %2251 = vmatpush1.bf16.msra.mxu0 0
    %2252 = vmatprep.subr.bf16.mxu0 0
    %2253 = vmatpush1.bf16.msra.mxu0 0
    %2254 = vmatprep.subr.bf16.mxu0 0
    %2255 = vmatpush1.bf16.msra.mxu0 0
    %2256 = vmatprep.subr.bf16.mxu0 0
    %2257 = vmatpush1.bf16.msra.mxu0 %v2238
    %2258 = vmatprep.subr.bf16.mxu0 0
    %2259 = vmatpush1.bf16.msra.mxu0 %v2237
    %2260 = vmatprep.subr.bf16.mxu0 0
    %2261 = vmatpush2.bf16.msra.mxu0 0
    %2262 = vmatprep.subr.bf16.mxu0 0
    %2263 = vmatpush2.bf16.msra.mxu0 0
    %2264 = vmatprep.subr.bf16.mxu0 0
    %2265 = vmatpush2.bf16.msra.mxu0 0
    %2266 = vmatprep.subr.bf16.mxu0 0
    %2267 = vmatpush2.bf16.msra.mxu0 0
    %2268 = vmatprep.subr.bf16.mxu0 0
    %2269 = vmatpush2.bf16.msra.mxu0 0
    %2270 = vmatprep.subr.bf16.mxu0 0
    %2271 = vmatpush2.bf16.msra.mxu0 0
    %2272 = vmatprep.subr.bf16.mxu0 0
    %2273 = vmatpush2.bf16.msra.mxu0 0
    %2274 = vmatprep.subr.bf16.mxu0 0
    %2275 = vmatpush2.bf16.msra.mxu0 0
    %2276 = vmatprep.mubr.bf16.mxu0 0
    %2277 = vmatmul.mubr.bf16.gmra.mxu0 %v2242
    %v2278 = vpop.f32.mrf.mxu0
    %v2279 = vadd.f32 %v2227, %v2278
    %v2280 = vpop.f32.mrf.mxu0
    %v2281 = vpop.f32.mrf.mxu0
    %v2282 = vadd.f32 %v2227, %v2281
    %v2283 = vpop.f32.mrf.mxu0
    %2284 = vdwg.mxu0
    %2286 = vrot.lane.b32.xlu0 %v2279, 96
    %v2287 = vpop.permute.xlu0 %2286
    %v2288 = vsel %vm636, %v2279, 0
    %v2290 = vsel %vm636, %v2287, 0
    %2292 = vmatprep.subr.mxu0 0.0
    %2293 = vmatpush1.xpose.msra.mxu0 0.0
    %2294 = vmatprep.subr.mxu0 0.0
    %2295 = vmatpush1.xpose.msra.mxu0 0.0
    %2296 = vmatprep.subr.mxu0 0.0
    %2297 = vmatpush1.xpose.msra.mxu0 0.0
    %2298 = vmatprep.subr.mxu0 0.0
    %2299 = vmatpush1.xpose.msra.mxu0 0.0
    %2300 = vmatprep.subr.mxu0 0.0
    %2301 = vmatpush1.xpose.msra.mxu0 0.0
    %2302 = vmatprep.subr.mxu0 0.0
    %2303 = vmatpush1.xpose.msra.mxu0 0.0
    %2304 = vmatprep.subr.mxu0 0.0
    %2305 = vmatpush1.xpose.msra.mxu0 0.0
    %2306 = vmatprep.subr.mxu0 0.0
    %2307 = vmatpush1.xpose.msra.mxu0 0.0
    %2308 = vmatprep.subr.mxu0 0.0
    %2309 = vmatpush1.xpose.msra.mxu0 0.0
    %2310 = vmatprep.subr.mxu0 0.0
    %2311 = vmatpush1.xpose.msra.mxu0 0.0
    %2312 = vmatprep.subr.mxu0 0.0
    %2313 = vmatpush1.xpose.msra.mxu0 0.0
    %2314 = vmatprep.subr.mxu0 0.0
    %2315 = vmatpush1.xpose.msra.mxu0 0.0
    %2316 = vmatprep.subr.mxu0 0.0
    %2317 = vmatpush1.xpose.msra.mxu0 0.0
    %2318 = vmatprep.subr.mxu0 0.0
    %2319 = vmatpush1.xpose.msra.mxu0 0.0
    %2320 = vmatprep.subr.mxu0 0.0
    %2321 = vmatpush1.xpose.msra.mxu0 0.0
    %2322 = vmatprep.subr.mxu0 0.0
    %2323 = vmatpush1.xpose.msra.mxu0 %v2290
    %2324 = vmatprep.subr.mxu0 0.0
    %2325 = vmatpush2.xpose.msra.mxu0 0.0
    %2326 = vmatprep.subr.mxu0 0.0
    %2327 = vmatpush2.xpose.msra.mxu0 0.0
    %2328 = vmatprep.subr.mxu0 0.0
    %2329 = vmatpush2.xpose.msra.mxu0 0.0
    %2330 = vmatprep.subr.mxu0 0.0
    %2331 = vmatpush2.xpose.msra.mxu0 0.0
    %2332 = vmatprep.subr.mxu0 0.0
    %2333 = vmatpush2.xpose.msra.mxu0 0.0
    %2334 = vmatprep.subr.mxu0 0.0
    %2335 = vmatpush2.xpose.msra.mxu0 0.0
    %2336 = vmatprep.subr.mxu0 0.0
    %2337 = vmatpush2.xpose.msra.mxu0 0.0
    %2338 = vmatprep.subr.mxu0 0.0
    %2339 = vmatpush2.xpose.msra.mxu0 0.0
    %2340 = vmatprep.subr.mxu0 0.0
    %2341 = vmatpush2.xpose.msra.mxu0 0.0
    %2342 = vmatprep.subr.mxu0 0.0
    %2343 = vmatpush2.xpose.msra.mxu0 0.0
    %2344 = vmatprep.subr.mxu0 0.0
    %2345 = vmatpush2.xpose.msra.mxu0 0.0
    %2346 = vmatprep.subr.mxu0 0.0
    %2347 = vmatpush2.xpose.msra.mxu0 0.0
    %2348 = vmatprep.subr.mxu0 0.0
    %2349 = vmatpush2.xpose.msra.mxu0 0.0
    %2350 = vmatprep.subr.mxu0 0.0
    %2351 = vmatpush2.xpose.msra.mxu0 0.0
    %2352 = vmatprep.subr.mxu0 0.0
    %2353 = vmatpush2.xpose.msra.mxu0 0.0
    %2354 = vmatprep.subr.mxu0 0.0
    %2355 = vmatpush2.xpose.msra.mxu0 0.0
    %2356 = vmatprep.mubr.f32.mxu0 0.0
    %2357 = vmatmul.mubr.f32.gmra.mxu0 %v2288
    %v2358 = vpop.f32.mrf.mxu0
    %v2359 = vadd.f32 0.0, %v2358
    %v2360 = vpop.f32.mrf.mxu0
    %2361 = vdwg.mxu0
    %2363 = vrot.lane.b32.xlu0 %v2282, 96
    %v2364 = vpop.permute.xlu0 %2363
    %v2365 = vsel %vm636, %v2282, 0
    %v2367 = vsel %vm636, %v2364, 0
    %2369 = vmatprep.subr.mxu0 0.0
    %2370 = vmatpush1.xpose.msra.mxu0 0.0
    %2371 = vmatprep.subr.mxu0 0.0
    %2372 = vmatpush1.xpose.msra.mxu0 0.0
    %2373 = vmatprep.subr.mxu0 0.0
    %2374 = vmatpush1.xpose.msra.mxu0 0.0
    %2375 = vmatprep.subr.mxu0 0.0
    %2376 = vmatpush1.xpose.msra.mxu0 0.0
    %2377 = vmatprep.subr.mxu0 0.0
    %2378 = vmatpush1.xpose.msra.mxu0 0.0
    %2379 = vmatprep.subr.mxu0 0.0
    %2380 = vmatpush1.xpose.msra.mxu0 0.0
    %2381 = vmatprep.subr.mxu0 0.0
    %2382 = vmatpush1.xpose.msra.mxu0 0.0
    %2383 = vmatprep.subr.mxu0 0.0
    %2384 = vmatpush1.xpose.msra.mxu0 0.0
    %2385 = vmatprep.subr.mxu0 0.0
    %2386 = vmatpush1.xpose.msra.mxu0 0.0
    %2387 = vmatprep.subr.mxu0 0.0
    %2388 = vmatpush1.xpose.msra.mxu0 0.0
    %2389 = vmatprep.subr.mxu0 0.0
    %2390 = vmatpush1.xpose.msra.mxu0 0.0
    %2391 = vmatprep.subr.mxu0 0.0
    %2392 = vmatpush1.xpose.msra.mxu0 0.0
    %2393 = vmatprep.subr.mxu0 0.0
    %2394 = vmatpush1.xpose.msra.mxu0 0.0
    %2395 = vmatprep.subr.mxu0 0.0
    %2396 = vmatpush1.xpose.msra.mxu0 0.0
    %2397 = vmatprep.subr.mxu0 0.0
    %2398 = vmatpush1.xpose.msra.mxu0 0.0
    %2399 = vmatprep.subr.mxu0 0.0
    %2400 = vmatpush1.xpose.msra.mxu0 %v2367
    %2401 = vmatprep.subr.mxu0 0.0
    %2402 = vmatpush2.xpose.msra.mxu0 0.0
    %2403 = vmatprep.subr.mxu0 0.0
    %2404 = vmatpush2.xpose.msra.mxu0 0.0
    %2405 = vmatprep.subr.mxu0 0.0
    %2406 = vmatpush2.xpose.msra.mxu0 0.0
    %2407 = vmatprep.subr.mxu0 0.0
    %2408 = vmatpush2.xpose.msra.mxu0 0.0
    %2409 = vmatprep.subr.mxu0 0.0
    %2410 = vmatpush2.xpose.msra.mxu0 0.0
    %2411 = vmatprep.subr.mxu0 0.0
    %2412 = vmatpush2.xpose.msra.mxu0 0.0
    %2413 = vmatprep.subr.mxu0 0.0
    %2414 = vmatpush2.xpose.msra.mxu0 0.0
    %2415 = vmatprep.subr.mxu0 0.0
    %2416 = vmatpush2.xpose.msra.mxu0 0.0
    %2417 = vmatprep.subr.mxu0 0.0
    %2418 = vmatpush2.xpose.msra.mxu0 0.0
    %2419 = vmatprep.subr.mxu0 0.0
    %2420 = vmatpush2.xpose.msra.mxu0 0.0
    %2421 = vmatprep.subr.mxu0 0.0
    %2422 = vmatpush2.xpose.msra.mxu0 0.0
    %2423 = vmatprep.subr.mxu0 0.0
    %2424 = vmatpush2.xpose.msra.mxu0 0.0
    %2425 = vmatprep.subr.mxu0 0.0
    %2426 = vmatpush2.xpose.msra.mxu0 0.0
    %2427 = vmatprep.subr.mxu0 0.0
    %2428 = vmatpush2.xpose.msra.mxu0 0.0
    %2429 = vmatprep.subr.mxu0 0.0
    %2430 = vmatpush2.xpose.msra.mxu0 0.0
    %2431 = vmatprep.subr.mxu0 0.0
    %2432 = vmatpush2.xpose.msra.mxu0 0.0
    %2433 = vmatprep.mubr.f32.mxu0 0.0
    %2434 = vmatmul.mubr.f32.gmra.mxu0 %v2365
    %v2435 = vpop.f32.mrf.mxu0
    %v2436 = vadd.f32 0.0, %v2435
    %v2437 = vpop.f32.mrf.mxu0
    %2438 = vdwg.mxu0
    %v2439 = vmul.f32 %v2359, 0.35355338
    %v2440 = vmul.f32 %v2436, 0.35355338
    %v2441 = vsel %vm636, %v2439, -inf
    %2442 = vmax.xlane.f32.xlu0 %v2441
    %v2443 = vpop.xlane.xlu0 %2442
    %v2444 = vsel %vm636, %v2440, -inf
    %2445 = vmax.xlane.f32.xlu0 %v2444
    %v2446 = vpop.xlane.xlu0 %2445
    %v2447 = vsub.f32 %v2439, %v2443
    %v2448 = vsub.f32 %v2440, %v2446
    %v2449 = vmul.f32 %v2447, 1.442695
    %v2450 = vpow.pop %v2449
    %v2451 = vmul.f32 %v2448, 1.442695
    %v2452 = vpow.pop %v2451
    %v2453 = vsel %vm636, %v2450, 0.0
    %2454 = vadd.xlane.f32.xlu0 %v2453
    %v2455 = vpop.xlane.xlu0 %2454
    %v2456 = vsel %vm636, %v2452, 0.0
    %2457 = vadd.xlane.f32.xlu0 %v2456
    %v2458 = vpop.xlane.xlu0 %2457
    %v2459 = vrcp.pop %v2455
    %v2460 = vrcp.pop %v2458
    %v2461 = vmul.f32 %v2450, %v2459
    %v2462 = vmul.f32 %v2452, %v2460
    %2463 = vrot.lane.b32.xlu0 %v2279, 64
    %v2464 = vpop.permute.xlu0 %2463
    %v2467 = vsel %vm636, %v2461, 0
    %2469 = vmatprep.subr.mxu0 0.0
    %2470 = vmatpush1.msra.mxu0 0.0
    %2471 = vmatprep.subr.mxu0 0.0
    %2472 = vmatpush1.msra.mxu0 0.0
    %2473 = vmatprep.subr.mxu0 0.0
    %2474 = vmatpush1.msra.mxu0 0.0
    %2475 = vmatprep.subr.mxu0 0.0
    %2476 = vmatpush1.msra.mxu0 0.0
    %2477 = vmatprep.subr.mxu0 0.0
    %2478 = vmatpush1.msra.mxu0 0.0
    %2479 = vmatprep.subr.mxu0 0.0
    %2480 = vmatpush1.msra.mxu0 0.0
    %2481 = vmatprep.subr.mxu0 0.0
    %2482 = vmatpush1.msra.mxu0 0.0
    %2483 = vmatprep.subr.mxu0 0.0
    %2484 = vmatpush1.msra.mxu0 0.0
    %2485 = vmatprep.subr.mxu0 0.0
    %2486 = vmatpush1.msra.mxu0 0.0
    %2487 = vmatprep.subr.mxu0 0.0
    %2488 = vmatpush1.msra.mxu0 0.0
    %2489 = vmatprep.subr.mxu0 0.0
    %2490 = vmatpush1.msra.mxu0 0.0
    %2491 = vmatprep.subr.mxu0 0.0
    %2492 = vmatpush1.msra.mxu0 0.0
    %2493 = vmatprep.subr.mxu0 0.0
    %2494 = vmatpush1.msra.mxu0 0.0
    %2495 = vmatprep.subr.mxu0 0.0
    %2496 = vmatpush1.msra.mxu0 0.0
    %2497 = vmatprep.subr.mxu0 0.0
    %2498 = vmatpush1.msra.mxu0 0.0
    %2499 = vmatprep.subr.mxu0 0.0
    %2500 = vmatpush1.msra.mxu0 %v2464
    %2501 = vmatprep.subr.mxu0 0.0
    %2502 = vmatpush2.msra.mxu0 0.0
    %2503 = vmatprep.subr.mxu0 0.0
    %2504 = vmatpush2.msra.mxu0 0.0
    %2505 = vmatprep.subr.mxu0 0.0
    %2506 = vmatpush2.msra.mxu0 0.0
    %2507 = vmatprep.subr.mxu0 0.0
    %2508 = vmatpush2.msra.mxu0 0.0
    %2509 = vmatprep.subr.mxu0 0.0
    %2510 = vmatpush2.msra.mxu0 0.0
    %2511 = vmatprep.subr.mxu0 0.0
    %2512 = vmatpush2.msra.mxu0 0.0
    %2513 = vmatprep.subr.mxu0 0.0
    %2514 = vmatpush2.msra.mxu0 0.0
    %2515 = vmatprep.subr.mxu0 0.0
    %2516 = vmatpush2.msra.mxu0 0.0
    %2517 = vmatprep.subr.mxu0 0.0
    %2518 = vmatpush2.msra.mxu0 0.0
    %2519 = vmatprep.subr.mxu0 0.0
    %2520 = vmatpush2.msra.mxu0 0.0
    %2521 = vmatprep.subr.mxu0 0.0
    %2522 = vmatpush2.msra.mxu0 0.0
    %2523 = vmatprep.subr.mxu0 0.0
    %2524 = vmatpush2.msra.mxu0 0.0
    %2525 = vmatprep.subr.mxu0 0.0
    %2526 = vmatpush2.msra.mxu0 0.0
    %2527 = vmatprep.subr.mxu0 0.0
    %2528 = vmatpush2.msra.mxu0 0.0
    %2529 = vmatprep.subr.mxu0 0.0
    %2530 = vmatpush2.msra.mxu0 0.0
    %2531 = vmatprep.subr.mxu0 0.0
    %2532 = vmatpush2.msra.mxu0 0.0
    %2533 = vmatprep.mubr.f32.mxu0 0.0
    %2534 = vmatmul.mubr.f32.gmra.mxu0 %v2467
    %v2535 = vpop.f32.mrf.mxu0
    %v2536 = vadd.f32 0.0, %v2535
    %v2537 = vpop.f32.mrf.mxu0
    %2538 = vdwg.mxu0
    %2539 = vrot.lane.b32.xlu0 %v2282, 64
    %v2540 = vpop.permute.xlu0 %2539
    %v2543 = vsel %vm636, %v2462, 0
    %2545 = vmatprep.subr.mxu0 0.0
    %2546 = vmatpush1.msra.mxu0 0.0
    %2547 = vmatprep.subr.mxu0 0.0
    %2548 = vmatpush1.msra.mxu0 0.0
    %2549 = vmatprep.subr.mxu0 0.0
    %2550 = vmatpush1.msra.mxu0 0.0
    %2551 = vmatprep.subr.mxu0 0.0
    %2552 = vmatpush1.msra.mxu0 0.0
    %2553 = vmatprep.subr.mxu0 0.0
    %2554 = vmatpush1.msra.mxu0 0.0
    %2555 = vmatprep.subr.mxu0 0.0
    %2556 = vmatpush1.msra.mxu0 0.0
    %2557 = vmatprep.subr.mxu0 0.0
    %2558 = vmatpush1.msra.mxu0 0.0
    %2559 = vmatprep.subr.mxu0 0.0
    %2560 = vmatpush1.msra.mxu0 0.0
    %2561 = vmatprep.subr.mxu0 0.0
    %2562 = vmatpush1.msra.mxu0 0.0
    %2563 = vmatprep.subr.mxu0 0.0
    %2564 = vmatpush1.msra.mxu0 0.0
    %2565 = vmatprep.subr.mxu0 0.0
    %2566 = vmatpush1.msra.mxu0 0.0
    %2567 = vmatprep.subr.mxu0 0.0
    %2568 = vmatpush1.msra.mxu0 0.0
    %2569 = vmatprep.subr.mxu0 0.0
    %2570 = vmatpush1.msra.mxu0 0.0
    %2571 = vmatprep.subr.mxu0 0.0
    %2572 = vmatpush1.msra.mxu0 0.0
    %2573 = vmatprep.subr.mxu0 0.0
    %2574 = vmatpush1.msra.mxu0 0.0
    %2575 = vmatprep.subr.mxu0 0.0
    %2576 = vmatpush1.msra.mxu0 %v2540
    %2577 = vmatprep.subr.mxu0 0.0
    %2578 = vmatpush2.msra.mxu0 0.0
    %2579 = vmatprep.subr.mxu0 0.0
    %2580 = vmatpush2.msra.mxu0 0.0
    %2581 = vmatprep.subr.mxu0 0.0
    %2582 = vmatpush2.msra.mxu0 0.0
    %2583 = vmatprep.subr.mxu0 0.0
    %2584 = vmatpush2.msra.mxu0 0.0
    %2585 = vmatprep.subr.mxu0 0.0
    %2586 = vmatpush2.msra.mxu0 0.0
    %2587 = vmatprep.subr.mxu0 0.0
    %2588 = vmatpush2.msra.mxu0 0.0
    %2589 = vmatprep.subr.mxu0 0.0
    %2590 = vmatpush2.msra.mxu0 0.0
    %2591 = vmatprep.subr.mxu0 0.0
    %2592 = vmatpush2.msra.mxu0 0.0
    %2593 = vmatprep.subr.mxu0 0.0
    %2594 = vmatpush2.msra.mxu0 0.0
    %2595 = vmatprep.subr.mxu0 0.0
    %2596 = vmatpush2.msra.mxu0 0.0
    %2597 = vmatprep.subr.mxu0 0.0
    %2598 = vmatpush2.msra.mxu0 0.0
    %2599 = vmatprep.subr.mxu0 0.0
    %2600 = vmatpush2.msra.mxu0 0.0
    %2601 = vmatprep.subr.mxu0 0.0
    %2602 = vmatpush2.msra.mxu0 0.0
    %2603 = vmatprep.subr.mxu0 0.0
    %2604 = vmatpush2.msra.mxu0 0.0
    %2605 = vmatprep.subr.mxu0 0.0
    %2606 = vmatpush2.msra.mxu0 0.0
    %2607 = vmatprep.subr.mxu0 0.0
    %2608 = vmatpush2.msra.mxu0 0.0
    %2609 = vmatprep.mubr.f32.mxu0 0.0
    %2610 = vmatmul.mubr.f32.gmra.mxu0 %v2543
    %v2611 = vpop.f32.mrf.mxu0
    %v2612 = vadd.f32 0.0, %v2611
    %v2613 = vpop.f32.mrf.mxu0
    %2614 = vdwg.mxu0
    %2615 = vrot.lane.b32.xlu0 %v2279, 120
    %v2616 = vpop.permute.xlu0 %2615
    %2617 = vrot.lane.b32.xlu0 %v2279, 88
    %v2618 = vpop.permute.xlu0 %2617
    %v2619 = vsel %vm636, %v2616, 0
    %v2621 = vsel %vm636, %v2618, 0
    %2623 = vmatprep.subr.mxu0 0.0
    %2624 = vmatpush1.xpose.msra.mxu0 0.0
    %2625 = vmatprep.subr.mxu0 0.0
    %2626 = vmatpush1.xpose.msra.mxu0 0.0
    %2627 = vmatprep.subr.mxu0 0.0
    %2628 = vmatpush1.xpose.msra.mxu0 0.0
    %2629 = vmatprep.subr.mxu0 0.0
    %2630 = vmatpush1.xpose.msra.mxu0 0.0
    %2631 = vmatprep.subr.mxu0 0.0
    %2632 = vmatpush1.xpose.msra.mxu0 0.0
    %2633 = vmatprep.subr.mxu0 0.0
    %2634 = vmatpush1.xpose.msra.mxu0 0.0
    %2635 = vmatprep.subr.mxu0 0.0
    %2636 = vmatpush1.xpose.msra.mxu0 0.0
    %2637 = vmatprep.subr.mxu0 0.0
    %2638 = vmatpush1.xpose.msra.mxu0 0.0
    %2639 = vmatprep.subr.mxu0 0.0
    %2640 = vmatpush1.xpose.msra.mxu0 0.0
    %2641 = vmatprep.subr.mxu0 0.0
    %2642 = vmatpush1.xpose.msra.mxu0 0.0
    %2643 = vmatprep.subr.mxu0 0.0
    %2644 = vmatpush1.xpose.msra.mxu0 0.0
    %2645 = vmatprep.subr.mxu0 0.0
    %2646 = vmatpush1.xpose.msra.mxu0 0.0
    %2647 = vmatprep.subr.mxu0 0.0
    %2648 = vmatpush1.xpose.msra.mxu0 0.0
    %2649 = vmatprep.subr.mxu0 0.0
    %2650 = vmatpush1.xpose.msra.mxu0 0.0
    %2651 = vmatprep.subr.mxu0 0.0
    %2652 = vmatpush1.xpose.msra.mxu0 0.0
    %2653 = vmatprep.subr.mxu0 0.0
    %2654 = vmatpush1.xpose.msra.mxu0 %v2621
    %2655 = vmatprep.subr.mxu0 0.0
    %2656 = vmatpush2.xpose.msra.mxu0 0.0
    %2657 = vmatprep.subr.mxu0 0.0
    %2658 = vmatpush2.xpose.msra.mxu0 0.0
    %2659 = vmatprep.subr.mxu0 0.0
    %2660 = vmatpush2.xpose.msra.mxu0 0.0
    %2661 = vmatprep.subr.mxu0 0.0
    %2662 = vmatpush2.xpose.msra.mxu0 0.0
    %2663 = vmatprep.subr.mxu0 0.0
    %2664 = vmatpush2.xpose.msra.mxu0 0.0
    %2665 = vmatprep.subr.mxu0 0.0
    %2666 = vmatpush2.xpose.msra.mxu0 0.0
    %2667 = vmatprep.subr.mxu0 0.0
    %2668 = vmatpush2.xpose.msra.mxu0 0.0
    %2669 = vmatprep.subr.mxu0 0.0
    %2670 = vmatpush2.xpose.msra.mxu0 0.0
    %2671 = vmatprep.subr.mxu0 0.0
    %2672 = vmatpush2.xpose.msra.mxu0 0.0
    %2673 = vmatprep.subr.mxu0 0.0
    %2674 = vmatpush2.xpose.msra.mxu0 0.0
    %2675 = vmatprep.subr.mxu0 0.0
    %2676 = vmatpush2.xpose.msra.mxu0 0.0
    %2677 = vmatprep.subr.mxu0 0.0
    %2678 = vmatpush2.xpose.msra.mxu0 0.0
    %2679 = vmatprep.subr.mxu0 0.0
    %2680 = vmatpush2.xpose.msra.mxu0 0.0
    %2681 = vmatprep.subr.mxu0 0.0
    %2682 = vmatpush2.xpose.msra.mxu0 0.0
    %2683 = vmatprep.subr.mxu0 0.0
    %2684 = vmatpush2.xpose.msra.mxu0 0.0
    %2685 = vmatprep.subr.mxu0 0.0
    %2686 = vmatpush2.xpose.msra.mxu0 0.0
    %2687 = vmatprep.mubr.f32.mxu0 0.0
    %2688 = vmatmul.mubr.f32.gmra.mxu0 %v2619
    %v2689 = vpop.f32.mrf.mxu0
    %v2690 = vadd.f32 0.0, %v2689
    %v2691 = vpop.f32.mrf.mxu0
    %2692 = vdwg.mxu0
    %2693 = vrot.lane.b32.xlu0 %v2282, 120
    %v2694 = vpop.permute.xlu0 %2693
    %2695 = vrot.lane.b32.xlu0 %v2282, 88
    %v2696 = vpop.permute.xlu0 %2695
    %v2697 = vsel %vm636, %v2694, 0
    %v2699 = vsel %vm636, %v2696, 0
    %2701 = vmatprep.subr.mxu0 0.0
    %2702 = vmatpush1.xpose.msra.mxu0 0.0
    %2703 = vmatprep.subr.mxu0 0.0
    %2704 = vmatpush1.xpose.msra.mxu0 0.0
    %2705 = vmatprep.subr.mxu0 0.0
    %2706 = vmatpush1.xpose.msra.mxu0 0.0
    %2707 = vmatprep.subr.mxu0 0.0
    %2708 = vmatpush1.xpose.msra.mxu0 0.0
    %2709 = vmatprep.subr.mxu0 0.0
    %2710 = vmatpush1.xpose.msra.mxu0 0.0
    %2711 = vmatprep.subr.mxu0 0.0
    %2712 = vmatpush1.xpose.msra.mxu0 0.0
    %2713 = vmatprep.subr.mxu0 0.0
    %2714 = vmatpush1.xpose.msra.mxu0 0.0
    %2715 = vmatprep.subr.mxu0 0.0
    %2716 = vmatpush1.xpose.msra.mxu0 0.0
    %2717 = vmatprep.subr.mxu0 0.0
    %2718 = vmatpush1.xpose.msra.mxu0 0.0
    %2719 = vmatprep.subr.mxu0 0.0
    %2720 = vmatpush1.xpose.msra.mxu0 0.0
    %2721 = vmatprep.subr.mxu0 0.0
    %2722 = vmatpush1.xpose.msra.mxu0 0.0
    %2723 = vmatprep.subr.mxu0 0.0
    %2724 = vmatpush1.xpose.msra.mxu0 0.0
    %2725 = vmatprep.subr.mxu0 0.0
    %2726 = vmatpush1.xpose.msra.mxu0 0.0
    %2727 = vmatprep.subr.mxu0 0.0
    %2728 = vmatpush1.xpose.msra.mxu0 0.0
    %2729 = vmatprep.subr.mxu0 0.0
    %2730 = vmatpush1.xpose.msra.mxu0 0.0
    %2731 = vmatprep.subr.mxu0 0.0
    %2732 = vmatpush1.xpose.msra.mxu0 %v2699
    %2733 = vmatprep.subr.mxu0 0.0
    %2734 = vmatpush2.xpose.msra.mxu0 0.0
    %2735 = vmatprep.subr.mxu0 0.0
    %2736 = vmatpush2.xpose.msra.mxu0 0.0
    %2737 = vmatprep.subr.mxu0 0.0
    %2738 = vmatpush2.xpose.msra.mxu0 0.0
    %2739 = vmatprep.subr.mxu0 0.0
    %2740 = vmatpush2.xpose.msra.mxu0 0.0
    %2741 = vmatprep.subr.mxu0 0.0
    %2742 = vmatpush2.xpose.msra.mxu0 0.0
    %2743 = vmatprep.subr.mxu0 0.0
    %2744 = vmatpush2.xpose.msra.mxu0 0.0
    %2745 = vmatprep.subr.mxu0 0.0
    %2746 = vmatpush2.xpose.msra.mxu0 0.0
    %2747 = vmatprep.subr.mxu0 0.0
    %2748 = vmatpush2.xpose.msra.mxu0 0.0
    %2749 = vmatprep.subr.mxu0 0.0
    %2750 = vmatpush2.xpose.msra.mxu0 0.0
    %2751 = vmatprep.subr.mxu0 0.0
    %2752 = vmatpush2.xpose.msra.mxu0 0.0
    %2753 = vmatprep.subr.mxu0 0.0
    %2754 = vmatpush2.xpose.msra.mxu0 0.0
    %2755 = vmatprep.subr.mxu0 0.0
    %2756 = vmatpush2.xpose.msra.mxu0 0.0
    %2757 = vmatprep.subr.mxu0 0.0
    %2758 = vmatpush2.xpose.msra.mxu0 0.0
    %2759 = vmatprep.subr.mxu0 0.0
    %2760 = vmatpush2.xpose.msra.mxu0 0.0
    %2761 = vmatprep.subr.mxu0 0.0
    %2762 = vmatpush2.xpose.msra.mxu0 0.0
    %2763 = vmatprep.subr.mxu0 0.0
    %2764 = vmatpush2.xpose.msra.mxu0 0.0
    %2765 = vmatprep.mubr.f32.mxu0 0.0
    %2766 = vmatmul.mubr.f32.gmra.mxu0 %v2697
    %v2767 = vpop.f32.mrf.mxu0
    %v2768 = vadd.f32 0.0, %v2767
    %v2769 = vpop.f32.mrf.mxu0
    %2770 = vdwg.mxu0
    %v2771 = vmul.f32 %v2690, 0.35355338
    %v2772 = vmul.f32 %v2768, 0.35355338
    %v2773 = vsel %vm636, %v2771, -inf
    %2774 = vmax.xlane.f32.xlu0 %v2773
    %v2775 = vpop.xlane.xlu0 %2774
    %v2776 = vsel %vm636, %v2772, -inf
    %2777 = vmax.xlane.f32.xlu0 %v2776
    %v2778 = vpop.xlane.xlu0 %2777
    %v2779 = vsub.f32 %v2771, %v2775
    %v2780 = vsub.f32 %v2772, %v2778
    %v2781 = vmul.f32 %v2779, 1.442695
    %v2782 = vpow.pop %v2781
    %v2783 = vmul.f32 %v2780, 1.442695
    %v2784 = vpow.pop %v2783
    %v2785 = vsel %vm636, %v2782, 0.0
    %2786 = vadd.xlane.f32.xlu0 %v2785
    %v2787 = vpop.xlane.xlu0 %2786
    %v2788 = vsel %vm636, %v2784, 0.0
    %2789 = vadd.xlane.f32.xlu0 %v2788
    %v2790 = vpop.xlane.xlu0 %2789
    %v2791 = vrcp.pop %v2787
    %v2792 = vrcp.pop %v2790
    %v2793 = vmul.f32 %v2782, %v2791
    %v2794 = vmul.f32 %v2784, %v2792
    %2795 = vrot.lane.b32.xlu0 %v2279, 56
    %v2796 = vpop.permute.xlu0 %2795
    %v2799 = vsel %vm636, %v2793, 0
    %2801 = vmatprep.subr.mxu0 0.0
    %2802 = vmatpush1.msra.mxu0 0.0
    %2803 = vmatprep.subr.mxu0 0.0
    %2804 = vmatpush1.msra.mxu0 0.0
    %2805 = vmatprep.subr.mxu0 0.0
    %2806 = vmatpush1.msra.mxu0 0.0
    %2807 = vmatprep.subr.mxu0 0.0
    %2808 = vmatpush1.msra.mxu0 0.0
    %2809 = vmatprep.subr.mxu0 0.0
    %2810 = vmatpush1.msra.mxu0 0.0
    %2811 = vmatprep.subr.mxu0 0.0
    %2812 = vmatpush1.msra.mxu0 0.0
    %2813 = vmatprep.subr.mxu0 0.0
    %2814 = vmatpush1.msra.mxu0 0.0
    %2815 = vmatprep.subr.mxu0 0.0
    %2816 = vmatpush1.msra.mxu0 0.0
    %2817 = vmatprep.subr.mxu0 0.0
    %2818 = vmatpush1.msra.mxu0 0.0
    %2819 = vmatprep.subr.mxu0 0.0
    %2820 = vmatpush1.msra.mxu0 0.0
    %2821 = vmatprep.subr.mxu0 0.0
    %2822 = vmatpush1.msra.mxu0 0.0
    %2823 = vmatprep.subr.mxu0 0.0
    %2824 = vmatpush1.msra.mxu0 0.0
    %2825 = vmatprep.subr.mxu0 0.0
    %2826 = vmatpush1.msra.mxu0 0.0
    %2827 = vmatprep.subr.mxu0 0.0
    %2828 = vmatpush1.msra.mxu0 0.0
    %2829 = vmatprep.subr.mxu0 0.0
    %2830 = vmatpush1.msra.mxu0 0.0
    %2831 = vmatprep.subr.mxu0 0.0
    %2832 = vmatpush1.msra.mxu0 %v2796
    %2833 = vmatprep.subr.mxu0 0.0
    %2834 = vmatpush2.msra.mxu0 0.0
    %2835 = vmatprep.subr.mxu0 0.0
    %2836 = vmatpush2.msra.mxu0 0.0
    %2837 = vmatprep.subr.mxu0 0.0
    %2838 = vmatpush2.msra.mxu0 0.0
    %2839 = vmatprep.subr.mxu0 0.0
    %2840 = vmatpush2.msra.mxu0 0.0
    %2841 = vmatprep.subr.mxu0 0.0
    %2842 = vmatpush2.msra.mxu0 0.0
    %2843 = vmatprep.subr.mxu0 0.0
    %2844 = vmatpush2.msra.mxu0 0.0
    %2845 = vmatprep.subr.mxu0 0.0
    %2846 = vmatpush2.msra.mxu0 0.0
    %2847 = vmatprep.subr.mxu0 0.0
    %2848 = vmatpush2.msra.mxu0 0.0
    %2849 = vmatprep.subr.mxu0 0.0
    %2850 = vmatpush2.msra.mxu0 0.0
    %2851 = vmatprep.subr.mxu0 0.0
    %2852 = vmatpush2.msra.mxu0 0.0
    %2853 = vmatprep.subr.mxu0 0.0
    %2854 = vmatpush2.msra.mxu0 0.0
    %2855 = vmatprep.subr.mxu0 0.0
    %2856 = vmatpush2.msra.mxu0 0.0
    %2857 = vmatprep.subr.mxu0 0.0
    %2858 = vmatpush2.msra.mxu0 0.0
    %2859 = vmatprep.subr.mxu0 0.0
    %2860 = vmatpush2.msra.mxu0 0.0
    %2861 = vmatprep.subr.mxu0 0.0
    %2862 = vmatpush2.msra.mxu0 0.0
    %2863 = vmatprep.subr.mxu0 0.0
    %2864 = vmatpush2.msra.mxu0 0.0
    %2865 = vmatprep.mubr.f32.mxu0 0.0
    %2866 = vmatmul.mubr.f32.gmra.mxu0 %v2799
    %v2867 = vpop.f32.mrf.mxu0
    %v2868 = vadd.f32 0.0, %v2867
    %v2869 = vpop.f32.mrf.mxu0
    %2870 = vdwg.mxu0
    %2871 = vrot.lane.b32.xlu0 %v2282, 56
    %v2872 = vpop.permute.xlu0 %2871
    %v2875 = vsel %vm636, %v2794, 0
    %2877 = vmatprep.subr.mxu0 0.0
    %2878 = vmatpush1.msra.mxu0 0.0
    %2879 = vmatprep.subr.mxu0 0.0
    %2880 = vmatpush1.msra.mxu0 0.0
    %2881 = vmatprep.subr.mxu0 0.0
    %2882 = vmatpush1.msra.mxu0 0.0
    %2883 = vmatprep.subr.mxu0 0.0
    %2884 = vmatpush1.msra.mxu0 0.0
    %2885 = vmatprep.subr.mxu0 0.0
    %2886 = vmatpush1.msra.mxu0 0.0
    %2887 = vmatprep.subr.mxu0 0.0
    %2888 = vmatpush1.msra.mxu0 0.0
    %2889 = vmatprep.subr.mxu0 0.0
    %2890 = vmatpush1.msra.mxu0 0.0
    %2891 = vmatprep.subr.mxu0 0.0
    %2892 = vmatpush1.msra.mxu0 0.0
    %2893 = vmatprep.subr.mxu0 0.0
    %2894 = vmatpush1.msra.mxu0 0.0
    %2895 = vmatprep.subr.mxu0 0.0
    %2896 = vmatpush1.msra.mxu0 0.0
    %2897 = vmatprep.subr.mxu0 0.0
    %2898 = vmatpush1.msra.mxu0 0.0
    %2899 = vmatprep.subr.mxu0 0.0
    %2900 = vmatpush1.msra.mxu0 0.0
    %2901 = vmatprep.subr.mxu0 0.0
    %2902 = vmatpush1.msra.mxu0 0.0
    %2903 = vmatprep.subr.mxu0 0.0
    %2904 = vmatpush1.msra.mxu0 0.0
    %2905 = vmatprep.subr.mxu0 0.0
    %2906 = vmatpush1.msra.mxu0 0.0
    %2907 = vmatprep.subr.mxu0 0.0
    %2908 = vmatpush1.msra.mxu0 %v2872
    %2909 = vmatprep.subr.mxu0 0.0
    %2910 = vmatpush2.msra.mxu0 0.0
    %2911 = vmatprep.subr.mxu0 0.0
    %2912 = vmatpush2.msra.mxu0 0.0
    %2913 = vmatprep.subr.mxu0 0.0
    %2914 = vmatpush2.msra.mxu0 0.0
    %2915 = vmatprep.subr.mxu0 0.0
    %2916 = vmatpush2.msra.mxu0 0.0
    %2917 = vmatprep.subr.mxu0 0.0
    %2918 = vmatpush2.msra.mxu0 0.0
    %2919 = vmatprep.subr.mxu0 0.0
    %2920 = vmatpush2.msra.mxu0 0.0
    %2921 = vmatprep.subr.mxu0 0.0
    %2922 = vmatpush2.msra.mxu0 0.0
    %2923 = vmatprep.subr.mxu0 0.0
    %2924 = vmatpush2.msra.mxu0 0.0
    %2925 = vmatprep.subr.mxu0 0.0
    %2926 = vmatpush2.msra.mxu0 0.0
    %2927 = vmatprep.subr.mxu0 0.0
    %2928 = vmatpush2.msra.mxu0 0.0
    %2929 = vmatprep.subr.mxu0 0.0
    %2930 = vmatpush2.msra.mxu0 0.0
    %2931 = vmatprep.subr.mxu0 0.0
    %2932 = vmatpush2.msra.mxu0 0.0
    %2933 = vmatprep.subr.mxu0 0.0
    %2934 = vmatpush2.msra.mxu0 0.0
    %2935 = vmatprep.subr.mxu0 0.0
    %2936 = vmatpush2.msra.mxu0 0.0
    %2937 = vmatprep.subr.mxu0 0.0
    %2938 = vmatpush2.msra.mxu0 0.0
    %2939 = vmatprep.subr.mxu0 0.0
    %2940 = vmatpush2.msra.mxu0 0.0
    %2941 = vmatprep.mubr.f32.mxu0 0.0
    %2942 = vmatmul.mubr.f32.gmra.mxu0 %v2875
    %v2943 = vpop.f32.mrf.mxu0
    %v2944 = vadd.f32 0.0, %v2943
    %v2945 = vpop.f32.mrf.mxu0
    %2946 = vdwg.mxu0
    %2947 = vrot.lane.b32.xlu0 %v2279, 112
    %v2948 = vpop.permute.xlu0 %2947
    %2949 = vrot.lane.b32.xlu0 %v2279, 80
    %v2950 = vpop.permute.xlu0 %2949
    %v2951 = vsel %vm636, %v2948, 0
    %v2953 = vsel %vm636, %v2950, 0
    %2955 = vmatprep.subr.mxu0 0.0
    %2956 = vmatpush1.xpose.msra.mxu0 0.0
    %2957 = vmatprep.subr.mxu0 0.0
    %2958 = vmatpush1.xpose.msra.mxu0 0.0
    %2959 = vmatprep.subr.mxu0 0.0
    %2960 = vmatpush1.xpose.msra.mxu0 0.0
    %2961 = vmatprep.subr.mxu0 0.0
    %2962 = vmatpush1.xpose.msra.mxu0 0.0
    %2963 = vmatprep.subr.mxu0 0.0
    %2964 = vmatpush1.xpose.msra.mxu0 0.0
    %2965 = vmatprep.subr.mxu0 0.0
    %2966 = vmatpush1.xpose.msra.mxu0 0.0
    %2967 = vmatprep.subr.mxu0 0.0
    %2968 = vmatpush1.xpose.msra.mxu0 0.0
    %2969 = vmatprep.subr.mxu0 0.0
    %2970 = vmatpush1.xpose.msra.mxu0 0.0
    %2971 = vmatprep.subr.mxu0 0.0
    %2972 = vmatpush1.xpose.msra.mxu0 0.0
    %2973 = vmatprep.subr.mxu0 0.0
    %2974 = vmatpush1.xpose.msra.mxu0 0.0
    %2975 = vmatprep.subr.mxu0 0.0
    %2976 = vmatpush1.xpose.msra.mxu0 0.0
    %2977 = vmatprep.subr.mxu0 0.0
    %2978 = vmatpush1.xpose.msra.mxu0 0.0
    %2979 = vmatprep.subr.mxu0 0.0
    %2980 = vmatpush1.xpose.msra.mxu0 0.0
    %2981 = vmatprep.subr.mxu0 0.0
    %2982 = vmatpush1.xpose.msra.mxu0 0.0
    %2983 = vmatprep.subr.mxu0 0.0
    %2984 = vmatpush1.xpose.msra.mxu0 0.0
    %2985 = vmatprep.subr.mxu0 0.0
    %2986 = vmatpush1.xpose.msra.mxu0 %v2953
    %2987 = vmatprep.subr.mxu0 0.0
    %2988 = vmatpush2.xpose.msra.mxu0 0.0
    %2989 = vmatprep.subr.mxu0 0.0
    %2990 = vmatpush2.xpose.msra.mxu0 0.0
    %2991 = vmatprep.subr.mxu0 0.0
    %2992 = vmatpush2.xpose.msra.mxu0 0.0
    %2993 = vmatprep.subr.mxu0 0.0
    %2994 = vmatpush2.xpose.msra.mxu0 0.0
    %2995 = vmatprep.subr.mxu0 0.0
    %2996 = vmatpush2.xpose.msra.mxu0 0.0
    %2997 = vmatprep.subr.mxu0 0.0
    %2998 = vmatpush2.xpose.msra.mxu0 0.0
    %2999 = vmatprep.subr.mxu0 0.0
    %3000 = vmatpush2.xpose.msra.mxu0 0.0
    %3001 = vmatprep.subr.mxu0 0.0
    %3002 = vmatpush2.xpose.msra.mxu0 0.0
    %3003 = vmatprep.subr.mxu0 0.0
    %3004 = vmatpush2.xpose.msra.mxu0 0.0
    %3005 = vmatprep.subr.mxu0 0.0
    %3006 = vmatpush2.xpose.msra.mxu0 0.0
    %3007 = vmatprep.subr.mxu0 0.0
    %3008 = vmatpush2.xpose.msra.mxu0 0.0
    %3009 = vmatprep.subr.mxu0 0.0
    %3010 = vmatpush2.xpose.msra.mxu0 0.0
    %3011 = vmatprep.subr.mxu0 0.0
    %3012 = vmatpush2.xpose.msra.mxu0 0.0
    %3013 = vmatprep.subr.mxu0 0.0
    %3014 = vmatpush2.xpose.msra.mxu0 0.0
    %3015 = vmatprep.subr.mxu0 0.0
    %3016 = vmatpush2.xpose.msra.mxu0 0.0
    %3017 = vmatprep.subr.mxu0 0.0
    %3018 = vmatpush2.xpose.msra.mxu0 0.0
    %3019 = vmatprep.mubr.f32.mxu0 0.0
    %3020 = vmatmul.mubr.f32.gmra.mxu0 %v2951
    %v3021 = vpop.f32.mrf.mxu0
    %v3022 = vadd.f32 0.0, %v3021
    %v3023 = vpop.f32.mrf.mxu0
    %3024 = vdwg.mxu0
    %3025 = vrot.lane.b32.xlu0 %v2282, 112
    %v3026 = vpop.permute.xlu0 %3025
    %3027 = vrot.lane.b32.xlu0 %v2282, 80
    %v3028 = vpop.permute.xlu0 %3027
    %v3029 = vsel %vm636, %v3026, 0
    %v3031 = vsel %vm636, %v3028, 0
    %3033 = vmatprep.subr.mxu0 0.0
    %3034 = vmatpush1.xpose.msra.mxu0 0.0
    %3035 = vmatprep.subr.mxu0 0.0
    %3036 = vmatpush1.xpose.msra.mxu0 0.0
    %3037 = vmatprep.subr.mxu0 0.0
    %3038 = vmatpush1.xpose.msra.mxu0 0.0
    %3039 = vmatprep.subr.mxu0 0.0
    %3040 = vmatpush1.xpose.msra.mxu0 0.0
    %3041 = vmatprep.subr.mxu0 0.0
    %3042 = vmatpush1.xpose.msra.mxu0 0.0
    %3043 = vmatprep.subr.mxu0 0.0
    %3044 = vmatpush1.xpose.msra.mxu0 0.0
    %3045 = vmatprep.subr.mxu0 0.0
    %3046 = vmatpush1.xpose.msra.mxu0 0.0
    %3047 = vmatprep.subr.mxu0 0.0
    %3048 = vmatpush1.xpose.msra.mxu0 0.0
    %3049 = vmatprep.subr.mxu0 0.0
    %3050 = vmatpush1.xpose.msra.mxu0 0.0
    %3051 = vmatprep.subr.mxu0 0.0
    %3052 = vmatpush1.xpose.msra.mxu0 0.0
    %3053 = vmatprep.subr.mxu0 0.0
    %3054 = vmatpush1.xpose.msra.mxu0 0.0
    %3055 = vmatprep.subr.mxu0 0.0
    %3056 = vmatpush1.xpose.msra.mxu0 0.0
    %3057 = vmatprep.subr.mxu0 0.0
    %3058 = vmatpush1.xpose.msra.mxu0 0.0
    %3059 = vmatprep.subr.mxu0 0.0
    %3060 = vmatpush1.xpose.msra.mxu0 0.0
    %3061 = vmatprep.subr.mxu0 0.0
    %3062 = vmatpush1.xpose.msra.mxu0 0.0
    %3063 = vmatprep.subr.mxu0 0.0
    %3064 = vmatpush1.xpose.msra.mxu0 %v3031
    %3065 = vmatprep.subr.mxu0 0.0
    %3066 = vmatpush2.xpose.msra.mxu0 0.0
    %3067 = vmatprep.subr.mxu0 0.0
    %3068 = vmatpush2.xpose.msra.mxu0 0.0
    %3069 = vmatprep.subr.mxu0 0.0
    %3070 = vmatpush2.xpose.msra.mxu0 0.0
    %3071 = vmatprep.subr.mxu0 0.0
    %3072 = vmatpush2.xpose.msra.mxu0 0.0
    %3073 = vmatprep.subr.mxu0 0.0
    %3074 = vmatpush2.xpose.msra.mxu0 0.0
    %3075 = vmatprep.subr.mxu0 0.0
    %3076 = vmatpush2.xpose.msra.mxu0 0.0
    %3077 = vmatprep.subr.mxu0 0.0
    %3078 = vmatpush2.xpose.msra.mxu0 0.0
    %3079 = vmatprep.subr.mxu0 0.0
    %3080 = vmatpush2.xpose.msra.mxu0 0.0
    %3081 = vmatprep.subr.mxu0 0.0
    %3082 = vmatpush2.xpose.msra.mxu0 0.0
    %3083 = vmatprep.subr.mxu0 0.0
    %3084 = vmatpush2.xpose.msra.mxu0 0.0
    %3085 = vmatprep.subr.mxu0 0.0
    %3086 = vmatpush2.xpose.msra.mxu0 0.0
    %3087 = vmatprep.subr.mxu0 0.0
    %3088 = vmatpush2.xpose.msra.mxu0 0.0
    %3089 = vmatprep.subr.mxu0 0.0
    %3090 = vmatpush2.xpose.msra.mxu0 0.0
    %3091 = vmatprep.subr.mxu0 0.0
    %3092 = vmatpush2.xpose.msra.mxu0 0.0
    %3093 = vmatprep.subr.mxu0 0.0
    %3094 = vmatpush2.xpose.msra.mxu0 0.0
    %3095 = vmatprep.subr.mxu0 0.0
    %3096 = vmatpush2.xpose.msra.mxu0 0.0
    %3097 = vmatprep.mubr.f32.mxu0 0.0
    %3098 = vmatmul.mubr.f32.gmra.mxu0 %v3029
    %v3099 = vpop.f32.mrf.mxu0
    %v3100 = vadd.f32 0.0, %v3099
    %v3101 = vpop.f32.mrf.mxu0
    %3102 = vdwg.mxu0
    %v3103 = vmul.f32 %v3022, 0.35355338
    %v3104 = vmul.f32 %v3100, 0.35355338
    %v3105 = vsel %vm636, %v3103, -inf
    %3106 = vmax.xlane.f32.xlu0 %v3105
    %v3107 = vpop.xlane.xlu0 %3106
    %v3108 = vsel %vm636, %v3104, -inf
    %3109 = vmax.xlane.f32.xlu0 %v3108
    %v3110 = vpop.xlane.xlu0 %3109
    %v3111 = vsub.f32 %v3103, %v3107
    %v3112 = vsub.f32 %v3104, %v3110
    %v3113 = vmul.f32 %v3111, 1.442695
    %v3114 = vpow.pop %v3113
    %v3115 = vmul.f32 %v3112, 1.442695
    %v3116 = vpow.pop %v3115
    %v3117 = vsel %vm636, %v3114, 0.0
    %3118 = vadd.xlane.f32.xlu0 %v3117
    %v3119 = vpop.xlane.xlu0 %3118
    %v3120 = vsel %vm636, %v3116, 0.0
    %3121 = vadd.xlane.f32.xlu0 %v3120
    %v3122 = vpop.xlane.xlu0 %3121
    %v3123 = vrcp.pop %v3119
    %v3124 = vrcp.pop %v3122
    %v3125 = vmul.f32 %v3114, %v3123
    %v3126 = vmul.f32 %v3116, %v3124
    %3127 = vrot.lane.b32.xlu0 %v2279, 48
    %v3128 = vpop.permute.xlu0 %3127
    %v3131 = vsel %vm636, %v3125, 0
    %3133 = vmatprep.subr.mxu0 0.0
    %3134 = vmatpush1.msra.mxu0 0.0
    %3135 = vmatprep.subr.mxu0 0.0
    %3136 = vmatpush1.msra.mxu0 0.0
    %3137 = vmatprep.subr.mxu0 0.0
    %3138 = vmatpush1.msra.mxu0 0.0
    %3139 = vmatprep.subr.mxu0 0.0
    %3140 = vmatpush1.msra.mxu0 0.0
    %3141 = vmatprep.subr.mxu0 0.0
    %3142 = vmatpush1.msra.mxu0 0.0
    %3143 = vmatprep.subr.mxu0 0.0
    %3144 = vmatpush1.msra.mxu0 0.0
    %3145 = vmatprep.subr.mxu0 0.0
    %3146 = vmatpush1.msra.mxu0 0.0
    %3147 = vmatprep.subr.mxu0 0.0
    %3148 = vmatpush1.msra.mxu0 0.0
    %3149 = vmatprep.subr.mxu0 0.0
    %3150 = vmatpush1.msra.mxu0 0.0
    %3151 = vmatprep.subr.mxu0 0.0
    %3152 = vmatpush1.msra.mxu0 0.0
    %3153 = vmatprep.subr.mxu0 0.0
    %3154 = vmatpush1.msra.mxu0 0.0
    %3155 = vmatprep.subr.mxu0 0.0
    %3156 = vmatpush1.msra.mxu0 0.0
    %3157 = vmatprep.subr.mxu0 0.0
    %3158 = vmatpush1.msra.mxu0 0.0
    %3159 = vmatprep.subr.mxu0 0.0
    %3160 = vmatpush1.msra.mxu0 0.0
    %3161 = vmatprep.subr.mxu0 0.0
    %3162 = vmatpush1.msra.mxu0 0.0
    %3163 = vmatprep.subr.mxu0 0.0
    %3164 = vmatpush1.msra.mxu0 %v3128
    %3165 = vmatprep.subr.mxu0 0.0
    %3166 = vmatpush2.msra.mxu0 0.0
    %3167 = vmatprep.subr.mxu0 0.0
    %3168 = vmatpush2.msra.mxu0 0.0
    %3169 = vmatprep.subr.mxu0 0.0
    %3170 = vmatpush2.msra.mxu0 0.0
    %3171 = vmatprep.subr.mxu0 0.0
    %3172 = vmatpush2.msra.mxu0 0.0
    %3173 = vmatprep.subr.mxu0 0.0
    %3174 = vmatpush2.msra.mxu0 0.0
    %3175 = vmatprep.subr.mxu0 0.0
    %3176 = vmatpush2.msra.mxu0 0.0
    %3177 = vmatprep.subr.mxu0 0.0
    %3178 = vmatpush2.msra.mxu0 0.0
    %3179 = vmatprep.subr.mxu0 0.0
    %3180 = vmatpush2.msra.mxu0 0.0
    %3181 = vmatprep.subr.mxu0 0.0
    %3182 = vmatpush2.msra.mxu0 0.0
    %3183 = vmatprep.subr.mxu0 0.0
    %3184 = vmatpush2.msra.mxu0 0.0
    %3185 = vmatprep.subr.mxu0 0.0
    %3186 = vmatpush2.msra.mxu0 0.0
    %3187 = vmatprep.subr.mxu0 0.0
    %3188 = vmatpush2.msra.mxu0 0.0
    %3189 = vmatprep.subr.mxu0 0.0
    %3190 = vmatpush2.msra.mxu0 0.0
    %3191 = vmatprep.subr.mxu0 0.0
    %3192 = vmatpush2.msra.mxu0 0.0
    %3193 = vmatprep.subr.mxu0 0.0
    %3194 = vmatpush2.msra.mxu0 0.0
    %3195 = vmatprep.subr.mxu0 0.0
    %3196 = vmatpush2.msra.mxu0 0.0
    %3197 = vmatprep.mubr.f32.mxu0 0.0
    %3198 = vmatmul.mubr.f32.gmra.mxu0 %v3131
    %v3199 = vpop.f32.mrf.mxu0
    %v3200 = vadd.f32 0.0, %v3199
    %v3201 = vpop.f32.mrf.mxu0
    %3202 = vdwg.mxu0
    %3203 = vrot.lane.b32.xlu0 %v2282, 48
    %v3204 = vpop.permute.xlu0 %3203
    %v3207 = vsel %vm636, %v3126, 0
    %3209 = vmatprep.subr.mxu0 0.0
    %3210 = vmatpush1.msra.mxu0 0.0
    %3211 = vmatprep.subr.mxu0 0.0
    %3212 = vmatpush1.msra.mxu0 0.0
    %3213 = vmatprep.subr.mxu0 0.0
    %3214 = vmatpush1.msra.mxu0 0.0
    %3215 = vmatprep.subr.mxu0 0.0
    %3216 = vmatpush1.msra.mxu0 0.0
    %3217 = vmatprep.subr.mxu0 0.0
    %3218 = vmatpush1.msra.mxu0 0.0
    %3219 = vmatprep.subr.mxu0 0.0
    %3220 = vmatpush1.msra.mxu0 0.0
    %3221 = vmatprep.subr.mxu0 0.0
    %3222 = vmatpush1.msra.mxu0 0.0
    %3223 = vmatprep.subr.mxu0 0.0
    %3224 = vmatpush1.msra.mxu0 0.0
    %3225 = vmatprep.subr.mxu0 0.0
    %3226 = vmatpush1.msra.mxu0 0.0
    %3227 = vmatprep.subr.mxu0 0.0
    %3228 = vmatpush1.msra.mxu0 0.0
    %3229 = vmatprep.subr.mxu0 0.0
    %3230 = vmatpush1.msra.mxu0 0.0
    %3231 = vmatprep.subr.mxu0 0.0
    %3232 = vmatpush1.msra.mxu0 0.0
    %3233 = vmatprep.subr.mxu0 0.0
    %3234 = vmatpush1.msra.mxu0 0.0
    %3235 = vmatprep.subr.mxu0 0.0
    %3236 = vmatpush1.msra.mxu0 0.0
    %3237 = vmatprep.subr.mxu0 0.0
    %3238 = vmatpush1.msra.mxu0 0.0
    %3239 = vmatprep.subr.mxu0 0.0
    %3240 = vmatpush1.msra.mxu0 %v3204
    %3241 = vmatprep.subr.mxu0 0.0
    %3242 = vmatpush2.msra.mxu0 0.0
    %3243 = vmatprep.subr.mxu0 0.0
    %3244 = vmatpush2.msra.mxu0 0.0
    %3245 = vmatprep.subr.mxu0 0.0
    %3246 = vmatpush2.msra.mxu0 0.0
    %3247 = vmatprep.subr.mxu0 0.0
    %3248 = vmatpush2.msra.mxu0 0.0
    %3249 = vmatprep.subr.mxu0 0.0
    %3250 = vmatpush2.msra.mxu0 0.0
    %3251 = vmatprep.subr.mxu0 0.0
    %3252 = vmatpush2.msra.mxu0 0.0
    %3253 = vmatprep.subr.mxu0 0.0
    %3254 = vmatpush2.msra.mxu0 0.0
    %3255 = vmatprep.subr.mxu0 0.0
    %3256 = vmatpush2.msra.mxu0 0.0
    %3257 = vmatprep.subr.mxu0 0.0
    %3258 = vmatpush2.msra.mxu0 0.0
    %3259 = vmatprep.subr.mxu0 0.0
    %3260 = vmatpush2.msra.mxu0 0.0
    %3261 = vmatprep.subr.mxu0 0.0
    %3262 = vmatpush2.msra.mxu0 0.0
    %3263 = vmatprep.subr.mxu0 0.0
    %3264 = vmatpush2.msra.mxu0 0.0
    %3265 = vmatprep.subr.mxu0 0.0
    %3266 = vmatpush2.msra.mxu0 0.0
    %3267 = vmatprep.subr.mxu0 0.0
    %3268 = vmatpush2.msra.mxu0 0.0
    %3269 = vmatprep.subr.mxu0 0.0
    %3270 = vmatpush2.msra.mxu0 0.0
    %3271 = vmatprep.subr.mxu0 0.0
    %3272 = vmatpush2.msra.mxu0 0.0
    %3273 = vmatprep.mubr.f32.mxu0 0.0
    %3274 = vmatmul.mubr.f32.gmra.mxu0 %v3207
    %v3275 = vpop.f32.mrf.mxu0
    %v3276 = vadd.f32 0.0, %v3275
    %v3277 = vpop.f32.mrf.mxu0
    %3278 = vdwg.mxu0
    %3279 = vrot.lane.b32.xlu0 %v2279, 104
    %v3280 = vpop.permute.xlu0 %3279
    %3281 = vrot.lane.b32.xlu0 %v2279, 72
    %v3282 = vpop.permute.xlu0 %3281
    %v3283 = vsel %vm636, %v3280, 0
    %v3285 = vsel %vm636, %v3282, 0
    %3287 = vmatprep.subr.mxu0 0.0
    %3288 = vmatpush1.xpose.msra.mxu0 0.0
    %3289 = vmatprep.subr.mxu0 0.0
    %3290 = vmatpush1.xpose.msra.mxu0 0.0
    %3291 = vmatprep.subr.mxu0 0.0
    %3292 = vmatpush1.xpose.msra.mxu0 0.0
    %3293 = vmatprep.subr.mxu0 0.0
    %3294 = vmatpush1.xpose.msra.mxu0 0.0
    %3295 = vmatprep.subr.mxu0 0.0
    %3296 = vmatpush1.xpose.msra.mxu0 0.0
    %3297 = vmatprep.subr.mxu0 0.0
    %3298 = vmatpush1.xpose.msra.mxu0 0.0
    %3299 = vmatprep.subr.mxu0 0.0
    %3300 = vmatpush1.xpose.msra.mxu0 0.0
    %3301 = vmatprep.subr.mxu0 0.0
    %3302 = vmatpush1.xpose.msra.mxu0 0.0
    %3303 = vmatprep.subr.mxu0 0.0
    %3304 = vmatpush1.xpose.msra.mxu0 0.0
    %3305 = vmatprep.subr.mxu0 0.0
    %3306 = vmatpush1.xpose.msra.mxu0 0.0
    %3307 = vmatprep.subr.mxu0 0.0
    %3308 = vmatpush1.xpose.msra.mxu0 0.0
    %3309 = vmatprep.subr.mxu0 0.0
    %3310 = vmatpush1.xpose.msra.mxu0 0.0
    %3311 = vmatprep.subr.mxu0 0.0
    %3312 = vmatpush1.xpose.msra.mxu0 0.0
    %3313 = vmatprep.subr.mxu0 0.0
    %3314 = vmatpush1.xpose.msra.mxu0 0.0
    %3315 = vmatprep.subr.mxu0 0.0
    %3316 = vmatpush1.xpose.msra.mxu0 0.0
    %3317 = vmatprep.subr.mxu0 0.0
    %3318 = vmatpush1.xpose.msra.mxu0 %v3285
    %3319 = vmatprep.subr.mxu0 0.0
    %3320 = vmatpush2.xpose.msra.mxu0 0.0
    %3321 = vmatprep.subr.mxu0 0.0
    %3322 = vmatpush2.xpose.msra.mxu0 0.0
    %3323 = vmatprep.subr.mxu0 0.0
    %3324 = vmatpush2.xpose.msra.mxu0 0.0
    %3325 = vmatprep.subr.mxu0 0.0
    %3326 = vmatpush2.xpose.msra.mxu0 0.0
    %3327 = vmatprep.subr.mxu0 0.0
    %3328 = vmatpush2.xpose.msra.mxu0 0.0
    %3329 = vmatprep.subr.mxu0 0.0
    %3330 = vmatpush2.xpose.msra.mxu0 0.0
    %3331 = vmatprep.subr.mxu0 0.0
    %3332 = vmatpush2.xpose.msra.mxu0 0.0
    %3333 = vmatprep.subr.mxu0 0.0
    %3334 = vmatpush2.xpose.msra.mxu0 0.0
    %3335 = vmatprep.subr.mxu0 0.0
    %3336 = vmatpush2.xpose.msra.mxu0 0.0
    %3337 = vmatprep.subr.mxu0 0.0
    %3338 = vmatpush2.xpose.msra.mxu0 0.0
    %3339 = vmatprep.subr.mxu0 0.0
    %3340 = vmatpush2.xpose.msra.mxu0 0.0
    %3341 = vmatprep.subr.mxu0 0.0
    %3342 = vmatpush2.xpose.msra.mxu0 0.0
    %3343 = vmatprep.subr.mxu0 0.0
    %3344 = vmatpush2.xpose.msra.mxu0 0.0
    %3345 = vmatprep.subr.mxu0 0.0
    %3346 = vmatpush2.xpose.msra.mxu0 0.0
    %3347 = vmatprep.subr.mxu0 0.0
    %3348 = vmatpush2.xpose.msra.mxu0 0.0
    %3349 = vmatprep.subr.mxu0 0.0
    %3350 = vmatpush2.xpose.msra.mxu0 0.0
    %3351 = vmatprep.mubr.f32.mxu0 0.0
    %3352 = vmatmul.mubr.f32.gmra.mxu0 %v3283
    %v3353 = vpop.f32.mrf.mxu0
    %v3354 = vadd.f32 0.0, %v3353
    %v3355 = vpop.f32.mrf.mxu0
    %3356 = vdwg.mxu0
    %3357 = vrot.lane.b32.xlu0 %v2282, 104
    %v3358 = vpop.permute.xlu0 %3357
    %3359 = vrot.lane.b32.xlu0 %v2282, 72
    %v3360 = vpop.permute.xlu0 %3359
    %v3361 = vsel %vm636, %v3358, 0
    %v3363 = vsel %vm636, %v3360, 0
    %3365 = vmatprep.subr.mxu0 0.0
    %3366 = vmatpush1.xpose.msra.mxu0 0.0
    %3367 = vmatprep.subr.mxu0 0.0
    %3368 = vmatpush1.xpose.msra.mxu0 0.0
    %3369 = vmatprep.subr.mxu0 0.0
    %3370 = vmatpush1.xpose.msra.mxu0 0.0
    %3371 = vmatprep.subr.mxu0 0.0
    %3372 = vmatpush1.xpose.msra.mxu0 0.0
    %3373 = vmatprep.subr.mxu0 0.0
    %3374 = vmatpush1.xpose.msra.mxu0 0.0
    %3375 = vmatprep.subr.mxu0 0.0
    %3376 = vmatpush1.xpose.msra.mxu0 0.0
    %3377 = vmatprep.subr.mxu0 0.0
    %3378 = vmatpush1.xpose.msra.mxu0 0.0
    %3379 = vmatprep.subr.mxu0 0.0
    %3380 = vmatpush1.xpose.msra.mxu0 0.0
    %3381 = vmatprep.subr.mxu0 0.0
    %3382 = vmatpush1.xpose.msra.mxu0 0.0
    %3383 = vmatprep.subr.mxu0 0.0
    %3384 = vmatpush1.xpose.msra.mxu0 0.0
    %3385 = vmatprep.subr.mxu0 0.0
    %3386 = vmatpush1.xpose.msra.mxu0 0.0
    %3387 = vmatprep.subr.mxu0 0.0
    %3388 = vmatpush1.xpose.msra.mxu0 0.0
    %3389 = vmatprep.subr.mxu0 0.0
    %3390 = vmatpush1.xpose.msra.mxu0 0.0
    %3391 = vmatprep.subr.mxu0 0.0
    %3392 = vmatpush1.xpose.msra.mxu0 0.0
    %3393 = vmatprep.subr.mxu0 0.0
    %3394 = vmatpush1.xpose.msra.mxu0 0.0
    %3395 = vmatprep.subr.mxu0 0.0
    %3396 = vmatpush1.xpose.msra.mxu0 %v3363
    %3397 = vmatprep.subr.mxu0 0.0
    %3398 = vmatpush2.xpose.msra.mxu0 0.0
    %3399 = vmatprep.subr.mxu0 0.0
    %3400 = vmatpush2.xpose.msra.mxu0 0.0
    %3401 = vmatprep.subr.mxu0 0.0
    %3402 = vmatpush2.xpose.msra.mxu0 0.0
    %3403 = vmatprep.subr.mxu0 0.0
    %3404 = vmatpush2.xpose.msra.mxu0 0.0
    %3405 = vmatprep.subr.mxu0 0.0
    %3406 = vmatpush2.xpose.msra.mxu0 0.0
    %3407 = vmatprep.subr.mxu0 0.0
    %3408 = vmatpush2.xpose.msra.mxu0 0.0
    %3409 = vmatprep.subr.mxu0 0.0
    %3410 = vmatpush2.xpose.msra.mxu0 0.0
    %3411 = vmatprep.subr.mxu0 0.0
    %3412 = vmatpush2.xpose.msra.mxu0 0.0
    %3413 = vmatprep.subr.mxu0 0.0
    %3414 = vmatpush2.xpose.msra.mxu0 0.0
    %3415 = vmatprep.subr.mxu0 0.0
    %3416 = vmatpush2.xpose.msra.mxu0 0.0
    %3417 = vmatprep.subr.mxu0 0.0
    %3418 = vmatpush2.xpose.msra.mxu0 0.0
    %3419 = vmatprep.subr.mxu0 0.0
    %3420 = vmatpush2.xpose.msra.mxu0 0.0
    %3421 = vmatprep.subr.mxu0 0.0
    %3422 = vmatpush2.xpose.msra.mxu0 0.0
    %3423 = vmatprep.subr.mxu0 0.0
    %3424 = vmatpush2.xpose.msra.mxu0 0.0
    %3425 = vmatprep.subr.mxu0 0.0
    %3426 = vmatpush2.xpose.msra.mxu0 0.0
    %3427 = vmatprep.subr.mxu0 0.0
    %3428 = vmatpush2.xpose.msra.mxu0 0.0
    %3429 = vmatprep.mubr.f32.mxu0 0.0
    %3430 = vmatmul.mubr.f32.gmra.mxu0 %v3361
    %v3431 = vpop.f32.mrf.mxu0
    %v3432 = vadd.f32 0.0, %v3431
    %v3433 = vpop.f32.mrf.mxu0
    %3434 = vdwg.mxu0
    %v3435 = vmul.f32 %v3354, 0.35355338
    %v3436 = vmul.f32 %v3432, 0.35355338
    %v3437 = vsel %vm636, %v3435, -inf
    %3438 = vmax.xlane.f32.xlu0 %v3437
    %v3439 = vpop.xlane.xlu0 %3438
    %v3440 = vsel %vm636, %v3436, -inf
    %3441 = vmax.xlane.f32.xlu0 %v3440
    %v3442 = vpop.xlane.xlu0 %3441
    %v3443 = vsub.f32 %v3435, %v3439
    %v3444 = vsub.f32 %v3436, %v3442
    %v3445 = vmul.f32 %v3443, 1.442695
    %v3446 = vpow.pop %v3445
    %v3447 = vmul.f32 %v3444, 1.442695
    %v3448 = vpow.pop %v3447
    %v3449 = vsel %vm636, %v3446, 0.0
    %3450 = vadd.xlane.f32.xlu0 %v3449
    %v3451 = vpop.xlane.xlu0 %3450
    %v3452 = vsel %vm636, %v3448, 0.0
    %3453 = vadd.xlane.f32.xlu0 %v3452
    %v3454 = vpop.xlane.xlu0 %3453
    %v3455 = vrcp.pop %v3451
    %v3456 = vrcp.pop %v3454
    %v3457 = vmul.f32 %v3446, %v3455
    %v3458 = vmul.f32 %v3448, %v3456
    %3459 = vrot.lane.b32.xlu0 %v2279, 40
    %v3460 = vpop.permute.xlu0 %3459
    %v3463 = vsel %vm636, %v3457, 0
    %3465 = vmatprep.subr.mxu0 0.0
    %3466 = vmatpush1.msra.mxu0 0.0
    %3467 = vmatprep.subr.mxu0 0.0
    %3468 = vmatpush1.msra.mxu0 0.0
    %3469 = vmatprep.subr.mxu0 0.0
    %3470 = vmatpush1.msra.mxu0 0.0
    %3471 = vmatprep.subr.mxu0 0.0
    %3472 = vmatpush1.msra.mxu0 0.0
    %3473 = vmatprep.subr.mxu0 0.0
    %3474 = vmatpush1.msra.mxu0 0.0
    %3475 = vmatprep.subr.mxu0 0.0
    %3476 = vmatpush1.msra.mxu0 0.0
    %3477 = vmatprep.subr.mxu0 0.0
    %3478 = vmatpush1.msra.mxu0 0.0
    %3479 = vmatprep.subr.mxu0 0.0
    %3480 = vmatpush1.msra.mxu0 0.0
    %3481 = vmatprep.subr.mxu0 0.0
    %3482 = vmatpush1.msra.mxu0 0.0
    %3483 = vmatprep.subr.mxu0 0.0
    %3484 = vmatpush1.msra.mxu0 0.0
    %3485 = vmatprep.subr.mxu0 0.0
    %3486 = vmatpush1.msra.mxu0 0.0
    %3487 = vmatprep.subr.mxu0 0.0
    %3488 = vmatpush1.msra.mxu0 0.0
    %3489 = vmatprep.subr.mxu0 0.0
    %3490 = vmatpush1.msra.mxu0 0.0
    %3491 = vmatprep.subr.mxu0 0.0
    %3492 = vmatpush1.msra.mxu0 0.0
    %3493 = vmatprep.subr.mxu0 0.0
    %3494 = vmatpush1.msra.mxu0 0.0
    %3495 = vmatprep.subr.mxu0 0.0
    %3496 = vmatpush1.msra.mxu0 %v3460
    %3497 = vmatprep.subr.mxu0 0.0
    %3498 = vmatpush2.msra.mxu0 0.0
    %3499 = vmatprep.subr.mxu0 0.0
    %3500 = vmatpush2.msra.mxu0 0.0
    %3501 = vmatprep.subr.mxu0 0.0
    %3502 = vmatpush2.msra.mxu0 0.0
    %3503 = vmatprep.subr.mxu0 0.0
    %3504 = vmatpush2.msra.mxu0 0.0
    %3505 = vmatprep.subr.mxu0 0.0
    %3506 = vmatpush2.msra.mxu0 0.0
    %3507 = vmatprep.subr.mxu0 0.0
    %3508 = vmatpush2.msra.mxu0 0.0
    %3509 = vmatprep.subr.mxu0 0.0
    %3510 = vmatpush2.msra.mxu0 0.0
    %3511 = vmatprep.subr.mxu0 0.0
    %3512 = vmatpush2.msra.mxu0 0.0
    %3513 = vmatprep.subr.mxu0 0.0
    %3514 = vmatpush2.msra.mxu0 0.0
    %3515 = vmatprep.subr.mxu0 0.0
    %3516 = vmatpush2.msra.mxu0 0.0
    %3517 = vmatprep.subr.mxu0 0.0
    %3518 = vmatpush2.msra.mxu0 0.0
    %3519 = vmatprep.subr.mxu0 0.0
    %3520 = vmatpush2.msra.mxu0 0.0
    %3521 = vmatprep.subr.mxu0 0.0
    %3522 = vmatpush2.msra.mxu0 0.0
    %3523 = vmatprep.subr.mxu0 0.0
    %3524 = vmatpush2.msra.mxu0 0.0
    %3525 = vmatprep.subr.mxu0 0.0
    %3526 = vmatpush2.msra.mxu0 0.0
    %3527 = vmatprep.subr.mxu0 0.0
    %3528 = vmatpush2.msra.mxu0 0.0
    %3529 = vmatprep.mubr.f32.mxu0 0.0
    %3530 = vmatmul.mubr.f32.gmra.mxu0 %v3463
    %v3531 = vpop.f32.mrf.mxu0
    %v3532 = vadd.f32 0.0, %v3531
    %v3533 = vpop.f32.mrf.mxu0
    %3534 = vdwg.mxu0
    %3535 = vrot.lane.b32.xlu0 %v2282, 40
    %v3536 = vpop.permute.xlu0 %3535
    %v3539 = vsel %vm636, %v3458, 0
    %3541 = vmatprep.subr.mxu0 0.0
    %3542 = vmatpush1.msra.mxu0 0.0
    %3543 = vmatprep.subr.mxu0 0.0
    %3544 = vmatpush1.msra.mxu0 0.0
    %3545 = vmatprep.subr.mxu0 0.0
    %3546 = vmatpush1.msra.mxu0 0.0
    %3547 = vmatprep.subr.mxu0 0.0
    %3548 = vmatpush1.msra.mxu0 0.0
    %3549 = vmatprep.subr.mxu0 0.0
    %3550 = vmatpush1.msra.mxu0 0.0
    %3551 = vmatprep.subr.mxu0 0.0
    %3552 = vmatpush1.msra.mxu0 0.0
    %3553 = vmatprep.subr.mxu0 0.0
    %3554 = vmatpush1.msra.mxu0 0.0
    %3555 = vmatprep.subr.mxu0 0.0
    %3556 = vmatpush1.msra.mxu0 0.0
    %3557 = vmatprep.subr.mxu0 0.0
    %3558 = vmatpush1.msra.mxu0 0.0
    %3559 = vmatprep.subr.mxu0 0.0
    %3560 = vmatpush1.msra.mxu0 0.0
    %3561 = vmatprep.subr.mxu0 0.0
    %3562 = vmatpush1.msra.mxu0 0.0
    %3563 = vmatprep.subr.mxu0 0.0
    %3564 = vmatpush1.msra.mxu0 0.0
    %3565 = vmatprep.subr.mxu0 0.0
    %3566 = vmatpush1.msra.mxu0 0.0
    %3567 = vmatprep.subr.mxu0 0.0
    %3568 = vmatpush1.msra.mxu0 0.0
    %3569 = vmatprep.subr.mxu0 0.0
    %3570 = vmatpush1.msra.mxu0 0.0
    %3571 = vmatprep.subr.mxu0 0.0
    %3572 = vmatpush1.msra.mxu0 %v3536
    %3573 = vmatprep.subr.mxu0 0.0
    %3574 = vmatpush2.msra.mxu0 0.0
    %3575 = vmatprep.subr.mxu0 0.0
    %3576 = vmatpush2.msra.mxu0 0.0
    %3577 = vmatprep.subr.mxu0 0.0
    %3578 = vmatpush2.msra.mxu0 0.0
    %3579 = vmatprep.subr.mxu0 0.0
    %3580 = vmatpush2.msra.mxu0 0.0
    %3581 = vmatprep.subr.mxu0 0.0
    %3582 = vmatpush2.msra.mxu0 0.0
    %3583 = vmatprep.subr.mxu0 0.0
    %3584 = vmatpush2.msra.mxu0 0.0
    %3585 = vmatprep.subr.mxu0 0.0
    %3586 = vmatpush2.msra.mxu0 0.0
    %3587 = vmatprep.subr.mxu0 0.0
    %3588 = vmatpush2.msra.mxu0 0.0
    %3589 = vmatprep.subr.mxu0 0.0
    %3590 = vmatpush2.msra.mxu0 0.0
    %3591 = vmatprep.subr.mxu0 0.0
    %3592 = vmatpush2.msra.mxu0 0.0
    %3593 = vmatprep.subr.mxu0 0.0
    %3594 = vmatpush2.msra.mxu0 0.0
    %3595 = vmatprep.subr.mxu0 0.0
    %3596 = vmatpush2.msra.mxu0 0.0
    %3597 = vmatprep.subr.mxu0 0.0
    %3598 = vmatpush2.msra.mxu0 0.0
    %3599 = vmatprep.subr.mxu0 0.0
    %3600 = vmatpush2.msra.mxu0 0.0
    %3601 = vmatprep.subr.mxu0 0.0
    %3602 = vmatpush2.msra.mxu0 0.0
    %3603 = vmatprep.subr.mxu0 0.0
    %3604 = vmatpush2.msra.mxu0 0.0
    %3605 = vmatprep.mubr.f32.mxu0 0.0
    %3606 = vmatmul.mubr.f32.gmra.mxu0 %v3539
    %v3607 = vpop.f32.mrf.mxu0
    %v3608 = vadd.f32 0.0, %v3607
    %v3609 = vpop.f32.mrf.mxu0
    %3610 = vdwg.mxu0
    %3613 = vrot.lane.b32.xlu0 %v2868, 8
    %v3614 = vpop.permute.xlu0 %3613
    %3615 = vrot.lane.b32.xlu0 %v2944, 8
    %v3616 = vpop.permute.xlu0 %3615
    %3621 = vrot.lane.b32.xlu0 %v3200, 16
    %v3622 = vpop.permute.xlu0 %3621
    %3623 = vrot.lane.b32.xlu0 %v3276, 16
    %v3624 = vpop.permute.xlu0 %3623
    %3629 = vrot.lane.b32.xlu0 %v3532, 24
    %v3630 = vpop.permute.xlu0 %3629
    %3631 = vrot.lane.b32.xlu0 %v3608, 24
    %v3632 = vpop.permute.xlu0 %3631
    %v3635 = vsel %vm636, %v2536, %v3614
    %v3636 = vsel %vm636, %v2612, %v3616
    %v3637 = vsel %vm318, %v3635, %v3622
    %v3638 = vsel %vm318, %v3636, %v3624
    %v3639 = vsel %vm2045, %v3637, %v3630
    %v3640 = vsel %vm2045, %v3638, %v3632
    %v3641 = vpack.c.bf16 %v3640, %v3639
    %s3642 = scalar_lea.vmem [#allocation14], 16
    %v3643 = vld [vmem:[%s3642] sm:$0xf]
    %v3644 = vld [vmem:[%s3642 + $0x4] sm:$0xf]
    %v3645 = vld [vmem:[%s3642 + $0x8] sm:$0xf]
    %v3646 = vld [vmem:[%s3642 + $0xc] sm:$0xf]
    %s3647 = scalar_lea.vmem [#allocation16], 1
    %v3648 = vld [vmem:[%s3647] sm:$0x1]
    %v3650 = vlaneseq
    %v3651 = vshrl.u32 %v3650, 7
    %v3652 = vsub.s32 0, %v3651
    %v3653 = vrot.slane %v3648, %v3652
    %v3659 = vunpack.c.l.b16 %v3643
    %v3660 = vunpack.c.l.b16 %v3644
    %v3661 = vunpack.c.l.b16 %v3645
    %v3662 = vunpack.c.l.b16 %v3646
    %v3663 = vpack.c.b16 %v3660, %v3659
    %v3664 = vpack.c.b16 %v3662, %v3661
    %v3668 = vsel %vm203, %v3641, 0
    %3670 = vmatprep.subr.bf16.mxu0 0
    %3671 = vmatpush1.bf16.msra.mxu0 0
    %3672 = vmatprep.subr.bf16.mxu0 0
    %3673 = vmatpush1.bf16.msra.mxu0 0
    %3674 = vmatprep.subr.bf16.mxu0 0
    %3675 = vmatpush1.bf16.msra.mxu0 0
    %3676 = vmatprep.subr.bf16.mxu0 0
    %3677 = vmatpush1.bf16.msra.mxu0 0
    %3678 = vmatprep.subr.bf16.mxu0 0
    %3679 = vmatpush1.bf16.msra.mxu0 0
    %3680 = vmatprep.subr.bf16.mxu0 0
    %3681 = vmatpush1.bf16.msra.mxu0 0
    %3682 = vmatprep.subr.bf16.mxu0 0
    %3683 = vmatpush1.bf16.msra.mxu0 %v3664
    %3684 = vmatprep.subr.bf16.mxu0 0
    %3685 = vmatpush1.bf16.msra.mxu0 %v3663
    %3686 = vmatprep.subr.bf16.mxu0 0
    %3687 = vmatpush2.bf16.msra.mxu0 0
    %3688 = vmatprep.subr.bf16.mxu0 0
    %3689 = vmatpush2.bf16.msra.mxu0 0
    %3690 = vmatprep.subr.bf16.mxu0 0
    %3691 = vmatpush2.bf16.msra.mxu0 0
    %3692 = vmatprep.subr.bf16.mxu0 0
    %3693 = vmatpush2.bf16.msra.mxu0 0
    %3694 = vmatprep.subr.bf16.mxu0 0
    %3695 = vmatpush2.bf16.msra.mxu0 0
    %3696 = vmatprep.subr.bf16.mxu0 0
    %3697 = vmatpush2.bf16.msra.mxu0 0
    %3698 = vmatprep.subr.bf16.mxu0 0
    %3699 = vmatpush2.bf16.msra.mxu0 0
    %3700 = vmatprep.subr.bf16.mxu0 0
    %3701 = vmatpush2.bf16.msra.mxu0 0
    %3702 = vmatprep.mubr.bf16.mxu0 0
    %3703 = vmatmul.mubr.bf16.gmra.mxu0 %v3668
    %v3704 = vpop.f32.mrf.mxu0
    %v3705 = vadd.f32 %v3653, %v3704
    %v3706 = vpop.f32.mrf.mxu0
    %v3707 = vpop.f32.mrf.mxu0
    %v3708 = vadd.f32 %v3653, %v3707
    %v3709 = vpop.f32.mrf.mxu0
    %3710 = vdwg.mxu0
    %3713 = vrot.lane.b32.xlu0 %v3705, 32
    %v3714 = vpop.permute.xlu0 %3713
    %3715 = vrot.lane.b32.xlu0 %v3708, 32
    %v3716 = vpop.permute.xlu0 %3715
    %v3719 = vmul.f32 %v2142, %v3714
    %v3720 = vmul.f32 %v2146, %v3716
    %3723 = vrot.lane.b32.xlu0 %v3719, 96
    %v3724 = vpop.permute.xlu0 %3723
    %3725 = vrot.lane.b32.xlu0 %v3720, 96
    %v3726 = vpop.permute.xlu0 %3725
    %v3729 = vadd.f32 %v2151, %v3724
    %v3730 = vadd.f32 %v2152, %v3726
    %s3731 = scalar_lea.vmem %s5, 2
    %v3732 = vld [vmem:[%s3731] sm:$0x1]
    %s3733 = scalar_lea.vmem [#allocation10], 2
    %v3734 = vld [vmem:[%s3733] sm:$0x1]
    %v3736 = vlaneseq
    %v3737 = vshrl.u32 %v3736, 7
    %v3738 = vsub.s32 0, %v3737
    %v3739 = vrot.slane %v3732, %v3738
    %v3741 = vmul.f32 %v253, %v3739
    %v3742 = vmul.f32 %v254, %v3739
    %v3743 = vmul.f32 %v255, %v3739
    %v3744 = vmul.f32 %v256, %v3739
    %v3746 = vlaneseq
    %v3747 = vshrl.u32 %v3746, 7
    %v3748 = vsub.s32 0, %v3747
    %v3749 = vrot.slane %v3734, %v3748
    %v3751 = vadd.f32 %v3741, %v3749
    %v3752 = vadd.f32 %v3742, %v3749
    %v3753 = vadd.f32 %v3743, %v3749
    %v3754 = vadd.f32 %v3744, %v3749
    %3755 = vrot.lane.b32.xlu0 %v457, 64
    %v3756 = vpop.permute.xlu0 %3755
    %3757 = vrot.lane.b32.xlu0 %v461, 64
    %v3758 = vpop.permute.xlu0 %3757
    %v3761 = vmul.f32 %v3751, %v3756
    %v3762 = vmul.f32 %v3752, %v3756
    %v3763 = vmul.f32 %v3753, %v3758
    %v3764 = vmul.f32 %v3754, %v3758
    %3765 = vrot.lane.b32.xlu0 %v494, 64
    %v3766 = vpop.permute.xlu0 %3765
    %3767 = vrot.lane.b32.xlu0 %v498, 64
    %v3768 = vpop.permute.xlu0 %3767
    %v3771 = vadd.f32 %v3761, %v3766
    %v3772 = vadd.f32 %v3762, %v3766
    %v3773 = vadd.f32 %v3763, %v3768
    %v3774 = vadd.f32 %v3764, %v3768
    %s3775 = scalar_lea.vmem [#allocation11], 32
    %v3776 = vld [vmem:[%s3775] sm:$0xf]
    %v3777 = vld [vmem:[%s3775 + $0x4] sm:$0xf]
    %v3778 = vld [vmem:[%s3775 + $0x8] sm:$0xf]
    %v3779 = vld [vmem:[%s3775 + $0xc] sm:$0xf]
    %s3780 = scalar_lea.vmem [#allocation13], 2
    %v3781 = vld [vmem:[%s3780] sm:$0x1]
    %v3782 = vpack.c.bf16 %v3772, %v3771
    %v3783 = vpack.c.bf16 %v3774, %v3773
    %v3785 = vlaneseq
    %v3786 = vshrl.u32 %v3785, 7
    %v3787 = vsub.s32 0, %v3786
    %v3788 = vrot.slane %v3781, %v3787
    %v3794 = vunpack.c.l.b16 %v3776
    %v3795 = vunpack.c.l.b16 %v3777
    %v3796 = vunpack.c.l.b16 %v3778
    %v3797 = vunpack.c.l.b16 %v3779
    %v3798 = vpack.c.b16 %v3795, %v3794
    %v3799 = vpack.c.b16 %v3797, %v3796
    %v3803 = vsel %vm203, %v3782, 0
    %v3806 = vsel %vm203, %v3783, 0
    %3808 = vmatprep.subr.bf16.mxu0 0
    %3809 = vmatpush1.bf16.msra.mxu0 0
    %3810 = vmatprep.subr.bf16.mxu0 0
    %3811 = vmatpush1.bf16.msra.mxu0 0
    %3812 = vmatprep.subr.bf16.mxu0 0
    %3813 = vmatpush1.bf16.msra.mxu0 0
    %3814 = vmatprep.subr.bf16.mxu0 0
    %3815 = vmatpush1.bf16.msra.mxu0 0
    %3816 = vmatprep.subr.bf16.mxu0 0
    %3817 = vmatpush1.bf16.msra.mxu0 0
    %3818 = vmatprep.subr.bf16.mxu0 0
    %3819 = vmatpush1.bf16.msra.mxu0 0
    %3820 = vmatprep.subr.bf16.mxu0 0
    %3821 = vmatpush1.bf16.msra.mxu0 %v3799
    %3822 = vmatprep.subr.bf16.mxu0 0
    %3823 = vmatpush1.bf16.msra.mxu0 %v3798
    %3824 = vmatprep.subr.bf16.mxu0 0
    %3825 = vmatpush2.bf16.msra.mxu0 0
    %3826 = vmatprep.subr.bf16.mxu0 0
    %3827 = vmatpush2.bf16.msra.mxu0 0
    %3828 = vmatprep.subr.bf16.mxu0 0
    %3829 = vmatpush2.bf16.msra.mxu0 0
    %3830 = vmatprep.subr.bf16.mxu0 0
    %3831 = vmatpush2.bf16.msra.mxu0 0
    %3832 = vmatprep.subr.bf16.mxu0 0
    %3833 = vmatpush2.bf16.msra.mxu0 0
    %3834 = vmatprep.subr.bf16.mxu0 0
    %3835 = vmatpush2.bf16.msra.mxu0 0
    %3836 = vmatprep.subr.bf16.mxu0 0
    %3837 = vmatpush2.bf16.msra.mxu0 0
    %3838 = vmatprep.subr.bf16.mxu0 0
    %3839 = vmatpush2.bf16.msra.mxu0 0
    %3840 = vmatprep.mubr.bf16.mxu0 0
    %3841 = vmatmul.mubr.bf16.gmra.mxu0 %v3803
    %v3842 = vpop.f32.mrf.mxu0
    %v3843 = vadd.f32 %v3788, %v3842
    %v3844 = vpop.f32.mrf.mxu0
    %v3845 = vpop.f32.mrf.mxu0
    %v3846 = vadd.f32 %v3788, %v3845
    %v3847 = vpop.f32.mrf.mxu0
    %3848 = vmatprep.mubr.bf16.mxu0 0
    %3849 = vmatmul.mubr.bf16.gmra.mxu0 %v3806
    %v3850 = vpop.f32.mrf.mxu0
    %v3851 = vadd.f32 %v3788, %v3850
    %v3852 = vpop.f32.mrf.mxu0
    %v3853 = vpop.f32.mrf.mxu0
    %v3854 = vadd.f32 %v3788, %v3853
    %v3855 = vpop.f32.mrf.mxu0
    %3856 = vdwg.mxu0
    %v3857 = vpack.c.bf16 %v3730, %v3729
    %v3859 = vsel %vm203, %v3857, 0
    %3861 = vmatprep.subr.bf16.mxu0 0
    %3862 = vmatpush1.bf16.msra.mxu0 0
    %3863 = vmatprep.subr.bf16.mxu0 0
    %3864 = vmatpush1.bf16.msra.mxu0 0
    %3865 = vmatprep.subr.bf16.mxu0 0
    %3866 = vmatpush1.bf16.msra.mxu0 0
    %3867 = vmatprep.subr.bf16.mxu0 0
    %3868 = vmatpush1.bf16.msra.mxu0 0
    %3869 = vmatprep.subr.bf16.mxu0 0
    %3870 = vmatpush1.bf16.msra.mxu0 0
    %3871 = vmatprep.subr.bf16.mxu0 0
    %3872 = vmatpush1.bf16.msra.mxu0 0
    %3873 = vmatprep.subr.bf16.mxu0 0
    %3874 = vmatpush1.bf16.msra.mxu0 %v3799
    %3875 = vmatprep.subr.bf16.mxu0 0
    %3876 = vmatpush1.bf16.msra.mxu0 %v3798
    %3877 = vmatprep.subr.bf16.mxu0 0
    %3878 = vmatpush2.bf16.msra.mxu0 0
    %3879 = vmatprep.subr.bf16.mxu0 0
    %3880 = vmatpush2.bf16.msra.mxu0 0
    %3881 = vmatprep.subr.bf16.mxu0 0
    %3882 = vmatpush2.bf16.msra.mxu0 0
    %3883 = vmatprep.subr.bf16.mxu0 0
    %3884 = vmatpush2.bf16.msra.mxu0 0
    %3885 = vmatprep.subr.bf16.mxu0 0
    %3886 = vmatpush2.bf16.msra.mxu0 0
    %3887 = vmatprep.subr.bf16.mxu0 0
    %3888 = vmatpush2.bf16.msra.mxu0 0
    %3889 = vmatprep.subr.bf16.mxu0 0
    %3890 = vmatpush2.bf16.msra.mxu0 0
    %3891 = vmatprep.subr.bf16.mxu0 0
    %3892 = vmatpush2.bf16.msra.mxu0 0
    %3893 = vmatprep.mubr.bf16.mxu0 0
    %3894 = vmatmul.mubr.bf16.gmra.mxu0 %v3859
    %v3895 = vpop.f32.mrf.mxu0
    %v3896 = vadd.f32 %v3788, %v3895
    %v3897 = vpop.f32.mrf.mxu0
    %v3898 = vpop.f32.mrf.mxu0
    %v3899 = vadd.f32 %v3788, %v3898
    %v3900 = vpop.f32.mrf.mxu0
    %3901 = vdwg.mxu0
    %3904 = vrot.lane.b32.xlu0 %v3843, 96
    %v3905 = vpop.permute.xlu0 %3904
    %3906 = vrot.lane.b32.xlu0 %v3846, 96
    %v3907 = vpop.permute.xlu0 %3906
    %v3909 = vsel %vm636, %v3896, 0
    %v3911 = vsel %vm636, %v3905, 0
    %v3913 = vsel %vm636, %v3907, 0
    %3915 = vmatprep.subr.mxu0 0.0
    %3916 = vmatpush1.xpose.msra.mxu0 0.0
    %3917 = vmatprep.subr.mxu0 0.0
    %3918 = vmatpush1.xpose.msra.mxu0 0.0
    %3919 = vmatprep.subr.mxu0 0.0
    %3920 = vmatpush1.xpose.msra.mxu0 0.0
    %3921 = vmatprep.subr.mxu0 0.0
    %3922 = vmatpush1.xpose.msra.mxu0 0.0
    %3923 = vmatprep.subr.mxu0 0.0
    %3924 = vmatpush1.xpose.msra.mxu0 0.0
    %3925 = vmatprep.subr.mxu0 0.0
    %3926 = vmatpush1.xpose.msra.mxu0 0.0
    %3927 = vmatprep.subr.mxu0 0.0
    %3928 = vmatpush1.xpose.msra.mxu0 0.0
    %3929 = vmatprep.subr.mxu0 0.0
    %3930 = vmatpush1.xpose.msra.mxu0 0.0
    %3931 = vmatprep.subr.mxu0 0.0
    %3932 = vmatpush1.xpose.msra.mxu0 0.0
    %3933 = vmatprep.subr.mxu0 0.0
    %3934 = vmatpush1.xpose.msra.mxu0 0.0
    %3935 = vmatprep.subr.mxu0 0.0
    %3936 = vmatpush1.xpose.msra.mxu0 0.0
    %3937 = vmatprep.subr.mxu0 0.0
    %3938 = vmatpush1.xpose.msra.mxu0 0.0
    %3939 = vmatprep.subr.mxu0 0.0
    %3940 = vmatpush1.xpose.msra.mxu0 0.0
    %3941 = vmatprep.subr.mxu0 0.0
    %3942 = vmatpush1.xpose.msra.mxu0 0.0
    %3943 = vmatprep.subr.mxu0 0.0
    %3944 = vmatpush1.xpose.msra.mxu0 %v3913
    %3945 = vmatprep.subr.mxu0 0.0
    %3946 = vmatpush1.xpose.msra.mxu0 %v3911
    %3947 = vmatprep.subr.mxu0 0.0
    %3948 = vmatpush2.xpose.msra.mxu0 0.0
    %3949 = vmatprep.subr.mxu0 0.0
    %3950 = vmatpush2.xpose.msra.mxu0 0.0
    %3951 = vmatprep.subr.mxu0 0.0
    %3952 = vmatpush2.xpose.msra.mxu0 0.0
    %3953 = vmatprep.subr.mxu0 0.0
    %3954 = vmatpush2.xpose.msra.mxu0 0.0
    %3955 = vmatprep.subr.mxu0 0.0
    %3956 = vmatpush2.xpose.msra.mxu0 0.0
    %3957 = vmatprep.subr.mxu0 0.0
    %3958 = vmatpush2.xpose.msra.mxu0 0.0
    %3959 = vmatprep.subr.mxu0 0.0
    %3960 = vmatpush2.xpose.msra.mxu0 0.0
    %3961 = vmatprep.subr.mxu0 0.0
    %3962 = vmatpush2.xpose.msra.mxu0 0.0
    %3963 = vmatprep.subr.mxu0 0.0
    %3964 = vmatpush2.xpose.msra.mxu0 0.0
    %3965 = vmatprep.subr.mxu0 0.0
    %3966 = vmatpush2.xpose.msra.mxu0 0.0
    %3967 = vmatprep.subr.mxu0 0.0
    %3968 = vmatpush2.xpose.msra.mxu0 0.0
    %3969 = vmatprep.subr.mxu0 0.0
    %3970 = vmatpush2.xpose.msra.mxu0 0.0
    %3971 = vmatprep.subr.mxu0 0.0
    %3972 = vmatpush2.xpose.msra.mxu0 0.0
    %3973 = vmatprep.subr.mxu0 0.0
    %3974 = vmatpush2.xpose.msra.mxu0 0.0
    %3975 = vmatprep.subr.mxu0 0.0
    %3976 = vmatpush2.xpose.msra.mxu0 0.0
    %3977 = vmatprep.subr.mxu0 0.0
    %3978 = vmatpush2.xpose.msra.mxu0 0.0
    %3979 = vmatprep.mubr.f32.mxu0 0.0
    %3980 = vmatmul.mubr.f32.gmra.mxu0 %v3909
    %v3981 = vpop.f32.mrf.mxu0
    %v3982 = vadd.f32 0.0, %v3981
    %v3983 = vpop.f32.mrf.mxu0
    %3984 = vdwg.mxu0
    %3987 = vrot.lane.b32.xlu0 %v3851, 96
    %v3988 = vpop.permute.xlu0 %3987
    %3989 = vrot.lane.b32.xlu0 %v3854, 96
    %v3990 = vpop.permute.xlu0 %3989
    %v3992 = vsel %vm636, %v3899, 0
    %v3994 = vsel %vm636, %v3988, 0
    %v3996 = vsel %vm636, %v3990, 0
    %3998 = vmatprep.subr.mxu0 0.0
    %3999 = vmatpush1.xpose.msra.mxu0 0.0
    %4000 = vmatprep.subr.mxu0 0.0
    %4001 = vmatpush1.xpose.msra.mxu0 0.0
    %4002 = vmatprep.subr.mxu0 0.0
    %4003 = vmatpush1.xpose.msra.mxu0 0.0
    %4004 = vmatprep.subr.mxu0 0.0
    %4005 = vmatpush1.xpose.msra.mxu0 0.0
    %4006 = vmatprep.subr.mxu0 0.0
    %4007 = vmatpush1.xpose.msra.mxu0 0.0
    %4008 = vmatprep.subr.mxu0 0.0
    %4009 = vmatpush1.xpose.msra.mxu0 0.0
    %4010 = vmatprep.subr.mxu0 0.0
    %4011 = vmatpush1.xpose.msra.mxu0 0.0
    %4012 = vmatprep.subr.mxu0 0.0
    %4013 = vmatpush1.xpose.msra.mxu0 0.0
    %4014 = vmatprep.subr.mxu0 0.0
    %4015 = vmatpush1.xpose.msra.mxu0 0.0
    %4016 = vmatprep.subr.mxu0 0.0
    %4017 = vmatpush1.xpose.msra.mxu0 0.0
    %4018 = vmatprep.subr.mxu0 0.0
    %4019 = vmatpush1.xpose.msra.mxu0 0.0
    %4020 = vmatprep.subr.mxu0 0.0
    %4021 = vmatpush1.xpose.msra.mxu0 0.0
    %4022 = vmatprep.subr.mxu0 0.0
    %4023 = vmatpush1.xpose.msra.mxu0 0.0
    %4024 = vmatprep.subr.mxu0 0.0
    %4025 = vmatpush1.xpose.msra.mxu0 0.0
    %4026 = vmatprep.subr.mxu0 0.0
    %4027 = vmatpush1.xpose.msra.mxu0 %v3996
    %4028 = vmatprep.subr.mxu0 0.0
    %4029 = vmatpush1.xpose.msra.mxu0 %v3994
    %4030 = vmatprep.subr.mxu0 0.0
    %4031 = vmatpush2.xpose.msra.mxu0 0.0
    %4032 = vmatprep.subr.mxu0 0.0
    %4033 = vmatpush2.xpose.msra.mxu0 0.0
    %4034 = vmatprep.subr.mxu0 0.0
    %4035 = vmatpush2.xpose.msra.mxu0 0.0
    %4036 = vmatprep.subr.mxu0 0.0
    %4037 = vmatpush2.xpose.msra.mxu0 0.0
    %4038 = vmatprep.subr.mxu0 0.0
    %4039 = vmatpush2.xpose.msra.mxu0 0.0
    %4040 = vmatprep.subr.mxu0 0.0
    %4041 = vmatpush2.xpose.msra.mxu0 0.0
    %4042 = vmatprep.subr.mxu0 0.0
    %4043 = vmatpush2.xpose.msra.mxu0 0.0
    %4044 = vmatprep.subr.mxu0 0.0
    %4045 = vmatpush2.xpose.msra.mxu0 0.0
    %4046 = vmatprep.subr.mxu0 0.0
    %4047 = vmatpush2.xpose.msra.mxu0 0.0
    %4048 = vmatprep.subr.mxu0 0.0
    %4049 = vmatpush2.xpose.msra.mxu0 0.0
    %4050 = vmatprep.subr.mxu0 0.0
    %4051 = vmatpush2.xpose.msra.mxu0 0.0
    %4052 = vmatprep.subr.mxu0 0.0
    %4053 = vmatpush2.xpose.msra.mxu0 0.0
    %4054 = vmatprep.subr.mxu0 0.0
    %4055 = vmatpush2.xpose.msra.mxu0 0.0
    %4056 = vmatprep.subr.mxu0 0.0
    %4057 = vmatpush2.xpose.msra.mxu0 0.0
    %4058 = vmatprep.subr.mxu0 0.0
    %4059 = vmatpush2.xpose.msra.mxu0 0.0
    %4060 = vmatprep.subr.mxu0 0.0
    %4061 = vmatpush2.xpose.msra.mxu0 0.0
    %4062 = vmatprep.mubr.f32.mxu0 0.0
    %4063 = vmatmul.mubr.f32.gmra.mxu0 %v3992
    %v4064 = vpop.f32.mrf.mxu0
    %v4065 = vadd.f32 0.0, %v4064
    %v4066 = vpop.f32.mrf.mxu0
    %4067 = vdwg.mxu0
    %v4068 = vmul.f32 %v3982, 0.35355338
    %v4069 = vmul.f32 %v4065, 0.35355338
    %v4070 = vsel %vm318, %v4068, -inf
    %4071 = vmax.xlane.f32.xlu0 %v4070
    %v4072 = vpop.xlane.xlu0 %4071
    %v4073 = vsel %vm318, %v4069, -inf
    %4074 = vmax.xlane.f32.xlu0 %v4073
    %v4075 = vpop.xlane.xlu0 %4074
    %v4076 = vsub.f32 %v4068, %v4072
    %v4077 = vsub.f32 %v4069, %v4075
    %v4078 = vmul.f32 %v4076, 1.442695
    %v4079 = vpow.pop %v4078
    %v4080 = vmul.f32 %v4077, 1.442695
    %v4081 = vpow.pop %v4080
    %v4082 = vsel %vm318, %v4079, 0.0
    %4083 = vadd.xlane.f32.xlu0 %v4082
    %v4084 = vpop.xlane.xlu0 %4083
    %v4085 = vsel %vm318, %v4081, 0.0
    %4086 = vadd.xlane.f32.xlu0 %v4085
    %v4087 = vpop.xlane.xlu0 %4086
    %v4088 = vrcp.pop %v4084
    %v4089 = vrcp.pop %v4087
    %v4090 = vmul.f32 %v4079, %v4088
    %v4091 = vmul.f32 %v4081, %v4089
    %4092 = vrot.lane.b32.xlu0 %v3843, 64
    %v4093 = vpop.permute.xlu0 %4092
    %4094 = vrot.lane.b32.xlu0 %v3846, 64
    %v4095 = vpop.permute.xlu0 %4094
    %v4099 = vsel %vm318, %v4090, 0
    %4101 = vmatprep.subr.mxu0 0.0
    %4102 = vmatpush1.msra.mxu0 0.0
    %4103 = vmatprep.subr.mxu0 0.0
    %4104 = vmatpush1.msra.mxu0 0.0
    %4105 = vmatprep.subr.mxu0 0.0
    %4106 = vmatpush1.msra.mxu0 0.0
    %4107 = vmatprep.subr.mxu0 0.0
    %4108 = vmatpush1.msra.mxu0 0.0
    %4109 = vmatprep.subr.mxu0 0.0
    %4110 = vmatpush1.msra.mxu0 0.0
    %4111 = vmatprep.subr.mxu0 0.0
    %4112 = vmatpush1.msra.mxu0 0.0
    %4113 = vmatprep.subr.mxu0 0.0
    %4114 = vmatpush1.msra.mxu0 0.0
    %4115 = vmatprep.subr.mxu0 0.0
    %4116 = vmatpush1.msra.mxu0 0.0
    %4117 = vmatprep.subr.mxu0 0.0
    %4118 = vmatpush1.msra.mxu0 0.0
    %4119 = vmatprep.subr.mxu0 0.0
    %4120 = vmatpush1.msra.mxu0 0.0
    %4121 = vmatprep.subr.mxu0 0.0
    %4122 = vmatpush1.msra.mxu0 0.0
    %4123 = vmatprep.subr.mxu0 0.0
    %4124 = vmatpush1.msra.mxu0 0.0
    %4125 = vmatprep.subr.mxu0 0.0
    %4126 = vmatpush1.msra.mxu0 0.0
    %4127 = vmatprep.subr.mxu0 0.0
    %4128 = vmatpush1.msra.mxu0 0.0
    %4129 = vmatprep.subr.mxu0 0.0
    %4130 = vmatpush1.msra.mxu0 %v4095
    %4131 = vmatprep.subr.mxu0 0.0
    %4132 = vmatpush1.msra.mxu0 %v4093
    %4133 = vmatprep.subr.mxu0 0.0
    %4134 = vmatpush2.msra.mxu0 0.0
    %4135 = vmatprep.subr.mxu0 0.0
    %4136 = vmatpush2.msra.mxu0 0.0
    %4137 = vmatprep.subr.mxu0 0.0
    %4138 = vmatpush2.msra.mxu0 0.0
    %4139 = vmatprep.subr.mxu0 0.0
    %4140 = vmatpush2.msra.mxu0 0.0
    %4141 = vmatprep.subr.mxu0 0.0
    %4142 = vmatpush2.msra.mxu0 0.0
    %4143 = vmatprep.subr.mxu0 0.0
    %4144 = vmatpush2.msra.mxu0 0.0
    %4145 = vmatprep.subr.mxu0 0.0
    %4146 = vmatpush2.msra.mxu0 0.0
    %4147 = vmatprep.subr.mxu0 0.0
    %4148 = vmatpush2.msra.mxu0 0.0
    %4149 = vmatprep.subr.mxu0 0.0
    %4150 = vmatpush2.msra.mxu0 0.0
    %4151 = vmatprep.subr.mxu0 0.0
    %4152 = vmatpush2.msra.mxu0 0.0
    %4153 = vmatprep.subr.mxu0 0.0
    %4154 = vmatpush2.msra.mxu0 0.0
    %4155 = vmatprep.subr.mxu0 0.0
    %4156 = vmatpush2.msra.mxu0 0.0
    %4157 = vmatprep.subr.mxu0 0.0
    %4158 = vmatpush2.msra.mxu0 0.0
    %4159 = vmatprep.subr.mxu0 0.0
    %4160 = vmatpush2.msra.mxu0 0.0
    %4161 = vmatprep.subr.mxu0 0.0
    %4162 = vmatpush2.msra.mxu0 0.0
    %4163 = vmatprep.subr.mxu0 0.0
    %4164 = vmatpush2.msra.mxu0 0.0
    %4165 = vmatprep.mubr.f32.mxu0 0.0
    %4166 = vmatmul.mubr.f32.gmra.mxu0 %v4099
    %v4167 = vpop.f32.mrf.mxu0
    %v4168 = vadd.f32 0.0, %v4167
    %v4169 = vpop.f32.mrf.mxu0
    %4170 = vdwg.mxu0
    %4171 = vrot.lane.b32.xlu0 %v3851, 64
    %v4172 = vpop.permute.xlu0 %4171
    %4173 = vrot.lane.b32.xlu0 %v3854, 64
    %v4174 = vpop.permute.xlu0 %4173
    %v4178 = vsel %vm318, %v4091, 0
    %4180 = vmatprep.subr.mxu0 0.0
    %4181 = vmatpush1.msra.mxu0 0.0
    %4182 = vmatprep.subr.mxu0 0.0
    %4183 = vmatpush1.msra.mxu0 0.0
    %4184 = vmatprep.subr.mxu0 0.0
    %4185 = vmatpush1.msra.mxu0 0.0
    %4186 = vmatprep.subr.mxu0 0.0
    %4187 = vmatpush1.msra.mxu0 0.0
    %4188 = vmatprep.subr.mxu0 0.0
    %4189 = vmatpush1.msra.mxu0 0.0
    %4190 = vmatprep.subr.mxu0 0.0
    %4191 = vmatpush1.msra.mxu0 0.0
    %4192 = vmatprep.subr.mxu0 0.0
    %4193 = vmatpush1.msra.mxu0 0.0
    %4194 = vmatprep.subr.mxu0 0.0
    %4195 = vmatpush1.msra.mxu0 0.0
    %4196 = vmatprep.subr.mxu0 0.0
    %4197 = vmatpush1.msra.mxu0 0.0
    %4198 = vmatprep.subr.mxu0 0.0
    %4199 = vmatpush1.msra.mxu0 0.0
    %4200 = vmatprep.subr.mxu0 0.0
    %4201 = vmatpush1.msra.mxu0 0.0
    %4202 = vmatprep.subr.mxu0 0.0
    %4203 = vmatpush1.msra.mxu0 0.0
    %4204 = vmatprep.subr.mxu0 0.0
    %4205 = vmatpush1.msra.mxu0 0.0
    %4206 = vmatprep.subr.mxu0 0.0
    %4207 = vmatpush1.msra.mxu0 0.0
    %4208 = vmatprep.subr.mxu0 0.0
    %4209 = vmatpush1.msra.mxu0 %v4174
    %4210 = vmatprep.subr.mxu0 0.0
    %4211 = vmatpush1.msra.mxu0 %v4172
    %4212 = vmatprep.subr.mxu0 0.0
    %4213 = vmatpush2.msra.mxu0 0.0
    %4214 = vmatprep.subr.mxu0 0.0
    %4215 = vmatpush2.msra.mxu0 0.0
    %4216 = vmatprep.subr.mxu0 0.0
    %4217 = vmatpush2.msra.mxu0 0.0
    %4218 = vmatprep.subr.mxu0 0.0
    %4219 = vmatpush2.msra.mxu0 0.0
    %4220 = vmatprep.subr.mxu0 0.0
    %4221 = vmatpush2.msra.mxu0 0.0
    %4222 = vmatprep.subr.mxu0 0.0
    %4223 = vmatpush2.msra.mxu0 0.0
    %4224 = vmatprep.subr.mxu0 0.0
    %4225 = vmatpush2.msra.mxu0 0.0
    %4226 = vmatprep.subr.mxu0 0.0
    %4227 = vmatpush2.msra.mxu0 0.0
    %4228 = vmatprep.subr.mxu0 0.0
    %4229 = vmatpush2.msra.mxu0 0.0
    %4230 = vmatprep.subr.mxu0 0.0
    %4231 = vmatpush2.msra.mxu0 0.0
    %4232 = vmatprep.subr.mxu0 0.0
    %4233 = vmatpush2.msra.mxu0 0.0
    %4234 = vmatprep.subr.mxu0 0.0
    %4235 = vmatpush2.msra.mxu0 0.0
    %4236 = vmatprep.subr.mxu0 0.0
    %4237 = vmatpush2.msra.mxu0 0.0
    %4238 = vmatprep.subr.mxu0 0.0
    %4239 = vmatpush2.msra.mxu0 0.0
    %4240 = vmatprep.subr.mxu0 0.0
    %4241 = vmatpush2.msra.mxu0 0.0
    %4242 = vmatprep.subr.mxu0 0.0
    %4243 = vmatpush2.msra.mxu0 0.0
    %4244 = vmatprep.mubr.f32.mxu0 0.0
    %4245 = vmatmul.mubr.f32.gmra.mxu0 %v4178
    %v4246 = vpop.f32.mrf.mxu0
    %v4247 = vadd.f32 0.0, %v4246
    %v4248 = vpop.f32.mrf.mxu0
    %4249 = vdwg.mxu0
    %4250 = vrot.lane.b32.xlu0 %v3896, 120
    %v4251 = vpop.permute.xlu0 %4250
    %4252 = vrot.lane.b32.xlu0 %v3843, 88
    %v4253 = vpop.permute.xlu0 %4252
    %4254 = vrot.lane.b32.xlu0 %v3846, 88
    %v4255 = vpop.permute.xlu0 %4254
    %v4256 = vsel %vm636, %v4251, 0
    %v4258 = vsel %vm636, %v4253, 0
    %v4260 = vsel %vm636, %v4255, 0
    %4262 = vmatprep.subr.mxu0 0.0
    %4263 = vmatpush1.xpose.msra.mxu0 0.0
    %4264 = vmatprep.subr.mxu0 0.0
    %4265 = vmatpush1.xpose.msra.mxu0 0.0
    %4266 = vmatprep.subr.mxu0 0.0
    %4267 = vmatpush1.xpose.msra.mxu0 0.0
    %4268 = vmatprep.subr.mxu0 0.0
    %4269 = vmatpush1.xpose.msra.mxu0 0.0
    %4270 = vmatprep.subr.mxu0 0.0
    %4271 = vmatpush1.xpose.msra.mxu0 0.0
    %4272 = vmatprep.subr.mxu0 0.0
    %4273 = vmatpush1.xpose.msra.mxu0 0.0
    %4274 = vmatprep.subr.mxu0 0.0
    %4275 = vmatpush1.xpose.msra.mxu0 0.0
    %4276 = vmatprep.subr.mxu0 0.0
    %4277 = vmatpush1.xpose.msra.mxu0 0.0
    %4278 = vmatprep.subr.mxu0 0.0
    %4279 = vmatpush1.xpose.msra.mxu0 0.0
    %4280 = vmatprep.subr.mxu0 0.0
    %4281 = vmatpush1.xpose.msra.mxu0 0.0
    %4282 = vmatprep.subr.mxu0 0.0
    %4283 = vmatpush1.xpose.msra.mxu0 0.0
    %4284 = vmatprep.subr.mxu0 0.0
    %4285 = vmatpush1.xpose.msra.mxu0 0.0
    %4286 = vmatprep.subr.mxu0 0.0
    %4287 = vmatpush1.xpose.msra.mxu0 0.0
    %4288 = vmatprep.subr.mxu0 0.0
    %4289 = vmatpush1.xpose.msra.mxu0 0.0
    %4290 = vmatprep.subr.mxu0 0.0
    %4291 = vmatpush1.xpose.msra.mxu0 %v4260
    %4292 = vmatprep.subr.mxu0 0.0
    %4293 = vmatpush1.xpose.msra.mxu0 %v4258
    %4294 = vmatprep.subr.mxu0 0.0
    %4295 = vmatpush2.xpose.msra.mxu0 0.0
    %4296 = vmatprep.subr.mxu0 0.0
    %4297 = vmatpush2.xpose.msra.mxu0 0.0
    %4298 = vmatprep.subr.mxu0 0.0
    %4299 = vmatpush2.xpose.msra.mxu0 0.0
    %4300 = vmatprep.subr.mxu0 0.0
    %4301 = vmatpush2.xpose.msra.mxu0 0.0
    %4302 = vmatprep.subr.mxu0 0.0
    %4303 = vmatpush2.xpose.msra.mxu0 0.0
    %4304 = vmatprep.subr.mxu0 0.0
    %4305 = vmatpush2.xpose.msra.mxu0 0.0
    %4306 = vmatprep.subr.mxu0 0.0
    %4307 = vmatpush2.xpose.msra.mxu0 0.0
    %4308 = vmatprep.subr.mxu0 0.0
    %4309 = vmatpush2.xpose.msra.mxu0 0.0
    %4310 = vmatprep.subr.mxu0 0.0
    %4311 = vmatpush2.xpose.msra.mxu0 0.0
    %4312 = vmatprep.subr.mxu0 0.0
    %4313 = vmatpush2.xpose.msra.mxu0 0.0
    %4314 = vmatprep.subr.mxu0 0.0
    %4315 = vmatpush2.xpose.msra.mxu0 0.0
    %4316 = vmatprep.subr.mxu0 0.0
    %4317 = vmatpush2.xpose.msra.mxu0 0.0
    %4318 = vmatprep.subr.mxu0 0.0
    %4319 = vmatpush2.xpose.msra.mxu0 0.0
    %4320 = vmatprep.subr.mxu0 0.0
    %4321 = vmatpush2.xpose.msra.mxu0 0.0
    %4322 = vmatprep.subr.mxu0 0.0
    %4323 = vmatpush2.xpose.msra.mxu0 0.0
    %4324 = vmatprep.subr.mxu0 0.0
    %4325 = vmatpush2.xpose.msra.mxu0 0.0
    %4326 = vmatprep.mubr.f32.mxu0 0.0
    %4327 = vmatmul.mubr.f32.gmra.mxu0 %v4256
    %v4328 = vpop.f32.mrf.mxu0
    %v4329 = vadd.f32 0.0, %v4328
    %v4330 = vpop.f32.mrf.mxu0
    %4331 = vdwg.mxu0
    %4332 = vrot.lane.b32.xlu0 %v3899, 120
    %v4333 = vpop.permute.xlu0 %4332
    %4334 = vrot.lane.b32.xlu0 %v3851, 88
    %v4335 = vpop.permute.xlu0 %4334
    %4336 = vrot.lane.b32.xlu0 %v3854, 88
    %v4337 = vpop.permute.xlu0 %4336
    %v4338 = vsel %vm636, %v4333, 0
    %v4340 = vsel %vm636, %v4335, 0
    %v4342 = vsel %vm636, %v4337, 0
    %4344 = vmatprep.subr.mxu0 0.0
    %4345 = vmatpush1.xpose.msra.mxu0 0.0
    %4346 = vmatprep.subr.mxu0 0.0
    %4347 = vmatpush1.xpose.msra.mxu0 0.0
    %4348 = vmatprep.subr.mxu0 0.0
    %4349 = vmatpush1.xpose.msra.mxu0 0.0
    %4350 = vmatprep.subr.mxu0 0.0
    %4351 = vmatpush1.xpose.msra.mxu0 0.0
    %4352 = vmatprep.subr.mxu0 0.0
    %4353 = vmatpush1.xpose.msra.mxu0 0.0
    %4354 = vmatprep.subr.mxu0 0.0
    %4355 = vmatpush1.xpose.msra.mxu0 0.0
    %4356 = vmatprep.subr.mxu0 0.0
    %4357 = vmatpush1.xpose.msra.mxu0 0.0
    %4358 = vmatprep.subr.mxu0 0.0
    %4359 = vmatpush1.xpose.msra.mxu0 0.0
    %4360 = vmatprep.subr.mxu0 0.0
    %4361 = vmatpush1.xpose.msra.mxu0 0.0
    %4362 = vmatprep.subr.mxu0 0.0
    %4363 = vmatpush1.xpose.msra.mxu0 0.0
    %4364 = vmatprep.subr.mxu0 0.0
    %4365 = vmatpush1.xpose.msra.mxu0 0.0
    %4366 = vmatprep.subr.mxu0 0.0
    %4367 = vmatpush1.xpose.msra.mxu0 0.0
    %4368 = vmatprep.subr.mxu0 0.0
    %4369 = vmatpush1.xpose.msra.mxu0 0.0
    %4370 = vmatprep.subr.mxu0 0.0
    %4371 = vmatpush1.xpose.msra.mxu0 0.0
    %4372 = vmatprep.subr.mxu0 0.0
    %4373 = vmatpush1.xpose.msra.mxu0 %v4342
    %4374 = vmatprep.subr.mxu0 0.0
    %4375 = vmatpush1.xpose.msra.mxu0 %v4340
    %4376 = vmatprep.subr.mxu0 0.0
    %4377 = vmatpush2.xpose.msra.mxu0 0.0
    %4378 = vmatprep.subr.mxu0 0.0
    %4379 = vmatpush2.xpose.msra.mxu0 0.0
    %4380 = vmatprep.subr.mxu0 0.0
    %4381 = vmatpush2.xpose.msra.mxu0 0.0
    %4382 = vmatprep.subr.mxu0 0.0
    %4383 = vmatpush2.xpose.msra.mxu0 0.0
    %4384 = vmatprep.subr.mxu0 0.0
    %4385 = vmatpush2.xpose.msra.mxu0 0.0
    %4386 = vmatprep.subr.mxu0 0.0
    %4387 = vmatpush2.xpose.msra.mxu0 0.0
    %4388 = vmatprep.subr.mxu0 0.0
    %4389 = vmatpush2.xpose.msra.mxu0 0.0
    %4390 = vmatprep.subr.mxu0 0.0
    %4391 = vmatpush2.xpose.msra.mxu0 0.0
    %4392 = vmatprep.subr.mxu0 0.0
    %4393 = vmatpush2.xpose.msra.mxu0 0.0
    %4394 = vmatprep.subr.mxu0 0.0
    %4395 = vmatpush2.xpose.msra.mxu0 0.0
    %4396 = vmatprep.subr.mxu0 0.0
    %4397 = vmatpush2.xpose.msra.mxu0 0.0
    %4398 = vmatprep.subr.mxu0 0.0
    %4399 = vmatpush2.xpose.msra.mxu0 0.0
    %4400 = vmatprep.subr.mxu0 0.0
    %4401 = vmatpush2.xpose.msra.mxu0 0.0
    %4402 = vmatprep.subr.mxu0 0.0
    %4403 = vmatpush2.xpose.msra.mxu0 0.0
    %4404 = vmatprep.subr.mxu0 0.0
    %4405 = vmatpush2.xpose.msra.mxu0 0.0
    %4406 = vmatprep.subr.mxu0 0.0
    %4407 = vmatpush2.xpose.msra.mxu0 0.0
    %4408 = vmatprep.mubr.f32.mxu0 0.0
    %4409 = vmatmul.mubr.f32.gmra.mxu0 %v4338
    %v4410 = vpop.f32.mrf.mxu0
    %v4411 = vadd.f32 0.0, %v4410
    %v4412 = vpop.f32.mrf.mxu0
    %4413 = vdwg.mxu0
    %v4414 = vmul.f32 %v4329, 0.35355338
    %v4415 = vmul.f32 %v4411, 0.35355338
    %v4416 = vsel %vm318, %v4414, -inf
    %4417 = vmax.xlane.f32.xlu0 %v4416
    %v4418 = vpop.xlane.xlu0 %4417
    %v4419 = vsel %vm318, %v4415, -inf
    %4420 = vmax.xlane.f32.xlu0 %v4419
    %v4421 = vpop.xlane.xlu0 %4420
    %v4422 = vsub.f32 %v4414, %v4418
    %v4423 = vsub.f32 %v4415, %v4421
    %v4424 = vmul.f32 %v4422, 1.442695
    %v4425 = vpow.pop %v4424
    %v4426 = vmul.f32 %v4423, 1.442695
    %v4427 = vpow.pop %v4426
    %v4428 = vsel %vm318, %v4425, 0.0
    %4429 = vadd.xlane.f32.xlu0 %v4428
    %v4430 = vpop.xlane.xlu0 %4429
    %v4431 = vsel %vm318, %v4427, 0.0
    %4432 = vadd.xlane.f32.xlu0 %v4431
    %v4433 = vpop.xlane.xlu0 %4432
    %v4434 = vrcp.pop %v4430
    %v4435 = vrcp.pop %v4433
    %v4436 = vmul.f32 %v4425, %v4434
    %v4437 = vmul.f32 %v4427, %v4435
    %4438 = vrot.lane.b32.xlu0 %v3843, 56
    %v4439 = vpop.permute.xlu0 %4438
    %4440 = vrot.lane.b32.xlu0 %v3846, 56
    %v4441 = vpop.permute.xlu0 %4440
    %v4445 = vsel %vm318, %v4436, 0
    %4447 = vmatprep.subr.mxu0 0.0
    %4448 = vmatpush1.msra.mxu0 0.0
    %4449 = vmatprep.subr.mxu0 0.0
    %4450 = vmatpush1.msra.mxu0 0.0
    %4451 = vmatprep.subr.mxu0 0.0
    %4452 = vmatpush1.msra.mxu0 0.0
    %4453 = vmatprep.subr.mxu0 0.0
    %4454 = vmatpush1.msra.mxu0 0.0
    %4455 = vmatprep.subr.mxu0 0.0
    %4456 = vmatpush1.msra.mxu0 0.0
    %4457 = vmatprep.subr.mxu0 0.0
    %4458 = vmatpush1.msra.mxu0 0.0
    %4459 = vmatprep.subr.mxu0 0.0
    %4460 = vmatpush1.msra.mxu0 0.0
    %4461 = vmatprep.subr.mxu0 0.0
    %4462 = vmatpush1.msra.mxu0 0.0
    %4463 = vmatprep.subr.mxu0 0.0
    %4464 = vmatpush1.msra.mxu0 0.0
    %4465 = vmatprep.subr.mxu0 0.0
    %4466 = vmatpush1.msra.mxu0 0.0
    %4467 = vmatprep.subr.mxu0 0.0
    %4468 = vmatpush1.msra.mxu0 0.0
    %4469 = vmatprep.subr.mxu0 0.0
    %4470 = vmatpush1.msra.mxu0 0.0
    %4471 = vmatprep.subr.mxu0 0.0
    %4472 = vmatpush1.msra.mxu0 0.0
    %4473 = vmatprep.subr.mxu0 0.0
    %4474 = vmatpush1.msra.mxu0 0.0
    %4475 = vmatprep.subr.mxu0 0.0
    %4476 = vmatpush1.msra.mxu0 %v4441
    %4477 = vmatprep.subr.mxu0 0.0
    %4478 = vmatpush1.msra.mxu0 %v4439
    %4479 = vmatprep.subr.mxu0 0.0
    %4480 = vmatpush2.msra.mxu0 0.0
    %4481 = vmatprep.subr.mxu0 0.0
    %4482 = vmatpush2.msra.mxu0 0.0
    %4483 = vmatprep.subr.mxu0 0.0
    %4484 = vmatpush2.msra.mxu0 0.0
    %4485 = vmatprep.subr.mxu0 0.0
    %4486 = vmatpush2.msra.mxu0 0.0
    %4487 = vmatprep.subr.mxu0 0.0
    %4488 = vmatpush2.msra.mxu0 0.0
    %4489 = vmatprep.subr.mxu0 0.0
    %4490 = vmatpush2.msra.mxu0 0.0
    %4491 = vmatprep.subr.mxu0 0.0
    %4492 = vmatpush2.msra.mxu0 0.0
    %4493 = vmatprep.subr.mxu0 0.0
    %4494 = vmatpush2.msra.mxu0 0.0
    %4495 = vmatprep.subr.mxu0 0.0
    %4496 = vmatpush2.msra.mxu0 0.0
    %4497 = vmatprep.subr.mxu0 0.0
    %4498 = vmatpush2.msra.mxu0 0.0
    %4499 = vmatprep.subr.mxu0 0.0
    %4500 = vmatpush2.msra.mxu0 0.0
    %4501 = vmatprep.subr.mxu0 0.0
    %4502 = vmatpush2.msra.mxu0 0.0
    %4503 = vmatprep.subr.mxu0 0.0
    %4504 = vmatpush2.msra.mxu0 0.0
    %4505 = vmatprep.subr.mxu0 0.0
    %4506 = vmatpush2.msra.mxu0 0.0
    %4507 = vmatprep.subr.mxu0 0.0
    %4508 = vmatpush2.msra.mxu0 0.0
    %4509 = vmatprep.subr.mxu0 0.0
    %4510 = vmatpush2.msra.mxu0 0.0
    %4511 = vmatprep.mubr.f32.mxu0 0.0
    %4512 = vmatmul.mubr.f32.gmra.mxu0 %v4445
    %v4513 = vpop.f32.mrf.mxu0
    %v4514 = vadd.f32 0.0, %v4513
    %v4515 = vpop.f32.mrf.mxu0
    %4516 = vdwg.mxu0
    %4517 = vrot.lane.b32.xlu0 %v3851, 56
    %v4518 = vpop.permute.xlu0 %4517
    %4519 = vrot.lane.b32.xlu0 %v3854, 56
    %v4520 = vpop.permute.xlu0 %4519
    %v4524 = vsel %vm318, %v4437, 0
    %4526 = vmatprep.subr.mxu0 0.0
    %4527 = vmatpush1.msra.mxu0 0.0
    %4528 = vmatprep.subr.mxu0 0.0
    %4529 = vmatpush1.msra.mxu0 0.0
    %4530 = vmatprep.subr.mxu0 0.0
    %4531 = vmatpush1.msra.mxu0 0.0
    %4532 = vmatprep.subr.mxu0 0.0
    %4533 = vmatpush1.msra.mxu0 0.0
    %4534 = vmatprep.subr.mxu0 0.0
    %4535 = vmatpush1.msra.mxu0 0.0
    %4536 = vmatprep.subr.mxu0 0.0
    %4537 = vmatpush1.msra.mxu0 0.0
    %4538 = vmatprep.subr.mxu0 0.0
    %4539 = vmatpush1.msra.mxu0 0.0
    %4540 = vmatprep.subr.mxu0 0.0
    %4541 = vmatpush1.msra.mxu0 0.0
    %4542 = vmatprep.subr.mxu0 0.0
    %4543 = vmatpush1.msra.mxu0 0.0
    %4544 = vmatprep.subr.mxu0 0.0
    %4545 = vmatpush1.msra.mxu0 0.0
    %4546 = vmatprep.subr.mxu0 0.0
    %4547 = vmatpush1.msra.mxu0 0.0
    %4548 = vmatprep.subr.mxu0 0.0
    %4549 = vmatpush1.msra.mxu0 0.0
    %4550 = vmatprep.subr.mxu0 0.0
    %4551 = vmatpush1.msra.mxu0 0.0
    %4552 = vmatprep.subr.mxu0 0.0
    %4553 = vmatpush1.msra.mxu0 0.0
    %4554 = vmatprep.subr.mxu0 0.0
    %4555 = vmatpush1.msra.mxu0 %v4520
    %4556 = vmatprep.subr.mxu0 0.0
    %4557 = vmatpush1.msra.mxu0 %v4518
    %4558 = vmatprep.subr.mxu0 0.0
    %4559 = vmatpush2.msra.mxu0 0.0
    %4560 = vmatprep.subr.mxu0 0.0
    %4561 = vmatpush2.msra.mxu0 0.0
    %4562 = vmatprep.subr.mxu0 0.0
    %4563 = vmatpush2.msra.mxu0 0.0
    %4564 = vmatprep.subr.mxu0 0.0
    %4565 = vmatpush2.msra.mxu0 0.0
    %4566 = vmatprep.subr.mxu0 0.0
    %4567 = vmatpush2.msra.mxu0 0.0
    %4568 = vmatprep.subr.mxu0 0.0
    %4569 = vmatpush2.msra.mxu0 0.0
    %4570 = vmatprep.subr.mxu0 0.0
    %4571 = vmatpush2.msra.mxu0 0.0
    %4572 = vmatprep.subr.mxu0 0.0
    %4573 = vmatpush2.msra.mxu0 0.0
    %4574 = vmatprep.subr.mxu0 0.0
    %4575 = vmatpush2.msra.mxu0 0.0
    %4576 = vmatprep.subr.mxu0 0.0
    %4577 = vmatpush2.msra.mxu0 0.0
    %4578 = vmatprep.subr.mxu0 0.0
    %4579 = vmatpush2.msra.mxu0 0.0
    %4580 = vmatprep.subr.mxu0 0.0
    %4581 = vmatpush2.msra.mxu0 0.0
    %4582 = vmatprep.subr.mxu0 0.0
    %4583 = vmatpush2.msra.mxu0 0.0
    %4584 = vmatprep.subr.mxu0 0.0
    %4585 = vmatpush2.msra.mxu0 0.0
    %4586 = vmatprep.subr.mxu0 0.0
    %4587 = vmatpush2.msra.mxu0 0.0
    %4588 = vmatprep.subr.mxu0 0.0
    %4589 = vmatpush2.msra.mxu0 0.0
    %4590 = vmatprep.mubr.f32.mxu0 0.0
    %4591 = vmatmul.mubr.f32.gmra.mxu0 %v4524
    %v4592 = vpop.f32.mrf.mxu0
    %v4593 = vadd.f32 0.0, %v4592
    %v4594 = vpop.f32.mrf.mxu0
    %4595 = vdwg.mxu0
    %4596 = vrot.lane.b32.xlu0 %v3896, 112
    %v4597 = vpop.permute.xlu0 %4596
    %4598 = vrot.lane.b32.xlu0 %v3843, 80
    %v4599 = vpop.permute.xlu0 %4598
    %4600 = vrot.lane.b32.xlu0 %v3846, 80
    %v4601 = vpop.permute.xlu0 %4600
    %v4602 = vsel %vm636, %v4597, 0
    %v4604 = vsel %vm636, %v4599, 0
    %v4606 = vsel %vm636, %v4601, 0
    %4608 = vmatprep.subr.mxu0 0.0
    %4609 = vmatpush1.xpose.msra.mxu0 0.0
    %4610 = vmatprep.subr.mxu0 0.0
    %4611 = vmatpush1.xpose.msra.mxu0 0.0
    %4612 = vmatprep.subr.mxu0 0.0
    %4613 = vmatpush1.xpose.msra.mxu0 0.0
    %4614 = vmatprep.subr.mxu0 0.0
    %4615 = vmatpush1.xpose.msra.mxu0 0.0
    %4616 = vmatprep.subr.mxu0 0.0
    %4617 = vmatpush1.xpose.msra.mxu0 0.0
    %4618 = vmatprep.subr.mxu0 0.0
    %4619 = vmatpush1.xpose.msra.mxu0 0.0
    %4620 = vmatprep.subr.mxu0 0.0
    %4621 = vmatpush1.xpose.msra.mxu0 0.0
    %4622 = vmatprep.subr.mxu0 0.0
    %4623 = vmatpush1.xpose.msra.mxu0 0.0
    %4624 = vmatprep.subr.mxu0 0.0
    %4625 = vmatpush1.xpose.msra.mxu0 0.0
    %4626 = vmatprep.subr.mxu0 0.0
    %4627 = vmatpush1.xpose.msra.mxu0 0.0
    %4628 = vmatprep.subr.mxu0 0.0
    %4629 = vmatpush1.xpose.msra.mxu0 0.0
    %4630 = vmatprep.subr.mxu0 0.0
    %4631 = vmatpush1.xpose.msra.mxu0 0.0
    %4632 = vmatprep.subr.mxu0 0.0
    %4633 = vmatpush1.xpose.msra.mxu0 0.0
    %4634 = vmatprep.subr.mxu0 0.0
    %4635 = vmatpush1.xpose.msra.mxu0 0.0
    %4636 = vmatprep.subr.mxu0 0.0
    %4637 = vmatpush1.xpose.msra.mxu0 %v4606
    %4638 = vmatprep.subr.mxu0 0.0
    %4639 = vmatpush1.xpose.msra.mxu0 %v4604
    %4640 = vmatprep.subr.mxu0 0.0
    %4641 = vmatpush2.xpose.msra.mxu0 0.0
    %4642 = vmatprep.subr.mxu0 0.0
    %4643 = vmatpush2.xpose.msra.mxu0 0.0
    %4644 = vmatprep.subr.mxu0 0.0
    %4645 = vmatpush2.xpose.msra.mxu0 0.0
    %4646 = vmatprep.subr.mxu0 0.0
    %4647 = vmatpush2.xpose.msra.mxu0 0.0
    %4648 = vmatprep.subr.mxu0 0.0
    %4649 = vmatpush2.xpose.msra.mxu0 0.0
    %4650 = vmatprep.subr.mxu0 0.0
    %4651 = vmatpush2.xpose.msra.mxu0 0.0
    %4652 = vmatprep.subr.mxu0 0.0
    %4653 = vmatpush2.xpose.msra.mxu0 0.0
    %4654 = vmatprep.subr.mxu0 0.0
    %4655 = vmatpush2.xpose.msra.mxu0 0.0
    %4656 = vmatprep.subr.mxu0 0.0
    %4657 = vmatpush2.xpose.msra.mxu0 0.0
    %4658 = vmatprep.subr.mxu0 0.0
    %4659 = vmatpush2.xpose.msra.mxu0 0.0
    %4660 = vmatprep.subr.mxu0 0.0
    %4661 = vmatpush2.xpose.msra.mxu0 0.0
    %4662 = vmatprep.subr.mxu0 0.0
    %4663 = vmatpush2.xpose.msra.mxu0 0.0
    %4664 = vmatprep.subr.mxu0 0.0
    %4665 = vmatpush2.xpose.msra.mxu0 0.0
    %4666 = vmatprep.subr.mxu0 0.0
    %4667 = vmatpush2.xpose.msra.mxu0 0.0
    %4668 = vmatprep.subr.mxu0 0.0
    %4669 = vmatpush2.xpose.msra.mxu0 0.0
    %4670 = vmatprep.subr.mxu0 0.0
    %4671 = vmatpush2.xpose.msra.mxu0 0.0
    %4672 = vmatprep.mubr.f32.mxu0 0.0
    %4673 = vmatmul.mubr.f32.gmra.mxu0 %v4602
    %v4674 = vpop.f32.mrf.mxu0
    %v4675 = vadd.f32 0.0, %v4674
    %v4676 = vpop.f32.mrf.mxu0
    %4677 = vdwg.mxu0
    %4678 = vrot.lane.b32.xlu0 %v3899, 112
    %v4679 = vpop.permute.xlu0 %4678
    %4680 = vrot.lane.b32.xlu0 %v3851, 80
    %v4681 = vpop.permute.xlu0 %4680
    %4682 = vrot.lane.b32.xlu0 %v3854, 80
    %v4683 = vpop.permute.xlu0 %4682
    %v4684 = vsel %vm636, %v4679, 0
    %v4686 = vsel %vm636, %v4681, 0
    %v4688 = vsel %vm636, %v4683, 0
    %4690 = vmatprep.subr.mxu0 0.0
    %4691 = vmatpush1.xpose.msra.mxu0 0.0
    %4692 = vmatprep.subr.mxu0 0.0
    %4693 = vmatpush1.xpose.msra.mxu0 0.0
    %4694 = vmatprep.subr.mxu0 0.0
    %4695 = vmatpush1.xpose.msra.mxu0 0.0
    %4696 = vmatprep.subr.mxu0 0.0
    %4697 = vmatpush1.xpose.msra.mxu0 0.0
    %4698 = vmatprep.subr.mxu0 0.0
    %4699 = vmatpush1.xpose.msra.mxu0 0.0
    %4700 = vmatprep.subr.mxu0 0.0
    %4701 = vmatpush1.xpose.msra.mxu0 0.0
    %4702 = vmatprep.subr.mxu0 0.0
    %4703 = vmatpush1.xpose.msra.mxu0 0.0
    %4704 = vmatprep.subr.mxu0 0.0
    %4705 = vmatpush1.xpose.msra.mxu0 0.0
    %4706 = vmatprep.subr.mxu0 0.0
    %4707 = vmatpush1.xpose.msra.mxu0 0.0
    %4708 = vmatprep.subr.mxu0 0.0
    %4709 = vmatpush1.xpose.msra.mxu0 0.0
    %4710 = vmatprep.subr.mxu0 0.0
    %4711 = vmatpush1.xpose.msra.mxu0 0.0
    %4712 = vmatprep.subr.mxu0 0.0
    %4713 = vmatpush1.xpose.msra.mxu0 0.0
    %4714 = vmatprep.subr.mxu0 0.0
    %4715 = vmatpush1.xpose.msra.mxu0 0.0
    %4716 = vmatprep.subr.mxu0 0.0
    %4717 = vmatpush1.xpose.msra.mxu0 0.0
    %4718 = vmatprep.subr.mxu0 0.0
    %4719 = vmatpush1.xpose.msra.mxu0 %v4688
    %4720 = vmatprep.subr.mxu0 0.0
    %4721 = vmatpush1.xpose.msra.mxu0 %v4686
    %4722 = vmatprep.subr.mxu0 0.0
    %4723 = vmatpush2.xpose.msra.mxu0 0.0
    %4724 = vmatprep.subr.mxu0 0.0
    %4725 = vmatpush2.xpose.msra.mxu0 0.0
    %4726 = vmatprep.subr.mxu0 0.0
    %4727 = vmatpush2.xpose.msra.mxu0 0.0
    %4728 = vmatprep.subr.mxu0 0.0
    %4729 = vmatpush2.xpose.msra.mxu0 0.0
    %4730 = vmatprep.subr.mxu0 0.0
    %4731 = vmatpush2.xpose.msra.mxu0 0.0
    %4732 = vmatprep.subr.mxu0 0.0
    %4733 = vmatpush2.xpose.msra.mxu0 0.0
    %4734 = vmatprep.subr.mxu0 0.0
    %4735 = vmatpush2.xpose.msra.mxu0 0.0
    %4736 = vmatprep.subr.mxu0 0.0
    %4737 = vmatpush2.xpose.msra.mxu0 0.0
    %4738 = vmatprep.subr.mxu0 0.0
    %4739 = vmatpush2.xpose.msra.mxu0 0.0
    %4740 = vmatprep.subr.mxu0 0.0
    %4741 = vmatpush2.xpose.msra.mxu0 0.0
    %4742 = vmatprep.subr.mxu0 0.0
    %4743 = vmatpush2.xpose.msra.mxu0 0.0
    %4744 = vmatprep.subr.mxu0 0.0
    %4745 = vmatpush2.xpose.msra.mxu0 0.0
    %4746 = vmatprep.subr.mxu0 0.0
    %4747 = vmatpush2.xpose.msra.mxu0 0.0
    %4748 = vmatprep.subr.mxu0 0.0
    %4749 = vmatpush2.xpose.msra.mxu0 0.0
    %4750 = vmatprep.subr.mxu0 0.0
    %4751 = vmatpush2.xpose.msra.mxu0 0.0
    %4752 = vmatprep.subr.mxu0 0.0
    %4753 = vmatpush2.xpose.msra.mxu0 0.0
    %4754 = vmatprep.mubr.f32.mxu0 0.0
    %4755 = vmatmul.mubr.f32.gmra.mxu0 %v4684
    %v4756 = vpop.f32.mrf.mxu0
    %v4757 = vadd.f32 0.0, %v4756
    %v4758 = vpop.f32.mrf.mxu0
    %4759 = vdwg.mxu0
    %v4760 = vmul.f32 %v4675, 0.35355338
    %v4761 = vmul.f32 %v4757, 0.35355338
    %v4762 = vsel %vm318, %v4760, -inf
    %4763 = vmax.xlane.f32.xlu0 %v4762
    %v4764 = vpop.xlane.xlu0 %4763
    %v4765 = vsel %vm318, %v4761, -inf
    %4766 = vmax.xlane.f32.xlu0 %v4765
    %v4767 = vpop.xlane.xlu0 %4766
    %v4768 = vsub.f32 %v4760, %v4764
    %v4769 = vsub.f32 %v4761, %v4767
    %v4770 = vmul.f32 %v4768, 1.442695
    %v4771 = vpow.pop %v4770
    %v4772 = vmul.f32 %v4769, 1.442695
    %v4773 = vpow.pop %v4772
    %v4774 = vsel %vm318, %v4771, 0.0
    %4775 = vadd.xlane.f32.xlu0 %v4774
    %v4776 = vpop.xlane.xlu0 %4775
    %v4777 = vsel %vm318, %v4773, 0.0
    %4778 = vadd.xlane.f32.xlu0 %v4777
    %v4779 = vpop.xlane.xlu0 %4778
    %v4780 = vrcp.pop %v4776
    %v4781 = vrcp.pop %v4779
    %v4782 = vmul.f32 %v4771, %v4780
    %v4783 = vmul.f32 %v4773, %v4781
    %4784 = vrot.lane.b32.xlu0 %v3843, 48
    %v4785 = vpop.permute.xlu0 %4784
    %4786 = vrot.lane.b32.xlu0 %v3846, 48
    %v4787 = vpop.permute.xlu0 %4786
    %v4791 = vsel %vm318, %v4782, 0
    %4793 = vmatprep.subr.mxu0 0.0
    %4794 = vmatpush1.msra.mxu0 0.0
    %4795 = vmatprep.subr.mxu0 0.0
    %4796 = vmatpush1.msra.mxu0 0.0
    %4797 = vmatprep.subr.mxu0 0.0
    %4798 = vmatpush1.msra.mxu0 0.0
    %4799 = vmatprep.subr.mxu0 0.0
    %4800 = vmatpush1.msra.mxu0 0.0
    %4801 = vmatprep.subr.mxu0 0.0
    %4802 = vmatpush1.msra.mxu0 0.0
    %4803 = vmatprep.subr.mxu0 0.0
    %4804 = vmatpush1.msra.mxu0 0.0
    %4805 = vmatprep.subr.mxu0 0.0
    %4806 = vmatpush1.msra.mxu0 0.0
    %4807 = vmatprep.subr.mxu0 0.0
    %4808 = vmatpush1.msra.mxu0 0.0
    %4809 = vmatprep.subr.mxu0 0.0
    %4810 = vmatpush1.msra.mxu0 0.0
    %4811 = vmatprep.subr.mxu0 0.0
    %4812 = vmatpush1.msra.mxu0 0.0
    %4813 = vmatprep.subr.mxu0 0.0
    %4814 = vmatpush1.msra.mxu0 0.0
    %4815 = vmatprep.subr.mxu0 0.0
    %4816 = vmatpush1.msra.mxu0 0.0
    %4817 = vmatprep.subr.mxu0 0.0
    %4818 = vmatpush1.msra.mxu0 0.0
    %4819 = vmatprep.subr.mxu0 0.0
    %4820 = vmatpush1.msra.mxu0 0.0
    %4821 = vmatprep.subr.mxu0 0.0
    %4822 = vmatpush1.msra.mxu0 %v4787
    %4823 = vmatprep.subr.mxu0 0.0
    %4824 = vmatpush1.msra.mxu0 %v4785
    %4825 = vmatprep.subr.mxu0 0.0
    %4826 = vmatpush2.msra.mxu0 0.0
    %4827 = vmatprep.subr.mxu0 0.0
    %4828 = vmatpush2.msra.mxu0 0.0
    %4829 = vmatprep.subr.mxu0 0.0
    %4830 = vmatpush2.msra.mxu0 0.0
    %4831 = vmatprep.subr.mxu0 0.0
    %4832 = vmatpush2.msra.mxu0 0.0
    %4833 = vmatprep.subr.mxu0 0.0
    %4834 = vmatpush2.msra.mxu0 0.0
    %4835 = vmatprep.subr.mxu0 0.0
    %4836 = vmatpush2.msra.mxu0 0.0
    %4837 = vmatprep.subr.mxu0 0.0
    %4838 = vmatpush2.msra.mxu0 0.0
    %4839 = vmatprep.subr.mxu0 0.0
    %4840 = vmatpush2.msra.mxu0 0.0
    %4841 = vmatprep.subr.mxu0 0.0
    %4842 = vmatpush2.msra.mxu0 0.0
    %4843 = vmatprep.subr.mxu0 0.0
    %4844 = vmatpush2.msra.mxu0 0.0
    %4845 = vmatprep.subr.mxu0 0.0
    %4846 = vmatpush2.msra.mxu0 0.0
    %4847 = vmatprep.subr.mxu0 0.0
    %4848 = vmatpush2.msra.mxu0 0.0
    %4849 = vmatprep.subr.mxu0 0.0
    %4850 = vmatpush2.msra.mxu0 0.0
    %4851 = vmatprep.subr.mxu0 0.0
    %4852 = vmatpush2.msra.mxu0 0.0
    %4853 = vmatprep.subr.mxu0 0.0
    %4854 = vmatpush2.msra.mxu0 0.0
    %4855 = vmatprep.subr.mxu0 0.0
    %4856 = vmatpush2.msra.mxu0 0.0
    %4857 = vmatprep.mubr.f32.mxu0 0.0
    %4858 = vmatmul.mubr.f32.gmra.mxu0 %v4791
    %v4859 = vpop.f32.mrf.mxu0
    %v4860 = vadd.f32 0.0, %v4859
    %v4861 = vpop.f32.mrf.mxu0
    %4862 = vdwg.mxu0
    %4863 = vrot.lane.b32.xlu0 %v3851, 48
    %v4864 = vpop.permute.xlu0 %4863
    %4865 = vrot.lane.b32.xlu0 %v3854, 48
    %v4866 = vpop.permute.xlu0 %4865
    %v4870 = vsel %vm318, %v4783, 0
    %4872 = vmatprep.subr.mxu0 0.0
    %4873 = vmatpush1.msra.mxu0 0.0
    %4874 = vmatprep.subr.mxu0 0.0
    %4875 = vmatpush1.msra.mxu0 0.0
    %4876 = vmatprep.subr.mxu0 0.0
    %4877 = vmatpush1.msra.mxu0 0.0
    %4878 = vmatprep.subr.mxu0 0.0
    %4879 = vmatpush1.msra.mxu0 0.0
    %4880 = vmatprep.subr.mxu0 0.0
    %4881 = vmatpush1.msra.mxu0 0.0
    %4882 = vmatprep.subr.mxu0 0.0
    %4883 = vmatpush1.msra.mxu0 0.0
    %4884 = vmatprep.subr.mxu0 0.0
    %4885 = vmatpush1.msra.mxu0 0.0
    %4886 = vmatprep.subr.mxu0 0.0
    %4887 = vmatpush1.msra.mxu0 0.0
    %4888 = vmatprep.subr.mxu0 0.0
    %4889 = vmatpush1.msra.mxu0 0.0
    %4890 = vmatprep.subr.mxu0 0.0
    %4891 = vmatpush1.msra.mxu0 0.0
    %4892 = vmatprep.subr.mxu0 0.0
    %4893 = vmatpush1.msra.mxu0 0.0
    %4894 = vmatprep.subr.mxu0 0.0
    %4895 = vmatpush1.msra.mxu0 0.0
    %4896 = vmatprep.subr.mxu0 0.0
    %4897 = vmatpush1.msra.mxu0 0.0
    %4898 = vmatprep.subr.mxu0 0.0
    %4899 = vmatpush1.msra.mxu0 0.0
    %4900 = vmatprep.subr.mxu0 0.0
    %4901 = vmatpush1.msra.mxu0 %v4866
    %4902 = vmatprep.subr.mxu0 0.0
    %4903 = vmatpush1.msra.mxu0 %v4864
    %4904 = vmatprep.subr.mxu0 0.0
    %4905 = vmatpush2.msra.mxu0 0.0
    %4906 = vmatprep.subr.mxu0 0.0
    %4907 = vmatpush2.msra.mxu0 0.0
    %4908 = vmatprep.subr.mxu0 0.0
    %4909 = vmatpush2.msra.mxu0 0.0
    %4910 = vmatprep.subr.mxu0 0.0
    %4911 = vmatpush2.msra.mxu0 0.0
    %4912 = vmatprep.subr.mxu0 0.0
    %4913 = vmatpush2.msra.mxu0 0.0
    %4914 = vmatprep.subr.mxu0 0.0
    %4915 = vmatpush2.msra.mxu0 0.0
    %4916 = vmatprep.subr.mxu0 0.0
    %4917 = vmatpush2.msra.mxu0 0.0
    %4918 = vmatprep.subr.mxu0 0.0
    %4919 = vmatpush2.msra.mxu0 0.0
    %4920 = vmatprep.subr.mxu0 0.0
    %4921 = vmatpush2.msra.mxu0 0.0
    %4922 = vmatprep.subr.mxu0 0.0
    %4923 = vmatpush2.msra.mxu0 0.0
    %4924 = vmatprep.subr.mxu0 0.0
    %4925 = vmatpush2.msra.mxu0 0.0
    %4926 = vmatprep.subr.mxu0 0.0
    %4927 = vmatpush2.msra.mxu0 0.0
    %4928 = vmatprep.subr.mxu0 0.0
    %4929 = vmatpush2.msra.mxu0 0.0
    %4930 = vmatprep.subr.mxu0 0.0
    %4931 = vmatpush2.msra.mxu0 0.0
    %4932 = vmatprep.subr.mxu0 0.0
    %4933 = vmatpush2.msra.mxu0 0.0
    %4934 = vmatprep.subr.mxu0 0.0
    %4935 = vmatpush2.msra.mxu0 0.0
    %4936 = vmatprep.mubr.f32.mxu0 0.0
    %4937 = vmatmul.mubr.f32.gmra.mxu0 %v4870
    %v4938 = vpop.f32.mrf.mxu0
    %v4939 = vadd.f32 0.0, %v4938
    %v4940 = vpop.f32.mrf.mxu0
    %4941 = vdwg.mxu0
    %4942 = vrot.lane.b32.xlu0 %v3896, 104
    %v4943 = vpop.permute.xlu0 %4942
    %4944 = vrot.lane.b32.xlu0 %v3843, 72
    %v4945 = vpop.permute.xlu0 %4944
    %4946 = vrot.lane.b32.xlu0 %v3846, 72
    %v4947 = vpop.permute.xlu0 %4946
    %v4948 = vsel %vm636, %v4943, 0
    %v4950 = vsel %vm636, %v4945, 0
    %v4952 = vsel %vm636, %v4947, 0
    %4954 = vmatprep.subr.mxu0 0.0
    %4955 = vmatpush1.xpose.msra.mxu0 0.0
    %4956 = vmatprep.subr.mxu0 0.0
    %4957 = vmatpush1.xpose.msra.mxu0 0.0
    %4958 = vmatprep.subr.mxu0 0.0
    %4959 = vmatpush1.xpose.msra.mxu0 0.0
    %4960 = vmatprep.subr.mxu0 0.0
    %4961 = vmatpush1.xpose.msra.mxu0 0.0
    %4962 = vmatprep.subr.mxu0 0.0
    %4963 = vmatpush1.xpose.msra.mxu0 0.0
    %4964 = vmatprep.subr.mxu0 0.0
    %4965 = vmatpush1.xpose.msra.mxu0 0.0
    %4966 = vmatprep.subr.mxu0 0.0
    %4967 = vmatpush1.xpose.msra.mxu0 0.0
    %4968 = vmatprep.subr.mxu0 0.0
    %4969 = vmatpush1.xpose.msra.mxu0 0.0
    %4970 = vmatprep.subr.mxu0 0.0
    %4971 = vmatpush1.xpose.msra.mxu0 0.0
    %4972 = vmatprep.subr.mxu0 0.0
    %4973 = vmatpush1.xpose.msra.mxu0 0.0
    %4974 = vmatprep.subr.mxu0 0.0
    %4975 = vmatpush1.xpose.msra.mxu0 0.0
    %4976 = vmatprep.subr.mxu0 0.0
    %4977 = vmatpush1.xpose.msra.mxu0 0.0
    %4978 = vmatprep.subr.mxu0 0.0
    %4979 = vmatpush1.xpose.msra.mxu0 0.0
    %4980 = vmatprep.subr.mxu0 0.0
    %4981 = vmatpush1.xpose.msra.mxu0 0.0
    %4982 = vmatprep.subr.mxu0 0.0
    %4983 = vmatpush1.xpose.msra.mxu0 %v4952
    %4984 = vmatprep.subr.mxu0 0.0
    %4985 = vmatpush1.xpose.msra.mxu0 %v4950
    %4986 = vmatprep.subr.mxu0 0.0
    %4987 = vmatpush2.xpose.msra.mxu0 0.0
    %4988 = vmatprep.subr.mxu0 0.0
    %4989 = vmatpush2.xpose.msra.mxu0 0.0
    %4990 = vmatprep.subr.mxu0 0.0
    %4991 = vmatpush2.xpose.msra.mxu0 0.0
    %4992 = vmatprep.subr.mxu0 0.0
    %4993 = vmatpush2.xpose.msra.mxu0 0.0
    %4994 = vmatprep.subr.mxu0 0.0
    %4995 = vmatpush2.xpose.msra.mxu0 0.0
    %4996 = vmatprep.subr.mxu0 0.0
    %4997 = vmatpush2.xpose.msra.mxu0 0.0
    %4998 = vmatprep.subr.mxu0 0.0
    %4999 = vmatpush2.xpose.msra.mxu0 0.0
    %5000 = vmatprep.subr.mxu0 0.0
    %5001 = vmatpush2.xpose.msra.mxu0 0.0
    %5002 = vmatprep.subr.mxu0 0.0
    %5003 = vmatpush2.xpose.msra.mxu0 0.0
    %5004 = vmatprep.subr.mxu0 0.0
    %5005 = vmatpush2.xpose.msra.mxu0 0.0
    %5006 = vmatprep.subr.mxu0 0.0
    %5007 = vmatpush2.xpose.msra.mxu0 0.0
    %5008 = vmatprep.subr.mxu0 0.0
    %5009 = vmatpush2.xpose.msra.mxu0 0.0
    %5010 = vmatprep.subr.mxu0 0.0
    %5011 = vmatpush2.xpose.msra.mxu0 0.0
    %5012 = vmatprep.subr.mxu0 0.0
    %5013 = vmatpush2.xpose.msra.mxu0 0.0
    %5014 = vmatprep.subr.mxu0 0.0
    %5015 = vmatpush2.xpose.msra.mxu0 0.0
    %5016 = vmatprep.subr.mxu0 0.0
    %5017 = vmatpush2.xpose.msra.mxu0 0.0
    %5018 = vmatprep.mubr.f32.mxu0 0.0
    %5019 = vmatmul.mubr.f32.gmra.mxu0 %v4948
    %v5020 = vpop.f32.mrf.mxu0
    %v5021 = vadd.f32 0.0, %v5020
    %v5022 = vpop.f32.mrf.mxu0
    %5023 = vdwg.mxu0
    %5024 = vrot.lane.b32.xlu0 %v3899, 104
    %v5025 = vpop.permute.xlu0 %5024
    %5026 = vrot.lane.b32.xlu0 %v3851, 72
    %v5027 = vpop.permute.xlu0 %5026
    %5028 = vrot.lane.b32.xlu0 %v3854, 72
    %v5029 = vpop.permute.xlu0 %5028
    %v5030 = vsel %vm636, %v5025, 0
    %v5032 = vsel %vm636, %v5027, 0
    %v5034 = vsel %vm636, %v5029, 0
    %5036 = vmatprep.subr.mxu0 0.0
    %5037 = vmatpush1.xpose.msra.mxu0 0.0
    %5038 = vmatprep.subr.mxu0 0.0
    %5039 = vmatpush1.xpose.msra.mxu0 0.0
    %5040 = vmatprep.subr.mxu0 0.0
    %5041 = vmatpush1.xpose.msra.mxu0 0.0
    %5042 = vmatprep.subr.mxu0 0.0
    %5043 = vmatpush1.xpose.msra.mxu0 0.0
    %5044 = vmatprep.subr.mxu0 0.0
    %5045 = vmatpush1.xpose.msra.mxu0 0.0
    %5046 = vmatprep.subr.mxu0 0.0
    %5047 = vmatpush1.xpose.msra.mxu0 0.0
    %5048 = vmatprep.subr.mxu0 0.0
    %5049 = vmatpush1.xpose.msra.mxu0 0.0
    %5050 = vmatprep.subr.mxu0 0.0
    %5051 = vmatpush1.xpose.msra.mxu0 0.0
    %5052 = vmatprep.subr.mxu0 0.0
    %5053 = vmatpush1.xpose.msra.mxu0 0.0
    %5054 = vmatprep.subr.mxu0 0.0
    %5055 = vmatpush1.xpose.msra.mxu0 0.0
    %5056 = vmatprep.subr.mxu0 0.0
    %5057 = vmatpush1.xpose.msra.mxu0 0.0
    %5058 = vmatprep.subr.mxu0 0.0
    %5059 = vmatpush1.xpose.msra.mxu0 0.0
    %5060 = vmatprep.subr.mxu0 0.0
    %5061 = vmatpush1.xpose.msra.mxu0 0.0
    %5062 = vmatprep.subr.mxu0 0.0
    %5063 = vmatpush1.xpose.msra.mxu0 0.0
    %5064 = vmatprep.subr.mxu0 0.0
    %5065 = vmatpush1.xpose.msra.mxu0 %v5034
    %5066 = vmatprep.subr.mxu0 0.0
    %5067 = vmatpush1.xpose.msra.mxu0 %v5032
    %5068 = vmatprep.subr.mxu0 0.0
    %5069 = vmatpush2.xpose.msra.mxu0 0.0
    %5070 = vmatprep.subr.mxu0 0.0
    %5071 = vmatpush2.xpose.msra.mxu0 0.0
    %5072 = vmatprep.subr.mxu0 0.0
    %5073 = vmatpush2.xpose.msra.mxu0 0.0
    %5074 = vmatprep.subr.mxu0 0.0
    %5075 = vmatpush2.xpose.msra.mxu0 0.0
    %5076 = vmatprep.subr.mxu0 0.0
    %5077 = vmatpush2.xpose.msra.mxu0 0.0
    %5078 = vmatprep.subr.mxu0 0.0
    %5079 = vmatpush2.xpose.msra.mxu0 0.0
    %5080 = vmatprep.subr.mxu0 0.0
    %5081 = vmatpush2.xpose.msra.mxu0 0.0
    %5082 = vmatprep.subr.mxu0 0.0
    %5083 = vmatpush2.xpose.msra.mxu0 0.0
    %5084 = vmatprep.subr.mxu0 0.0
    %5085 = vmatpush2.xpose.msra.mxu0 0.0
    %5086 = vmatprep.subr.mxu0 0.0
    %5087 = vmatpush2.xpose.msra.mxu0 0.0
    %5088 = vmatprep.subr.mxu0 0.0
    %5089 = vmatpush2.xpose.msra.mxu0 0.0
    %5090 = vmatprep.subr.mxu0 0.0
    %5091 = vmatpush2.xpose.msra.mxu0 0.0
    %5092 = vmatprep.subr.mxu0 0.0
    %5093 = vmatpush2.xpose.msra.mxu0 0.0
    %5094 = vmatprep.subr.mxu0 0.0
    %5095 = vmatpush2.xpose.msra.mxu0 0.0
    %5096 = vmatprep.subr.mxu0 0.0
    %5097 = vmatpush2.xpose.msra.mxu0 0.0
    %5098 = vmatprep.subr.mxu0 0.0
    %5099 = vmatpush2.xpose.msra.mxu0 0.0
    %5100 = vmatprep.mubr.f32.mxu0 0.0
    %5101 = vmatmul.mubr.f32.gmra.mxu0 %v5030
    %v5102 = vpop.f32.mrf.mxu0
    %v5103 = vadd.f32 0.0, %v5102
    %v5104 = vpop.f32.mrf.mxu0
    %5105 = vdwg.mxu0
    %v5106 = vmul.f32 %v5021, 0.35355338
    %v5107 = vmul.f32 %v5103, 0.35355338
    %v5108 = vsel %vm318, %v5106, -inf
    %5109 = vmax.xlane.f32.xlu0 %v5108
    %v5110 = vpop.xlane.xlu0 %5109
    %v5111 = vsel %vm318, %v5107, -inf
    %5112 = vmax.xlane.f32.xlu0 %v5111
    %v5113 = vpop.xlane.xlu0 %5112
    %v5114 = vsub.f32 %v5106, %v5110
    %v5115 = vsub.f32 %v5107, %v5113
    %v5116 = vmul.f32 %v5114, 1.442695
    %v5117 = vpow.pop %v5116
    %v5118 = vmul.f32 %v5115, 1.442695
    %v5119 = vpow.pop %v5118
    %v5120 = vsel %vm318, %v5117, 0.0
    %5121 = vadd.xlane.f32.xlu0 %v5120
    %v5122 = vpop.xlane.xlu0 %5121
    %v5123 = vsel %vm318, %v5119, 0.0
    %5124 = vadd.xlane.f32.xlu0 %v5123
    %v5125 = vpop.xlane.xlu0 %5124
    %v5126 = vrcp.pop %v5122
    %v5127 = vrcp.pop %v5125
    %v5128 = vmul.f32 %v5117, %v5126
    %v5129 = vmul.f32 %v5119, %v5127
    %5130 = vrot.lane.b32.xlu0 %v3843, 40
    %v5131 = vpop.permute.xlu0 %5130
    %5132 = vrot.lane.b32.xlu0 %v3846, 40
    %v5133 = vpop.permute.xlu0 %5132
    %v5137 = vsel %vm318, %v5128, 0
    %5139 = vmatprep.subr.mxu0 0.0
    %5140 = vmatpush1.msra.mxu0 0.0
    %5141 = vmatprep.subr.mxu0 0.0
    %5142 = vmatpush1.msra.mxu0 0.0
    %5143 = vmatprep.subr.mxu0 0.0
    %5144 = vmatpush1.msra.mxu0 0.0
    %5145 = vmatprep.subr.mxu0 0.0
    %5146 = vmatpush1.msra.mxu0 0.0
    %5147 = vmatprep.subr.mxu0 0.0
    %5148 = vmatpush1.msra.mxu0 0.0
    %5149 = vmatprep.subr.mxu0 0.0
    %5150 = vmatpush1.msra.mxu0 0.0
    %5151 = vmatprep.subr.mxu0 0.0
    %5152 = vmatpush1.msra.mxu0 0.0
    %5153 = vmatprep.subr.mxu0 0.0
    %5154 = vmatpush1.msra.mxu0 0.0
    %5155 = vmatprep.subr.mxu0 0.0
    %5156 = vmatpush1.msra.mxu0 0.0
    %5157 = vmatprep.subr.mxu0 0.0
    %5158 = vmatpush1.msra.mxu0 0.0
    %5159 = vmatprep.subr.mxu0 0.0
    %5160 = vmatpush1.msra.mxu0 0.0
    %5161 = vmatprep.subr.mxu0 0.0
    %5162 = vmatpush1.msra.mxu0 0.0
    %5163 = vmatprep.subr.mxu0 0.0
    %5164 = vmatpush1.msra.mxu0 0.0
    %5165 = vmatprep.subr.mxu0 0.0
    %5166 = vmatpush1.msra.mxu0 0.0
    %5167 = vmatprep.subr.mxu0 0.0
    %5168 = vmatpush1.msra.mxu0 %v5133
    %5169 = vmatprep.subr.mxu0 0.0
    %5170 = vmatpush1.msra.mxu0 %v5131
    %5171 = vmatprep.subr.mxu0 0.0
    %5172 = vmatpush2.msra.mxu0 0.0
    %5173 = vmatprep.subr.mxu0 0.0
    %5174 = vmatpush2.msra.mxu0 0.0
    %5175 = vmatprep.subr.mxu0 0.0
    %5176 = vmatpush2.msra.mxu0 0.0
    %5177 = vmatprep.subr.mxu0 0.0
    %5178 = vmatpush2.msra.mxu0 0.0
    %5179 = vmatprep.subr.mxu0 0.0
    %5180 = vmatpush2.msra.mxu0 0.0
    %5181 = vmatprep.subr.mxu0 0.0
    %5182 = vmatpush2.msra.mxu0 0.0
    %5183 = vmatprep.subr.mxu0 0.0
    %5184 = vmatpush2.msra.mxu0 0.0
    %5185 = vmatprep.subr.mxu0 0.0
    %5186 = vmatpush2.msra.mxu0 0.0
    %5187 = vmatprep.subr.mxu0 0.0
    %5188 = vmatpush2.msra.mxu0 0.0
    %5189 = vmatprep.subr.mxu0 0.0
    %5190 = vmatpush2.msra.mxu0 0.0
    %5191 = vmatprep.subr.mxu0 0.0
    %5192 = vmatpush2.msra.mxu0 0.0
    %5193 = vmatprep.subr.mxu0 0.0
    %5194 = vmatpush2.msra.mxu0 0.0
    %5195 = vmatprep.subr.mxu0 0.0
    %5196 = vmatpush2.msra.mxu0 0.0
    %5197 = vmatprep.subr.mxu0 0.0
    %5198 = vmatpush2.msra.mxu0 0.0
    %5199 = vmatprep.subr.mxu0 0.0
    %5200 = vmatpush2.msra.mxu0 0.0
    %5201 = vmatprep.subr.mxu0 0.0
    %5202 = vmatpush2.msra.mxu0 0.0
    %5203 = vmatprep.mubr.f32.mxu0 0.0
    %5204 = vmatmul.mubr.f32.gmra.mxu0 %v5137
    %v5205 = vpop.f32.mrf.mxu0
    %v5206 = vadd.f32 0.0, %v5205
    %v5207 = vpop.f32.mrf.mxu0
    %5208 = vdwg.mxu0
    %5209 = vrot.lane.b32.xlu0 %v3851, 40
    %v5210 = vpop.permute.xlu0 %5209
    %5211 = vrot.lane.b32.xlu0 %v3854, 40
    %v5212 = vpop.permute.xlu0 %5211
    %v5216 = vsel %vm318, %v5129, 0
    %5218 = vmatprep.subr.mxu0 0.0
    %5219 = vmatpush1.msra.mxu0 0.0
    %5220 = vmatprep.subr.mxu0 0.0
    %5221 = vmatpush1.msra.mxu0 0.0
    %5222 = vmatprep.subr.mxu0 0.0
    %5223 = vmatpush1.msra.mxu0 0.0
    %5224 = vmatprep.subr.mxu0 0.0
    %5225 = vmatpush1.msra.mxu0 0.0
    %5226 = vmatprep.subr.mxu0 0.0
    %5227 = vmatpush1.msra.mxu0 0.0
    %5228 = vmatprep.subr.mxu0 0.0
    %5229 = vmatpush1.msra.mxu0 0.0
    %5230 = vmatprep.subr.mxu0 0.0
    %5231 = vmatpush1.msra.mxu0 0.0
    %5232 = vmatprep.subr.mxu0 0.0
    %5233 = vmatpush1.msra.mxu0 0.0
    %5234 = vmatprep.subr.mxu0 0.0
    %5235 = vmatpush1.msra.mxu0 0.0
    %5236 = vmatprep.subr.mxu0 0.0
    %5237 = vmatpush1.msra.mxu0 0.0
    %5238 = vmatprep.subr.mxu0 0.0
    %5239 = vmatpush1.msra.mxu0 0.0
    %5240 = vmatprep.subr.mxu0 0.0
    %5241 = vmatpush1.msra.mxu0 0.0
    %5242 = vmatprep.subr.mxu0 0.0
    %5243 = vmatpush1.msra.mxu0 0.0
    %5244 = vmatprep.subr.mxu0 0.0
    %5245 = vmatpush1.msra.mxu0 0.0
    %5246 = vmatprep.subr.mxu0 0.0
    %5247 = vmatpush1.msra.mxu0 %v5212
    %5248 = vmatprep.subr.mxu0 0.0
    %5249 = vmatpush1.msra.mxu0 %v5210
    %5250 = vmatprep.subr.mxu0 0.0
    %5251 = vmatpush2.msra.mxu0 0.0
    %5252 = vmatprep.subr.mxu0 0.0
    %5253 = vmatpush2.msra.mxu0 0.0
    %5254 = vmatprep.subr.mxu0 0.0
    %5255 = vmatpush2.msra.mxu0 0.0
    %5256 = vmatprep.subr.mxu0 0.0
    %5257 = vmatpush2.msra.mxu0 0.0
    %5258 = vmatprep.subr.mxu0 0.0
    %5259 = vmatpush2.msra.mxu0 0.0
    %5260 = vmatprep.subr.mxu0 0.0
    %5261 = vmatpush2.msra.mxu0 0.0
    %5262 = vmatprep.subr.mxu0 0.0
    %5263 = vmatpush2.msra.mxu0 0.0
    %5264 = vmatprep.subr.mxu0 0.0
    %5265 = vmatpush2.msra.mxu0 0.0
    %5266 = vmatprep.subr.mxu0 0.0
    %5267 = vmatpush2.msra.mxu0 0.0
    %5268 = vmatprep.subr.mxu0 0.0
    %5269 = vmatpush2.msra.mxu0 0.0
    %5270 = vmatprep.subr.mxu0 0.0
    %5271 = vmatpush2.msra.mxu0 0.0
    %5272 = vmatprep.subr.mxu0 0.0
    %5273 = vmatpush2.msra.mxu0 0.0
    %5274 = vmatprep.subr.mxu0 0.0
    %5275 = vmatpush2.msra.mxu0 0.0
    %5276 = vmatprep.subr.mxu0 0.0
    %5277 = vmatpush2.msra.mxu0 0.0
    %5278 = vmatprep.subr.mxu0 0.0
    %5279 = vmatpush2.msra.mxu0 0.0
    %5280 = vmatprep.subr.mxu0 0.0
    %5281 = vmatpush2.msra.mxu0 0.0
    %5282 = vmatprep.mubr.f32.mxu0 0.0
    %5283 = vmatmul.mubr.f32.gmra.mxu0 %v5216
    %v5284 = vpop.f32.mrf.mxu0
    %v5285 = vadd.f32 0.0, %v5284
    %v5286 = vpop.f32.mrf.mxu0
    %5287 = vdwg.mxu0
    %5290 = vrot.lane.b32.xlu0 %v4514, 8
    %v5291 = vpop.permute.xlu0 %5290
    %5292 = vrot.lane.b32.xlu0 %v4593, 8
    %v5293 = vpop.permute.xlu0 %5292
    %5298 = vrot.lane.b32.xlu0 %v4860, 16
    %v5299 = vpop.permute.xlu0 %5298
    %5300 = vrot.lane.b32.xlu0 %v4939, 16
    %v5301 = vpop.permute.xlu0 %5300
    %5306 = vrot.lane.b32.xlu0 %v5206, 24
    %v5307 = vpop.permute.xlu0 %5306
    %5308 = vrot.lane.b32.xlu0 %v5285, 24
    %v5309 = vpop.permute.xlu0 %5308
    %v5312 = vsel %vm636, %v4168, %v5291
    %v5313 = vsel %vm636, %v4247, %v5293
    %v5314 = vsel %vm318, %v5312, %v5299
    %v5315 = vsel %vm318, %v5313, %v5301
    %v5316 = vsel %vm2045, %v5314, %v5307
    %v5317 = vsel %vm2045, %v5315, %v5309
    %v5318 = vpack.c.bf16 %v5317, %v5316
    %s5319 = scalar_lea.vmem [#allocation14], 32
    %v5320 = vld [vmem:[%s5319] sm:$0xf]
    %v5321 = vld [vmem:[%s5319 + $0x4] sm:$0xf]
    %v5322 = vld [vmem:[%s5319 + $0x8] sm:$0xf]
    %v5323 = vld [vmem:[%s5319 + $0xc] sm:$0xf]
    %s5324 = scalar_lea.vmem [#allocation16], 2
    %v5325 = vld [vmem:[%s5324] sm:$0x1]
    %v5327 = vlaneseq
    %v5328 = vshrl.u32 %v5327, 7
    %v5329 = vsub.s32 0, %v5328
    %v5330 = vrot.slane %v5325, %v5329
    %v5336 = vunpack.c.l.b16 %v5320
    %v5337 = vunpack.c.l.b16 %v5321
    %v5338 = vunpack.c.l.b16 %v5322
    %v5339 = vunpack.c.l.b16 %v5323
    %v5340 = vpack.c.b16 %v5337, %v5336
    %v5341 = vpack.c.b16 %v5339, %v5338
    %v5345 = vsel %vm203, %v5318, 0
    %5347 = vmatprep.subr.bf16.mxu0 0
    %5348 = vmatpush1.bf16.msra.mxu0 0
    %5349 = vmatprep.subr.bf16.mxu0 0
    %5350 = vmatpush1.bf16.msra.mxu0 0
    %5351 = vmatprep.subr.bf16.mxu0 0
    %5352 = vmatpush1.bf16.msra.mxu0 0
    %5353 = vmatprep.subr.bf16.mxu0 0
    %5354 = vmatpush1.bf16.msra.mxu0 0
    %5355 = vmatprep.subr.bf16.mxu0 0
    %5356 = vmatpush1.bf16.msra.mxu0 0
    %5357 = vmatprep.subr.bf16.mxu0 0
    %5358 = vmatpush1.bf16.msra.mxu0 0
    %5359 = vmatprep.subr.bf16.mxu0 0
    %5360 = vmatpush1.bf16.msra.mxu0 %v5341
    %5361 = vmatprep.subr.bf16.mxu0 0
    %5362 = vmatpush1.bf16.msra.mxu0 %v5340
    %5363 = vmatprep.subr.bf16.mxu0 0
    %5364 = vmatpush2.bf16.msra.mxu0 0
    %5365 = vmatprep.subr.bf16.mxu0 0
    %5366 = vmatpush2.bf16.msra.mxu0 0
    %5367 = vmatprep.subr.bf16.mxu0 0
    %5368 = vmatpush2.bf16.msra.mxu0 0
    %5369 = vmatprep.subr.bf16.mxu0 0
    %5370 = vmatpush2.bf16.msra.mxu0 0
    %5371 = vmatprep.subr.bf16.mxu0 0
    %5372 = vmatpush2.bf16.msra.mxu0 0
    %5373 = vmatprep.subr.bf16.mxu0 0
    %5374 = vmatpush2.bf16.msra.mxu0 0
    %5375 = vmatprep.subr.bf16.mxu0 0
    %5376 = vmatpush2.bf16.msra.mxu0 0
    %5377 = vmatprep.subr.bf16.mxu0 0
    %5378 = vmatpush2.bf16.msra.mxu0 0
    %5379 = vmatprep.mubr.bf16.mxu0 0
    %5380 = vmatmul.mubr.bf16.gmra.mxu0 %v5345
    %v5381 = vpop.f32.mrf.mxu0
    %v5382 = vadd.f32 %v5330, %v5381
    %v5383 = vpop.f32.mrf.mxu0
    %v5384 = vpop.f32.mrf.mxu0
    %v5385 = vadd.f32 %v5330, %v5384
    %v5386 = vpop.f32.mrf.mxu0
    %5387 = vdwg.mxu0
    %5390 = vrot.lane.b32.xlu0 %v5382, 64
    %v5391 = vpop.permute.xlu0 %5390
    %5392 = vrot.lane.b32.xlu0 %v5385, 64
    %v5393 = vpop.permute.xlu0 %5392
    %v5396 = vmul.f32 %v2142, %v5391
    %v5397 = vmul.f32 %v2146, %v5393
    %5400 = vrot.lane.b32.xlu0 %v5396, 64
    %v5401 = vpop.permute.xlu0 %5400
    %5402 = vrot.lane.b32.xlu0 %v5397, 64
    %v5403 = vpop.permute.xlu0 %5402
    %v5406 = vadd.f32 %v3729, %v5401
    %v5407 = vadd.f32 %v3730, %v5403
    %s5408 = scalar_lea.vmem %s5, 3
    %v5409 = vld [vmem:[%s5408] sm:$0x1]
    %s5410 = scalar_lea.vmem [#allocation10], 3
    %v5411 = vld [vmem:[%s5410] sm:$0x1]
    %v5412 = vsel %vm203, %v5406, 0.0
    %5413 = vadd.xlane.f32.xlu0 %v5412
    %v5414 = vpop.xlane.xlu0 %5413
    %v5415 = vsel %vm203, %v5407, 0.0
    %5416 = vadd.xlane.f32.xlu0 %v5415
    %v5417 = vpop.xlane.xlu0 %5416
    %v5418 = vmul.f32 %v5414, %v216
    %v5419 = vmul.f32 %v5417, %v216
    %v5420 = vsub.f32 %v5406, %v5418
    %v5421 = vsub.f32 %v5407, %v5419
    %v5422 = vmul.f32 %v5420, %v5420
    %v5423 = vmul.f32 %v5421, %v5421
    %v5424 = vsel %vm203, %v5422, 0.0
    %5425 = vadd.xlane.f32.xlu0 %v5424
    %v5426 = vpop.xlane.xlu0 %5425
    %v5427 = vsel %vm203, %v5423, 0.0
    %5428 = vadd.xlane.f32.xlu0 %v5427
    %v5429 = vpop.xlane.xlu0 %5428
    %v5430 = vmul.f32 %v5426, %v216
    %v5431 = vmul.f32 %v5429, %v216
    %v5432 = vadd.f32 %v5430, 1e-05
    %v5433 = vadd.f32 %v5431, 1e-05
    %v5434 = vrsqrt.pop %v5432
    %v5435 = vrsqrt.pop %v5433
    %v5436 = vmul.f32 %v5420, %v5434
    %v5437 = vmul.f32 %v5421, %v5435
    %v5439 = vlaneseq
    %v5440 = vshrl.u32 %v5439, 7
    %v5441 = vsub.s32 0, %v5440
    %v5442 = vrot.slane %v5409, %v5441
    %v5444 = vmul.f32 %v5436, %v5442
    %v5445 = vmul.f32 %v5437, %v5442
    %v5447 = vlaneseq
    %v5448 = vshrl.u32 %v5447, 7
    %v5449 = vsub.s32 0, %v5448
    %v5450 = vrot.slane %v5411, %v5449
    %v5452 = vadd.f32 %v5444, %v5450
    %v5453 = vadd.f32 %v5445, %v5450
    %5454 = vrot.lane.b32.xlu0 %v457, 32
    %v5455 = vpop.permute.xlu0 %5454
    %5456 = vrot.lane.b32.xlu0 %v461, 32
    %v5457 = vpop.permute.xlu0 %5456
    %v5460 = vmul.f32 %v5452, %v5455
    %v5461 = vmul.f32 %v5453, %v5457
    %5462 = vrot.lane.b32.xlu0 %v494, 32
    %v5463 = vpop.permute.xlu0 %5462
    %5464 = vrot.lane.b32.xlu0 %v498, 32
    %v5465 = vpop.permute.xlu0 %5464
    %v5468 = vadd.f32 %v5460, %v5463
    %v5469 = vadd.f32 %v5461, %v5465
    %s5470 = scalar_lea.vmem [#allocation11], 48
    %v5471 = vld [vmem:[%s5470] sm:$0xf]
    %v5472 = vld [vmem:[%s5470 + $0x4] sm:$0xf]
    %v5473 = vld [vmem:[%s5470 + $0x8] sm:$0xf]
    %v5474 = vld [vmem:[%s5470 + $0xc] sm:$0xf]
    %s5475 = scalar_lea.vmem [#allocation13], 3
    %v5476 = vld [vmem:[%s5475] sm:$0x1]
    %v5477 = vpack.c.bf16 %v5469, %v5468
    %v5479 = vlaneseq
    %v5480 = vshrl.u32 %v5479, 7
    %v5481 = vsub.s32 0, %v5480
    %v5482 = vrot.slane %v5476, %v5481
    %v5488 = vunpack.c.l.b16 %v5471
    %v5489 = vunpack.c.l.b16 %v5472
    %v5490 = vunpack.c.l.b16 %v5473
    %v5491 = vunpack.c.l.b16 %v5474
    %v5492 = vpack.c.b16 %v5489, %v5488
    %v5493 = vpack.c.b16 %v5491, %v5490
    %v5497 = vsel %vm203, %v5477, 0
    %5499 = vmatprep.subr.bf16.mxu0 0
    %5500 = vmatpush1.bf16.msra.mxu0 0
    %5501 = vmatprep.subr.bf16.mxu0 0
    %5502 = vmatpush1.bf16.msra.mxu0 0
    %5503 = vmatprep.subr.bf16.mxu0 0
    %5504 = vmatpush1.bf16.msra.mxu0 0
    %5505 = vmatprep.subr.bf16.mxu0 0
    %5506 = vmatpush1.bf16.msra.mxu0 0
    %5507 = vmatprep.subr.bf16.mxu0 0
    %5508 = vmatpush1.bf16.msra.mxu0 0
    %5509 = vmatprep.subr.bf16.mxu0 0
    %5510 = vmatpush1.bf16.msra.mxu0 0
    %5511 = vmatprep.subr.bf16.mxu0 0
    %5512 = vmatpush1.bf16.msra.mxu0 %v5493
    %5513 = vmatprep.subr.bf16.mxu0 0
    %5514 = vmatpush1.bf16.msra.mxu0 %v5492
    %5515 = vmatprep.subr.bf16.mxu0 0
    %5516 = vmatpush2.bf16.msra.mxu0 0
    %5517 = vmatprep.subr.bf16.mxu0 0
    %5518 = vmatpush2.bf16.msra.mxu0 0
    %5519 = vmatprep.subr.bf16.mxu0 0
    %5520 = vmatpush2.bf16.msra.mxu0 0
    %5521 = vmatprep.subr.bf16.mxu0 0
    %5522 = vmatpush2.bf16.msra.mxu0 0
    %5523 = vmatprep.subr.bf16.mxu0 0
    %5524 = vmatpush2.bf16.msra.mxu0 0
    %5525 = vmatprep.subr.bf16.mxu0 0
    %5526 = vmatpush2.bf16.msra.mxu0 0
    %5527 = vmatprep.subr.bf16.mxu0 0
    %5528 = vmatpush2.bf16.msra.mxu0 0
    %5529 = vmatprep.subr.bf16.mxu0 0
    %5530 = vmatpush2.bf16.msra.mxu0 0
    %5531 = vmatprep.mubr.bf16.mxu0 0
    %5532 = vmatmul.mubr.bf16.gmra.mxu0 %v5497
    %v5533 = vpop.f32.mrf.mxu0
    %v5534 = vadd.f32 %v5482, %v5533
    %v5535 = vpop.f32.mrf.mxu0
    %v5536 = vpop.f32.mrf.mxu0
    %v5537 = vadd.f32 %v5482, %v5536
    %v5538 = vpop.f32.mrf.mxu0
    %5539 = vdwg.mxu0
    %5541 = vrot.lane.b32.xlu0 %v5534, 96
    %v5542 = vpop.permute.xlu0 %5541
    %v5543 = vsel %vm636, %v5534, 0
    %v5545 = vsel %vm636, %v5542, 0
    %5547 = vmatprep.subr.mxu0 0.0
    %5548 = vmatpush1.xpose.msra.mxu0 0.0
    %5549 = vmatprep.subr.mxu0 0.0
    %5550 = vmatpush1.xpose.msra.mxu0 0.0
    %5551 = vmatprep.subr.mxu0 0.0
    %5552 = vmatpush1.xpose.msra.mxu0 0.0
    %5553 = vmatprep.subr.mxu0 0.0
    %5554 = vmatpush1.xpose.msra.mxu0 0.0
    %5555 = vmatprep.subr.mxu0 0.0
    %5556 = vmatpush1.xpose.msra.mxu0 0.0
    %5557 = vmatprep.subr.mxu0 0.0
    %5558 = vmatpush1.xpose.msra.mxu0 0.0
    %5559 = vmatprep.subr.mxu0 0.0
    %5560 = vmatpush1.xpose.msra.mxu0 0.0
    %5561 = vmatprep.subr.mxu0 0.0
    %5562 = vmatpush1.xpose.msra.mxu0 0.0
    %5563 = vmatprep.subr.mxu0 0.0
    %5564 = vmatpush1.xpose.msra.mxu0 0.0
    %5565 = vmatprep.subr.mxu0 0.0
    %5566 = vmatpush1.xpose.msra.mxu0 0.0
    %5567 = vmatprep.subr.mxu0 0.0
    %5568 = vmatpush1.xpose.msra.mxu0 0.0
    %5569 = vmatprep.subr.mxu0 0.0
    %5570 = vmatpush1.xpose.msra.mxu0 0.0
    %5571 = vmatprep.subr.mxu0 0.0
    %5572 = vmatpush1.xpose.msra.mxu0 0.0
    %5573 = vmatprep.subr.mxu0 0.0
    %5574 = vmatpush1.xpose.msra.mxu0 0.0
    %5575 = vmatprep.subr.mxu0 0.0
    %5576 = vmatpush1.xpose.msra.mxu0 0.0
    %5577 = vmatprep.subr.mxu0 0.0
    %5578 = vmatpush1.xpose.msra.mxu0 %v5545
    %5579 = vmatprep.subr.mxu0 0.0
    %5580 = vmatpush2.xpose.msra.mxu0 0.0
    %5581 = vmatprep.subr.mxu0 0.0
    %5582 = vmatpush2.xpose.msra.mxu0 0.0
    %5583 = vmatprep.subr.mxu0 0.0
    %5584 = vmatpush2.xpose.msra.mxu0 0.0
    %5585 = vmatprep.subr.mxu0 0.0
    %5586 = vmatpush2.xpose.msra.mxu0 0.0
    %5587 = vmatprep.subr.mxu0 0.0
    %5588 = vmatpush2.xpose.msra.mxu0 0.0
    %5589 = vmatprep.subr.mxu0 0.0
    %5590 = vmatpush2.xpose.msra.mxu0 0.0
    %5591 = vmatprep.subr.mxu0 0.0
    %5592 = vmatpush2.xpose.msra.mxu0 0.0
    %5593 = vmatprep.subr.mxu0 0.0
    %5594 = vmatpush2.xpose.msra.mxu0 0.0
    %5595 = vmatprep.subr.mxu0 0.0
    %5596 = vmatpush2.xpose.msra.mxu0 0.0
    %5597 = vmatprep.subr.mxu0 0.0
    %5598 = vmatpush2.xpose.msra.mxu0 0.0
    %5599 = vmatprep.subr.mxu0 0.0
    %5600 = vmatpush2.xpose.msra.mxu0 0.0
    %5601 = vmatprep.subr.mxu0 0.0
    %5602 = vmatpush2.xpose.msra.mxu0 0.0
    %5603 = vmatprep.subr.mxu0 0.0
    %5604 = vmatpush2.xpose.msra.mxu0 0.0
    %5605 = vmatprep.subr.mxu0 0.0
    %5606 = vmatpush2.xpose.msra.mxu0 0.0
    %5607 = vmatprep.subr.mxu0 0.0
    %5608 = vmatpush2.xpose.msra.mxu0 0.0
    %5609 = vmatprep.subr.mxu0 0.0
    %5610 = vmatpush2.xpose.msra.mxu0 0.0
    %5611 = vmatprep.mubr.f32.mxu0 0.0
    %5612 = vmatmul.mubr.f32.gmra.mxu0 %v5543
    %v5613 = vpop.f32.mrf.mxu0
    %v5614 = vadd.f32 0.0, %v5613
    %v5615 = vpop.f32.mrf.mxu0
    %5616 = vdwg.mxu0
    %5618 = vrot.lane.b32.xlu0 %v5537, 96
    %v5619 = vpop.permute.xlu0 %5618
    %v5620 = vsel %vm636, %v5537, 0
    %v5622 = vsel %vm636, %v5619, 0
    %5624 = vmatprep.subr.mxu0 0.0
    %5625 = vmatpush1.xpose.msra.mxu0 0.0
    %5626 = vmatprep.subr.mxu0 0.0
    %5627 = vmatpush1.xpose.msra.mxu0 0.0
    %5628 = vmatprep.subr.mxu0 0.0
    %5629 = vmatpush1.xpose.msra.mxu0 0.0
    %5630 = vmatprep.subr.mxu0 0.0
    %5631 = vmatpush1.xpose.msra.mxu0 0.0
    %5632 = vmatprep.subr.mxu0 0.0
    %5633 = vmatpush1.xpose.msra.mxu0 0.0
    %5634 = vmatprep.subr.mxu0 0.0
    %5635 = vmatpush1.xpose.msra.mxu0 0.0
    %5636 = vmatprep.subr.mxu0 0.0
    %5637 = vmatpush1.xpose.msra.mxu0 0.0
    %5638 = vmatprep.subr.mxu0 0.0
    %5639 = vmatpush1.xpose.msra.mxu0 0.0
    %5640 = vmatprep.subr.mxu0 0.0
    %5641 = vmatpush1.xpose.msra.mxu0 0.0
    %5642 = vmatprep.subr.mxu0 0.0
    %5643 = vmatpush1.xpose.msra.mxu0 0.0
    %5644 = vmatprep.subr.mxu0 0.0
    %5645 = vmatpush1.xpose.msra.mxu0 0.0
    %5646 = vmatprep.subr.mxu0 0.0
    %5647 = vmatpush1.xpose.msra.mxu0 0.0
    %5648 = vmatprep.subr.mxu0 0.0
    %5649 = vmatpush1.xpose.msra.mxu0 0.0
    %5650 = vmatprep.subr.mxu0 0.0
    %5651 = vmatpush1.xpose.msra.mxu0 0.0
    %5652 = vmatprep.subr.mxu0 0.0
    %5653 = vmatpush1.xpose.msra.mxu0 0.0
    %5654 = vmatprep.subr.mxu0 0.0
    %5655 = vmatpush1.xpose.msra.mxu0 %v5622
    %5656 = vmatprep.subr.mxu0 0.0
    %5657 = vmatpush2.xpose.msra.mxu0 0.0
    %5658 = vmatprep.subr.mxu0 0.0
    %5659 = vmatpush2.xpose.msra.mxu0 0.0
    %5660 = vmatprep.subr.mxu0 0.0
    %5661 = vmatpush2.xpose.msra.mxu0 0.0
    %5662 = vmatprep.subr.mxu0 0.0
    %5663 = vmatpush2.xpose.msra.mxu0 0.0
    %5664 = vmatprep.subr.mxu0 0.0
    %5665 = vmatpush2.xpose.msra.mxu0 0.0
    %5666 = vmatprep.subr.mxu0 0.0
    %5667 = vmatpush2.xpose.msra.mxu0 0.0
    %5668 = vmatprep.subr.mxu0 0.0
    %5669 = vmatpush2.xpose.msra.mxu0 0.0
    %5670 = vmatprep.subr.mxu0 0.0
    %5671 = vmatpush2.xpose.msra.mxu0 0.0
    %5672 = vmatprep.subr.mxu0 0.0
    %5673 = vmatpush2.xpose.msra.mxu0 0.0
    %5674 = vmatprep.subr.mxu0 0.0
    %5675 = vmatpush2.xpose.msra.mxu0 0.0
    %5676 = vmatprep.subr.mxu0 0.0
    %5677 = vmatpush2.xpose.msra.mxu0 0.0
    %5678 = vmatprep.subr.mxu0 0.0
    %5679 = vmatpush2.xpose.msra.mxu0 0.0
    %5680 = vmatprep.subr.mxu0 0.0
    %5681 = vmatpush2.xpose.msra.mxu0 0.0
    %5682 = vmatprep.subr.mxu0 0.0
    %5683 = vmatpush2.xpose.msra.mxu0 0.0
    %5684 = vmatprep.subr.mxu0 0.0
    %5685 = vmatpush2.xpose.msra.mxu0 0.0
    %5686 = vmatprep.subr.mxu0 0.0
    %5687 = vmatpush2.xpose.msra.mxu0 0.0
    %5688 = vmatprep.mubr.f32.mxu0 0.0
    %5689 = vmatmul.mubr.f32.gmra.mxu0 %v5620
    %v5690 = vpop.f32.mrf.mxu0
    %v5691 = vadd.f32 0.0, %v5690
    %v5692 = vpop.f32.mrf.mxu0
    %5693 = vdwg.mxu0
    %v5694 = vmul.f32 %v5614, 0.35355338
    %v5695 = vmul.f32 %v5691, 0.35355338
    %v5696 = vsel %vm636, %v5694, -inf
    %5697 = vmax.xlane.f32.xlu0 %v5696
    %v5698 = vpop.xlane.xlu0 %5697
    %v5699 = vsel %vm636, %v5695, -inf
    %5700 = vmax.xlane.f32.xlu0 %v5699
    %v5701 = vpop.xlane.xlu0 %5700
    %v5702 = vsub.f32 %v5694, %v5698
    %v5703 = vsub.f32 %v5695, %v5701
    %v5704 = vmul.f32 %v5702, 1.442695
    %v5705 = vpow.pop %v5704
    %v5706 = vmul.f32 %v5703, 1.442695
    %v5707 = vpow.pop %v5706
    %v5708 = vsel %vm636, %v5705, 0.0
    %5709 = vadd.xlane.f32.xlu0 %v5708
    %v5710 = vpop.xlane.xlu0 %5709
    %v5711 = vsel %vm636, %v5707, 0.0
    %5712 = vadd.xlane.f32.xlu0 %v5711
    %v5713 = vpop.xlane.xlu0 %5712
    %v5714 = vrcp.pop %v5710
    %v5715 = vrcp.pop %v5713
    %v5716 = vmul.f32 %v5705, %v5714
    %v5717 = vmul.f32 %v5707, %v5715
    %5718 = vrot.lane.b32.xlu0 %v5534, 64
    %v5719 = vpop.permute.xlu0 %5718
    %v5722 = vsel %vm636, %v5716, 0
    %5724 = vmatprep.subr.mxu0 0.0
    %5725 = vmatpush1.msra.mxu0 0.0
    %5726 = vmatprep.subr.mxu0 0.0
    %5727 = vmatpush1.msra.mxu0 0.0
    %5728 = vmatprep.subr.mxu0 0.0
    %5729 = vmatpush1.msra.mxu0 0.0
    %5730 = vmatprep.subr.mxu0 0.0
    %5731 = vmatpush1.msra.mxu0 0.0
    %5732 = vmatprep.subr.mxu0 0.0
    %5733 = vmatpush1.msra.mxu0 0.0
    %5734 = vmatprep.subr.mxu0 0.0
    %5735 = vmatpush1.msra.mxu0 0.0
    %5736 = vmatprep.subr.mxu0 0.0
    %5737 = vmatpush1.msra.mxu0 0.0
    %5738 = vmatprep.subr.mxu0 0.0
    %5739 = vmatpush1.msra.mxu0 0.0
    %5740 = vmatprep.subr.mxu0 0.0
    %5741 = vmatpush1.msra.mxu0 0.0
    %5742 = vmatprep.subr.mxu0 0.0
    %5743 = vmatpush1.msra.mxu0 0.0
    %5744 = vmatprep.subr.mxu0 0.0
    %5745 = vmatpush1.msra.mxu0 0.0
    %5746 = vmatprep.subr.mxu0 0.0
    %5747 = vmatpush1.msra.mxu0 0.0
    %5748 = vmatprep.subr.mxu0 0.0
    %5749 = vmatpush1.msra.mxu0 0.0
    %5750 = vmatprep.subr.mxu0 0.0
    %5751 = vmatpush1.msra.mxu0 0.0
    %5752 = vmatprep.subr.mxu0 0.0
    %5753 = vmatpush1.msra.mxu0 0.0
    %5754 = vmatprep.subr.mxu0 0.0
    %5755 = vmatpush1.msra.mxu0 %v5719
    %5756 = vmatprep.subr.mxu0 0.0
    %5757 = vmatpush2.msra.mxu0 0.0
    %5758 = vmatprep.subr.mxu0 0.0
    %5759 = vmatpush2.msra.mxu0 0.0
    %5760 = vmatprep.subr.mxu0 0.0
    %5761 = vmatpush2.msra.mxu0 0.0
    %5762 = vmatprep.subr.mxu0 0.0
    %5763 = vmatpush2.msra.mxu0 0.0
    %5764 = vmatprep.subr.mxu0 0.0
    %5765 = vmatpush2.msra.mxu0 0.0
    %5766 = vmatprep.subr.mxu0 0.0
    %5767 = vmatpush2.msra.mxu0 0.0
    %5768 = vmatprep.subr.mxu0 0.0
    %5769 = vmatpush2.msra.mxu0 0.0
    %5770 = vmatprep.subr.mxu0 0.0
    %5771 = vmatpush2.msra.mxu0 0.0
    %5772 = vmatprep.subr.mxu0 0.0
    %5773 = vmatpush2.msra.mxu0 0.0
    %5774 = vmatprep.subr.mxu0 0.0
    %5775 = vmatpush2.msra.mxu0 0.0
    %5776 = vmatprep.subr.mxu0 0.0
    %5777 = vmatpush2.msra.mxu0 0.0
    %5778 = vmatprep.subr.mxu0 0.0
    %5779 = vmatpush2.msra.mxu0 0.0
    %5780 = vmatprep.subr.mxu0 0.0
    %5781 = vmatpush2.msra.mxu0 0.0
    %5782 = vmatprep.subr.mxu0 0.0
    %5783 = vmatpush2.msra.mxu0 0.0
    %5784 = vmatprep.subr.mxu0 0.0
    %5785 = vmatpush2.msra.mxu0 0.0
    %5786 = vmatprep.subr.mxu0 0.0
    %5787 = vmatpush2.msra.mxu0 0.0
    %5788 = vmatprep.mubr.f32.mxu0 0.0
    %5789 = vmatmul.mubr.f32.gmra.mxu0 %v5722
    %v5790 = vpop.f32.mrf.mxu0
    %v5791 = vadd.f32 0.0, %v5790
    %v5792 = vpop.f32.mrf.mxu0
    %5793 = vdwg.mxu0
    %5794 = vrot.lane.b32.xlu0 %v5537, 64
    %v5795 = vpop.permute.xlu0 %5794
    %v5798 = vsel %vm636, %v5717, 0
    %5800 = vmatprep.subr.mxu0 0.0
    %5801 = vmatpush1.msra.mxu0 0.0
    %5802 = vmatprep.subr.mxu0 0.0
    %5803 = vmatpush1.msra.mxu0 0.0
    %5804 = vmatprep.subr.mxu0 0.0
    %5805 = vmatpush1.msra.mxu0 0.0
    %5806 = vmatprep.subr.mxu0 0.0
    %5807 = vmatpush1.msra.mxu0 0.0
    %5808 = vmatprep.subr.mxu0 0.0
    %5809 = vmatpush1.msra.mxu0 0.0
    %5810 = vmatprep.subr.mxu0 0.0
    %5811 = vmatpush1.msra.mxu0 0.0
    %5812 = vmatprep.subr.mxu0 0.0
    %5813 = vmatpush1.msra.mxu0 0.0
    %5814 = vmatprep.subr.mxu0 0.0
    %5815 = vmatpush1.msra.mxu0 0.0
    %5816 = vmatprep.subr.mxu0 0.0
    %5817 = vmatpush1.msra.mxu0 0.0
    %5818 = vmatprep.subr.mxu0 0.0
    %5819 = vmatpush1.msra.mxu0 0.0
    %5820 = vmatprep.subr.mxu0 0.0
    %5821 = vmatpush1.msra.mxu0 0.0
    %5822 = vmatprep.subr.mxu0 0.0
    %5823 = vmatpush1.msra.mxu0 0.0
    %5824 = vmatprep.subr.mxu0 0.0
    %5825 = vmatpush1.msra.mxu0 0.0
    %5826 = vmatprep.subr.mxu0 0.0
    %5827 = vmatpush1.msra.mxu0 0.0
    %5828 = vmatprep.subr.mxu0 0.0
    %5829 = vmatpush1.msra.mxu0 0.0
    %5830 = vmatprep.subr.mxu0 0.0
    %5831 = vmatpush1.msra.mxu0 %v5795
    %5832 = vmatprep.subr.mxu0 0.0
    %5833 = vmatpush2.msra.mxu0 0.0
    %5834 = vmatprep.subr.mxu0 0.0
    %5835 = vmatpush2.msra.mxu0 0.0
    %5836 = vmatprep.subr.mxu0 0.0
    %5837 = vmatpush2.msra.mxu0 0.0
    %5838 = vmatprep.subr.mxu0 0.0
    %5839 = vmatpush2.msra.mxu0 0.0
    %5840 = vmatprep.subr.mxu0 0.0
    %5841 = vmatpush2.msra.mxu0 0.0
    %5842 = vmatprep.subr.mxu0 0.0
    %5843 = vmatpush2.msra.mxu0 0.0
    %5844 = vmatprep.subr.mxu0 0.0
    %5845 = vmatpush2.msra.mxu0 0.0
    %5846 = vmatprep.subr.mxu0 0.0
    %5847 = vmatpush2.msra.mxu0 0.0
    %5848 = vmatprep.subr.mxu0 0.0
    %5849 = vmatpush2.msra.mxu0 0.0
    %5850 = vmatprep.subr.mxu0 0.0
    %5851 = vmatpush2.msra.mxu0 0.0
    %5852 = vmatprep.subr.mxu0 0.0
    %5853 = vmatpush2.msra.mxu0 0.0
    %5854 = vmatprep.subr.mxu0 0.0
    %5855 = vmatpush2.msra.mxu0 0.0
    %5856 = vmatprep.subr.mxu0 0.0
    %5857 = vmatpush2.msra.mxu0 0.0
    %5858 = vmatprep.subr.mxu0 0.0
    %5859 = vmatpush2.msra.mxu0 0.0
    %5860 = vmatprep.subr.mxu0 0.0
    %5861 = vmatpush2.msra.mxu0 0.0
    %5862 = vmatprep.subr.mxu0 0.0
    %5863 = vmatpush2.msra.mxu0 0.0
    %5864 = vmatprep.mubr.f32.mxu0 0.0
    %5865 = vmatmul.mubr.f32.gmra.mxu0 %v5798
    %v5866 = vpop.f32.mrf.mxu0
    %v5867 = vadd.f32 0.0, %v5866
    %v5868 = vpop.f32.mrf.mxu0
    %5869 = vdwg.mxu0
    %5870 = vrot.lane.b32.xlu0 %v5534, 120
    %v5871 = vpop.permute.xlu0 %5870
    %5872 = vrot.lane.b32.xlu0 %v5534, 88
    %v5873 = vpop.permute.xlu0 %5872
    %v5874 = vsel %vm636, %v5871, 0
    %v5876 = vsel %vm636, %v5873, 0
    %5878 = vmatprep.subr.mxu0 0.0
    %5879 = vmatpush1.xpose.msra.mxu0 0.0
    %5880 = vmatprep.subr.mxu0 0.0
    %5881 = vmatpush1.xpose.msra.mxu0 0.0
    %5882 = vmatprep.subr.mxu0 0.0
    %5883 = vmatpush1.xpose.msra.mxu0 0.0
    %5884 = vmatprep.subr.mxu0 0.0
    %5885 = vmatpush1.xpose.msra.mxu0 0.0
    %5886 = vmatprep.subr.mxu0 0.0
    %5887 = vmatpush1.xpose.msra.mxu0 0.0
    %5888 = vmatprep.subr.mxu0 0.0
    %5889 = vmatpush1.xpose.msra.mxu0 0.0
    %5890 = vmatprep.subr.mxu0 0.0
    %5891 = vmatpush1.xpose.msra.mxu0 0.0
    %5892 = vmatprep.subr.mxu0 0.0
    %5893 = vmatpush1.xpose.msra.mxu0 0.0
    %5894 = vmatprep.subr.mxu0 0.0
    %5895 = vmatpush1.xpose.msra.mxu0 0.0
    %5896 = vmatprep.subr.mxu0 0.0
    %5897 = vmatpush1.xpose.msra.mxu0 0.0
    %5898 = vmatprep.subr.mxu0 0.0
    %5899 = vmatpush1.xpose.msra.mxu0 0.0
    %5900 = vmatprep.subr.mxu0 0.0
    %5901 = vmatpush1.xpose.msra.mxu0 0.0
    %5902 = vmatprep.subr.mxu0 0.0
    %5903 = vmatpush1.xpose.msra.mxu0 0.0
    %5904 = vmatprep.subr.mxu0 0.0
    %5905 = vmatpush1.xpose.msra.mxu0 0.0
    %5906 = vmatprep.subr.mxu0 0.0
    %5907 = vmatpush1.xpose.msra.mxu0 0.0
    %5908 = vmatprep.subr.mxu0 0.0
    %5909 = vmatpush1.xpose.msra.mxu0 %v5876
    %5910 = vmatprep.subr.mxu0 0.0
    %5911 = vmatpush2.xpose.msra.mxu0 0.0
    %5912 = vmatprep.subr.mxu0 0.0
    %5913 = vmatpush2.xpose.msra.mxu0 0.0
    %5914 = vmatprep.subr.mxu0 0.0
    %5915 = vmatpush2.xpose.msra.mxu0 0.0
    %5916 = vmatprep.subr.mxu0 0.0
    %5917 = vmatpush2.xpose.msra.mxu0 0.0
    %5918 = vmatprep.subr.mxu0 0.0
    %5919 = vmatpush2.xpose.msra.mxu0 0.0
    %5920 = vmatprep.subr.mxu0 0.0
    %5921 = vmatpush2.xpose.msra.mxu0 0.0
    %5922 = vmatprep.subr.mxu0 0.0
    %5923 = vmatpush2.xpose.msra.mxu0 0.0
    %5924 = vmatprep.subr.mxu0 0.0
    %5925 = vmatpush2.xpose.msra.mxu0 0.0
    %5926 = vmatprep.subr.mxu0 0.0
    %5927 = vmatpush2.xpose.msra.mxu0 0.0
    %5928 = vmatprep.subr.mxu0 0.0
    %5929 = vmatpush2.xpose.msra.mxu0 0.0
    %5930 = vmatprep.subr.mxu0 0.0
    %5931 = vmatpush2.xpose.msra.mxu0 0.0
    %5932 = vmatprep.subr.mxu0 0.0
    %5933 = vmatpush2.xpose.msra.mxu0 0.0
    %5934 = vmatprep.subr.mxu0 0.0
    %5935 = vmatpush2.xpose.msra.mxu0 0.0
    %5936 = vmatprep.subr.mxu0 0.0
    %5937 = vmatpush2.xpose.msra.mxu0 0.0
    %5938 = vmatprep.subr.mxu0 0.0
    %5939 = vmatpush2.xpose.msra.mxu0 0.0
    %5940 = vmatprep.subr.mxu0 0.0
    %5941 = vmatpush2.xpose.msra.mxu0 0.0
    %5942 = vmatprep.mubr.f32.mxu0 0.0
    %5943 = vmatmul.mubr.f32.gmra.mxu0 %v5874
    %v5944 = vpop.f32.mrf.mxu0
    %v5945 = vadd.f32 0.0, %v5944
    %v5946 = vpop.f32.mrf.mxu0
    %5947 = vdwg.mxu0
    %5948 = vrot.lane.b32.xlu0 %v5537, 120
    %v5949 = vpop.permute.xlu0 %5948
    %5950 = vrot.lane.b32.xlu0 %v5537, 88
    %v5951 = vpop.permute.xlu0 %5950
    %v5952 = vsel %vm636, %v5949, 0
    %v5954 = vsel %vm636, %v5951, 0
    %5956 = vmatprep.subr.mxu0 0.0
    %5957 = vmatpush1.xpose.msra.mxu0 0.0
    %5958 = vmatprep.subr.mxu0 0.0
    %5959 = vmatpush1.xpose.msra.mxu0 0.0
    %5960 = vmatprep.subr.mxu0 0.0
    %5961 = vmatpush1.xpose.msra.mxu0 0.0
    %5962 = vmatprep.subr.mxu0 0.0
    %5963 = vmatpush1.xpose.msra.mxu0 0.0
    %5964 = vmatprep.subr.mxu0 0.0
    %5965 = vmatpush1.xpose.msra.mxu0 0.0
    %5966 = vmatprep.subr.mxu0 0.0
    %5967 = vmatpush1.xpose.msra.mxu0 0.0
    %5968 = vmatprep.subr.mxu0 0.0
    %5969 = vmatpush1.xpose.msra.mxu0 0.0
    %5970 = vmatprep.subr.mxu0 0.0
    %5971 = vmatpush1.xpose.msra.mxu0 0.0
    %5972 = vmatprep.subr.mxu0 0.0
    %5973 = vmatpush1.xpose.msra.mxu0 0.0
    %5974 = vmatprep.subr.mxu0 0.0
    %5975 = vmatpush1.xpose.msra.mxu0 0.0
    %5976 = vmatprep.subr.mxu0 0.0
    %5977 = vmatpush1.xpose.msra.mxu0 0.0
    %5978 = vmatprep.subr.mxu0 0.0
    %5979 = vmatpush1.xpose.msra.mxu0 0.0
    %5980 = vmatprep.subr.mxu0 0.0
    %5981 = vmatpush1.xpose.msra.mxu0 0.0
    %5982 = vmatprep.subr.mxu0 0.0
    %5983 = vmatpush1.xpose.msra.mxu0 0.0
    %5984 = vmatprep.subr.mxu0 0.0
    %5985 = vmatpush1.xpose.msra.mxu0 0.0
    %5986 = vmatprep.subr.mxu0 0.0
    %5987 = vmatpush1.xpose.msra.mxu0 %v5954
    %5988 = vmatprep.subr.mxu0 0.0
    %5989 = vmatpush2.xpose.msra.mxu0 0.0
    %5990 = vmatprep.subr.mxu0 0.0
    %5991 = vmatpush2.xpose.msra.mxu0 0.0
    %5992 = vmatprep.subr.mxu0 0.0
    %5993 = vmatpush2.xpose.msra.mxu0 0.0
    %5994 = vmatprep.subr.mxu0 0.0
    %5995 = vmatpush2.xpose.msra.mxu0 0.0
    %5996 = vmatprep.subr.mxu0 0.0
    %5997 = vmatpush2.xpose.msra.mxu0 0.0
    %5998 = vmatprep.subr.mxu0 0.0
    %5999 = vmatpush2.xpose.msra.mxu0 0.0
    %6000 = vmatprep.subr.mxu0 0.0
    %6001 = vmatpush2.xpose.msra.mxu0 0.0
    %6002 = vmatprep.subr.mxu0 0.0
    %6003 = vmatpush2.xpose.msra.mxu0 0.0
    %6004 = vmatprep.subr.mxu0 0.0
    %6005 = vmatpush2.xpose.msra.mxu0 0.0
    %6006 = vmatprep.subr.mxu0 0.0
    %6007 = vmatpush2.xpose.msra.mxu0 0.0
    %6008 = vmatprep.subr.mxu0 0.0
    %6009 = vmatpush2.xpose.msra.mxu0 0.0
    %6010 = vmatprep.subr.mxu0 0.0
    %6011 = vmatpush2.xpose.msra.mxu0 0.0
    %6012 = vmatprep.subr.mxu0 0.0
    %6013 = vmatpush2.xpose.msra.mxu0 0.0
    %6014 = vmatprep.subr.mxu0 0.0
    %6015 = vmatpush2.xpose.msra.mxu0 0.0
    %6016 = vmatprep.subr.mxu0 0.0
    %6017 = vmatpush2.xpose.msra.mxu0 0.0
    %6018 = vmatprep.subr.mxu0 0.0
    %6019 = vmatpush2.xpose.msra.mxu0 0.0
    %6020 = vmatprep.mubr.f32.mxu0 0.0
    %6021 = vmatmul.mubr.f32.gmra.mxu0 %v5952
    %v6022 = vpop.f32.mrf.mxu0
    %v6023 = vadd.f32 0.0, %v6022
    %v6024 = vpop.f32.mrf.mxu0
    %6025 = vdwg.mxu0
    %v6026 = vmul.f32 %v5945, 0.35355338
    %v6027 = vmul.f32 %v6023, 0.35355338
    %v6028 = vsel %vm636, %v6026, -inf
    %6029 = vmax.xlane.f32.xlu0 %v6028
    %v6030 = vpop.xlane.xlu0 %6029
    %v6031 = vsel %vm636, %v6027, -inf
    %6032 = vmax.xlane.f32.xlu0 %v6031
    %v6033 = vpop.xlane.xlu0 %6032
    %v6034 = vsub.f32 %v6026, %v6030
    %v6035 = vsub.f32 %v6027, %v6033
    %v6036 = vmul.f32 %v6034, 1.442695
    %v6037 = vpow.pop %v6036
    %v6038 = vmul.f32 %v6035, 1.442695
    %v6039 = vpow.pop %v6038
    %v6040 = vsel %vm636, %v6037, 0.0
    %6041 = vadd.xlane.f32.xlu0 %v6040
    %v6042 = vpop.xlane.xlu0 %6041
    %v6043 = vsel %vm636, %v6039, 0.0
    %6044 = vadd.xlane.f32.xlu0 %v6043
    %v6045 = vpop.xlane.xlu0 %6044
    %v6046 = vrcp.pop %v6042
    %v6047 = vrcp.pop %v6045
    %v6048 = vmul.f32 %v6037, %v6046
    %v6049 = vmul.f32 %v6039, %v6047
    %6050 = vrot.lane.b32.xlu0 %v5534, 56
    %v6051 = vpop.permute.xlu0 %6050
    %v6054 = vsel %vm636, %v6048, 0
    %6056 = vmatprep.subr.mxu0 0.0
    %6057 = vmatpush1.msra.mxu0 0.0
    %6058 = vmatprep.subr.mxu0 0.0
    %6059 = vmatpush1.msra.mxu0 0.0
    %6060 = vmatprep.subr.mxu0 0.0
    %6061 = vmatpush1.msra.mxu0 0.0
    %6062 = vmatprep.subr.mxu0 0.0
    %6063 = vmatpush1.msra.mxu0 0.0
    %6064 = vmatprep.subr.mxu0 0.0
    %6065 = vmatpush1.msra.mxu0 0.0
    %6066 = vmatprep.subr.mxu0 0.0
    %6067 = vmatpush1.msra.mxu0 0.0
    %6068 = vmatprep.subr.mxu0 0.0
    %6069 = vmatpush1.msra.mxu0 0.0
    %6070 = vmatprep.subr.mxu0 0.0
    %6071 = vmatpush1.msra.mxu0 0.0
    %6072 = vmatprep.subr.mxu0 0.0
    %6073 = vmatpush1.msra.mxu0 0.0
    %6074 = vmatprep.subr.mxu0 0.0
    %6075 = vmatpush1.msra.mxu0 0.0
    %6076 = vmatprep.subr.mxu0 0.0
    %6077 = vmatpush1.msra.mxu0 0.0
    %6078 = vmatprep.subr.mxu0 0.0
    %6079 = vmatpush1.msra.mxu0 0.0
    %6080 = vmatprep.subr.mxu0 0.0
    %6081 = vmatpush1.msra.mxu0 0.0
    %6082 = vmatprep.subr.mxu0 0.0
    %6083 = vmatpush1.msra.mxu0 0.0
    %6084 = vmatprep.subr.mxu0 0.0
    %6085 = vmatpush1.msra.mxu0 0.0
    %6086 = vmatprep.subr.mxu0 0.0
    %6087 = vmatpush1.msra.mxu0 %v6051
    %6088 = vmatprep.subr.mxu0 0.0
    %6089 = vmatpush2.msra.mxu0 0.0
    %6090 = vmatprep.subr.mxu0 0.0
    %6091 = vmatpush2.msra.mxu0 0.0
    %6092 = vmatprep.subr.mxu0 0.0
    %6093 = vmatpush2.msra.mxu0 0.0
    %6094 = vmatprep.subr.mxu0 0.0
    %6095 = vmatpush2.msra.mxu0 0.0
    %6096 = vmatprep.subr.mxu0 0.0
    %6097 = vmatpush2.msra.mxu0 0.0
    %6098 = vmatprep.subr.mxu0 0.0
    %6099 = vmatpush2.msra.mxu0 0.0
    %6100 = vmatprep.subr.mxu0 0.0
    %6101 = vmatpush2.msra.mxu0 0.0
    %6102 = vmatprep.subr.mxu0 0.0
    %6103 = vmatpush2.msra.mxu0 0.0
    %6104 = vmatprep.subr.mxu0 0.0
    %6105 = vmatpush2.msra.mxu0 0.0
    %6106 = vmatprep.subr.mxu0 0.0
    %6107 = vmatpush2.msra.mxu0 0.0
    %6108 = vmatprep.subr.mxu0 0.0
    %6109 = vmatpush2.msra.mxu0 0.0
    %6110 = vmatprep.subr.mxu0 0.0
    %6111 = vmatpush2.msra.mxu0 0.0
    %6112 = vmatprep.subr.mxu0 0.0
    %6113 = vmatpush2.msra.mxu0 0.0
    %6114 = vmatprep.subr.mxu0 0.0
    %6115 = vmatpush2.msra.mxu0 0.0
    %6116 = vmatprep.subr.mxu0 0.0
    %6117 = vmatpush2.msra.mxu0 0.0
    %6118 = vmatprep.subr.mxu0 0.0
    %6119 = vmatpush2.msra.mxu0 0.0
    %6120 = vmatprep.mubr.f32.mxu0 0.0
    %6121 = vmatmul.mubr.f32.gmra.mxu0 %v6054
    %v6122 = vpop.f32.mrf.mxu0
    %v6123 = vadd.f32 0.0, %v6122
    %v6124 = vpop.f32.mrf.mxu0
    %6125 = vdwg.mxu0
    %6126 = vrot.lane.b32.xlu0 %v5537, 56
    %v6127 = vpop.permute.xlu0 %6126
    %v6130 = vsel %vm636, %v6049, 0
    %6132 = vmatprep.subr.mxu0 0.0
    %6133 = vmatpush1.msra.mxu0 0.0
    %6134 = vmatprep.subr.mxu0 0.0
    %6135 = vmatpush1.msra.mxu0 0.0
    %6136 = vmatprep.subr.mxu0 0.0
    %6137 = vmatpush1.msra.mxu0 0.0
    %6138 = vmatprep.subr.mxu0 0.0
    %6139 = vmatpush1.msra.mxu0 0.0
    %6140 = vmatprep.subr.mxu0 0.0
    %6141 = vmatpush1.msra.mxu0 0.0
    %6142 = vmatprep.subr.mxu0 0.0
    %6143 = vmatpush1.msra.mxu0 0.0
    %6144 = vmatprep.subr.mxu0 0.0
    %6145 = vmatpush1.msra.mxu0 0.0
    %6146 = vmatprep.subr.mxu0 0.0
    %6147 = vmatpush1.msra.mxu0 0.0
    %6148 = vmatprep.subr.mxu0 0.0
    %6149 = vmatpush1.msra.mxu0 0.0
    %6150 = vmatprep.subr.mxu0 0.0
    %6151 = vmatpush1.msra.mxu0 0.0
    %6152 = vmatprep.subr.mxu0 0.0
    %6153 = vmatpush1.msra.mxu0 0.0
    %6154 = vmatprep.subr.mxu0 0.0
    %6155 = vmatpush1.msra.mxu0 0.0
    %6156 = vmatprep.subr.mxu0 0.0
    %6157 = vmatpush1.msra.mxu0 0.0
    %6158 = vmatprep.subr.mxu0 0.0
    %6159 = vmatpush1.msra.mxu0 0.0
    %6160 = vmatprep.subr.mxu0 0.0
    %6161 = vmatpush1.msra.mxu0 0.0
    %6162 = vmatprep.subr.mxu0 0.0
    %6163 = vmatpush1.msra.mxu0 %v6127
    %6164 = vmatprep.subr.mxu0 0.0
    %6165 = vmatpush2.msra.mxu0 0.0
    %6166 = vmatprep.subr.mxu0 0.0
    %6167 = vmatpush2.msra.mxu0 0.0
    %6168 = vmatprep.subr.mxu0 0.0
    %6169 = vmatpush2.msra.mxu0 0.0
    %6170 = vmatprep.subr.mxu0 0.0
    %6171 = vmatpush2.msra.mxu0 0.0
    %6172 = vmatprep.subr.mxu0 0.0
    %6173 = vmatpush2.msra.mxu0 0.0
    %6174 = vmatprep.subr.mxu0 0.0
    %6175 = vmatpush2.msra.mxu0 0.0
    %6176 = vmatprep.subr.mxu0 0.0
    %6177 = vmatpush2.msra.mxu0 0.0
    %6178 = vmatprep.subr.mxu0 0.0
    %6179 = vmatpush2.msra.mxu0 0.0
    %6180 = vmatprep.subr.mxu0 0.0
    %6181 = vmatpush2.msra.mxu0 0.0
    %6182 = vmatprep.subr.mxu0 0.0
    %6183 = vmatpush2.msra.mxu0 0.0
    %6184 = vmatprep.subr.mxu0 0.0
    %6185 = vmatpush2.msra.mxu0 0.0
    %6186 = vmatprep.subr.mxu0 0.0
    %6187 = vmatpush2.msra.mxu0 0.0
    %6188 = vmatprep.subr.mxu0 0.0
    %6189 = vmatpush2.msra.mxu0 0.0
    %6190 = vmatprep.subr.mxu0 0.0
    %6191 = vmatpush2.msra.mxu0 0.0
    %6192 = vmatprep.subr.mxu0 0.0
    %6193 = vmatpush2.msra.mxu0 0.0
    %6194 = vmatprep.subr.mxu0 0.0
    %6195 = vmatpush2.msra.mxu0 0.0
    %6196 = vmatprep.mubr.f32.mxu0 0.0
    %6197 = vmatmul.mubr.f32.gmra.mxu0 %v6130
    %v6198 = vpop.f32.mrf.mxu0
    %v6199 = vadd.f32 0.0, %v6198
    %v6200 = vpop.f32.mrf.mxu0
    %6201 = vdwg.mxu0
    %6202 = vrot.lane.b32.xlu0 %v5534, 112
    %v6203 = vpop.permute.xlu0 %6202
    %6204 = vrot.lane.b32.xlu0 %v5534, 80
    %v6205 = vpop.permute.xlu0 %6204
    %v6206 = vsel %vm636, %v6203, 0
    %v6208 = vsel %vm636, %v6205, 0
    %6210 = vmatprep.subr.mxu0 0.0
    %6211 = vmatpush1.xpose.msra.mxu0 0.0
    %6212 = vmatprep.subr.mxu0 0.0
    %6213 = vmatpush1.xpose.msra.mxu0 0.0
    %6214 = vmatprep.subr.mxu0 0.0
    %6215 = vmatpush1.xpose.msra.mxu0 0.0
    %6216 = vmatprep.subr.mxu0 0.0
    %6217 = vmatpush1.xpose.msra.mxu0 0.0
    %6218 = vmatprep.subr.mxu0 0.0
    %6219 = vmatpush1.xpose.msra.mxu0 0.0
    %6220 = vmatprep.subr.mxu0 0.0
    %6221 = vmatpush1.xpose.msra.mxu0 0.0
    %6222 = vmatprep.subr.mxu0 0.0
    %6223 = vmatpush1.xpose.msra.mxu0 0.0
    %6224 = vmatprep.subr.mxu0 0.0
    %6225 = vmatpush1.xpose.msra.mxu0 0.0
    %6226 = vmatprep.subr.mxu0 0.0
    %6227 = vmatpush1.xpose.msra.mxu0 0.0
    %6228 = vmatprep.subr.mxu0 0.0
    %6229 = vmatpush1.xpose.msra.mxu0 0.0
    %6230 = vmatprep.subr.mxu0 0.0
    %6231 = vmatpush1.xpose.msra.mxu0 0.0
    %6232 = vmatprep.subr.mxu0 0.0
    %6233 = vmatpush1.xpose.msra.mxu0 0.0
    %6234 = vmatprep.subr.mxu0 0.0
    %6235 = vmatpush1.xpose.msra.mxu0 0.0
    %6236 = vmatprep.subr.mxu0 0.0
    %6237 = vmatpush1.xpose.msra.mxu0 0.0
    %6238 = vmatprep.subr.mxu0 0.0
    %6239 = vmatpush1.xpose.msra.mxu0 0.0
    %6240 = vmatprep.subr.mxu0 0.0
    %6241 = vmatpush1.xpose.msra.mxu0 %v6208
    %6242 = vmatprep.subr.mxu0 0.0
    %6243 = vmatpush2.xpose.msra.mxu0 0.0
    %6244 = vmatprep.subr.mxu0 0.0
    %6245 = vmatpush2.xpose.msra.mxu0 0.0
    %6246 = vmatprep.subr.mxu0 0.0
    %6247 = vmatpush2.xpose.msra.mxu0 0.0
    %6248 = vmatprep.subr.mxu0 0.0
    %6249 = vmatpush2.xpose.msra.mxu0 0.0
    %6250 = vmatprep.subr.mxu0 0.0
    %6251 = vmatpush2.xpose.msra.mxu0 0.0
    %6252 = vmatprep.subr.mxu0 0.0
    %6253 = vmatpush2.xpose.msra.mxu0 0.0
    %6254 = vmatprep.subr.mxu0 0.0
    %6255 = vmatpush2.xpose.msra.mxu0 0.0
    %6256 = vmatprep.subr.mxu0 0.0
    %6257 = vmatpush2.xpose.msra.mxu0 0.0
    %6258 = vmatprep.subr.mxu0 0.0
    %6259 = vmatpush2.xpose.msra.mxu0 0.0
    %6260 = vmatprep.subr.mxu0 0.0
    %6261 = vmatpush2.xpose.msra.mxu0 0.0
    %6262 = vmatprep.subr.mxu0 0.0
    %6263 = vmatpush2.xpose.msra.mxu0 0.0
    %6264 = vmatprep.subr.mxu0 0.0
    %6265 = vmatpush2.xpose.msra.mxu0 0.0
    %6266 = vmatprep.subr.mxu0 0.0
    %6267 = vmatpush2.xpose.msra.mxu0 0.0
    %6268 = vmatprep.subr.mxu0 0.0
    %6269 = vmatpush2.xpose.msra.mxu0 0.0
    %6270 = vmatprep.subr.mxu0 0.0
    %6271 = vmatpush2.xpose.msra.mxu0 0.0
    %6272 = vmatprep.subr.mxu0 0.0
    %6273 = vmatpush2.xpose.msra.mxu0 0.0
    %6274 = vmatprep.mubr.f32.mxu0 0.0
    %6275 = vmatmul.mubr.f32.gmra.mxu0 %v6206
    %v6276 = vpop.f32.mrf.mxu0
    %v6277 = vadd.f32 0.0, %v6276
    %v6278 = vpop.f32.mrf.mxu0
    %6279 = vdwg.mxu0
    %6280 = vrot.lane.b32.xlu0 %v5537, 112
    %v6281 = vpop.permute.xlu0 %6280
    %6282 = vrot.lane.b32.xlu0 %v5537, 80
    %v6283 = vpop.permute.xlu0 %6282
    %v6284 = vsel %vm636, %v6281, 0
    %v6286 = vsel %vm636, %v6283, 0
    %6288 = vmatprep.subr.mxu0 0.0
    %6289 = vmatpush1.xpose.msra.mxu0 0.0
    %6290 = vmatprep.subr.mxu0 0.0
    %6291 = vmatpush1.xpose.msra.mxu0 0.0
    %6292 = vmatprep.subr.mxu0 0.0
    %6293 = vmatpush1.xpose.msra.mxu0 0.0
    %6294 = vmatprep.subr.mxu0 0.0
    %6295 = vmatpush1.xpose.msra.mxu0 0.0
    %6296 = vmatprep.subr.mxu0 0.0
    %6297 = vmatpush1.xpose.msra.mxu0 0.0
    %6298 = vmatprep.subr.mxu0 0.0
    %6299 = vmatpush1.xpose.msra.mxu0 0.0
    %6300 = vmatprep.subr.mxu0 0.0
    %6301 = vmatpush1.xpose.msra.mxu0 0.0
    %6302 = vmatprep.subr.mxu0 0.0
    %6303 = vmatpush1.xpose.msra.mxu0 0.0
    %6304 = vmatprep.subr.mxu0 0.0
    %6305 = vmatpush1.xpose.msra.mxu0 0.0
    %6306 = vmatprep.subr.mxu0 0.0
    %6307 = vmatpush1.xpose.msra.mxu0 0.0
    %6308 = vmatprep.subr.mxu0 0.0
    %6309 = vmatpush1.xpose.msra.mxu0 0.0
    %6310 = vmatprep.subr.mxu0 0.0
    %6311 = vmatpush1.xpose.msra.mxu0 0.0
    %6312 = vmatprep.subr.mxu0 0.0
    %6313 = vmatpush1.xpose.msra.mxu0 0.0
    %6314 = vmatprep.subr.mxu0 0.0
    %6315 = vmatpush1.xpose.msra.mxu0 0.0
    %6316 = vmatprep.subr.mxu0 0.0
    %6317 = vmatpush1.xpose.msra.mxu0 0.0
    %6318 = vmatprep.subr.mxu0 0.0
    %6319 = vmatpush1.xpose.msra.mxu0 %v6286
    %6320 = vmatprep.subr.mxu0 0.0
    %6321 = vmatpush2.xpose.msra.mxu0 0.0
    %6322 = vmatprep.subr.mxu0 0.0
    %6323 = vmatpush2.xpose.msra.mxu0 0.0
    %6324 = vmatprep.subr.mxu0 0.0
    %6325 = vmatpush2.xpose.msra.mxu0 0.0
    %6326 = vmatprep.subr.mxu0 0.0
    %6327 = vmatpush2.xpose.msra.mxu0 0.0
    %6328 = vmatprep.subr.mxu0 0.0
    %6329 = vmatpush2.xpose.msra.mxu0 0.0
    %6330 = vmatprep.subr.mxu0 0.0
    %6331 = vmatpush2.xpose.msra.mxu0 0.0
    %6332 = vmatprep.subr.mxu0 0.0
    %6333 = vmatpush2.xpose.msra.mxu0 0.0
    %6334 = vmatprep.subr.mxu0 0.0
    %6335 = vmatpush2.xpose.msra.mxu0 0.0
    %6336 = vmatprep.subr.mxu0 0.0
    %6337 = vmatpush2.xpose.msra.mxu0 0.0
    %6338 = vmatprep.subr.mxu0 0.0
    %6339 = vmatpush2.xpose.msra.mxu0 0.0
    %6340 = vmatprep.subr.mxu0 0.0
    %6341 = vmatpush2.xpose.msra.mxu0 0.0
    %6342 = vmatprep.subr.mxu0 0.0
    %6343 = vmatpush2.xpose.msra.mxu0 0.0
    %6344 = vmatprep.subr.mxu0 0.0
    %6345 = vmatpush2.xpose.msra.mxu0 0.0
    %6346 = vmatprep.subr.mxu0 0.0
    %6347 = vmatpush2.xpose.msra.mxu0 0.0
    %6348 = vmatprep.subr.mxu0 0.0
    %6349 = vmatpush2.xpose.msra.mxu0 0.0
    %6350 = vmatprep.subr.mxu0 0.0
    %6351 = vmatpush2.xpose.msra.mxu0 0.0
    %6352 = vmatprep.mubr.f32.mxu0 0.0
    %6353 = vmatmul.mubr.f32.gmra.mxu0 %v6284
    %v6354 = vpop.f32.mrf.mxu0
    %v6355 = vadd.f32 0.0, %v6354
    %v6356 = vpop.f32.mrf.mxu0
    %6357 = vdwg.mxu0
    %v6358 = vmul.f32 %v6277, 0.35355338
    %v6359 = vmul.f32 %v6355, 0.35355338
    %v6360 = vsel %vm636, %v6358, -inf
    %6361 = vmax.xlane.f32.xlu0 %v6360
    %v6362 = vpop.xlane.xlu0 %6361
    %v6363 = vsel %vm636, %v6359, -inf
    %6364 = vmax.xlane.f32.xlu0 %v6363
    %v6365 = vpop.xlane.xlu0 %6364
    %v6366 = vsub.f32 %v6358, %v6362
    %v6367 = vsub.f32 %v6359, %v6365
    %v6368 = vmul.f32 %v6366, 1.442695
    %v6369 = vpow.pop %v6368
    %v6370 = vmul.f32 %v6367, 1.442695
    %v6371 = vpow.pop %v6370
    %v6372 = vsel %vm636, %v6369, 0.0
    %6373 = vadd.xlane.f32.xlu0 %v6372
    %v6374 = vpop.xlane.xlu0 %6373
    %v6375 = vsel %vm636, %v6371, 0.0
    %6376 = vadd.xlane.f32.xlu0 %v6375
    %v6377 = vpop.xlane.xlu0 %6376
    %v6378 = vrcp.pop %v6374
    %v6379 = vrcp.pop %v6377
    %v6380 = vmul.f32 %v6369, %v6378
    %v6381 = vmul.f32 %v6371, %v6379
    %6382 = vrot.lane.b32.xlu0 %v5534, 48
    %v6383 = vpop.permute.xlu0 %6382
    %v6386 = vsel %vm636, %v6380, 0
    %6388 = vmatprep.subr.mxu0 0.0
    %6389 = vmatpush1.msra.mxu0 0.0
    %6390 = vmatprep.subr.mxu0 0.0
    %6391 = vmatpush1.msra.mxu0 0.0
    %6392 = vmatprep.subr.mxu0 0.0
    %6393 = vmatpush1.msra.mxu0 0.0
    %6394 = vmatprep.subr.mxu0 0.0
    %6395 = vmatpush1.msra.mxu0 0.0
    %6396 = vmatprep.subr.mxu0 0.0
    %6397 = vmatpush1.msra.mxu0 0.0
    %6398 = vmatprep.subr.mxu0 0.0
    %6399 = vmatpush1.msra.mxu0 0.0
    %6400 = vmatprep.subr.mxu0 0.0
    %6401 = vmatpush1.msra.mxu0 0.0
    %6402 = vmatprep.subr.mxu0 0.0
    %6403 = vmatpush1.msra.mxu0 0.0
    %6404 = vmatprep.subr.mxu0 0.0
    %6405 = vmatpush1.msra.mxu0 0.0
    %6406 = vmatprep.subr.mxu0 0.0
    %6407 = vmatpush1.msra.mxu0 0.0
    %6408 = vmatprep.subr.mxu0 0.0
    %6409 = vmatpush1.msra.mxu0 0.0
    %6410 = vmatprep.subr.mxu0 0.0
    %6411 = vmatpush1.msra.mxu0 0.0
    %6412 = vmatprep.subr.mxu0 0.0
    %6413 = vmatpush1.msra.mxu0 0.0
    %6414 = vmatprep.subr.mxu0 0.0
    %6415 = vmatpush1.msra.mxu0 0.0
    %6416 = vmatprep.subr.mxu0 0.0
    %6417 = vmatpush1.msra.mxu0 0.0
    %6418 = vmatprep.subr.mxu0 0.0
    %6419 = vmatpush1.msra.mxu0 %v6383
    %6420 = vmatprep.subr.mxu0 0.0
    %6421 = vmatpush2.msra.mxu0 0.0
    %6422 = vmatprep.subr.mxu0 0.0
    %6423 = vmatpush2.msra.mxu0 0.0
    %6424 = vmatprep.subr.mxu0 0.0
    %6425 = vmatpush2.msra.mxu0 0.0
    %6426 = vmatprep.subr.mxu0 0.0
    %6427 = vmatpush2.msra.mxu0 0.0
    %6428 = vmatprep.subr.mxu0 0.0
    %6429 = vmatpush2.msra.mxu0 0.0
    %6430 = vmatprep.subr.mxu0 0.0
    %6431 = vmatpush2.msra.mxu0 0.0
    %6432 = vmatprep.subr.mxu0 0.0
    %6433 = vmatpush2.msra.mxu0 0.0
    %6434 = vmatprep.subr.mxu0 0.0
    %6435 = vmatpush2.msra.mxu0 0.0
    %6436 = vmatprep.subr.mxu0 0.0
    %6437 = vmatpush2.msra.mxu0 0.0
    %6438 = vmatprep.subr.mxu0 0.0
    %6439 = vmatpush2.msra.mxu0 0.0
    %6440 = vmatprep.subr.mxu0 0.0
    %6441 = vmatpush2.msra.mxu0 0.0
    %6442 = vmatprep.subr.mxu0 0.0
    %6443 = vmatpush2.msra.mxu0 0.0
    %6444 = vmatprep.subr.mxu0 0.0
    %6445 = vmatpush2.msra.mxu0 0.0
    %6446 = vmatprep.subr.mxu0 0.0
    %6447 = vmatpush2.msra.mxu0 0.0
    %6448 = vmatprep.subr.mxu0 0.0
    %6449 = vmatpush2.msra.mxu0 0.0
    %6450 = vmatprep.subr.mxu0 0.0
    %6451 = vmatpush2.msra.mxu0 0.0
    %6452 = vmatprep.mubr.f32.mxu0 0.0
    %6453 = vmatmul.mubr.f32.gmra.mxu0 %v6386
    %v6454 = vpop.f32.mrf.mxu0
    %v6455 = vadd.f32 0.0, %v6454
    %v6456 = vpop.f32.mrf.mxu0
    %6457 = vdwg.mxu0
    %6458 = vrot.lane.b32.xlu0 %v5537, 48
    %v6459 = vpop.permute.xlu0 %6458
    %v6462 = vsel %vm636, %v6381, 0
    %6464 = vmatprep.subr.mxu0 0.0
    %6465 = vmatpush1.msra.mxu0 0.0
    %6466 = vmatprep.subr.mxu0 0.0
    %6467 = vmatpush1.msra.mxu0 0.0
    %6468 = vmatprep.subr.mxu0 0.0
    %6469 = vmatpush1.msra.mxu0 0.0
    %6470 = vmatprep.subr.mxu0 0.0
    %6471 = vmatpush1.msra.mxu0 0.0
    %6472 = vmatprep.subr.mxu0 0.0
    %6473 = vmatpush1.msra.mxu0 0.0
    %6474 = vmatprep.subr.mxu0 0.0
    %6475 = vmatpush1.msra.mxu0 0.0
    %6476 = vmatprep.subr.mxu0 0.0
    %6477 = vmatpush1.msra.mxu0 0.0
    %6478 = vmatprep.subr.mxu0 0.0
    %6479 = vmatpush1.msra.mxu0 0.0
    %6480 = vmatprep.subr.mxu0 0.0
    %6481 = vmatpush1.msra.mxu0 0.0
    %6482 = vmatprep.subr.mxu0 0.0
    %6483 = vmatpush1.msra.mxu0 0.0
    %6484 = vmatprep.subr.mxu0 0.0
    %6485 = vmatpush1.msra.mxu0 0.0
    %6486 = vmatprep.subr.mxu0 0.0
    %6487 = vmatpush1.msra.mxu0 0.0
    %6488 = vmatprep.subr.mxu0 0.0
    %6489 = vmatpush1.msra.mxu0 0.0
    %6490 = vmatprep.subr.mxu0 0.0
    %6491 = vmatpush1.msra.mxu0 0.0
    %6492 = vmatprep.subr.mxu0 0.0
    %6493 = vmatpush1.msra.mxu0 0.0
    %6494 = vmatprep.subr.mxu0 0.0
    %6495 = vmatpush1.msra.mxu0 %v6459
    %6496 = vmatprep.subr.mxu0 0.0
    %6497 = vmatpush2.msra.mxu0 0.0
    %6498 = vmatprep.subr.mxu0 0.0
    %6499 = vmatpush2.msra.mxu0 0.0
    %6500 = vmatprep.subr.mxu0 0.0
    %6501 = vmatpush2.msra.mxu0 0.0
    %6502 = vmatprep.subr.mxu0 0.0
    %6503 = vmatpush2.msra.mxu0 0.0
    %6504 = vmatprep.subr.mxu0 0.0
    %6505 = vmatpush2.msra.mxu0 0.0
    %6506 = vmatprep.subr.mxu0 0.0
    %6507 = vmatpush2.msra.mxu0 0.0
    %6508 = vmatprep.subr.mxu0 0.0
    %6509 = vmatpush2.msra.mxu0 0.0
    %6510 = vmatprep.subr.mxu0 0.0
    %6511 = vmatpush2.msra.mxu0 0.0
    %6512 = vmatprep.subr.mxu0 0.0
    %6513 = vmatpush2.msra.mxu0 0.0
    %6514 = vmatprep.subr.mxu0 0.0
    %6515 = vmatpush2.msra.mxu0 0.0
    %6516 = vmatprep.subr.mxu0 0.0
    %6517 = vmatpush2.msra.mxu0 0.0
    %6518 = vmatprep.subr.mxu0 0.0
    %6519 = vmatpush2.msra.mxu0 0.0
    %6520 = vmatprep.subr.mxu0 0.0
    %6521 = vmatpush2.msra.mxu0 0.0
    %6522 = vmatprep.subr.mxu0 0.0
    %6523 = vmatpush2.msra.mxu0 0.0
    %6524 = vmatprep.subr.mxu0 0.0
    %6525 = vmatpush2.msra.mxu0 0.0
    %6526 = vmatprep.subr.mxu0 0.0
    %6527 = vmatpush2.msra.mxu0 0.0
    %6528 = vmatprep.mubr.f32.mxu0 0.0
    %6529 = vmatmul.mubr.f32.gmra.mxu0 %v6462
    %v6530 = vpop.f32.mrf.mxu0
    %v6531 = vadd.f32 0.0, %v6530
    %v6532 = vpop.f32.mrf.mxu0
    %6533 = vdwg.mxu0
    %6534 = vrot.lane.b32.xlu0 %v5534, 104
    %v6535 = vpop.permute.xlu0 %6534
    %6536 = vrot.lane.b32.xlu0 %v5534, 72
    %v6537 = vpop.permute.xlu0 %6536
    %v6538 = vsel %vm636, %v6535, 0
    %v6540 = vsel %vm636, %v6537, 0
    %6542 = vmatprep.subr.mxu0 0.0
    %6543 = vmatpush1.xpose.msra.mxu0 0.0
    %6544 = vmatprep.subr.mxu0 0.0
    %6545 = vmatpush1.xpose.msra.mxu0 0.0
    %6546 = vmatprep.subr.mxu0 0.0
    %6547 = vmatpush1.xpose.msra.mxu0 0.0
    %6548 = vmatprep.subr.mxu0 0.0
    %6549 = vmatpush1.xpose.msra.mxu0 0.0
    %6550 = vmatprep.subr.mxu0 0.0
    %6551 = vmatpush1.xpose.msra.mxu0 0.0
    %6552 = vmatprep.subr.mxu0 0.0
    %6553 = vmatpush1.xpose.msra.mxu0 0.0
    %6554 = vmatprep.subr.mxu0 0.0
    %6555 = vmatpush1.xpose.msra.mxu0 0.0
    %6556 = vmatprep.subr.mxu0 0.0
    %6557 = vmatpush1.xpose.msra.mxu0 0.0
    %6558 = vmatprep.subr.mxu0 0.0
    %6559 = vmatpush1.xpose.msra.mxu0 0.0
    %6560 = vmatprep.subr.mxu0 0.0
    %6561 = vmatpush1.xpose.msra.mxu0 0.0
    %6562 = vmatprep.subr.mxu0 0.0
    %6563 = vmatpush1.xpose.msra.mxu0 0.0
    %6564 = vmatprep.subr.mxu0 0.0
    %6565 = vmatpush1.xpose.msra.mxu0 0.0
    %6566 = vmatprep.subr.mxu0 0.0
    %6567 = vmatpush1.xpose.msra.mxu0 0.0
    %6568 = vmatprep.subr.mxu0 0.0
    %6569 = vmatpush1.xpose.msra.mxu0 0.0
    %6570 = vmatprep.subr.mxu0 0.0
    %6571 = vmatpush1.xpose.msra.mxu0 0.0
    %6572 = vmatprep.subr.mxu0 0.0
    %6573 = vmatpush1.xpose.msra.mxu0 %v6540
    %6574 = vmatprep.subr.mxu0 0.0
    %6575 = vmatpush2.xpose.msra.mxu0 0.0
    %6576 = vmatprep.subr.mxu0 0.0
    %6577 = vmatpush2.xpose.msra.mxu0 0.0
    %6578 = vmatprep.subr.mxu0 0.0
    %6579 = vmatpush2.xpose.msra.mxu0 0.0
    %6580 = vmatprep.subr.mxu0 0.0
    %6581 = vmatpush2.xpose.msra.mxu0 0.0
    %6582 = vmatprep.subr.mxu0 0.0
    %6583 = vmatpush2.xpose.msra.mxu0 0.0
    %6584 = vmatprep.subr.mxu0 0.0
    %6585 = vmatpush2.xpose.msra.mxu0 0.0
    %6586 = vmatprep.subr.mxu0 0.0
    %6587 = vmatpush2.xpose.msra.mxu0 0.0
    %6588 = vmatprep.subr.mxu0 0.0
    %6589 = vmatpush2.xpose.msra.mxu0 0.0
    %6590 = vmatprep.subr.mxu0 0.0
    %6591 = vmatpush2.xpose.msra.mxu0 0.0
    %6592 = vmatprep.subr.mxu0 0.0
    %6593 = vmatpush2.xpose.msra.mxu0 0.0
    %6594 = vmatprep.subr.mxu0 0.0
    %6595 = vmatpush2.xpose.msra.mxu0 0.0
    %6596 = vmatprep.subr.mxu0 0.0
    %6597 = vmatpush2.xpose.msra.mxu0 0.0
    %6598 = vmatprep.subr.mxu0 0.0
    %6599 = vmatpush2.xpose.msra.mxu0 0.0
    %6600 = vmatprep.subr.mxu0 0.0
    %6601 = vmatpush2.xpose.msra.mxu0 0.0
    %6602 = vmatprep.subr.mxu0 0.0
    %6603 = vmatpush2.xpose.msra.mxu0 0.0
    %6604 = vmatprep.subr.mxu0 0.0
    %6605 = vmatpush2.xpose.msra.mxu0 0.0
    %6606 = vmatprep.mubr.f32.mxu0 0.0
    %6607 = vmatmul.mubr.f32.gmra.mxu0 %v6538
    %v6608 = vpop.f32.mrf.mxu0
    %v6609 = vadd.f32 0.0, %v6608
    %v6610 = vpop.f32.mrf.mxu0
    %6611 = vdwg.mxu0
    %6612 = vrot.lane.b32.xlu0 %v5537, 104
    %v6613 = vpop.permute.xlu0 %6612
    %6614 = vrot.lane.b32.xlu0 %v5537, 72
    %v6615 = vpop.permute.xlu0 %6614
    %v6616 = vsel %vm636, %v6613, 0
    %v6618 = vsel %vm636, %v6615, 0
    %6620 = vmatprep.subr.mxu0 0.0
    %6621 = vmatpush1.xpose.msra.mxu0 0.0
    %6622 = vmatprep.subr.mxu0 0.0
    %6623 = vmatpush1.xpose.msra.mxu0 0.0
    %6624 = vmatprep.subr.mxu0 0.0
    %6625 = vmatpush1.xpose.msra.mxu0 0.0
    %6626 = vmatprep.subr.mxu0 0.0
    %6627 = vmatpush1.xpose.msra.mxu0 0.0
    %6628 = vmatprep.subr.mxu0 0.0
    %6629 = vmatpush1.xpose.msra.mxu0 0.0
    %6630 = vmatprep.subr.mxu0 0.0
    %6631 = vmatpush1.xpose.msra.mxu0 0.0
    %6632 = vmatprep.subr.mxu0 0.0
    %6633 = vmatpush1.xpose.msra.mxu0 0.0
    %6634 = vmatprep.subr.mxu0 0.0
    %6635 = vmatpush1.xpose.msra.mxu0 0.0
    %6636 = vmatprep.subr.mxu0 0.0
    %6637 = vmatpush1.xpose.msra.mxu0 0.0
    %6638 = vmatprep.subr.mxu0 0.0
    %6639 = vmatpush1.xpose.msra.mxu0 0.0
    %6640 = vmatprep.subr.mxu0 0.0
    %6641 = vmatpush1.xpose.msra.mxu0 0.0
    %6642 = vmatprep.subr.mxu0 0.0
    %6643 = vmatpush1.xpose.msra.mxu0 0.0
    %6644 = vmatprep.subr.mxu0 0.0
    %6645 = vmatpush1.xpose.msra.mxu0 0.0
    %6646 = vmatprep.subr.mxu0 0.0
    %6647 = vmatpush1.xpose.msra.mxu0 0.0
    %6648 = vmatprep.subr.mxu0 0.0
    %6649 = vmatpush1.xpose.msra.mxu0 0.0
    %6650 = vmatprep.subr.mxu0 0.0
    %6651 = vmatpush1.xpose.msra.mxu0 %v6618
    %6652 = vmatprep.subr.mxu0 0.0
    %6653 = vmatpush2.xpose.msra.mxu0 0.0
    %6654 = vmatprep.subr.mxu0 0.0
    %6655 = vmatpush2.xpose.msra.mxu0 0.0
    %6656 = vmatprep.subr.mxu0 0.0
    %6657 = vmatpush2.xpose.msra.mxu0 0.0
    %6658 = vmatprep.subr.mxu0 0.0
    %6659 = vmatpush2.xpose.msra.mxu0 0.0
    %6660 = vmatprep.subr.mxu0 0.0
    %6661 = vmatpush2.xpose.msra.mxu0 0.0
    %6662 = vmatprep.subr.mxu0 0.0
    %6663 = vmatpush2.xpose.msra.mxu0 0.0
    %6664 = vmatprep.subr.mxu0 0.0
    %6665 = vmatpush2.xpose.msra.mxu0 0.0
    %6666 = vmatprep.subr.mxu0 0.0
    %6667 = vmatpush2.xpose.msra.mxu0 0.0
    %6668 = vmatprep.subr.mxu0 0.0
    %6669 = vmatpush2.xpose.msra.mxu0 0.0
    %6670 = vmatprep.subr.mxu0 0.0
    %6671 = vmatpush2.xpose.msra.mxu0 0.0
    %6672 = vmatprep.subr.mxu0 0.0
    %6673 = vmatpush2.xpose.msra.mxu0 0.0
    %6674 = vmatprep.subr.mxu0 0.0
    %6675 = vmatpush2.xpose.msra.mxu0 0.0
    %6676 = vmatprep.subr.mxu0 0.0
    %6677 = vmatpush2.xpose.msra.mxu0 0.0
    %6678 = vmatprep.subr.mxu0 0.0
    %6679 = vmatpush2.xpose.msra.mxu0 0.0
    %6680 = vmatprep.subr.mxu0 0.0
    %6681 = vmatpush2.xpose.msra.mxu0 0.0
    %6682 = vmatprep.subr.mxu0 0.0
    %6683 = vmatpush2.xpose.msra.mxu0 0.0
    %6684 = vmatprep.mubr.f32.mxu0 0.0
    %6685 = vmatmul.mubr.f32.gmra.mxu0 %v6616
    %v6686 = vpop.f32.mrf.mxu0
    %v6687 = vadd.f32 0.0, %v6686
    %v6688 = vpop.f32.mrf.mxu0
    %6689 = vdwg.mxu0
    %v6690 = vmul.f32 %v6609, 0.35355338
    %v6691 = vmul.f32 %v6687, 0.35355338
    %v6692 = vsel %vm636, %v6690, -inf
    %6693 = vmax.xlane.f32.xlu0 %v6692
    %v6694 = vpop.xlane.xlu0 %6693
    %v6695 = vsel %vm636, %v6691, -inf
    %6696 = vmax.xlane.f32.xlu0 %v6695
    %v6697 = vpop.xlane.xlu0 %6696
    %v6698 = vsub.f32 %v6690, %v6694
    %v6699 = vsub.f32 %v6691, %v6697
    %v6700 = vmul.f32 %v6698, 1.442695
    %v6701 = vpow.pop %v6700
    %v6702 = vmul.f32 %v6699, 1.442695
    %v6703 = vpow.pop %v6702
    %v6704 = vsel %vm636, %v6701, 0.0
    %6705 = vadd.xlane.f32.xlu0 %v6704
    %v6706 = vpop.xlane.xlu0 %6705
    %v6707 = vsel %vm636, %v6703, 0.0
    %6708 = vadd.xlane.f32.xlu0 %v6707
    %v6709 = vpop.xlane.xlu0 %6708
    %v6710 = vrcp.pop %v6706
    %v6711 = vrcp.pop %v6709
    %v6712 = vmul.f32 %v6701, %v6710
    %v6713 = vmul.f32 %v6703, %v6711
    %6714 = vrot.lane.b32.xlu0 %v5534, 40
    %v6715 = vpop.permute.xlu0 %6714
    %v6718 = vsel %vm636, %v6712, 0
    %6720 = vmatprep.subr.mxu0 0.0
    %6721 = vmatpush1.msra.mxu0 0.0
    %6722 = vmatprep.subr.mxu0 0.0
    %6723 = vmatpush1.msra.mxu0 0.0
    %6724 = vmatprep.subr.mxu0 0.0
    %6725 = vmatpush1.msra.mxu0 0.0
    %6726 = vmatprep.subr.mxu0 0.0
    %6727 = vmatpush1.msra.mxu0 0.0
    %6728 = vmatprep.subr.mxu0 0.0
    %6729 = vmatpush1.msra.mxu0 0.0
    %6730 = vmatprep.subr.mxu0 0.0
    %6731 = vmatpush1.msra.mxu0 0.0
    %6732 = vmatprep.subr.mxu0 0.0
    %6733 = vmatpush1.msra.mxu0 0.0
    %6734 = vmatprep.subr.mxu0 0.0
    %6735 = vmatpush1.msra.mxu0 0.0
    %6736 = vmatprep.subr.mxu0 0.0
    %6737 = vmatpush1.msra.mxu0 0.0
    %6738 = vmatprep.subr.mxu0 0.0
    %6739 = vmatpush1.msra.mxu0 0.0
    %6740 = vmatprep.subr.mxu0 0.0
    %6741 = vmatpush1.msra.mxu0 0.0
    %6742 = vmatprep.subr.mxu0 0.0
    %6743 = vmatpush1.msra.mxu0 0.0
    %6744 = vmatprep.subr.mxu0 0.0
    %6745 = vmatpush1.msra.mxu0 0.0
    %6746 = vmatprep.subr.mxu0 0.0
    %6747 = vmatpush1.msra.mxu0 0.0
    %6748 = vmatprep.subr.mxu0 0.0
    %6749 = vmatpush1.msra.mxu0 0.0
    %6750 = vmatprep.subr.mxu0 0.0
    %6751 = vmatpush1.msra.mxu0 %v6715
    %6752 = vmatprep.subr.mxu0 0.0
    %6753 = vmatpush2.msra.mxu0 0.0
    %6754 = vmatprep.subr.mxu0 0.0
    %6755 = vmatpush2.msra.mxu0 0.0
    %6756 = vmatprep.subr.mxu0 0.0
    %6757 = vmatpush2.msra.mxu0 0.0
    %6758 = vmatprep.subr.mxu0 0.0
    %6759 = vmatpush2.msra.mxu0 0.0
    %6760 = vmatprep.subr.mxu0 0.0
    %6761 = vmatpush2.msra.mxu0 0.0
    %6762 = vmatprep.subr.mxu0 0.0
    %6763 = vmatpush2.msra.mxu0 0.0
    %6764 = vmatprep.subr.mxu0 0.0
    %6765 = vmatpush2.msra.mxu0 0.0
    %6766 = vmatprep.subr.mxu0 0.0
    %6767 = vmatpush2.msra.mxu0 0.0
    %6768 = vmatprep.subr.mxu0 0.0
    %6769 = vmatpush2.msra.mxu0 0.0
    %6770 = vmatprep.subr.mxu0 0.0
    %6771 = vmatpush2.msra.mxu0 0.0
    %6772 = vmatprep.subr.mxu0 0.0
    %6773 = vmatpush2.msra.mxu0 0.0
    %6774 = vmatprep.subr.mxu0 0.0
    %6775 = vmatpush2.msra.mxu0 0.0
    %6776 = vmatprep.subr.mxu0 0.0
    %6777 = vmatpush2.msra.mxu0 0.0
    %6778 = vmatprep.subr.mxu0 0.0
    %6779 = vmatpush2.msra.mxu0 0.0
    %6780 = vmatprep.subr.mxu0 0.0
    %6781 = vmatpush2.msra.mxu0 0.0
    %6782 = vmatprep.subr.mxu0 0.0
    %6783 = vmatpush2.msra.mxu0 0.0
    %6784 = vmatprep.mubr.f32.mxu0 0.0
    %6785 = vmatmul.mubr.f32.gmra.mxu0 %v6718
    %v6786 = vpop.f32.mrf.mxu0
    %v6787 = vadd.f32 0.0, %v6786
    %v6788 = vpop.f32.mrf.mxu0
    %6789 = vdwg.mxu0
    %6790 = vrot.lane.b32.xlu0 %v5537, 40
    %v6791 = vpop.permute.xlu0 %6790
    %v6794 = vsel %vm636, %v6713, 0
    %6796 = vmatprep.subr.mxu0 0.0
    %6797 = vmatpush1.msra.mxu0 0.0
    %6798 = vmatprep.subr.mxu0 0.0
    %6799 = vmatpush1.msra.mxu0 0.0
    %6800 = vmatprep.subr.mxu0 0.0
    %6801 = vmatpush1.msra.mxu0 0.0
    %6802 = vmatprep.subr.mxu0 0.0
    %6803 = vmatpush1.msra.mxu0 0.0
    %6804 = vmatprep.subr.mxu0 0.0
    %6805 = vmatpush1.msra.mxu0 0.0
    %6806 = vmatprep.subr.mxu0 0.0
    %6807 = vmatpush1.msra.mxu0 0.0
    %6808 = vmatprep.subr.mxu0 0.0
    %6809 = vmatpush1.msra.mxu0 0.0
    %6810 = vmatprep.subr.mxu0 0.0
    %6811 = vmatpush1.msra.mxu0 0.0
    %6812 = vmatprep.subr.mxu0 0.0
    %6813 = vmatpush1.msra.mxu0 0.0
    %6814 = vmatprep.subr.mxu0 0.0
    %6815 = vmatpush1.msra.mxu0 0.0
    %6816 = vmatprep.subr.mxu0 0.0
    %6817 = vmatpush1.msra.mxu0 0.0
    %6818 = vmatprep.subr.mxu0 0.0
    %6819 = vmatpush1.msra.mxu0 0.0
    %6820 = vmatprep.subr.mxu0 0.0
    %6821 = vmatpush1.msra.mxu0 0.0
    %6822 = vmatprep.subr.mxu0 0.0
    %6823 = vmatpush1.msra.mxu0 0.0
    %6824 = vmatprep.subr.mxu0 0.0
    %6825 = vmatpush1.msra.mxu0 0.0
    %6826 = vmatprep.subr.mxu0 0.0
    %6827 = vmatpush1.msra.mxu0 %v6791
    %6828 = vmatprep.subr.mxu0 0.0
    %6829 = vmatpush2.msra.mxu0 0.0
    %6830 = vmatprep.subr.mxu0 0.0
    %6831 = vmatpush2.msra.mxu0 0.0
    %6832 = vmatprep.subr.mxu0 0.0
    %6833 = vmatpush2.msra.mxu0 0.0
    %6834 = vmatprep.subr.mxu0 0.0
    %6835 = vmatpush2.msra.mxu0 0.0
    %6836 = vmatprep.subr.mxu0 0.0
    %6837 = vmatpush2.msra.mxu0 0.0
    %6838 = vmatprep.subr.mxu0 0.0
    %6839 = vmatpush2.msra.mxu0 0.0
    %6840 = vmatprep.subr.mxu0 0.0
    %6841 = vmatpush2.msra.mxu0 0.0
    %6842 = vmatprep.subr.mxu0 0.0
    %6843 = vmatpush2.msra.mxu0 0.0
    %6844 = vmatprep.subr.mxu0 0.0
    %6845 = vmatpush2.msra.mxu0 0.0
    %6846 = vmatprep.subr.mxu0 0.0
    %6847 = vmatpush2.msra.mxu0 0.0
    %6848 = vmatprep.subr.mxu0 0.0
    %6849 = vmatpush2.msra.mxu0 0.0
    %6850 = vmatprep.subr.mxu0 0.0
    %6851 = vmatpush2.msra.mxu0 0.0
    %6852 = vmatprep.subr.mxu0 0.0
    %6853 = vmatpush2.msra.mxu0 0.0
    %6854 = vmatprep.subr.mxu0 0.0
    %6855 = vmatpush2.msra.mxu0 0.0
    %6856 = vmatprep.subr.mxu0 0.0
    %6857 = vmatpush2.msra.mxu0 0.0
    %6858 = vmatprep.subr.mxu0 0.0
    %6859 = vmatpush2.msra.mxu0 0.0
    %6860 = vmatprep.mubr.f32.mxu0 0.0
    %6861 = vmatmul.mubr.f32.gmra.mxu0 %v6794
    %v6862 = vpop.f32.mrf.mxu0
    %v6863 = vadd.f32 0.0, %v6862
    %v6864 = vpop.f32.mrf.mxu0
    %6865 = vdwg.mxu0
    %6868 = vrot.lane.b32.xlu0 %v6123, 8
    %v6869 = vpop.permute.xlu0 %6868
    %6870 = vrot.lane.b32.xlu0 %v6199, 8
    %v6871 = vpop.permute.xlu0 %6870
    %6876 = vrot.lane.b32.xlu0 %v6455, 16
    %v6877 = vpop.permute.xlu0 %6876
    %6878 = vrot.lane.b32.xlu0 %v6531, 16
    %v6879 = vpop.permute.xlu0 %6878
    %6884 = vrot.lane.b32.xlu0 %v6787, 24
    %v6885 = vpop.permute.xlu0 %6884
    %6886 = vrot.lane.b32.xlu0 %v6863, 24
    %v6887 = vpop.permute.xlu0 %6886
    %v6890 = vsel %vm636, %v5791, %v6869
    %v6891 = vsel %vm636, %v5867, %v6871
    %v6892 = vsel %vm318, %v6890, %v6877
    %v6893 = vsel %vm318, %v6891, %v6879
    %v6894 = vsel %vm2045, %v6892, %v6885
    %v6895 = vsel %vm2045, %v6893, %v6887
    %v6896 = vpack.c.bf16 %v6895, %v6894
    %s6897 = scalar_lea.vmem [#allocation14], 48
    %v6898 = vld [vmem:[%s6897] sm:$0xf]
    %v6899 = vld [vmem:[%s6897 + $0x4] sm:$0xf]
    %v6900 = vld [vmem:[%s6897 + $0x8] sm:$0xf]
    %v6901 = vld [vmem:[%s6897 + $0xc] sm:$0xf]
    %s6902 = scalar_lea.vmem [#allocation16], 3
    %v6903 = vld [vmem:[%s6902] sm:$0x1]
    %v6905 = vlaneseq
    %v6906 = vshrl.u32 %v6905, 7
    %v6907 = vsub.s32 0, %v6906
    %v6908 = vrot.slane %v6903, %v6907
    %v6914 = vunpack.c.l.b16 %v6898
    %v6915 = vunpack.c.l.b16 %v6899
    %v6916 = vunpack.c.l.b16 %v6900
    %v6917 = vunpack.c.l.b16 %v6901
    %v6918 = vpack.c.b16 %v6915, %v6914
    %v6919 = vpack.c.b16 %v6917, %v6916
    %v6923 = vsel %vm203, %v6896, 0
    %6925 = vmatprep.subr.bf16.mxu0 0
    %6926 = vmatpush1.bf16.msra.mxu0 0
    %6927 = vmatprep.subr.bf16.mxu0 0
    %6928 = vmatpush1.bf16.msra.mxu0 0
    %6929 = vmatprep.subr.bf16.mxu0 0
    %6930 = vmatpush1.bf16.msra.mxu0 0
    %6931 = vmatprep.subr.bf16.mxu0 0
    %6932 = vmatpush1.bf16.msra.mxu0 0
    %6933 = vmatprep.subr.bf16.mxu0 0
    %6934 = vmatpush1.bf16.msra.mxu0 0
    %6935 = vmatprep.subr.bf16.mxu0 0
    %6936 = vmatpush1.bf16.msra.mxu0 0
    %6937 = vmatprep.subr.bf16.mxu0 0
    %6938 = vmatpush1.bf16.msra.mxu0 %v6919
    %6939 = vmatprep.subr.bf16.mxu0 0
    %6940 = vmatpush1.bf16.msra.mxu0 %v6918
    %6941 = vmatprep.subr.bf16.mxu0 0
    %6942 = vmatpush2.bf16.msra.mxu0 0
    %6943 = vmatprep.subr.bf16.mxu0 0
    %6944 = vmatpush2.bf16.msra.mxu0 0
    %6945 = vmatprep.subr.bf16.mxu0 0
    %6946 = vmatpush2.bf16.msra.mxu0 0
    %6947 = vmatprep.subr.bf16.mxu0 0
    %6948 = vmatpush2.bf16.msra.mxu0 0
    %6949 = vmatprep.subr.bf16.mxu0 0
    %6950 = vmatpush2.bf16.msra.mxu0 0
    %6951 = vmatprep.subr.bf16.mxu0 0
    %6952 = vmatpush2.bf16.msra.mxu0 0
    %6953 = vmatprep.subr.bf16.mxu0 0
    %6954 = vmatpush2.bf16.msra.mxu0 0
    %6955 = vmatprep.subr.bf16.mxu0 0
    %6956 = vmatpush2.bf16.msra.mxu0 0
    %6957 = vmatprep.mubr.bf16.mxu0 0
    %6958 = vmatmul.mubr.bf16.gmra.mxu0 %v6923
    %v6959 = vpop.f32.mrf.mxu0
    %v6960 = vadd.f32 %v6908, %v6959
    %v6961 = vpop.f32.mrf.mxu0
    %v6962 = vpop.f32.mrf.mxu0
    %v6963 = vadd.f32 %v6908, %v6962
    %v6964 = vpop.f32.mrf.mxu0
    %6965 = vdwg.mxu0
    %6968 = vrot.lane.b32.xlu0 %v6960, 96
    %v6969 = vpop.permute.xlu0 %6968
    %6970 = vrot.lane.b32.xlu0 %v6963, 96
    %v6971 = vpop.permute.xlu0 %6970
    %v6974 = vmul.f32 %v2142, %v6969
    %v6975 = vmul.f32 %v2146, %v6971
    %6978 = vrot.lane.b32.xlu0 %v6974, 32
    %v6979 = vpop.permute.xlu0 %6978
    %6980 = vrot.lane.b32.xlu0 %v6975, 32
    %v6981 = vpop.permute.xlu0 %6980
    %v6984 = vadd.f32 %v5406, %v6979
    %v6985 = vadd.f32 %v5407, %v6981
    %v6986 = vsel %vm203, %v6984, 0.0
    %6987 = vadd.xlane.f32.xlu0 %v6986
    %v6988 = vpop.xlane.xlu0 %6987
    %v6989 = vsel %vm203, %v6985, 0.0
    %6990 = vadd.xlane.f32.xlu0 %v6989
    %v6991 = vpop.xlane.xlu0 %6990
    %v6992 = vmul.f32 %v6988, %v216
    %v6993 = vmul.f32 %v6991, %v216
    %v6994 = vsub.f32 %v6984, %v6992
    %v6995 = vsub.f32 %v6985, %v6993
    %v6996 = vmul.f32 %v6994, %v6994
    %v6997 = vmul.f32 %v6995, %v6995
    %v6998 = vsel %vm203, %v6996, 0.0
    %6999 = vadd.xlane.f32.xlu0 %v6998
    %v7000 = vpop.xlane.xlu0 %6999
    %v7001 = vsel %vm203, %v6997, 0.0
    %7002 = vadd.xlane.f32.xlu0 %v7001
    %v7003 = vpop.xlane.xlu0 %7002
    %v7004 = vmul.f32 %v7000, %v216
    %v7005 = vmul.f32 %v7003, %v216
    %v7006 = vadd.f32 %v7004, 1e-05
    %v7007 = vadd.f32 %v7005, 1e-05
    %v7008 = vrsqrt.pop %v7006
    %v7009 = vrsqrt.pop %v7007
    %v7010 = vmul.f32 %v6994, %v7008
    %v7011 = vmul.f32 %v6995, %v7009
    %v7012 = vld [vmem:[#allocation17] sm:$0x1]
    %v7014 = vlaneseq
    %v7015 = vshrl.u32 %v7014, 7
    %v7016 = vsub.s32 0, %v7015
    %v7017 = vrot.slane %v7012, %v7016
    %v7019 = vmul.f32 %v7010, %v7017
    %v7020 = vmul.f32 %v7011, %v7017
    %v7021 = vld [vmem:[#allocation19] sm:$0x1]
    %v7023 = vlaneseq
    %v7024 = vshrl.u32 %v7023, 7
    %v7025 = vsub.s32 0, %v7024
    %v7026 = vrot.slane %v7021, %v7025
    %v7028 = vadd.f32 %v7019, %v7026
    %v7029 = vadd.f32 %v7020, %v7026
    %v7030 = vpack.c.bf16 %v7029, %v7028
    %v7031 = vld [vmem:[%s13] sm:$0xf]
    %v7032 = vld [vmem:[%s13 + $0x4] sm:$0xf]
    %v7033 = vld [vmem:[%s13 + $0x8] sm:$0xf]
    %v7034 = vld [vmem:[%s13 + $0xc] sm:$0xf]
    %v7035 = vld [vmem:[%s14] sm:$0x1]
    %v7037 = vlaneseq
    %v7038 = vshrl.u32 %v7037, 7
    %v7039 = vsub.s32 0, %v7038
    %v7040 = vrot.slane %v7035, %v7039
    %v7046 = vunpack.c.l.b16 %v7031
    %v7047 = vunpack.c.l.b16 %v7032
    %v7048 = vunpack.c.l.b16 %v7033
    %v7049 = vunpack.c.l.b16 %v7034
    %v7050 = vpack.c.b16 %v7047, %v7046
    %v7051 = vpack.c.b16 %v7049, %v7048
    %v7055 = vsel %vm203, %v7030, 0
    %7057 = vmatprep.subr.bf16.mxu0 0
    %7058 = vmatpush1.bf16.msra.mxu0 0
    %7059 = vmatprep.subr.bf16.mxu0 0
    %7060 = vmatpush1.bf16.msra.mxu0 0
    %7061 = vmatprep.subr.bf16.mxu0 0
    %7062 = vmatpush1.bf16.msra.mxu0 0
    %7063 = vmatprep.subr.bf16.mxu0 0
    %7064 = vmatpush1.bf16.msra.mxu0 0
    %7065 = vmatprep.subr.bf16.mxu0 0
    %7066 = vmatpush1.bf16.msra.mxu0 0
    %7067 = vmatprep.subr.bf16.mxu0 0
    %7068 = vmatpush1.bf16.msra.mxu0 0
    %7069 = vmatprep.subr.bf16.mxu0 0
    %7070 = vmatpush1.bf16.msra.mxu0 %v7051
    %7071 = vmatprep.subr.bf16.mxu0 0
    %7072 = vmatpush1.bf16.msra.mxu0 %v7050
    %7073 = vmatprep.subr.bf16.mxu0 0
    %7074 = vmatpush2.bf16.msra.mxu0 0
    %7075 = vmatprep.subr.bf16.mxu0 0
    %7076 = vmatpush2.bf16.msra.mxu0 0
    %7077 = vmatprep.subr.bf16.mxu0 0
    %7078 = vmatpush2.bf16.msra.mxu0 0
    %7079 = vmatprep.subr.bf16.mxu0 0
    %7080 = vmatpush2.bf16.msra.mxu0 0
    %7081 = vmatprep.subr.bf16.mxu0 0
    %7082 = vmatpush2.bf16.msra.mxu0 0
    %7083 = vmatprep.subr.bf16.mxu0 0
    %7084 = vmatpush2.bf16.msra.mxu0 0
    %7085 = vmatprep.subr.bf16.mxu0 0
    %7086 = vmatpush2.bf16.msra.mxu0 0
    %7087 = vmatprep.subr.bf16.mxu0 0
    %7088 = vmatpush2.bf16.msra.mxu0 0
    %7089 = vmatprep.mubr.bf16.mxu0 0
    %7090 = vmatmul.mubr.bf16.gmra.mxu0 %v7055
    %v7091 = vpop.f32.mrf.mxu0
    %v7092 = vadd.f32 %v7040, %v7091
    %v7093 = vpop.f32.mrf.mxu0
    %v7094 = vpop.f32.mrf.mxu0
    %v7095 = vadd.f32 %v7040, %v7094
    %v7096 = vpop.f32.mrf.mxu0
    %7097 = vdwg.mxu0
    %7098 = vst [vmem:[#allocation20] sm:$0xff] %v7092
    %7099 = vst [vmem:[#allocation20 + $0x8] sm:$0xff] %v7095
    // Predicated region
    $region106: #{tpu_custom_call.1} parent=1 // pred_check
      _
    $region107: #{tpu_custom_call.1} parent=1 // pred_check_branch
      %7101 = sbr.rel (0) target = $region109
    $region108: #{tpu_custom_call.1} parent=1 // pred_region
      %s7103 = ssub.s32 256, 256
      %7104 = vsyncadd [#allocation4], %s7103
      %s7105 = sshll.u32 [#allocation20], 4
      %s7106 = int_to_ptr.vmem [resolvable:$true] %s7105
      %7111 = dma.vmem_to_hbm [thread:$0]  %s7106, 256, %s15, [#allocation4], 128, 128, 8
    $region109: #{tpu_custom_call.1} parent=1 // pred_fallthru
      _
    // Predicated region
    $region110: #{tpu_custom_call.1} parent=1 // pred_check
      _
    $region111: #{tpu_custom_call.1} parent=1 // pred_check_branch
      %7113 = sbr.rel (0) target = $region113
    $region112: #{tpu_custom_call.1} parent=1 // pred_region
      %7114 = dma.done [#allocation4], 256
    $region113: #{tpu_custom_call.1} parent=1 // pred_fallthru
      _
    %7115 = vsyncpa [#allocation3], 1
    %7116 = vsyncpa [#allocation6], 1
    %7117 = vsyncpa [#allocation9], 1
    %7118 = vsyncpa [#allocation12], 1
    %7119 = vsyncpa [#allocation15], 1
    %7120 = vsyncpa [#allocation18], 1
    %7121 = vsyncpa [#allocation4], 1

</llo_original>
